<compile_context>
chip_gen: v7x
topology: tpu7x:2x2x1
jax: 0.10.0
libtpu: 0.0.40
codegen_flags: <defaults>
</compile_context>

<pallas_src>
import functools
import math

import numpy as np
import jax
import jax.numpy as jnp
from jax import lax
from jax.experimental import pallas as pl
from jax.experimental.pallas import tpu as pltpu

MIN_NORM = 1e-15
EPS = 1e-7
_VMEM_LIMIT = 48 * 1024 * 1024        # explicit budget: v7x only has 64 MiB physical VMEM


def _round_up(x, m):
    return ((x + m - 1) // m) * m


def _pick_tile(n, target):
    """Largest tile <= target that divides n and is a multiple of 8 (fallback: n)."""
    t = min(target, n)
    t -= t % 8
    while t >= 8:
        if n % t == 0:
            return t
        t -= 8
    return n


# ----------------------- Hyperboloid manifold glue (plain JAX) -----------------------
def hyp_expmap0(u, c):
    K = 1.0 / c
    sqrtK = math.sqrt(K)
    x = u[..., 1:]
    x_norm = jnp.maximum(jnp.sqrt(jnp.sum(x * x, axis=-1, keepdims=True)), MIN_NORM)
    theta = x_norm / sqrtK
    time = sqrtK * jnp.cosh(theta)
    space = sqrtK * jnp.sinh(theta) * x / x_norm
    return jnp.concatenate([time, space], axis=-1)


def hyp_proj(x, c):
    K = 1.0 / c
    space = x[..., 1:]
    sq = jnp.sum(space * space, axis=-1, keepdims=True)
    time = jnp.sqrt(jnp.maximum(K + sq, EPS))
    return jnp.concatenate([time, space], axis=-1)


def hyp_logmap0(x, c):
    K = 1.0 / c
    sqrtK = math.sqrt(K)
    y = x[..., 1:]
    y_norm = jnp.maximum(jnp.sqrt(jnp.sum(y * y, axis=-1, keepdims=True)), MIN_NORM)
    theta = jnp.maximum(x[..., 0:1] / sqrtK, 1.0 + EPS)
    space = sqrtK * jnp.arccosh(theta) * y / y_norm
    return jnp.concatenate([jnp.zeros_like(x[..., 0:1]), space], axis=-1)


# -------------- Pallas kernel 1: fused (3*H)-wide hyperbolic linear --------------
# TODO(synk): exact two-curvature HypLinear source was not provided; implemented as
# the common form logmap0 -> (x @ W^T + b) -> expmap0 -> proj (bias added in tangent
# space instead of a mobius_add).
def _fused_qkv_hyp_linear_kernel(u_ref, wt_ref, bt_ref, mask_ref, bdiag_ref, o_ref, *,
                                 curve):
    """One N-tile: bf16 tangent matmul (+bias) for all 3*H weight matrices at once,
    then per-head expmap0 + proj.  Per-head space norms come from ONE block-diagonal
    matmul; proj()'s time is sqrtK*cosh(theta) (no second norm pass)."""
    K = 1.0 / curve
    sqrtK = math.sqrt(K)

    u = u_ref[...]                                        # (TN, C) f32
    space_mask = mask_ref[...]                            # (1, GD); 0 at each head's time col
    mv = jnp.dot(u.astype(jnp.bfloat16), wt_ref[...],
                 preferred_element_type=jnp.float32) + bt_ref[...]
    mv_sp = mv * space_mask

    # per-head squared space norm, broadcast back to the wide layout (one MXU pass)
    sq_w = jnp.dot(mv_sp * mv_sp, bdiag_ref[...], preferred_element_type=jnp.float32)
    inv = lax.rsqrt(jnp.maximum(sq_w, MIN_NORM * MIN_NORM))          # EUP, no divide
    sp_norm = sq_w * inv
    theta = sp_norm * (1.0 / sqrtK)

    e = jnp.exp(theta)                                    # one shared exp for sinh & cosh
    e_inv = pl.reciprocal(e, approx=True)
    sinh = 0.5 * (e - e_inv)
    cosh = 0.5 * (e + e_inv)

    out_space = mv_sp * (sqrtK * sinh * inv)
    # proj(): time = sqrt(K + ||space||^2) == sqrtK * cosh(theta)  (algebraic shortcut)
    o_ref[...] = out_space + (sqrtK * cosh) * (1.0 - space_mask)


def fused_qkv_hyp_linear(u, W_all, b_all, curve, *, block_n=256):
    """u: (N, C) tangent at origin; W_all: (G, D, C) torch Linear weights;
    b_all: (G, 1, D).  Returns (N, G*D) hyperboloid points; matrix g occupies
    columns [g*D, (g+1)*D)."""
    G, D, C = W_all.shape
    N = u.shape[0]
    GD = G * D
    tn = _pick_tile(N, block_n)

    Wt = jnp.transpose(W_all, (2, 0, 1)).reshape(C, GD).astype(jnp.bfloat16)
    bt = b_all.reshape(1, GD).astype(jnp.float32)

    # host-side constants: per-head space mask + block-diagonal norm-broadcast matrix
    mask_np = np.ones((1, GD), np.float32)
    mask_np[0, ::D] = 0.0
    bd_np = np.zeros((GD, GD), np.float32)
    for g in range(G):
        s = g * D
        bd_np[s:s + D, s:s + D] = 1.0

    kernel = functools.partial(_fused_qkv_hyp_linear_kernel, curve=curve)
    return pl.pallas_call(
        kernel,
        out_shape=jax.ShapeDtypeStruct((N, GD), jnp.float32),
        grid_spec=pltpu.PrefetchScalarGridSpec(
            num_scalar_prefetch=0,
            grid=(N // tn,),
            in_specs=[
                pl.BlockSpec((tn, C), lambda i: (i, 0)),
                pl.BlockSpec((C, GD), lambda i: (0, 0)),
                pl.BlockSpec((1, GD), lambda i: (0, 0)),
                pl.BlockSpec((1, GD), lambda i: (0, 0)),
                pl.BlockSpec((GD, GD), lambda i: (0, 0)),
            ],
            out_specs=pl.BlockSpec((tn, GD), lambda i: (i, 0)),
        ),
        compiler_params=pltpu.CompilerParams(
            dimension_semantics=("parallel",),
            vmem_limit_bytes=_VMEM_LIMIT),
    )(u.astype(jnp.float32), Wt, bt, jnp.asarray(mask_np), jnp.asarray(bd_np))


# --------- Pallas kernel 2A: Performer K' features + global K'V accumulation ---------
def _kv_accum_kernel(k_ref, v_ref, p_ref, last_ref, *, curve, tau, inv_sqrt_m, m_feat):
    @pl.when(pl.program_id(0) == 0)
    def _():
        last_ref[...] = jnp.zeros_like(last_ref)

    inv_sqrt_tau = 1.0 / math.sqrt(tau)
    k = k_ref[...]                                        # (H, TN, D) f32
    v = v_ref[...]
    H, TN, D = k.shape
    Mp = p_ref.shape[-1]

    col_d = lax.broadcasted_iota(jnp.int32, (1, 1, D), 2)
    time_mask = (col_d == 0).astype(jnp.float32)
    x_time = jnp.sum(k * time_mask, axis=-1, keepdims=True)          # (H, TN, 1)

    # Performer feature map (torch uses curve/tau in `front`; reproduced verbatim)
    flat = k.reshape(H * TN, D)
    wx = jnp.exp(jnp.dot(flat.astype(jnp.bfloat16), p_ref[...],
                         preferred_element_type=jnp.float32) * inv_sqrt_tau)
    wx = wx.reshape(H, TN, Mp)
    front = jnp.exp((curve / tau - x_time * x_time / tau) * 0.5) * inv_sqrt_m
    col_m = lax.broadcasted_iota(jnp.int32, (1, 1, Mp), 2)
    feat_mask = (col_m < m_feat).astype(jnp.float32)      # zero the lane padding of M
    k_prime = wx * front * feat_mask                      # (H, TN, Mp)

    last_ref[...] += jnp.einsum(
        'hnm,hnd->hmd', k_prime.astype(jnp.bfloat16), v.astype(jnp.bfloat16),
        preferred_element_type=jnp.float32)


def kv_feature_accumulate(k_h, v_h, P_pad, curve, tau, inv_sqrt_m, m_feat, *, block_n=256):
    H, N, D = k_h.shape
    Mp = P_pad.shape[1]
    tn = _pick_tile(N, block_n)
    kernel = functools.partial(_kv_accum_kernel, curve=curve, tau=tau,
                               inv_sqrt_m=inv_sqrt_m, m_feat=m_feat)
    return pl.pallas_call(
        kernel,
        out_shape=jax.ShapeDtypeStruct((H, Mp, D), jnp.float32),
        grid_spec=pltpu.PrefetchScalarGridSpec(
            num_scalar_prefetch=0,
            grid=(N // tn,),
            in_specs=[
                pl.BlockSpec((H, tn, D), lambda i: (0, i, 0)),
                pl.BlockSpec((H, tn, D), lambda i: (0, i, 0)),
                pl.BlockSpec((D, Mp), lambda i: (0, 0)),
            ],
            out_specs=pl.BlockSpec((H, Mp, D), lambda i: (0, 0, 0)),  # accumulator-resident
        ),
        compiler_params=pltpu.CompilerParams(
            dimension_semantics=("arbitrary",),
            vmem_limit_bytes=_VMEM_LIMIT),
    )(k_h, v_h, P_pad)


# ----- Pallas kernel 2B: attention read-out + hyperbolic head agg + final HypLinear -----
def _attn_agg_fc_kernel(q_ref, last_ref, p_ref, wfc_ref, bfc_ref, o_ref, *,
                        num_heads, curve, tau, inv_sqrt_m, m_feat):
    H = num_heads
    K = 1.0 / curve
    sqrtK = math.sqrt(K)
    inv_sqrt_c = 1.0 / math.sqrt(curve)
    inv_sqrt_tau = 1.0 / math.sqrt(tau)

    q = q_ref[...]                                        # (H, TN, D) f32
    _, TN, D = q.shape
    Mp = p_ref.shape[-1]

    col_d3 = lax.broadcasted_iota(jnp.int32, (1, 1, D), 2)
    time_mask3 = (col_d3 == 0).astype(jnp.float32)
    sign3 = 1.0 - 2.0 * time_mask3                        # -1 on time col, +1 on space

    # Performer feature map for q
    x_time = jnp.sum(q * time_mask3, axis=-1, keepdims=True)
    flat = q.reshape(H * TN, D)
    wx = jnp.exp(jnp.dot(flat.astype(jnp.bfloat16), p_ref[...],
                         preferred_element_type=jnp.float32) * inv_sqrt_tau)
    wx = wx.reshape(H, TN, Mp)
    front = jnp.exp((curve / tau - x_time * x_time / tau) * 0.5) * inv_sqrt_m
    col_m = lax.broadcasted_iota(jnp.int32, (1, 1, Mp), 2)
    feat_mask = (col_m < m_feat).astype(jnp.float32)
    q_prime = wx * front * feat_mask                      # (H, TN, Mp)

    # linear-attention read-out against the globally accumulated K'V
    z = jnp.einsum('hnm,hmd->hnd', q_prime.astype(jnp.bfloat16), last_ref[...],
                   preferred_element_type=jnp.float32)    # (H, TN, D)

    # per-head Minkowski normalization; fold hyperbolic-mean 1/H into the coefficient
    mink = jnp.sum(z * z * sign3, axis=-1, keepdims=True)
    coeff = (inv_sqrt_c / H) * lax.rsqrt(jnp.maximum(jnp.abs(mink), MIN_NORM))
    agg = jnp.sum(z * coeff, axis=0)                      # (TN, D)

    col_d2 = lax.broadcasted_iota(jnp.int32, (1, D), 1)
    time_mask2 = (col_d2 == 0).astype(jnp.float32)
    sign2 = 1.0 - 2.0 * time_mask2
    space_mask2 = 1.0 - time_mask2

    mink2 = jnp.sum(agg * agg * sign2, axis=-1, keepdims=True)
    coeff2 = inv_sqrt_c * lax.rsqrt(jnp.maximum(jnp.abs(mink2), MIN_NORM))
    z_next = agg * coeff2                                 # hyper_agg output

    # fused final HypLinear: logmap0 -> linear -> expmap0 -> proj
    y_sp = z_next * space_mask2
    ysq = jnp.sum(y_sp * y_sp, axis=-1, keepdims=True)
    inv_yn = lax.rsqrt(jnp.maximum(ysq, MIN_NORM * MIN_NORM))
    z_time = jnp.sum(z_next * time_mask2, axis=-1, keepdims=True)
    theta_l = jnp.maximum(z_time * (1.0 / sqrtK), 1.0 + EPS)
    acosh = jnp.log(theta_l + jnp.sqrt(theta_l * theta_l - 1.0))     # hgcn Arcosh form
    u_out = y_sp * (sqrtK * acosh * inv_yn)               # tangent at origin

    mv = jnp.dot(u_out.astype(jnp.bfloat16), wfc_ref[...],
                 preferred_element_type=jnp.float32) + bfc_ref[...]
    OUTp = mv.shape[-1]
    col_o = lax.broadcasted_iota(jnp.int32, (1, OUTp), 1)
    time_mask_o = (col_o == 0).astype(jnp.float32)
    mv_sp = mv * (1.0 - time_mask_o)
    sq = jnp.sum(mv_sp * mv_sp, axis=-1, keepdims=True)
    inv = lax.rsqrt(jnp.maximum(sq, MIN_NORM * MIN_NORM))
    sp_norm = sq * inv
    theta2 = sp_norm * (1.0 / sqrtK)
    e = jnp.exp(theta2)
    e_inv = pl.reciprocal(e, approx=True)
    sinh = 0.5 * (e - e_inv)
    cosh = 0.5 * (e + e_inv)
    out_space = mv_sp * (sqrtK * sinh * inv)
    o_ref[...] = out_space + (sqrtK * cosh) * time_mask_o


def attention_agg_fc(q_h, last_bf16, P_pad, WfcT, bfc, curve, tau, inv_sqrt_m, m_feat, *,
                     block_n=256):
    H, N, D = q_h.shape
    Mp = P_pad.shape[1]
    OUTp = WfcT.shape[1]
    tn = _pick_tile(N, block_n)
    kernel = functools.partial(_attn_agg_fc_kernel, num_heads=H, curve=curve, tau=tau,
                               inv_sqrt_m=inv_sqrt_m, m_feat=m_feat)
    return pl.pallas_call(
        kernel,
        out_shape=jax.ShapeDtypeStruct((N, OUTp), jnp.float32),
        grid_spec=pltpu.PrefetchScalarGridSpec(
            num_scalar_prefetch=0,
            grid=(N // tn,),
            in_specs=[
                pl.BlockSpec((H, tn, D), lambda i: (0, i, 0)),
                pl.BlockSpec((H, Mp, D), lambda i: (0, 0, 0)),
                pl.BlockSpec((D, Mp), lambda i: (0, 0)),
                pl.BlockSpec((D, OUTp), lambda i: (0, 0)),
                pl.BlockSpec((1, OUTp), lambda i: (0, 0)),
            ],
            out_specs=pl.BlockSpec((tn, OUTp), lambda i: (i, 0)),
        ),
        compiler_params=pltpu.CompilerParams(
            dimension_semantics=("parallel",),
            vmem_limit_bytes=_VMEM_LIMIT),
    )(q_h, last_bf16, P_pad, WfcT, bfc)


# ----------------------- Parameter / random-feature construction -----------------------
def create_projection_matrix(m, d, seed=0):
    # Structurally mirrors _create_projection_matrix(scaling=0, struct_mode=False);
    # TODO(synk): RNG stream differs from torch.manual_seed but is deterministic.
    rng = np.random.RandomState(seed)
    nb_full_blocks = m // d
    blocks = []
    for _ in range(nb_full_blocks):
        q, _ = np.linalg.qr(rng.randn(d, d))
        blocks.append(q.T)
    rem = m - nb_full_blocks * d
    if rem > 0:
        q, _ = np.linalg.qr(rng.randn(d, d))
        blocks.append(q.T[:rem])
    final = np.vstack(blocks)                              # (m, d)
    multiplier = np.linalg.norm(rng.randn(m, d), axis=1)   # (m,)
    return jnp.asarray(np.diag(multiplier) @ final, dtype=jnp.float32)


def init_params(key, in_channels, hidden, out_channels, num_heads):
    # torch nn.Linear convention: weight (out_features, in_features)
    ks = jax.random.split(key, 8)
    s = 1.0 / math.sqrt(hidden)
    Wq = jax.random.normal(ks[0], (num_heads, hidden, hidden), jnp.float32) * s
    Wk = jax.random.normal(ks[1], (num_heads, hidden, hidden), jnp.float32) * s
    Wv = jax.random.normal(ks[2], (num_heads, hidden, hidden), jnp.float32) * s
    bq = jax.random.normal(ks[3], (num_heads, 1, hidden), jnp.float32) * 0.01
    bk = jax.random.normal(ks[4], (num_heads, 1, hidden), jnp.float32) * 0.01
    bv = jax.random.normal(ks[5], (num_heads, 1, hidden), jnp.float32) * 0.01
    Wfc = jax.random.normal(ks[6], (1, out_channels, in_channels), jnp.float32) / math.sqrt(in_channels)
    bfc = jax.random.normal(ks[7], (1, 1, out_channels), jnp.float32) * 0.01
    return dict(Wq=Wq, Wk=Wk, Wv=Wv, bq=bq, bk=bk, bv=bv, Wfc=Wfc, bfc=bfc)


# ----------------------- Full forward (num_layers = 1) -----------------------
def light_hyper_former_forward(params, x, edge_index, *, curve, tau, num_heads,
                               hidden, P, block_n=256):
    N = x.shape[0]
    H, D = num_heads, hidden
    HD = H * D

    # conv: z = manifold.proj(manifold.expmap0(z, c), c)
    z = hyp_proj(hyp_expmap0(x, curve), curve)
    u = hyp_logmap0(z, curve)                              # tangent input for HypLinear

    # all 3*H hyperbolic linear projections fused into one lane-dense, N-tiled call
    W_all = jnp.concatenate([params["Wq"], params["Wk"], params["Wv"]], axis=0)
    b_all = jnp.concatenate([params["bq"], params["bk"], params["bv"]], axis=0)
    qkv_wide = fused_qkv_hyp_linear(u, W_all, b_all, curve, block_n=block_n)   # (N, 3HD)

    def torch_head_scramble(wide):
        # Reproduce torch exactly: stack(dim=0) -> reshape(-1, N, H, D) -> permute(2,0,1,3)
        # (a true data scramble, B = 1).  Done once per tensor in the wrapper.
        stacked = jnp.transpose(wide.reshape(N, H, D), (1, 0, 2))     # == torch.stack (H,N,D)
        return jnp.transpose(stacked.reshape(N, H, D), (1, 0, 2))     # torch reshape+permute

    q_h = torch_head_scramble(qkv_wide[:, :HD])
    k_h = torch_head_scramble(qkv_wide[:, HD:2 * HD])
    v_h = torch_head_scramble(qkv_wide[:, 2 * HD:])

    # projection matrix acts on the space part only -> zero time row; lane-pad M to 128
    M = P.shape[1]
    Mp = _round_up(max(M, 1), 128)
    P_pad = jnp.zeros((D, Mp), jnp.float32).at[1:, :M].set(P).astype(jnp.bfloat16)
    inv_sqrt_m = 1.0 / math.sqrt(P.shape[0])   # torch uses projection_matrix.shape[0]

    # final fc params, lane-padded to a dense output block (padding sliced off below)
    Wfc = params["Wfc"][0]                                 # (OUT, D)
    OUT = Wfc.shape[0]
    OUTp = _round_up(OUT, 128)
    WfcT = jnp.zeros((D, OUTp), jnp.float32).at[:, :OUT].set(Wfc.T).astype(jnp.bfloat16)
    bfc = jnp.zeros((1, OUTp), jnp.float32).at[:, :OUT].set(params["bfc"].reshape(1, OUT))

    # phase A: global sum_n K'(n) V(n)  (accumulator-resident output, 'arbitrary' axis)
    last = kv_feature_accumulate(k_h, v_h, P_pad, curve, tau, inv_sqrt_m, M,
                                 block_n=block_n)          # (H, Mp, D) f32
    # phase B: per-node attention read-out + hyperbolic head agg + final HypLinear
    x_out_p = attention_agg_fc(q_h, last.astype(jnp.bfloat16), P_pad, WfcT, bfc,
                               curve, tau, inv_sqrt_m, M, block_n=block_n)
    x_out = x_out_p[:, :OUT]

    # TODO(synk): edge attention weight A_weight (gather over edge_index) is dead code
    # when use_edge_loss=False, so it is not computed here.
    del edge_index

    link_loss = []                                         # forward never appends
    return x_out, link_loss


if __name__ == "__main__":
    # small shapes consistent with the module: N nodes, in == hidden (required by the
    # module's own fcs[-1] usage), 1 conv layer, H heads, M random features.
    N, IN, HID, OUT, H, M = 256, 16, 16, 8, 4, 8
    CURVE, TAU = 0.5, 1.0

    key = jax.random.PRNGKey(0)
    kx, kp, ke = jax.random.split(key, 3)
    x = 0.1 * jax.random.normal(kx, (N, IN), dtype=jnp.float32)      # node features
    params = init_params(kp, IN, HID, OUT, H)
    P = create_projection_matrix(HID - 1, M, seed=0)                 # (hidden-1, M)

    n_edges = 64
    start = jax.random.randint(ke, (n_edges,), 0, N)
    end = jax.random.randint(jax.random.fold_in(ke, 1), (n_edges,), 0, N)
    edge_index = (start, end)                                        # adjs[0]

    fwd = jax.jit(functools.partial(light_hyper_former_forward,
                                    curve=CURVE, tau=TAU, num_heads=H,
                                    hidden=HID, P=P, block_n=128))
    x_out, link_loss = fwd(params, x, edge_index)
    x_out = jax.block_until_ready(x_out)

    assert x_out.shape == (N, OUT), x_out.shape
    assert bool(jnp.all(jnp.isfinite(x_out)))
    print("KERNEL_OK")
</pallas_src>

<mosaic_0001>
module attributes {stable_mosaic.version = 11 : i64} {
  func.func @_fused_qkv_hyp_linear_kernel(%arg0: i32, %arg1: memref<128x16xf32, #tpu.memory_space<vmem>>, %arg2: memref<16x192xbf16, #tpu.memory_space<vmem>>, %arg3: memref<1x192xf32, #tpu.memory_space<vmem>>, %arg4: memref<1x192xf32, #tpu.memory_space<vmem>>, %arg5: memref<192x192xf32, #tpu.memory_space<vmem>>, %arg6: memref<128x192xf32, #tpu.memory_space<vmem>>) attributes {dimension_semantics = [#tpu.dimension_semantics<parallel>], iteration_bounds = array<i64: 2>, scalar_prefetch = 0 : i64, scratch_operands = 0 : i64, tpu.core_type = #tpu.core_type<tc>, window_params = [{transform_indices = @transform_0, window_bounds = array<i64: 128, 16>}, {pipeline_mode = #tpu.pipeline_mode<synchronous>, transform_indices = @transform_1, window_bounds = array<i64: 16, 192>}, {pipeline_mode = #tpu.pipeline_mode<synchronous>, transform_indices = @transform_2, window_bounds = array<i64: 1, 192>}, {pipeline_mode = #tpu.pipeline_mode<synchronous>, transform_indices = @transform_3, window_bounds = array<i64: 1, 192>}, {pipeline_mode = #tpu.pipeline_mode<synchronous>, transform_indices = @transform_4, window_bounds = array<i64: 192, 192>}, {transform_indices = @transform_5, window_bounds = array<i64: 128, 192>}]} {
    %c0 = arith.constant 0 : index
    %c0_0 = arith.constant 0 : index
    %0 = vector.load %arg1[%c0, %c0_0] : memref<128x16xf32, #tpu.memory_space<vmem>>, vector<128x16xf32>
    %c0_1 = arith.constant 0 : index
    %c0_2 = arith.constant 0 : index
    %1 = vector.load %arg4[%c0_1, %c0_2] : memref<1x192xf32, #tpu.memory_space<vmem>>, vector<1x192xf32>
    %2 = arith.truncf %0 : vector<128x16xf32> to vector<128x16xbf16>
    %c0_3 = arith.constant 0 : index
    %c0_4 = arith.constant 0 : index
    %3 = vector.load %arg2[%c0_3, %c0_4] : memref<16x192xbf16, #tpu.memory_space<vmem>>, vector<16x192xbf16>
    %cst = arith.constant dense<0.000000e+00> : vector<128x192xf32>
    %4 = tpu.matmul %2, %3, %cst {dimension_numbers = #tpu.dot_dimension_numbers<[1], [0], [0], [1], [0, 0, 1, 1], [], []>} : vector<128x16xbf16>, vector<16x192xbf16>, vector<128x192xf32> -> vector<128x192xf32>
    %c0_5 = arith.constant 0 : index
    %c0_6 = arith.constant 0 : index
    %5 = vector.load %arg3[%c0_5, %c0_6] : memref<1x192xf32, #tpu.memory_space<vmem>>, vector<1x192xf32>
    %6 = vector.broadcast %5 : vector<1x192xf32> to vector<128x192xf32>
    %7 = arith.addf %4, %6 : vector<128x192xf32>
    %8 = vector.broadcast %1 : vector<1x192xf32> to vector<128x192xf32>
    %9 = arith.mulf %7, %8 : vector<128x192xf32>
    %10 = arith.mulf %9, %9 : vector<128x192xf32>
    %c0_7 = arith.constant 0 : index
    %c0_8 = arith.constant 0 : index
    %11 = vector.load %arg5[%c0_7, %c0_8] : memref<192x192xf32, #tpu.memory_space<vmem>>, vector<192x192xf32>
    %cst_9 = arith.constant dense<0.000000e+00> : vector<128x192xf32>
    %12 = tpu.matmul %10, %11, %cst_9 {dimension_numbers = #tpu.dot_dimension_numbers<[1], [0], [0], [1], [0, 0, 1, 1], [], []>} : vector<128x192xf32>, vector<192x192xf32>, vector<128x192xf32> -> vector<128x192xf32>
    %cst_10 = arith.constant 1.000000e-30 : f32
    %13 = vector.broadcast %cst_10 : f32 to vector<128x192xf32>
    %14 = arith.maximumf %12, %13 : vector<128x192xf32>
    %15 = math.rsqrt %14 : vector<128x192xf32>
    %16 = arith.mulf %12, %15 : vector<128x192xf32>
    %cst_11 = arith.constant 0.707106769 : f32
    %17 = vector.broadcast %cst_11 : f32 to vector<128x192xf32>
    %18 = arith.mulf %16, %17 : vector<128x192xf32>
    %19 = math.exp %18 : vector<128x192xf32>
    %20 = tpu.reciprocal %19 {approx = true} : vector<128x192xf32> -> vector<128x192xf32>
    %21 = arith.subf %19, %20 : vector<128x192xf32>
    %cst_12 = arith.constant 5.000000e-01 : f32
    %22 = vector.broadcast %cst_12 : f32 to vector<128x192xf32>
    %23 = arith.mulf %22, %21 : vector<128x192xf32>
    %24 = arith.addf %19, %20 : vector<128x192xf32>
    %cst_13 = arith.constant 5.000000e-01 : f32
    %25 = vector.broadcast %cst_13 : f32 to vector<128x192xf32>
    %26 = arith.mulf %25, %24 : vector<128x192xf32>
    %cst_14 = arith.constant 1.41421354 : f32
    %27 = vector.broadcast %cst_14 : f32 to vector<128x192xf32>
    %28 = arith.mulf %27, %23 : vector<128x192xf32>
    %29 = arith.mulf %28, %15 : vector<128x192xf32>
    %30 = arith.mulf %9, %29 : vector<128x192xf32>
    %cst_15 = arith.constant 1.41421354 : f32
    %31 = vector.broadcast %cst_15 : f32 to vector<128x192xf32>
    %32 = arith.mulf %31, %26 : vector<128x192xf32>
    %cst_16 = arith.constant 1.000000e+00 : f32
    %33 = vector.broadcast %cst_16 : f32 to vector<1x192xf32>
    %34 = arith.subf %33, %1 : vector<1x192xf32>
    %35 = vector.broadcast %34 : vector<1x192xf32> to vector<128x192xf32>
    %36 = arith.mulf %32, %35 : vector<128x192xf32>
    %37 = arith.addf %30, %36 : vector<128x192xf32>
    %c0_17 = arith.constant 0 : index
    %c0_18 = arith.constant 0 : index
    %38 = vector.load %arg6[%c0_17, %c0_18] : memref<128x192xf32, #tpu.memory_space<vmem>>, vector<128x192xf32>
    tpu.vector_store %arg6[%c0_17, %c0_18], %37 {strides = array<i32>} : memref<128x192xf32, #tpu.memory_space<vmem>>, vector<128x192xf32>,
    return
  }
  func.func @transform_0(%arg0: i32) -> (i32, i32) {
    %c0_i32 = arith.constant 0 : i32
    %c0_i32_0 = arith.constant 0 : i32
    return %arg0, %c0_i32 : i32, i32
  }
  func.func @transform_1(%arg0: i32) -> (i32, i32) {
    %c0_i32 = arith.constant 0 : i32
    %c0_i32_0 = arith.constant 0 : i32
    %c0_i32_1 = arith.constant 0 : i32
    return %c0_i32, %c0_i32_0 : i32, i32
  }
  func.func @transform_2(%arg0: i32) -> (i32, i32) {
    %c0_i32 = arith.constant 0 : i32
    %c0_i32_0 = arith.constant 0 : i32
    %c0_i32_1 = arith.constant 0 : i32
    return %c0_i32, %c0_i32_0 : i32, i32
  }
  func.func @transform_3(%arg0: i32) -> (i32, i32) {
    %c0_i32 = arith.constant 0 : i32
    %c0_i32_0 = arith.constant 0 : i32
    %c0_i32_1 = arith.constant 0 : i32
    return %c0_i32, %c0_i32_0 : i32, i32
  }
  func.func @transform_4(%arg0: i32) -> (i32, i32) {
    %c0_i32 = arith.constant 0 : i32
    %c0_i32_0 = arith.constant 0 : i32
    %c0_i32_1 = arith.constant 0 : i32
    return %c0_i32, %c0_i32_0 : i32, i32
  }
  func.func @transform_5(%arg0: i32) -> (i32, i32) {
    %c0_i32 = arith.constant 0 : i32
    %c0_i32_0 = arith.constant 0 : i32
    return %arg0, %c0_i32 : i32, i32
  }
}

module attributes {stable_mosaic.version = 11 : i64} {
  func.func @_kv_accum_kernel(%arg0: i32, %arg1: memref<4x128x16xf32, #tpu.memory_space<vmem>>, %arg2: memref<4x128x16xf32, #tpu.memory_space<vmem>>, %arg3: memref<16x128xbf16, #tpu.memory_space<vmem>>, %arg4: memref<4x128x16xf32, #tpu.memory_space<vmem>>) attributes {dimension_semantics = [#tpu.dimension_semantics<arbitrary>], iteration_bounds = array<i64: 2>, scalar_prefetch = 0 : i64, scratch_operands = 0 : i64, tpu.core_type = #tpu.core_type<tc>, window_params = [{transform_indices = @transform_0, window_bounds = array<i64: 4, 128, 16>}, {transform_indices = @transform_1, window_bounds = array<i64: 4, 128, 16>}, {pipeline_mode = #tpu.pipeline_mode<synchronous>, transform_indices = @transform_2, window_bounds = array<i64: 16, 128>}, {pipeline_mode = #tpu.pipeline_mode<synchronous>, transform_indices = @transform_3, window_bounds = array<i64: 4, 128, 16>}]} {
    %c0_i32 = arith.constant 0 : i32
    %0 = arith.cmpi eq, %arg0, %c0_i32 : i32
    %1 = arith.extui %0 : i1 to i32
    %c0_i32_0 = arith.constant 0 : i32
    %2 = arith.cmpi ne, %1, %c0_i32_0 : i32
    scf.if %2 {
      %cst_22 = arith.constant 0.000000e+00 : f32
      %47 = vector.broadcast %cst_22 : f32 to vector<4x128x16xf32>
      %c0_23 = arith.constant 0 : index
      %c0_24 = arith.constant 0 : index
      %c0_25 = arith.constant 0 : index
      %48 = vector.load %arg4[%c0_23, %c0_24, %c0_25] : memref<4x128x16xf32, #tpu.memory_space<vmem>>, vector<4x128x16xf32>
      tpu.vector_store %arg4[%c0_23, %c0_24, %c0_25], %47 {strides = array<i32>} : memref<4x128x16xf32, #tpu.memory_space<vmem>>, vector<4x128x16xf32>,
    } else {
    }
    %c0 = arith.constant 0 : index
    %c0_1 = arith.constant 0 : index
    %c0_2 = arith.constant 0 : index
    %3 = vector.load %arg1[%c0, %c0_1, %c0_2] : memref<4x128x16xf32, #tpu.memory_space<vmem>>, vector<4x128x16xf32>
    %c0_3 = arith.constant 0 : index
    %c0_4 = arith.constant 0 : index
    %c0_5 = arith.constant 0 : index
    %4 = vector.load %arg2[%c0_3, %c0_4, %c0_5] : memref<4x128x16xf32, #tpu.memory_space<vmem>>, vector<4x128x16xf32>
    %5 = tpu.iota {dimensions = array<i32: 2>} : vector<1x1x16xi32>
    %c0_i32_6 = arith.constant 0 : i32
    %6 = vector.broadcast %c0_i32_6 : i32 to vector<1x1x16xi32>
    %7 = arith.cmpi eq, %5, %6 : vector<1x1x16xi32>
    %8 = arith.extui %7 : vector<1x1x16xi1> to vector<1x1x16xi32>
    %9 = arith.sitofp %8 : vector<1x1x16xi32> to vector<1x1x16xf32>
    %10 = vector.broadcast %9 : vector<1x1x16xf32> to vector<4x128x16xf32>
    %11 = arith.mulf %3, %10 : vector<4x128x16xf32>
    %cst = arith.constant dense<0.000000e+00> : vector<4x128xf32>
    %12 = vector.multi_reduction <add>, %11, %cst [2] : vector<4x128x16xf32> to vector<4x128xf32>
    %13 = vector.shape_cast %12 : vector<4x128xf32> to vector<4x128x1xf32>
    %14 = vector.shape_cast %3 : vector<4x128x16xf32> to vector<512x16xf32>
    %15 = arith.truncf %14 : vector<512x16xf32> to vector<512x16xbf16>
    %c0_7 = arith.constant 0 : index
    %c0_8 = arith.constant 0 : index
    %16 = vector.load %arg3[%c0_7, %c0_8] : memref<16x128xbf16, #tpu.memory_space<vmem>>, vector<16x128xbf16>
    %cst_9 = arith.constant dense<0.000000e+00> : vector<512x128xf32>
    %17 = tpu.matmul %15, %16, %cst_9 {dimension_numbers = #tpu.dot_dimension_numbers<[1], [0], [0], [1], [0, 0, 1, 1], [], []>} : vector<512x16xbf16>, vector<16x128xbf16>, vector<512x128xf32> -> vector<512x128xf32>
    %cst_10 = arith.constant 1.000000e+00 : f32
    %18 = vector.broadcast %cst_10 : f32 to vector<512x128xf32>
    %19 = arith.mulf %17, %18 : vector<512x128xf32>
    %20 = math.exp %19 : vector<512x128xf32>
    %21 = vector.shape_cast %20 : vector<512x128xf32> to vector<4x128x128xf32>
    %22 = arith.mulf %13, %13 : vector<4x128x1xf32>
    %cst_11 = arith.constant 1.000000e+00 : f32
    %23 = vector.broadcast %cst_11 : f32 to vector<4x128x1xf32>
    %24 = arith.divf %22, %23 : vector<4x128x1xf32>
    %cst_12 = arith.constant 5.000000e-01 : f32
    %25 = vector.broadcast %cst_12 : f32 to vector<4x128x1xf32>
    %26 = arith.subf %25, %24 : vector<4x128x1xf32>
    %cst_13 = arith.constant 5.000000e-01 : f32
    %27 = vector.broadcast %cst_13 : f32 to vector<4x128x1xf32>
    %28 = arith.mulf %26, %27 : vector<4x128x1xf32>
    %29 = math.exp %28 : vector<4x128x1xf32>
    %cst_14 = arith.constant 0.258198887 : f32
    %30 = vector.broadcast %cst_14 : f32 to vector<4x128x1xf32>
    %31 = arith.mulf %29, %30 : vector<4x128x1xf32>
    %32 = tpu.iota {dimensions = array<i32: 2>} : vector<1x1x128xi32>
    %c8_i32 = arith.constant 8 : i32
    %33 = vector.broadcast %c8_i32 : i32 to vector<1x1x128xi32>
    %34 = arith.cmpi slt, %32, %33 : vector<1x1x128xi32>
    %35 = arith.extui %34 : vector<1x1x128xi1> to vector<1x1x128xi32>
    %36 = arith.sitofp %35 : vector<1x1x128xi32> to vector<1x1x128xf32>
    %37 = vector.broadcast %31 : vector<4x128x1xf32> to vector<4x128x128xf32>
    %38 = arith.mulf %21, %37 : vector<4x128x128xf32>
    %39 = vector.broadcast %36 : vector<1x1x128xf32> to vector<4x128x128xf32>
    %40 = arith.mulf %38, %39 : vector<4x128x128xf32>
    %c0_15 = arith.constant 0 : index
    %c0_16 = arith.constant 0 : index
    %c0_17 = arith.constant 0 : index
    %41 = vector.load %arg4[%c0_15, %c0_16, %c0_17] : memref<4x128x16xf32, #tpu.memory_space<vmem>>, vector<4x128x16xf32>
    %42 = arith.truncf %40 : vector<4x128x128xf32> to vector<4x128x128xbf16>
    %43 = arith.truncf %4 : vector<4x128x16xf32> to vector<4x128x16xbf16>
    "tpu.trace_start"() <{level = 10 : i32, message = "hnm,hnd->hmd"}> : () -> ()
    %cst_18 = arith.constant dense<0.000000e+00> : vector<4x128x16xf32>
    %44 = tpu.matmul %42, %43, %cst_18 {dimension_numbers = #tpu.dot_dimension_numbers<[1], [1], [2], [2], [0, 0, 0, 2, 1, 2], [0], [0]>} : vector<4x128x128xbf16>, vector<4x128x16xbf16>, vector<4x128x16xf32> -> vector<4x128x16xf32>
    "tpu.trace_stop"() : () -> ()
    %45 = arith.addf %41, %44 : vector<4x128x16xf32>
    %c0_19 = arith.constant 0 : index
    %c0_20 = arith.constant 0 : index
    %c0_21 = arith.constant 0 : index
    %46 = vector.load %arg4[%c0_19, %c0_20, %c0_21] : memref<4x128x16xf32, #tpu.memory_space<vmem>>, vector<4x128x16xf32>
    tpu.vector_store %arg4[%c0_19, %c0_20, %c0_21], %45 {strides = array<i32>} : memref<4x128x16xf32, #tpu.memory_space<vmem>>, vector<4x128x16xf32>,
    return
  }
  func.func @transform_0(%arg0: i32) -> (i32, i32, i32) {
    %c0_i32 = arith.constant 0 : i32
    %c0_i32_0 = arith.constant 0 : i32
    %c0_i32_1 = arith.constant 0 : i32
    return %c0_i32, %arg0, %c0_i32_0 : i32, i32, i32
  }
  func.func @transform_1(%arg0: i32) -> (i32, i32, i32) {
    %c0_i32 = arith.constant 0 : i32
    %c0_i32_0 = arith.constant 0 : i32
    %c0_i32_1 = arith.constant 0 : i32
    return %c0_i32, %arg0, %c0_i32_0 : i32, i32, i32
  }
  func.func @transform_2(%arg0: i32) -> (i32, i32) {
    %c0_i32 = arith.constant 0 : i32
    %c0_i32_0 = arith.constant 0 : i32
    %c0_i32_1 = arith.constant 0 : i32
    return %c0_i32, %c0_i32_0 : i32, i32
  }
  func.func @transform_3(%arg0: i32) -> (i32, i32, i32) {
    %c0_i32 = arith.constant 0 : i32
    %c0_i32_0 = arith.constant 0 : i32
    %c0_i32_1 = arith.constant 0 : i32
    %c0_i32_2 = arith.constant 0 : i32
    return %c0_i32, %c0_i32_0, %c0_i32_1 : i32, i32, i32
  }
}

module attributes {stable_mosaic.version = 11 : i64} {
  func.func @_attn_agg_fc_kernel(%arg0: i32, %arg1: memref<4x128x16xf32, #tpu.memory_space<vmem>>, %arg2: memref<4x128x16xbf16, #tpu.memory_space<vmem>>, %arg3: memref<16x128xbf16, #tpu.memory_space<vmem>>, %arg4: memref<16x128xbf16, #tpu.memory_space<vmem>>, %arg5: memref<1x128xf32, #tpu.memory_space<vmem>>, %arg6: memref<128x128xf32, #tpu.memory_space<vmem>>) attributes {dimension_semantics = [#tpu.dimension_semantics<parallel>], iteration_bounds = array<i64: 2>, scalar_prefetch = 0 : i64, scratch_operands = 0 : i64, tpu.core_type = #tpu.core_type<tc>, window_params = [{transform_indices = @transform_0, window_bounds = array<i64: 4, 128, 16>}, {pipeline_mode = #tpu.pipeline_mode<synchronous>, transform_indices = @transform_1, window_bounds = array<i64: 4, 128, 16>}, {pipeline_mode = #tpu.pipeline_mode<synchronous>, transform_indices = @transform_2, window_bounds = array<i64: 16, 128>}, {pipeline_mode = #tpu.pipeline_mode<synchronous>, transform_indices = @transform_3, window_bounds = array<i64: 16, 128>}, {pipeline_mode = #tpu.pipeline_mode<synchronous>, transform_indices = @transform_4, window_bounds = array<i64: 1, 128>}, {transform_indices = @transform_5, window_bounds = array<i64: 128, 128>}]} {
    %c0 = arith.constant 0 : index
    %c0_0 = arith.constant 0 : index
    %c0_1 = arith.constant 0 : index
    %0 = vector.load %arg1[%c0, %c0_0, %c0_1] : memref<4x128x16xf32, #tpu.memory_space<vmem>>, vector<4x128x16xf32>
    %1 = tpu.iota {dimensions = array<i32: 2>} : vector<1x1x16xi32>
    %c0_i32 = arith.constant 0 : i32
    %2 = vector.broadcast %c0_i32 : i32 to vector<1x1x16xi32>
    %3 = arith.cmpi eq, %1, %2 : vector<1x1x16xi32>
    %4 = arith.extui %3 : vector<1x1x16xi1> to vector<1x1x16xi32>
    %5 = arith.sitofp %4 : vector<1x1x16xi32> to vector<1x1x16xf32>
    %cst = arith.constant 2.000000e+00 : f32
    %6 = vector.broadcast %cst : f32 to vector<1x1x16xf32>
    %7 = arith.mulf %6, %5 : vector<1x1x16xf32>
    %cst_2 = arith.constant 1.000000e+00 : f32
    %8 = vector.broadcast %cst_2 : f32 to vector<1x1x16xf32>
    %9 = arith.subf %8, %7 : vector<1x1x16xf32>
    %10 = vector.broadcast %5 : vector<1x1x16xf32> to vector<4x128x16xf32>
    %11 = arith.mulf %0, %10 : vector<4x128x16xf32>
    %cst_3 = arith.constant dense<0.000000e+00> : vector<4x128xf32>
    %12 = vector.multi_reduction <add>, %11, %cst_3 [2] : vector<4x128x16xf32> to vector<4x128xf32>
    %13 = vector.shape_cast %12 : vector<4x128xf32> to vector<4x128x1xf32>
    %14 = vector.shape_cast %0 : vector<4x128x16xf32> to vector<512x16xf32>
    %15 = arith.truncf %14 : vector<512x16xf32> to vector<512x16xbf16>
    %c0_4 = arith.constant 0 : index
    %c0_5 = arith.constant 0 : index
    %16 = vector.load %arg3[%c0_4, %c0_5] : memref<16x128xbf16, #tpu.memory_space<vmem>>, vector<16x128xbf16>
    %cst_6 = arith.constant dense<0.000000e+00> : vector<512x128xf32>
    %17 = tpu.matmul %15, %16, %cst_6 {dimension_numbers = #tpu.dot_dimension_numbers<[1], [0], [0], [1], [0, 0, 1, 1], [], []>} : vector<512x16xbf16>, vector<16x128xbf16>, vector<512x128xf32> -> vector<512x128xf32>
    %cst_7 = arith.constant 1.000000e+00 : f32
    %18 = vector.broadcast %cst_7 : f32 to vector<512x128xf32>
    %19 = arith.mulf %17, %18 : vector<512x128xf32>
    %20 = math.exp %19 : vector<512x128xf32>
    %21 = vector.shape_cast %20 : vector<512x128xf32> to vector<4x128x128xf32>
    %22 = arith.mulf %13, %13 : vector<4x128x1xf32>
    %cst_8 = arith.constant 1.000000e+00 : f32
    %23 = vector.broadcast %cst_8 : f32 to vector<4x128x1xf32>
    %24 = arith.divf %22, %23 : vector<4x128x1xf32>
    %cst_9 = arith.constant 5.000000e-01 : f32
    %25 = vector.broadcast %cst_9 : f32 to vector<4x128x1xf32>
    %26 = arith.subf %25, %24 : vector<4x128x1xf32>
    %cst_10 = arith.constant 5.000000e-01 : f32
    %27 = vector.broadcast %cst_10 : f32 to vector<4x128x1xf32>
    %28 = arith.mulf %26, %27 : vector<4x128x1xf32>
    %29 = math.exp %28 : vector<4x128x1xf32>
    %cst_11 = arith.constant 0.258198887 : f32
    %30 = vector.broadcast %cst_11 : f32 to vector<4x128x1xf32>
    %31 = arith.mulf %29, %30 : vector<4x128x1xf32>
    %32 = tpu.iota {dimensions = array<i32: 2>} : vector<1x1x128xi32>
    %c8_i32 = arith.constant 8 : i32
    %33 = vector.broadcast %c8_i32 : i32 to vector<1x1x128xi32>
    %34 = arith.cmpi slt, %32, %33 : vector<1x1x128xi32>
    %35 = arith.extui %34 : vector<1x1x128xi1> to vector<1x1x128xi32>
    %36 = arith.sitofp %35 : vector<1x1x128xi32> to vector<1x1x128xf32>
    %37 = vector.broadcast %31 : vector<4x128x1xf32> to vector<4x128x128xf32>
    %38 = arith.mulf %21, %37 : vector<4x128x128xf32>
    %39 = vector.broadcast %36 : vector<1x1x128xf32> to vector<4x128x128xf32>
    %40 = arith.mulf %38, %39 : vector<4x128x128xf32>
    %41 = arith.truncf %40 : vector<4x128x128xf32> to vector<4x128x128xbf16>
    %c0_12 = arith.constant 0 : index
    %c0_13 = arith.constant 0 : index
    %c0_14 = arith.constant 0 : index
    %42 = vector.load %arg2[%c0_12, %c0_13, %c0_14] : memref<4x128x16xbf16, #tpu.memory_space<vmem>>, vector<4x128x16xbf16>
    "tpu.trace_start"() <{level = 10 : i32, message = "hnm,hmd->hnd"}> : () -> ()
    %cst_15 = arith.constant dense<0.000000e+00> : vector<4x128x16xf32>
    %43 = tpu.matmul %41, %42, %cst_15 {dimension_numbers = #tpu.dot_dimension_numbers<[2], [1], [1], [2], [0, 0, 0, 1, 1, 2], [0], [0]>} : vector<4x128x128xbf16>, vector<4x128x16xbf16>, vector<4x128x16xf32> -> vector<4x128x16xf32>
    "tpu.trace_stop"() : () -> ()
    %44 = arith.mulf %43, %43 : vector<4x128x16xf32>
    %45 = vector.broadcast %9 : vector<1x1x16xf32> to vector<4x128x16xf32>
    %46 = arith.mulf %44, %45 : vector<4x128x16xf32>
    %cst_16 = arith.constant dense<0.000000e+00> : vector<4x128xf32>
    %47 = vector.multi_reduction <add>, %46, %cst_16 [2] : vector<4x128x16xf32> to vector<4x128xf32>
    %48 = vector.shape_cast %47 : vector<4x128xf32> to vector<4x128x1xf32>
    %49 = math.absf %48 : vector<4x128x1xf32>
    %cst_17 = arith.constant 1.000000e-15 : f32
    %50 = vector.broadcast %cst_17 : f32 to vector<4x128x1xf32>
    %51 = arith.maximumf %49, %50 : vector<4x128x1xf32>
    %52 = math.rsqrt %51 : vector<4x128x1xf32>
    %cst_18 = arith.constant 0.353553385 : f32
    %53 = vector.broadcast %cst_18 : f32 to vector<4x128x1xf32>
    %54 = arith.mulf %53, %52 : vector<4x128x1xf32>
    %55 = vector.broadcast %54 : vector<4x128x1xf32> to vector<4x128x16xf32>
    %56 = arith.mulf %43, %55 : vector<4x128x16xf32>
    %cst_19 = arith.constant dense<0.000000e+00> : vector<128x16xf32>
    %57 = vector.multi_reduction <add>, %56, %cst_19 [0] : vector<4x128x16xf32> to vector<128x16xf32>
    %58 = tpu.iota {dimensions = array<i32: 1>} : vector<1x16xi32>
    %c0_i32_20 = arith.constant 0 : i32
    %59 = vector.broadcast %c0_i32_20 : i32 to vector<1x16xi32>
    %60 = arith.cmpi eq, %58, %59 : vector<1x16xi32>
    %61 = arith.extui %60 : vector<1x16xi1> to vector<1x16xi32>
    %62 = arith.sitofp %61 : vector<1x16xi32> to vector<1x16xf32>
    %cst_21 = arith.constant 2.000000e+00 : f32
    %63 = vector.broadcast %cst_21 : f32 to vector<1x16xf32>
    %64 = arith.mulf %63, %62 : vector<1x16xf32>
    %cst_22 = arith.constant 1.000000e+00 : f32
    %65 = vector.broadcast %cst_22 : f32 to vector<1x16xf32>
    %66 = arith.subf %65, %64 : vector<1x16xf32>
    %cst_23 = arith.constant 1.000000e+00 : f32
    %67 = vector.broadcast %cst_23 : f32 to vector<1x16xf32>
    %68 = arith.subf %67, %62 : vector<1x16xf32>
    %69 = arith.mulf %57, %57 : vector<128x16xf32>
    %70 = vector.broadcast %66 : vector<1x16xf32> to vector<128x16xf32>
    %71 = arith.mulf %69, %70 : vector<128x16xf32>
    %cst_24 = arith.constant dense<0.000000e+00> : vector<128xf32>
    %72 = vector.multi_reduction <add>, %71, %cst_24 [1] : vector<128x16xf32> to vector<128xf32>
    %73 = vector.shape_cast %72 : vector<128xf32> to vector<128x1xf32>
    %74 = math.absf %73 : vector<128x1xf32>
    %cst_25 = arith.constant 1.000000e-15 : f32
    %75 = vector.broadcast %cst_25 : f32 to vector<128x1xf32>
    %76 = arith.maximumf %74, %75 : vector<128x1xf32>
    %77 = math.rsqrt %76 : vector<128x1xf32>
    %cst_26 = arith.constant 1.41421354 : f32
    %78 = vector.broadcast %cst_26 : f32 to vector<128x1xf32>
    %79 = arith.mulf %78, %77 : vector<128x1xf32>
    %80 = vector.broadcast %79 : vector<128x1xf32> to vector<128x16xf32>
    %81 = arith.mulf %57, %80 : vector<128x16xf32>
    %82 = vector.broadcast %68 : vector<1x16xf32> to vector<128x16xf32>
    %83 = arith.mulf %81, %82 : vector<128x16xf32>
    %84 = arith.mulf %83, %83 : vector<128x16xf32>
    %cst_27 = arith.constant dense<0.000000e+00> : vector<128xf32>
    %85 = vector.multi_reduction <add>, %84, %cst_27 [1] : vector<128x16xf32> to vector<128xf32>
    %86 = vector.shape_cast %85 : vector<128xf32> to vector<128x1xf32>
    %cst_28 = arith.constant 1.000000e-30 : f32
    %87 = vector.broadcast %cst_28 : f32 to vector<128x1xf32>
    %88 = arith.maximumf %86, %87 : vector<128x1xf32>
    %89 = math.rsqrt %88 : vector<128x1xf32>
    %90 = vector.broadcast %62 : vector<1x16xf32> to vector<128x16xf32>
    %91 = arith.mulf %81, %90 : vector<128x16xf32>
    %cst_29 = arith.constant dense<0.000000e+00> : vector<128xf32>
    %92 = vector.multi_reduction <add>, %91, %cst_29 [1] : vector<128x16xf32> to vector<128xf32>
    %93 = vector.shape_cast %92 : vector<128xf32> to vector<128x1xf32>
    %cst_30 = arith.constant 0.707106769 : f32
    %94 = vector.broadcast %cst_30 : f32 to vector<128x1xf32>
    %95 = arith.mulf %93, %94 : vector<128x1xf32>
    %cst_31 = arith.constant 1.00000012 : f32
    %96 = vector.broadcast %cst_31 : f32 to vector<128x1xf32>
    %97 = arith.maximumf %95, %96 : vector<128x1xf32>
    %98 = arith.mulf %97, %97 : vector<128x1xf32>
    %cst_32 = arith.constant 1.000000e+00 : f32
    %99 = vector.broadcast %cst_32 : f32 to vector<128x1xf32>
    %100 = arith.subf %98, %99 : vector<128x1xf32>
    %101 = math.sqrt %100 : vector<128x1xf32>
    %102 = arith.addf %97, %101 : vector<128x1xf32>
    %103 = math.log %102 : vector<128x1xf32>
    %cst_33 = arith.constant 1.41421354 : f32
    %104 = vector.broadcast %cst_33 : f32 to vector<128x1xf32>
    %105 = arith.mulf %104, %103 : vector<128x1xf32>
    %106 = arith.mulf %105, %89 : vector<128x1xf32>
    %107 = vector.broadcast %106 : vector<128x1xf32> to vector<128x16xf32>
    %108 = arith.mulf %83, %107 : vector<128x16xf32>
    %109 = arith.truncf %108 : vector<128x16xf32> to vector<128x16xbf16>
    %c0_34 = arith.constant 0 : index
    %c0_35 = arith.constant 0 : index
    %110 = vector.load %arg4[%c0_34, %c0_35] : memref<16x128xbf16, #tpu.memory_space<vmem>>, vector<16x128xbf16>
    %cst_36 = arith.constant dense<0.000000e+00> : vector<128x128xf32>
    %111 = tpu.matmul %109, %110, %cst_36 {dimension_numbers = #tpu.dot_dimension_numbers<[1], [0], [0], [1], [0, 0, 1, 1], [], []>} : vector<128x16xbf16>, vector<16x128xbf16>, vector<128x128xf32> -> vector<128x128xf32>
    %c0_37 = arith.constant 0 : index
    %c0_38 = arith.constant 0 : index
    %112 = vector.load %arg5[%c0_37, %c0_38] : memref<1x128xf32, #tpu.memory_space<vmem>>, vector<1x128xf32>
    %113 = vector.broadcast %112 : vector<1x128xf32> to vector<128x128xf32>
    %114 = arith.addf %111, %113 : vector<128x128xf32>
    %115 = tpu.iota {dimensions = array<i32: 1>} : vector<1x128xi32>
    %c0_i32_39 = arith.constant 0 : i32
    %116 = vector.broadcast %c0_i32_39 : i32 to vector<1x128xi32>
    %117 = arith.cmpi eq, %115, %116 : vector<1x128xi32>
    %118 = arith.extui %117 : vector<1x128xi1> to vector<1x128xi32>
    %119 = arith.sitofp %118 : vector<1x128xi32> to vector<1x128xf32>
    %cst_40 = arith.constant 1.000000e+00 : f32
    %120 = vector.broadcast %cst_40 : f32 to vector<1x128xf32>
    %121 = arith.subf %120, %119 : vector<1x128xf32>
    %122 = vector.broadcast %121 : vector<1x128xf32> to vector<128x128xf32>
    %123 = arith.mulf %114, %122 : vector<128x128xf32>
    %124 = arith.mulf %123, %123 : vector<128x128xf32>
    %cst_41 = arith.constant dense<0.000000e+00> : vector<128xf32>
    %125 = vector.multi_reduction <add>, %124, %cst_41 [1] : vector<128x128xf32> to vector<128xf32>
    %126 = vector.shape_cast %125 : vector<128xf32> to vector<128x1xf32>
    %cst_42 = arith.constant 1.000000e-30 : f32
    %127 = vector.broadcast %cst_42 : f32 to vector<128x1xf32>
    %128 = arith.maximumf %126, %127 : vector<128x1xf32>
    %129 = math.rsqrt %128 : vector<128x1xf32>
    %130 = arith.mulf %126, %129 : vector<128x1xf32>
    %cst_43 = arith.constant 0.707106769 : f32
    %131 = vector.broadcast %cst_43 : f32 to vector<128x1xf32>
    %132 = arith.mulf %130, %131 : vector<128x1xf32>
    %133 = math.exp %132 : vector<128x1xf32>
    %134 = tpu.reciprocal %133 {approx = true} : vector<128x1xf32> -> vector<128x1xf32>
    %135 = arith.subf %133, %134 : vector<128x1xf32>
    %cst_44 = arith.constant 5.000000e-01 : f32
    %136 = vector.broadcast %cst_44 : f32 to vector<128x1xf32>
    %137 = arith.mulf %136, %135 : vector<128x1xf32>
    %138 = arith.addf %133, %134 : vector<128x1xf32>
    %cst_45 = arith.constant 5.000000e-01 : f32
    %139 = vector.broadcast %cst_45 : f32 to vector<128x1xf32>
    %140 = arith.mulf %139, %138 : vector<128x1xf32>
    %cst_46 = arith.constant 1.41421354 : f32
    %141 = vector.broadcast %cst_46 : f32 to vector<128x1xf32>
    %142 = arith.mulf %141, %137 : vector<128x1xf32>
    %143 = arith.mulf %142, %129 : vector<128x1xf32>
    %144 = vector.broadcast %143 : vector<128x1xf32> to vector<128x128xf32>
    %145 = arith.mulf %123, %144 : vector<128x128xf32>
    %cst_47 = arith.constant 1.41421354 : f32
    %146 = vector.broadcast %cst_47 : f32 to vector<128x1xf32>
    %147 = arith.mulf %146, %140 : vector<128x1xf32>
    %148 = vector.broadcast %147 : vector<128x1xf32> to vector<128x128xf32>
    %149 = vector.broadcast %119 : vector<1x128xf32> to vector<128x128xf32>
    %150 = arith.mulf %148, %149 : vector<128x128xf32>
    %151 = arith.addf %145, %150 : vector<128x128xf32>
    %c0_48 = arith.constant 0 : index
    %c0_49 = arith.constant 0 : index
    %152 = vector.load %arg6[%c0_48, %c0_49] : memref<128x128xf32, #tpu.memory_space<vmem>>, vector<128x128xf32>
    tpu.vector_store %arg6[%c0_48, %c0_49], %151 {strides = array<i32>} : memref<128x128xf32, #tpu.memory_space<vmem>>, vector<128x128xf32>,
    return
  }
  func.func @transform_0(%arg0: i32) -> (i32, i32, i32) {
    %c0_i32 = arith.constant 0 : i32
    %c0_i32_0 = arith.constant 0 : i32
    %c0_i32_1 = arith.constant 0 : i32
    return %c0_i32, %arg0, %c0_i32_0 : i32, i32, i32
  }
  func.func @transform_1(%arg0: i32) -> (i32, i32, i32) {
    %c0_i32 = arith.constant 0 : i32
    %c0_i32_0 = arith.constant 0 : i32
    %c0_i32_1 = arith.constant 0 : i32
    %c0_i32_2 = arith.constant 0 : i32
    return %c0_i32, %c0_i32_0, %c0_i32_1 : i32, i32, i32
  }
  func.func @transform_2(%arg0: i32) -> (i32, i32) {
    %c0_i32 = arith.constant 0 : i32
    %c0_i32_0 = arith.constant 0 : i32
    %c0_i32_1 = arith.constant 0 : i32
    return %c0_i32, %c0_i32_0 : i32, i32
  }
  func.func @transform_3(%arg0: i32) -> (i32, i32) {
    %c0_i32 = arith.constant 0 : i32
    %c0_i32_0 = arith.constant 0 : i32
    %c0_i32_1 = arith.constant 0 : i32
    return %c0_i32, %c0_i32_0 : i32, i32
  }
  func.func @transform_4(%arg0: i32) -> (i32, i32) {
    %c0_i32 = arith.constant 0 : i32
    %c0_i32_0 = arith.constant 0 : i32
    %c0_i32_1 = arith.constant 0 : i32
    return %c0_i32, %c0_i32_0 : i32, i32
  }
  func.func @transform_5(%arg0: i32) -> (i32, i32) {
    %c0_i32 = arith.constant 0 : i32
    %c0_i32_0 = arith.constant 0 : i32
    return %arg0, %c0_i32 : i32, i32
  }
}

</mosaic_0001>

<llo_original>
// kernel: light_hyper_former_forward.3
$region0: #{light_hyper_former_forward.3}
  #allocation0 [shape = 'u32[]', space=smem, size = 0x4, offset = 0x4, fixed_abs, tag = 'smem constant byte address 0x4 - core index']
  #allocation1 [shape = 'u32[144,128]{1,0:T(1,128)}', space=vmem, size = 0x12000, scoped, tag = 'internal scratch']
  %s0 = inlined_call_operand.vmem [shape: f32[256,16], index: 0, kind: input, shape index: {}]
  %s1 = inlined_call_operand.vmem [shape: bf16[16,192], index: 1, kind: input, shape index: {}]
  %s2 = inlined_call_operand.vmem [shape: f32[1,192], index: 2, kind: input, shape index: {}]
  %s3 = inlined_call_operand.vmem [shape: f32[1,192], index: 3, kind: input, shape index: {}]
  %s4 = inlined_call_operand.vmem [shape: f32[192,192], index: 4, kind: input, shape index: {}]
  %s5 = inlined_call_operand.vmem [shape: f32[256,192], index: 5, kind: output, shape index: {}]
  %s6 = sld [smem:[#allocation0]]
  $region53: #{light_hyper_former_forward.3} parent=0
    _
  %s8 = ssub.s32 1, %s6
  %s9 = scalar_select 0, %s8, %s6
  loop: start=0, step=1, limit=4
  $region2: #{light_hyper_former_forward.3} parent=0 // loop_pre_header
    _
  $region3: #{light_hyper_former_forward.3} parent=0 // loop_header
    %s11 = sphi 0, %s15
    %p12 = scmp.ge.s32.totalorder %s11, 4
    %s21 = sphi 0, %s23
    %s24 = sphi 0, %s21
    %s25 = sphi 0, %s24
    %s41 = sphi 0, %s25
    %s45 = sphi 0, %s45
    %s47 = sphi 0, %s45
    %s48 = sphi 0, %s47
    %s62 = sphi 0, %s48
    %s66 = sphi 0, %s66
    %s68 = sphi 0, %s66
    %s69 = sphi 0, %s68
    %s83 = sphi 0, %s69
    %s87 = sphi 0, %s87
    %s89 = sphi 0, %s87
    %s90 = sphi 0, %s89
    %s104 = sphi 0, %s90
    %s108 = sphi 0, %s108
    %s110 = sphi 0, %s108
    %s111 = sphi 0, %s110
    %s125 = sphi 0, %s111
    %s131 = sphi 0, %s133
    %s134 = sphi 0, %s131
    %s135 = sphi 0, %s134
    %s151 = sphi 0, %s135
  $region4: #{light_hyper_former_forward.3} parent=0 // loop_header_branch
    %14 = sbr.rel (%p12) target = $region8
  $region5: #{light_hyper_former_forward.3} parent=0 // loop_body
    %s16 = ssub.s32 %s11, 1
    %s17 = ssub.s32 %s11, 2
    %s18 = sadd.s32 %s11, 1
    %s19 = ssub.s32 %s11, %s18
    %p20 = scmp.eq.s32.totalorder %s19, 0
    %s22 = sadd.s32 %s21, 1
    %s23 = scalar_select %p20, %s21, %s22
    %p26 = pneg %p20
    %p27 = scmp.eq.s32.totalorder %s11, 1
    %p28 = por %p26, %p27
    %p29 = scmp.ne.s32.totalorder %s21, %s24
    %p30 = scmp.eq.s32.totalorder %s11, 0
    %p31 = por %p29, %p30
    %p32 = scmp.ne.s32.totalorder %s21, %s24
    %p33 = scmp.eq.s32.totalorder %s16, 1
    %p34 = por %p32, %p33
    %p35 = scmp.ne.s32.totalorder %s24, %s25
    %p36 = scmp.eq.s32.totalorder %s16, 0
    %p37 = por %p35, %p36
    %p38 = scmp.ne.s32.totalorder %s24, %s25
    %p39 = scmp.eq.s32.totalorder %s17, 1
    %p40 = por %p38, %p39
    %p42 = scmp.ne.s32.totalorder %s25, %s41
    %p43 = scmp.eq.s32.totalorder %s17, 0
    %p44 = por %p42, %p43
    %s46 = sadd.s32 %s45, 1
    %p49 = scmp.eq.s32.totalorder %s11, 1
    %p50 = scmp.ne.s32.totalorder %s45, %s47
    %p51 = scmp.eq.s32.totalorder %s11, 0
    %p52 = por %p50, %p51
    %p53 = scmp.ne.s32.totalorder %s45, %s47
    %p54 = scmp.eq.s32.totalorder %s16, 1
    %p55 = por %p53, %p54
    %p56 = scmp.ne.s32.totalorder %s47, %s48
    %p57 = scmp.eq.s32.totalorder %s16, 0
    %p58 = por %p56, %p57
    %p59 = scmp.ne.s32.totalorder %s47, %s48
    %p60 = scmp.eq.s32.totalorder %s17, 1
    %p61 = por %p59, %p60
    %p63 = scmp.ne.s32.totalorder %s48, %s62
    %p64 = scmp.eq.s32.totalorder %s17, 0
    %p65 = por %p63, %p64
    %s67 = sadd.s32 %s66, 1
    %p70 = scmp.eq.s32.totalorder %s11, 1
    %p71 = scmp.ne.s32.totalorder %s66, %s68
    %p72 = scmp.eq.s32.totalorder %s11, 0
    %p73 = por %p71, %p72
    %p74 = scmp.ne.s32.totalorder %s66, %s68
    %p75 = scmp.eq.s32.totalorder %s16, 1
    %p76 = por %p74, %p75
    %p77 = scmp.ne.s32.totalorder %s68, %s69
    %p78 = scmp.eq.s32.totalorder %s16, 0
    %p79 = por %p77, %p78
    %p80 = scmp.ne.s32.totalorder %s68, %s69
    %p81 = scmp.eq.s32.totalorder %s17, 1
    %p82 = por %p80, %p81
    %p84 = scmp.ne.s32.totalorder %s69, %s83
    %p85 = scmp.eq.s32.totalorder %s17, 0
    %p86 = por %p84, %p85
    %s88 = sadd.s32 %s87, 1
    %p91 = scmp.eq.s32.totalorder %s11, 1
    %p92 = scmp.ne.s32.totalorder %s87, %s89
    %p93 = scmp.eq.s32.totalorder %s11, 0
    %p94 = por %p92, %p93
    %p95 = scmp.ne.s32.totalorder %s87, %s89
    %p96 = scmp.eq.s32.totalorder %s16, 1
    %p97 = por %p95, %p96
    %p98 = scmp.ne.s32.totalorder %s89, %s90
    %p99 = scmp.eq.s32.totalorder %s16, 0
    %p100 = por %p98, %p99
    %p101 = scmp.ne.s32.totalorder %s89, %s90
    %p102 = scmp.eq.s32.totalorder %s17, 1
    %p103 = por %p101, %p102
    %p105 = scmp.ne.s32.totalorder %s90, %s104
    %p106 = scmp.eq.s32.totalorder %s17, 0
    %p107 = por %p105, %p106
    %s109 = sadd.s32 %s108, 1
    %p112 = scmp.eq.s32.totalorder %s11, 1
    %p113 = scmp.ne.s32.totalorder %s108, %s110
    %p114 = scmp.eq.s32.totalorder %s11, 0
    %p115 = por %p113, %p114
    %p116 = scmp.ne.s32.totalorder %s108, %s110
    %p117 = scmp.eq.s32.totalorder %s16, 1
    %p118 = por %p116, %p117
    %p119 = scmp.ne.s32.totalorder %s110, %s111
    %p120 = scmp.eq.s32.totalorder %s16, 0
    %p121 = por %p119, %p120
    %p122 = scmp.ne.s32.totalorder %s110, %s111
    %p123 = scmp.eq.s32.totalorder %s17, 1
    %p124 = por %p122, %p123
    %p126 = scmp.ne.s32.totalorder %s111, %s125
    %p127 = scmp.eq.s32.totalorder %s17, 0
    %p128 = por %p126, %p127
    %s129 = ssub.s32 %s11, %s18
    %p130 = scmp.eq.s32.totalorder %s129, 0
    %s132 = sadd.s32 %s131, 1
    %s133 = scalar_select %p130, %s131, %s132
    %p136 = pneg %p130
    %p137 = scmp.eq.s32.totalorder %s11, 1
    %p138 = por %p136, %p137
    %p139 = scmp.ne.s32.totalorder %s131, %s134
    %p140 = scmp.eq.s32.totalorder %s11, 0
    %p141 = por %p139, %p140
    %p142 = scmp.ne.s32.totalorder %s131, %s134
    %p143 = scmp.eq.s32.totalorder %s16, 1
    %p144 = por %p142, %p143
    %p145 = scmp.ne.s32.totalorder %s134, %s135
    %p146 = scmp.eq.s32.totalorder %s16, 0
    %p147 = por %p145, %p146
    %p148 = scmp.ne.s32.totalorder %s134, %s135
    %p149 = scmp.eq.s32.totalorder %s17, 1
    %p150 = por %p148, %p149
    %p152 = scmp.ne.s32.totalorder %s135, %s151
    %p153 = scmp.eq.s32.totalorder %s17, 0
    %p154 = por %p152, %p153
    %p155 = scmp.le.s32.totalorder 1, %s11
    %p156 = scmp.lt.s32.totalorder %s11, 3
    %p157 = pnand %p155, %p156
    %p158 = pneg %p157
    // Predicated region
    $region9: #{light_hyper_former_forward.3} parent=5 // pred_check
      _
    $region10: #{light_hyper_former_forward.3} parent=5 // pred_check_branch
      %160 = sbr.rel (%p157) target = $region12
    $region11: #{light_hyper_former_forward.3} parent=5 // pred_region
      %s161 = ssub.s32 %s11, 1
      // Predicated region
      $region13: #{light_hyper_former_forward.3} parent=11 // pred_check
        %p162 = pneg %p58
      $region14: #{light_hyper_former_forward.3} parent=11 // pred_check_branch
        %164 = sbr.rel (%p162) target = $region16
      $region15: #{light_hyper_former_forward.3} parent=11 // pred_region
        _
      $region16: #{light_hyper_former_forward.3} parent=11 // pred_fallthru
        _
      // Predicated region
      $region17: #{light_hyper_former_forward.3} parent=11 // pred_check
        %p165 = pneg %p79
      $region18: #{light_hyper_former_forward.3} parent=11 // pred_check_branch
        %167 = sbr.rel (%p165) target = $region20
      $region19: #{light_hyper_former_forward.3} parent=11 // pred_region
        _
      $region20: #{light_hyper_former_forward.3} parent=11 // pred_fallthru
        _
      // Predicated region
      $region21: #{light_hyper_former_forward.3} parent=11 // pred_check
        %p168 = pneg %p100
      $region22: #{light_hyper_former_forward.3} parent=11 // pred_check_branch
        %170 = sbr.rel (%p168) target = $region24
      $region23: #{light_hyper_former_forward.3} parent=11 // pred_region
        _
      $region24: #{light_hyper_former_forward.3} parent=11 // pred_fallthru
        _
      // Predicated region
      $region25: #{light_hyper_former_forward.3} parent=11 // pred_check
        %p171 = pneg %p121
      $region26: #{light_hyper_former_forward.3} parent=11 // pred_check_branch
        %173 = sbr.rel (%p171) target = $region28
      $region27: #{light_hyper_former_forward.3} parent=11 // pred_region
        _
      $region28: #{light_hyper_former_forward.3} parent=11 // pred_fallthru
        _
    $region12: #{light_hyper_former_forward.3} parent=5 // pred_fallthru
      _
    %p174 = scmp.lt.s32.totalorder %s11, 2
    // Predicated region
    $region29: #{light_hyper_former_forward.3} parent=5 // pred_check
      %p175 = pneg %p174
    $region30: #{light_hyper_former_forward.3} parent=5 // pred_check_branch
      %177 = sbr.rel (%p175) target = $region32
    $region31: #{light_hyper_former_forward.3} parent=5 // pred_region
      // Predicated region
      $region33: #{light_hyper_former_forward.3} parent=31 // pred_check
        %p178 = pneg %p31
      $region34: #{light_hyper_former_forward.3} parent=31 // pred_check_branch
        %180 = sbr.rel (%p178) target = $region36
      $region35: #{light_hyper_former_forward.3} parent=31 // pred_region
        %s181 = smul.u32 16, %s11
        %p182 = scmp.lt.s32.totalorder %s181, 31
        %s183 = scalar_select %p182, %s181, 31
        %s184 = smul.addr %s183, 8
        %s185 = scalar_lea.vmem %s0, %s184
        %s186 = smul.u32 16, %s11
      $region36: #{light_hyper_former_forward.3} parent=31 // pred_fallthru
        _
    $region32: #{light_hyper_former_forward.3} parent=5 // pred_fallthru
      _
    %p187 = scmp.le.s32.totalorder 1, %s11
    %p188 = scmp.lt.s32.totalorder %s11, 3
    %p189 = pnand %p187, %p188
    %p190 = pneg %p189
    // Predicated region
    $region37: #{light_hyper_former_forward.3} parent=5 // pred_check
      _
    $region38: #{light_hyper_former_forward.3} parent=5 // pred_check_branch
      %192 = sbr.rel (%p189) target = $region40
    $region39: #{light_hyper_former_forward.3} parent=5 // pred_region
      %s193 = ssub.s32 %s11, 1
      %s194 = smul.u32 16, %s16
      %p195 = scmp.lt.s32.totalorder %s194, 31
      %s196 = scalar_select %p195, %s194, 31
      %s197 = smul.addr %s196, 8
      %s198 = scalar_lea.vmem %s0, %s197
      %p199 = pneg %p37
      %p200 = pneg %p34
      %p201 = pneg %p58
      %p202 = pneg %p55
      %p203 = pneg %p79
      %p204 = pneg %p76
      %p205 = pneg %p100
      %p206 = pneg %p97
      %p207 = pneg %p121
      %p208 = pneg %p118
      %p209 = pneg %p147
      %p210 = pneg %p144
      %s211 = smul.u32 16, %s16
      %p212 = scmp.lt.s32.totalorder %s211, 31
      %s213 = scalar_select %p212, %s211, 31
      %s214 = smul.addr %s213, 2
      %s215 = smul.addr %s214, 8
      %s216 = scalar_lea.vmem %s5, %s215
      %s217 = smul.u32 16, %s16
      %p218 = scmp.lt.s32.totalorder %s217, 31
      %s219 = scalar_select %p218, %s217, 31
      %s220 = smul.addr %s219, 8
      %s221 = scalar_lea.vmem %s0, %s220
      %s222 = smul.u32 16, %s16
      %s223 = smul.u32 16, %s16
      %p224 = scmp.lt.s32.totalorder %s223, 31
      %s225 = scalar_select %p224, %s223, 31
      %s226 = smul.addr %s225, 2
      %s227 = smul.addr %s226, 8
      %s228 = scalar_lea.vmem %s5, %s227
      %s229 = smul.u32 16, %s16
      %v231 = vld [vmem:[%s221] sm:$0xff]
      %v232 = vld [vmem:[%s221 + $0x8] sm:$0xff]
      %v233 = vld [vmem:[%s221 + $0x10] sm:$0xff]
      %v234 = vld [vmem:[%s221 + $0x18] sm:$0xff]
      %v235 = vld [vmem:[%s221 + $0x20] sm:$0xff]
      %v236 = vld [vmem:[%s221 + $0x28] sm:$0xff]
      %v237 = vld [vmem:[%s221 + $0x30] sm:$0xff]
      %v238 = vld [vmem:[%s221 + $0x38] sm:$0xff]
      %v239 = vld [vmem:[%s221 + $0x40] sm:$0xff]
      %v240 = vld [vmem:[%s221 + $0x48] sm:$0xff]
      %v241 = vld [vmem:[%s221 + $0x50] sm:$0xff]
      %v242 = vld [vmem:[%s221 + $0x58] sm:$0xff]
      %v243 = vld [vmem:[%s221 + $0x60] sm:$0xff]
      %v244 = vld [vmem:[%s221 + $0x68] sm:$0xff]
      %v245 = vld [vmem:[%s221 + $0x70] sm:$0xff]
      %v246 = vld [vmem:[%s221 + $0x78] sm:$0xff]
      %v247 = vld [vmem:[%s3] sm:$0x3]
      %v248 = vpack.c.bf16 %v232, %v231
      %v249 = vpack.c.bf16 %v234, %v233
      %v250 = vpack.c.bf16 %v236, %v235
      %v251 = vpack.c.bf16 %v238, %v237
      %v252 = vpack.c.bf16 %v240, %v239
      %v253 = vpack.c.bf16 %v242, %v241
      %v254 = vpack.c.bf16 %v244, %v243
      %v255 = vpack.c.bf16 %v246, %v245
      %v256 = vld [vmem:[%s1] sm:$0xff]
      %v257 = vld [vmem:[%s1 + $0x8] sm:$0xff]
      %v258 = vld [vmem:[%s2] sm:$0x3]
      %v260 = vlaneseq
      %v261 = vshrl.u32 %v260, 7
      %v262 = vsub.s32 0, %v261
      %v263 = vrot.slane %v258, %v262
      %v264 = vlaneseq
      %v265 = vshrl.u32 %v264, 7
      %v266 = vsub.s32 1, %v265
      %v267 = vrot.slane %v258, %v266
      %v272 = vunpack.c.l.b16 %v256
      %v273 = vunpack.c.h.b16 %v256
      %v274 = vunpack.c.l.b16 %v257
      %v275 = vunpack.c.h.b16 %v257
      %v276 = vpack.c.b16 %v274, %v272
      %v277 = vpack.c.b16 %v275, %v273
      %vm280 = vcmask 130048
      %v282 = vsel %vm280, %v248, 0
      %v285 = vsel %vm280, %v249, 0
      %v288 = vsel %vm280, %v250, 0
      %v291 = vsel %vm280, %v251, 0
      %v294 = vsel %vm280, %v252, 0
      %v297 = vsel %vm280, %v253, 0
      %v300 = vsel %vm280, %v254, 0
      %v303 = vsel %vm280, %v255, 0
      %305 = vmatprep.subr.bf16.mxu0 %v277
      %306 = vmatpush1.bf16.msra.mxu0 %v276
      %307 = vmatprep.subr.bf16.mxu0 0
      %308 = vmatpush1.bf16.msra.mxu0 0
      %309 = vmatprep.subr.bf16.mxu0 0
      %310 = vmatpush1.bf16.msra.mxu0 0
      %311 = vmatprep.subr.bf16.mxu0 0
      %312 = vmatpush1.bf16.msra.mxu0 0
      %313 = vmatprep.subr.bf16.mxu0 0
      %314 = vmatpush1.bf16.msra.mxu0 0
      %315 = vmatprep.subr.bf16.mxu0 0
      %316 = vmatpush1.bf16.msra.mxu0 0
      %317 = vmatprep.subr.bf16.mxu0 0
      %318 = vmatpush1.bf16.msra.mxu0 0
      %319 = vmatprep.subr.bf16.mxu0 0
      %320 = vmatpush1.bf16.msra.mxu0 0
      %321 = vmatprep.subr.bf16.mxu0 0
      %322 = vmatpush1.bf16.msra.mxu0 0
      %323 = vmatprep.subr.bf16.mxu0 0
      %324 = vmatpush1.bf16.msra.mxu0 0
      %325 = vmatprep.subr.bf16.mxu0 0
      %326 = vmatpush1.bf16.msra.mxu0 0
      %327 = vmatprep.subr.bf16.mxu0 0
      %328 = vmatpush1.bf16.msra.mxu0 0
      %329 = vmatprep.subr.bf16.mxu0 0
      %330 = vmatpush1.bf16.msra.mxu0 0
      %331 = vmatprep.subr.bf16.mxu0 0
      %332 = vmatpush1.bf16.msra.mxu0 0
      %333 = vmatprep.subr.bf16.mxu0 0
      %334 = vmatpush1.bf16.msra.mxu0 0
      %335 = vmatprep.subr.bf16.mxu0 0
      %336 = vmatpush1.bf16.msra.mxu0 0
      %337 = vmatprep.mubr.bf16.mxu0 0
      %338 = vmatmul.mubr.bf16.gmra.mrb[0].mxu0 %v282
      %v339 = vpop.f32.mrb[0].mxu0
      %v340 = vadd.f32 %v263, %v339
      %v341 = vpop.f32.mrb[0].mxu0
      %v342 = vadd.f32 %v267, %v341
      %v343 = vpop.f32.mrb[0].mxu0
      %v344 = vadd.f32 %v263, %v343
      %v345 = vpop.f32.mrb[0].mxu0
      %v346 = vadd.f32 %v267, %v345
      %347 = vmatprep.mubr.bf16.mxu0 0
      %348 = vmatmul.mubr.bf16.gmra.mrb[0].mxu0 %v285
      %v349 = vpop.f32.mrb[0].mxu0
      %v350 = vadd.f32 %v263, %v349
      %v351 = vpop.f32.mrb[0].mxu0
      %v352 = vadd.f32 %v267, %v351
      %v353 = vpop.f32.mrb[0].mxu0
      %v354 = vadd.f32 %v263, %v353
      %v355 = vpop.f32.mrb[0].mxu0
      %v356 = vadd.f32 %v267, %v355
      %357 = vmatprep.mubr.bf16.mxu0 0
      %358 = vmatmul.mubr.bf16.gmra.mrb[0].mxu0 %v288
      %v359 = vpop.f32.mrb[0].mxu0
      %v360 = vadd.f32 %v263, %v359
      %v361 = vpop.f32.mrb[0].mxu0
      %v362 = vadd.f32 %v267, %v361
      %v363 = vpop.f32.mrb[0].mxu0
      %v364 = vadd.f32 %v263, %v363
      %v365 = vpop.f32.mrb[0].mxu0
      %v366 = vadd.f32 %v267, %v365
      %367 = vmatprep.mubr.bf16.mxu0 0
      %368 = vmatmul.mubr.bf16.gmra.mrb[0].mxu0 %v291
      %v369 = vpop.f32.mrb[0].mxu0
      %v370 = vadd.f32 %v263, %v369
      %v371 = vpop.f32.mrb[0].mxu0
      %v372 = vadd.f32 %v267, %v371
      %v373 = vpop.f32.mrb[0].mxu0
      %v374 = vadd.f32 %v263, %v373
      %v375 = vpop.f32.mrb[0].mxu0
      %v376 = vadd.f32 %v267, %v375
      %377 = vmatprep.mubr.bf16.mxu0 0
      %378 = vmatmul.mubr.bf16.gmra.mrb[0].mxu0 %v294
      %v379 = vpop.f32.mrb[0].mxu0
      %v380 = vadd.f32 %v263, %v379
      %v381 = vpop.f32.mrb[0].mxu0
      %v382 = vadd.f32 %v267, %v381
      %v383 = vpop.f32.mrb[0].mxu0
      %v384 = vadd.f32 %v263, %v383
      %v385 = vpop.f32.mrb[0].mxu0
      %v386 = vadd.f32 %v267, %v385
      %387 = vmatprep.mubr.bf16.mxu0 0
      %388 = vmatmul.mubr.bf16.gmra.mrb[0].mxu0 %v297
      %v389 = vpop.f32.mrb[0].mxu0
      %v390 = vadd.f32 %v263, %v389
      %v391 = vpop.f32.mrb[0].mxu0
      %v392 = vadd.f32 %v267, %v391
      %v393 = vpop.f32.mrb[0].mxu0
      %v394 = vadd.f32 %v263, %v393
      %v395 = vpop.f32.mrb[0].mxu0
      %v396 = vadd.f32 %v267, %v395
      %397 = vmatprep.mubr.bf16.mxu0 0
      %398 = vmatmul.mubr.bf16.gmra.mrb[0].mxu0 %v300
      %v399 = vpop.f32.mrb[0].mxu0
      %v400 = vadd.f32 %v263, %v399
      %v401 = vpop.f32.mrb[0].mxu0
      %v402 = vadd.f32 %v267, %v401
      %v403 = vpop.f32.mrb[0].mxu0
      %v404 = vadd.f32 %v263, %v403
      %v405 = vpop.f32.mrb[0].mxu0
      %v406 = vadd.f32 %v267, %v405
      %407 = vmatprep.mubr.bf16.mxu0 0
      %408 = vmatmul.mubr.bf16.gmra.mrb[0].mxu0 %v303
      %v409 = vpop.f32.mrb[0].mxu0
      %v410 = vadd.f32 %v263, %v409
      %v411 = vpop.f32.mrb[0].mxu0
      %v412 = vadd.f32 %v267, %v411
      %v413 = vpop.f32.mrb[0].mxu0
      %v414 = vadd.f32 %v263, %v413
      %v415 = vpop.f32.mrb[0].mxu0
      %v416 = vadd.f32 %v267, %v415
      %417 = vdwg.mxu0
      %v419 = vlaneseq
      %v420 = vshrl.u32 %v419, 7
      %v421 = vsub.s32 0, %v420
      %v422 = vrot.slane %v247, %v421
      %v423 = vlaneseq
      %v424 = vshrl.u32 %v423, 7
      %v425 = vsub.s32 1, %v424
      %v426 = vrot.slane %v247, %v425
      %v429 = vmul.f32 %v340, %v422
      %v430 = vmul.f32 %v342, %v426
      %v431 = vmul.f32 %v344, %v422
      %v432 = vmul.f32 %v346, %v426
      %v433 = vmul.f32 %v350, %v422
      %v434 = vmul.f32 %v352, %v426
      %v435 = vmul.f32 %v354, %v422
      %v436 = vmul.f32 %v356, %v426
      %v437 = vmul.f32 %v360, %v422
      %v438 = vmul.f32 %v362, %v426
      %v439 = vmul.f32 %v364, %v422
      %v440 = vmul.f32 %v366, %v426
      %v441 = vmul.f32 %v370, %v422
      %v442 = vmul.f32 %v372, %v426
      %v443 = vmul.f32 %v374, %v422
      %v444 = vmul.f32 %v376, %v426
      %v445 = vmul.f32 %v380, %v422
      %v446 = vmul.f32 %v382, %v426
      %v447 = vmul.f32 %v384, %v422
      %v448 = vmul.f32 %v386, %v426
      %v449 = vmul.f32 %v390, %v422
      %v450 = vmul.f32 %v392, %v426
      %v451 = vmul.f32 %v394, %v422
      %v452 = vmul.f32 %v396, %v426
      %v453 = vmul.f32 %v400, %v422
      %v454 = vmul.f32 %v402, %v426
      %v455 = vmul.f32 %v404, %v422
      %v456 = vmul.f32 %v406, %v426
      %v457 = vmul.f32 %v410, %v422
      %v458 = vmul.f32 %v412, %v426
      %v459 = vmul.f32 %v414, %v422
      %v460 = vmul.f32 %v416, %v426
      %v461 = vmul.f32 %v429, %v429
      %v462 = vmul.f32 %v430, %v430
      %v463 = vmul.f32 %v431, %v431
      %v464 = vmul.f32 %v432, %v432
      %v465 = vmul.f32 %v433, %v433
      %v466 = vmul.f32 %v434, %v434
      %v467 = vmul.f32 %v435, %v435
      %v468 = vmul.f32 %v436, %v436
      %v469 = vmul.f32 %v437, %v437
      %v470 = vmul.f32 %v438, %v438
      %v471 = vmul.f32 %v439, %v439
      %v472 = vmul.f32 %v440, %v440
      %v473 = vmul.f32 %v441, %v441
      %v474 = vmul.f32 %v442, %v442
      %v475 = vmul.f32 %v443, %v443
      %v476 = vmul.f32 %v444, %v444
      %v477 = vmul.f32 %v445, %v445
      %v478 = vmul.f32 %v446, %v446
      %v479 = vmul.f32 %v447, %v447
      %v480 = vmul.f32 %v448, %v448
      %v481 = vmul.f32 %v449, %v449
      %v482 = vmul.f32 %v450, %v450
      %v483 = vmul.f32 %v451, %v451
      %v484 = vmul.f32 %v452, %v452
      %v485 = vmul.f32 %v453, %v453
      %v486 = vmul.f32 %v454, %v454
      %v487 = vmul.f32 %v455, %v455
      %v488 = vmul.f32 %v456, %v456
      %v489 = vmul.f32 %v457, %v457
      %v490 = vmul.f32 %v458, %v458
      %v491 = vmul.f32 %v459, %v459
      %v492 = vmul.f32 %v460, %v460
      %v493 = vld [vmem:[%s4] sm:$0xff]
      %v494 = vld [vmem:[%s4 + $0x8] sm:$0xff]
      %v495 = vld [vmem:[%s4 + $0x10] sm:$0xff]
      %v496 = vld [vmem:[%s4 + $0x18] sm:$0xff]
      %v497 = vld [vmem:[%s4 + $0x20] sm:$0xff]
      %v498 = vld [vmem:[%s4 + $0x28] sm:$0xff]
      %v499 = vld [vmem:[%s4 + $0x30] sm:$0xff]
      %v500 = vld [vmem:[%s4 + $0x38] sm:$0xff]
      %v501 = vld [vmem:[%s4 + $0x40] sm:$0xff]
      %v502 = vld [vmem:[%s4 + $0x48] sm:$0xff]
      %v503 = vld [vmem:[%s4 + $0x50] sm:$0xff]
      %v504 = vld [vmem:[%s4 + $0x58] sm:$0xff]
      %v505 = vld [vmem:[%s4 + $0x60] sm:$0xff]
      %v506 = vld [vmem:[%s4 + $0x68] sm:$0xff]
      %v507 = vld [vmem:[%s4 + $0x70] sm:$0xff]
      %v508 = vld [vmem:[%s4 + $0x78] sm:$0xff]
      %v509 = vld [vmem:[%s4 + $0x80] sm:$0xff]
      %v510 = vld [vmem:[%s4 + $0x88] sm:$0xff]
      %v511 = vld [vmem:[%s4 + $0x90] sm:$0xff]
      %v512 = vld [vmem:[%s4 + $0x98] sm:$0xff]
      %v513 = vld [vmem:[%s4 + $0xa0] sm:$0xff]
      %v514 = vld [vmem:[%s4 + $0xa8] sm:$0xff]
      %v515 = vld [vmem:[%s4 + $0xb0] sm:$0xff]
      %v516 = vld [vmem:[%s4 + $0xb8] sm:$0xff]
      %v517 = vld [vmem:[%s4 + $0xc0] sm:$0xff]
      %v518 = vld [vmem:[%s4 + $0xc8] sm:$0xff]
      %v519 = vld [vmem:[%s4 + $0xd0] sm:$0xff]
      %v520 = vld [vmem:[%s4 + $0xd8] sm:$0xff]
      %v521 = vld [vmem:[%s4 + $0xe0] sm:$0xff]
      %v522 = vld [vmem:[%s4 + $0xe8] sm:$0xff]
      %v523 = vld [vmem:[%s4 + $0xf0] sm:$0xff]
      %v524 = vld [vmem:[%s4 + $0xf8] sm:$0xff]
      %v525 = vld [vmem:[%s4 + $0x100] sm:$0xff]
      %v526 = vld [vmem:[%s4 + $0x108] sm:$0xff]
      %v527 = vld [vmem:[%s4 + $0x110] sm:$0xff]
      %v528 = vld [vmem:[%s4 + $0x118] sm:$0xff]
      %v529 = vld [vmem:[%s4 + $0x120] sm:$0xff]
      %v530 = vld [vmem:[%s4 + $0x128] sm:$0xff]
      %v531 = vld [vmem:[%s4 + $0x130] sm:$0xff]
      %v532 = vld [vmem:[%s4 + $0x138] sm:$0xff]
      %v533 = vld [vmem:[%s4 + $0x140] sm:$0xff]
      %v534 = vld [vmem:[%s4 + $0x148] sm:$0xff]
      %v535 = vld [vmem:[%s4 + $0x150] sm:$0xff]
      %v536 = vld [vmem:[%s4 + $0x158] sm:$0xff]
      %v537 = vld [vmem:[%s4 + $0x160] sm:$0xff]
      %v538 = vld [vmem:[%s4 + $0x168] sm:$0xff]
      %v539 = vld [vmem:[%s4 + $0x170] sm:$0xff]
      %v540 = vld [vmem:[%s4 + $0x178] sm:$0xff]
      %vm541 = vcmask 523264
      %v543 = vsel %vm541, %v462, 0
      %v546 = vsel %vm541, %v464, 0
      %v549 = vsel %vm541, %v466, 0
      %v552 = vsel %vm541, %v468, 0
      %v555 = vsel %vm541, %v470, 0
      %v558 = vsel %vm541, %v472, 0
      %v561 = vsel %vm541, %v474, 0
      %v564 = vsel %vm541, %v476, 0
      %v567 = vsel %vm541, %v478, 0
      %v570 = vsel %vm541, %v480, 0
      %v573 = vsel %vm541, %v482, 0
      %v576 = vsel %vm541, %v484, 0
      %v579 = vsel %vm541, %v486, 0
      %v582 = vsel %vm541, %v488, 0
      %v585 = vsel %vm541, %v490, 0
      %v588 = vsel %vm541, %v492, 0
      %590 = vmatprep.subr.mxu0 %v494
      %591 = vmatpush1.msra.mxu0 %v493
      %592 = vmatprep.subr.mxu0 %v496
      %593 = vmatpush1.msra.mxu0 %v495
      %594 = vmatprep.subr.mxu0 %v498
      %595 = vmatpush1.msra.mxu0 %v497
      %596 = vmatprep.subr.mxu0 %v500
      %597 = vmatpush1.msra.mxu0 %v499
      %598 = vmatprep.subr.mxu0 %v502
      %599 = vmatpush1.msra.mxu0 %v501
      %600 = vmatprep.subr.mxu0 %v504
      %601 = vmatpush1.msra.mxu0 %v503
      %602 = vmatprep.subr.mxu0 %v506
      %603 = vmatpush1.msra.mxu0 %v505
      %604 = vmatprep.subr.mxu0 %v508
      %605 = vmatpush1.msra.mxu0 %v507
      %606 = vmatprep.subr.mxu0 %v510
      %607 = vmatpush1.msra.mxu0 %v509
      %608 = vmatprep.subr.mxu0 %v512
      %609 = vmatpush1.msra.mxu0 %v511
      %610 = vmatprep.subr.mxu0 %v514
      %611 = vmatpush1.msra.mxu0 %v513
      %612 = vmatprep.subr.mxu0 %v516
      %613 = vmatpush1.msra.mxu0 %v515
      %614 = vmatprep.subr.mxu0 %v518
      %615 = vmatpush1.msra.mxu0 %v517
      %616 = vmatprep.subr.mxu0 %v520
      %617 = vmatpush1.msra.mxu0 %v519
      %618 = vmatprep.subr.mxu0 %v522
      %619 = vmatpush1.msra.mxu0 %v521
      %620 = vmatprep.subr.mxu0 %v524
      %621 = vmatpush1.msra.mxu0 %v523
      %622 = vmatprep.subr.mxu0 %v526
      %623 = vmatpush1.msra.mxu0 %v525
      %624 = vmatprep.subr.mxu0 %v528
      %625 = vmatpush1.msra.mxu0 %v527
      %626 = vmatprep.subr.mxu0 %v530
      %627 = vmatpush1.msra.mxu0 %v529
      %628 = vmatprep.subr.mxu0 %v532
      %629 = vmatpush1.msra.mxu0 %v531
      %630 = vmatprep.subr.mxu0 %v534
      %631 = vmatpush1.msra.mxu0 %v533
      %632 = vmatprep.subr.mxu0 %v536
      %633 = vmatpush1.msra.mxu0 %v535
      %634 = vmatprep.subr.mxu0 %v538
      %635 = vmatpush1.msra.mxu0 %v537
      %636 = vmatprep.subr.mxu0 %v540
      %637 = vmatpush1.msra.mxu0 %v539
      %638 = vmatprep.subr.mxu0 0.0
      %639 = vmatpush1.msra.mxu0 0.0
      %640 = vmatprep.subr.mxu0 0.0
      %641 = vmatpush1.msra.mxu0 0.0
      %642 = vmatprep.subr.mxu0 0.0
      %643 = vmatpush1.msra.mxu0 0.0
      %644 = vmatprep.subr.mxu0 0.0
      %645 = vmatpush1.msra.mxu0 0.0
      %646 = vmatprep.subr.mxu0 0.0
      %647 = vmatpush1.msra.mxu0 0.0
      %648 = vmatprep.subr.mxu0 0.0
      %649 = vmatpush1.msra.mxu0 0.0
      %650 = vmatprep.subr.mxu0 0.0
      %651 = vmatpush1.msra.mxu0 0.0
      %652 = vmatprep.subr.mxu0 0.0
      %653 = vmatpush1.msra.mxu0 0.0
      %654 = vmatprep.mubr.f32.mxu0 %v543
      %655 = vmatmul.mubr.f32.gmra.mrb[0].mxu0 %v461
      %v656 = vpop.f32.mrb[0].mxu0
      %v657 = vadd.f32 0.0, %v656
      %v658 = vpop.f32.mrb[0].mxu0
      %v659 = vadd.f32 0.0, %v658
      %660 = vmatprep.mubr.f32.mxu0 %v546
      %661 = vmatmul.mubr.f32.gmra.mrb[0].mxu0 %v463
      %v662 = vpop.f32.mrb[0].mxu0
      %v663 = vadd.f32 0.0, %v662
      %v664 = vpop.f32.mrb[0].mxu0
      %v665 = vadd.f32 0.0, %v664
      %666 = vmatprep.mubr.f32.mxu0 %v549
      %667 = vmatmul.mubr.f32.gmra.mrb[0].mxu0 %v465
      %v668 = vpop.f32.mrb[0].mxu0
      %v669 = vadd.f32 0.0, %v668
      %v670 = vpop.f32.mrb[0].mxu0
      %v671 = vadd.f32 0.0, %v670
      %672 = vmatprep.mubr.f32.mxu0 %v552
      %673 = vmatmul.mubr.f32.gmra.mrb[0].mxu0 %v467
      %v674 = vpop.f32.mrb[0].mxu0
      %v675 = vadd.f32 0.0, %v674
      %v676 = vpop.f32.mrb[0].mxu0
      %v677 = vadd.f32 0.0, %v676
      %678 = vmatprep.mubr.f32.mxu0 %v555
      %679 = vmatmul.mubr.f32.gmra.mrb[0].mxu0 %v469
      %v680 = vpop.f32.mrb[0].mxu0
      %v681 = vadd.f32 0.0, %v680
      %v682 = vpop.f32.mrb[0].mxu0
      %v683 = vadd.f32 0.0, %v682
      %684 = vmatprep.mubr.f32.mxu0 %v558
      %685 = vmatmul.mubr.f32.gmra.mrb[0].mxu0 %v471
      %v686 = vpop.f32.mrb[0].mxu0
      %v687 = vadd.f32 0.0, %v686
      %v688 = vpop.f32.mrb[0].mxu0
      %v689 = vadd.f32 0.0, %v688
      %690 = vmatprep.mubr.f32.mxu0 %v561
      %691 = vmatmul.mubr.f32.gmra.mrb[0].mxu0 %v473
      %v692 = vpop.f32.mrb[0].mxu0
      %v693 = vadd.f32 0.0, %v692
      %v694 = vpop.f32.mrb[0].mxu0
      %v695 = vadd.f32 0.0, %v694
      %696 = vmatprep.mubr.f32.mxu0 %v564
      %697 = vmatmul.mubr.f32.gmra.mrb[0].mxu0 %v475
      %v698 = vpop.f32.mrb[0].mxu0
      %v699 = vadd.f32 0.0, %v698
      %v700 = vpop.f32.mrb[0].mxu0
      %v701 = vadd.f32 0.0, %v700
      %702 = vmatprep.mubr.f32.mxu0 %v567
      %703 = vmatmul.mubr.f32.gmra.mrb[0].mxu0 %v477
      %v704 = vpop.f32.mrb[0].mxu0
      %v705 = vadd.f32 0.0, %v704
      %v706 = vpop.f32.mrb[0].mxu0
      %v707 = vadd.f32 0.0, %v706
      %708 = vmatprep.mubr.f32.mxu0 %v570
      %709 = vmatmul.mubr.f32.gmra.mrb[0].mxu0 %v479
      %v710 = vpop.f32.mrb[0].mxu0
      %v711 = vadd.f32 0.0, %v710
      %v712 = vpop.f32.mrb[0].mxu0
      %v713 = vadd.f32 0.0, %v712
      %714 = vmatprep.mubr.f32.mxu0 %v573
      %715 = vmatmul.mubr.f32.gmra.mrb[0].mxu0 %v481
      %v716 = vpop.f32.mrb[0].mxu0
      %v717 = vadd.f32 0.0, %v716
      %v718 = vpop.f32.mrb[0].mxu0
      %v719 = vadd.f32 0.0, %v718
      %720 = vmatprep.mubr.f32.mxu0 %v576
      %721 = vmatmul.mubr.f32.gmra.mrb[0].mxu0 %v483
      %v722 = vpop.f32.mrb[0].mxu0
      %v723 = vadd.f32 0.0, %v722
      %v724 = vpop.f32.mrb[0].mxu0
      %v725 = vadd.f32 0.0, %v724
      %726 = vmatprep.mubr.f32.mxu0 %v579
      %727 = vmatmul.mubr.f32.gmra.mrb[0].mxu0 %v485
      %v728 = vpop.f32.mrb[0].mxu0
      %v729 = vadd.f32 0.0, %v728
      %v730 = vpop.f32.mrb[0].mxu0
      %v731 = vadd.f32 0.0, %v730
      %732 = vmatprep.mubr.f32.mxu0 %v582
      %733 = vmatmul.mubr.f32.gmra.mrb[0].mxu0 %v487
      %v734 = vpop.f32.mrb[0].mxu0
      %v735 = vadd.f32 0.0, %v734
      %v736 = vpop.f32.mrb[0].mxu0
      %v737 = vadd.f32 0.0, %v736
      %738 = vmatprep.mubr.f32.mxu0 %v585
      %739 = vmatmul.mubr.f32.gmra.mrb[0].mxu0 %v489
      %v740 = vpop.f32.mrb[0].mxu0
      %v741 = vadd.f32 0.0, %v740
      %v742 = vpop.f32.mrb[0].mxu0
      %v743 = vadd.f32 0.0, %v742
      %744 = vmatprep.mubr.f32.mxu0 %v588
      %745 = vmatmul.mubr.f32.gmra.mrb[0].mxu0 %v491
      %v746 = vpop.f32.mrb[0].mxu0
      %v747 = vadd.f32 0.0, %v746
      %v748 = vpop.f32.mrb[0].mxu0
      %v749 = vadd.f32 0.0, %v748
      %750 = vdwg.mxu0
      %v751 = vmax.f32 %v657, 1e-30
      %v752 = vmax.f32 %v659, 1e-30
      %v753 = vmax.f32 %v663, 1e-30
      %v754 = vmax.f32 %v665, 1e-30
      %v755 = vmax.f32 %v669, 1e-30
      %v756 = vmax.f32 %v671, 1e-30
      %v757 = vmax.f32 %v675, 1e-30
      %v758 = vmax.f32 %v677, 1e-30
      %v759 = vmax.f32 %v681, 1e-30
      %v760 = vmax.f32 %v683, 1e-30
      %v761 = vmax.f32 %v687, 1e-30
      %v762 = vmax.f32 %v689, 1e-30
      %v763 = vmax.f32 %v693, 1e-30
      %v764 = vmax.f32 %v695, 1e-30
      %v765 = vmax.f32 %v699, 1e-30
      %v766 = vmax.f32 %v701, 1e-30
      %v767 = vmax.f32 %v705, 1e-30
      %v768 = vmax.f32 %v707, 1e-30
      %v769 = vmax.f32 %v711, 1e-30
      %v770 = vmax.f32 %v713, 1e-30
      %v771 = vmax.f32 %v717, 1e-30
      %v772 = vmax.f32 %v719, 1e-30
      %v773 = vmax.f32 %v723, 1e-30
      %v774 = vmax.f32 %v725, 1e-30
      %v775 = vmax.f32 %v729, 1e-30
      %v776 = vmax.f32 %v731, 1e-30
      %v777 = vmax.f32 %v735, 1e-30
      %v778 = vmax.f32 %v737, 1e-30
      %v779 = vmax.f32 %v741, 1e-30
      %v780 = vmax.f32 %v743, 1e-30
      %v781 = vmax.f32 %v747, 1e-30
      %v782 = vmax.f32 %v749, 1e-30
      %v783 = vrsqrt.pop %v751
      %v784 = vrsqrt.pop %v752
      %v785 = vrsqrt.pop %v753
      %v786 = vrsqrt.pop %v754
      %v787 = vrsqrt.pop %v755
      %v788 = vrsqrt.pop %v756
      %v789 = vrsqrt.pop %v757
      %v790 = vrsqrt.pop %v758
      %v791 = vrsqrt.pop %v759
      %v792 = vrsqrt.pop %v760
      %v793 = vrsqrt.pop %v761
      %v794 = vrsqrt.pop %v762
      %v795 = vrsqrt.pop %v763
      %v796 = vrsqrt.pop %v764
      %v797 = vrsqrt.pop %v765
      %v798 = vrsqrt.pop %v766
      %v799 = vrsqrt.pop %v767
      %v800 = vrsqrt.pop %v768
      %v801 = vrsqrt.pop %v769
      %v802 = vrsqrt.pop %v770
      %v803 = vrsqrt.pop %v771
      %v804 = vrsqrt.pop %v772
      %v805 = vrsqrt.pop %v773
      %v806 = vrsqrt.pop %v774
      %v807 = vrsqrt.pop %v775
      %v808 = vrsqrt.pop %v776
      %v809 = vrsqrt.pop %v777
      %v810 = vrsqrt.pop %v778
      %v811 = vrsqrt.pop %v779
      %v812 = vrsqrt.pop %v780
      %v813 = vrsqrt.pop %v781
      %v814 = vrsqrt.pop %v782
      %v815 = vmul.f32 %v657, %v783
      %v816 = vmul.f32 %v659, %v784
      %v817 = vmul.f32 %v663, %v785
      %v818 = vmul.f32 %v665, %v786
      %v819 = vmul.f32 %v669, %v787
      %v820 = vmul.f32 %v671, %v788
      %v821 = vmul.f32 %v675, %v789
      %v822 = vmul.f32 %v677, %v790
      %v823 = vmul.f32 %v681, %v791
      %v824 = vmul.f32 %v683, %v792
      %v825 = vmul.f32 %v687, %v793
      %v826 = vmul.f32 %v689, %v794
      %v827 = vmul.f32 %v693, %v795
      %v828 = vmul.f32 %v695, %v796
      %v829 = vmul.f32 %v699, %v797
      %v830 = vmul.f32 %v701, %v798
      %v831 = vmul.f32 %v705, %v799
      %v832 = vmul.f32 %v707, %v800
      %v833 = vmul.f32 %v711, %v801
      %v834 = vmul.f32 %v713, %v802
      %v835 = vmul.f32 %v717, %v803
      %v836 = vmul.f32 %v719, %v804
      %v837 = vmul.f32 %v723, %v805
      %v838 = vmul.f32 %v725, %v806
      %v839 = vmul.f32 %v729, %v807
      %v840 = vmul.f32 %v731, %v808
      %v841 = vmul.f32 %v735, %v809
      %v842 = vmul.f32 %v737, %v810
      %v843 = vmul.f32 %v741, %v811
      %v844 = vmul.f32 %v743, %v812
      %v845 = vmul.f32 %v747, %v813
      %v846 = vmul.f32 %v749, %v814
      %v847 = vmul.f32 %v815, 0.70710677
      %v848 = vmul.f32 %v816, 0.70710677
      %v849 = vmul.f32 %v817, 0.70710677
      %v850 = vmul.f32 %v818, 0.70710677
      %v851 = vmul.f32 %v819, 0.70710677
      %v852 = vmul.f32 %v820, 0.70710677
      %v853 = vmul.f32 %v821, 0.70710677
      %v854 = vmul.f32 %v822, 0.70710677
      %v855 = vmul.f32 %v823, 0.70710677
      %v856 = vmul.f32 %v824, 0.70710677
      %v857 = vmul.f32 %v825, 0.70710677
      %v858 = vmul.f32 %v826, 0.70710677
      %v859 = vmul.f32 %v827, 0.70710677
      %v860 = vmul.f32 %v828, 0.70710677
      %v861 = vmul.f32 %v829, 0.70710677
      %v862 = vmul.f32 %v830, 0.70710677
      %v863 = vmul.f32 %v831, 0.70710677
      %v864 = vmul.f32 %v832, 0.70710677
      %v865 = vmul.f32 %v833, 0.70710677
      %v866 = vmul.f32 %v834, 0.70710677
      %v867 = vmul.f32 %v835, 0.70710677
      %v868 = vmul.f32 %v836, 0.70710677
      %v869 = vmul.f32 %v837, 0.70710677
      %v870 = vmul.f32 %v838, 0.70710677
      %v871 = vmul.f32 %v839, 0.70710677
      %v872 = vmul.f32 %v840, 0.70710677
      %v873 = vmul.f32 %v841, 0.70710677
      %v874 = vmul.f32 %v842, 0.70710677
      %v875 = vmul.f32 %v843, 0.70710677
      %v876 = vmul.f32 %v844, 0.70710677
      %v877 = vmul.f32 %v845, 0.70710677
      %v878 = vmul.f32 %v846, 0.70710677
      %v879 = vmul.f32 %v847, 1.442695
      %v880 = vpow.pop %v879
      %v881 = vmul.f32 %v848, 1.442695
      %v882 = vpow.pop %v881
      %v883 = vmul.f32 %v849, 1.442695
      %v884 = vpow.pop %v883
      %v885 = vmul.f32 %v850, 1.442695
      %v886 = vpow.pop %v885
      %v887 = vmul.f32 %v851, 1.442695
      %v888 = vpow.pop %v887
      %v889 = vmul.f32 %v852, 1.442695
      %v890 = vpow.pop %v889
      %v891 = vmul.f32 %v853, 1.442695
      %v892 = vpow.pop %v891
      %v893 = vmul.f32 %v854, 1.442695
      %v894 = vpow.pop %v893
      %v895 = vmul.f32 %v855, 1.442695
      %v896 = vpow.pop %v895
      %v897 = vmul.f32 %v856, 1.442695
      %v898 = vpow.pop %v897
      %v899 = vmul.f32 %v857, 1.442695
      %v900 = vpow.pop %v899
      %v901 = vmul.f32 %v858, 1.442695
      %v902 = vpow.pop %v901
      %v903 = vmul.f32 %v859, 1.442695
      %v904 = vpow.pop %v903
      %v905 = vmul.f32 %v860, 1.442695
      %v906 = vpow.pop %v905
      %v907 = vmul.f32 %v861, 1.442695
      %v908 = vpow.pop %v907
      %v909 = vmul.f32 %v862, 1.442695
      %v910 = vpow.pop %v909
      %v911 = vmul.f32 %v863, 1.442695
      %v912 = vpow.pop %v911
      %v913 = vmul.f32 %v864, 1.442695
      %v914 = vpow.pop %v913
      %v915 = vmul.f32 %v865, 1.442695
      %v916 = vpow.pop %v915
      %v917 = vmul.f32 %v866, 1.442695
      %v918 = vpow.pop %v917
      %v919 = vmul.f32 %v867, 1.442695
      %v920 = vpow.pop %v919
      %v921 = vmul.f32 %v868, 1.442695
      %v922 = vpow.pop %v921
      %v923 = vmul.f32 %v869, 1.442695
      %v924 = vpow.pop %v923
      %v925 = vmul.f32 %v870, 1.442695
      %v926 = vpow.pop %v925
      %v927 = vmul.f32 %v871, 1.442695
      %v928 = vpow.pop %v927
      %v929 = vmul.f32 %v872, 1.442695
      %v930 = vpow.pop %v929
      %v931 = vmul.f32 %v873, 1.442695
      %v932 = vpow.pop %v931
      %v933 = vmul.f32 %v874, 1.442695
      %v934 = vpow.pop %v933
      %v935 = vmul.f32 %v875, 1.442695
      %v936 = vpow.pop %v935
      %v937 = vmul.f32 %v876, 1.442695
      %v938 = vpow.pop %v937
      %v939 = vmul.f32 %v877, 1.442695
      %v940 = vpow.pop %v939
      %v941 = vmul.f32 %v878, 1.442695
      %v942 = vpow.pop %v941
      %v943 = vrcp.pop %v880
      %v944 = vrcp.pop %v882
      %v945 = vrcp.pop %v884
      %v946 = vrcp.pop %v886
      %v947 = vrcp.pop %v888
      %v948 = vrcp.pop %v890
      %v949 = vrcp.pop %v892
      %v950 = vrcp.pop %v894
      %v951 = vrcp.pop %v896
      %v952 = vrcp.pop %v898
      %v953 = vrcp.pop %v900
      %v954 = vrcp.pop %v902
      %v955 = vrcp.pop %v904
      %v956 = vrcp.pop %v906
      %v957 = vrcp.pop %v908
      %v958 = vrcp.pop %v910
      %v959 = vrcp.pop %v912
      %v960 = vrcp.pop %v914
      %v961 = vrcp.pop %v916
      %v962 = vrcp.pop %v918
      %v963 = vrcp.pop %v920
      %v964 = vrcp.pop %v922
      %v965 = vrcp.pop %v924
      %v966 = vrcp.pop %v926
      %v967 = vrcp.pop %v928
      %v968 = vrcp.pop %v930
      %v969 = vrcp.pop %v932
      %v970 = vrcp.pop %v934
      %v971 = vrcp.pop %v936
      %v972 = vrcp.pop %v938
      %v973 = vrcp.pop %v940
      %v974 = vrcp.pop %v942
      %v975 = vsub.f32 %v880, %v943
      %v976 = vsub.f32 %v882, %v944
      %v977 = vsub.f32 %v884, %v945
      %v978 = vsub.f32 %v886, %v946
      %v979 = vsub.f32 %v888, %v947
      %v980 = vsub.f32 %v890, %v948
      %v981 = vsub.f32 %v892, %v949
      %v982 = vsub.f32 %v894, %v950
      %v983 = vsub.f32 %v896, %v951
      %v984 = vsub.f32 %v898, %v952
      %v985 = vsub.f32 %v900, %v953
      %v986 = vsub.f32 %v902, %v954
      %v987 = vsub.f32 %v904, %v955
      %v988 = vsub.f32 %v906, %v956
      %v989 = vsub.f32 %v908, %v957
      %v990 = vsub.f32 %v910, %v958
      %v991 = vsub.f32 %v912, %v959
      %v992 = vsub.f32 %v914, %v960
      %v993 = vsub.f32 %v916, %v961
      %v994 = vsub.f32 %v918, %v962
      %v995 = vsub.f32 %v920, %v963
      %v996 = vsub.f32 %v922, %v964
      %v997 = vsub.f32 %v924, %v965
      %v998 = vsub.f32 %v926, %v966
      %v999 = vsub.f32 %v928, %v967
      %v1000 = vsub.f32 %v930, %v968
      %v1001 = vsub.f32 %v932, %v969
      %v1002 = vsub.f32 %v934, %v970
      %v1003 = vsub.f32 %v936, %v971
      %v1004 = vsub.f32 %v938, %v972
      %v1005 = vsub.f32 %v940, %v973
      %v1006 = vsub.f32 %v942, %v974
      %v1007 = vmul.f32 %v975, 0.5
      %v1008 = vmul.f32 %v976, 0.5
      %v1009 = vmul.f32 %v977, 0.5
      %v1010 = vmul.f32 %v978, 0.5
      %v1011 = vmul.f32 %v979, 0.5
      %v1012 = vmul.f32 %v980, 0.5
      %v1013 = vmul.f32 %v981, 0.5
      %v1014 = vmul.f32 %v982, 0.5
      %v1015 = vmul.f32 %v983, 0.5
      %v1016 = vmul.f32 %v984, 0.5
      %v1017 = vmul.f32 %v985, 0.5
      %v1018 = vmul.f32 %v986, 0.5
      %v1019 = vmul.f32 %v987, 0.5
      %v1020 = vmul.f32 %v988, 0.5
      %v1021 = vmul.f32 %v989, 0.5
      %v1022 = vmul.f32 %v990, 0.5
      %v1023 = vmul.f32 %v991, 0.5
      %v1024 = vmul.f32 %v992, 0.5
      %v1025 = vmul.f32 %v993, 0.5
      %v1026 = vmul.f32 %v994, 0.5
      %v1027 = vmul.f32 %v995, 0.5
      %v1028 = vmul.f32 %v996, 0.5
      %v1029 = vmul.f32 %v997, 0.5
      %v1030 = vmul.f32 %v998, 0.5
      %v1031 = vmul.f32 %v999, 0.5
      %v1032 = vmul.f32 %v1000, 0.5
      %v1033 = vmul.f32 %v1001, 0.5
      %v1034 = vmul.f32 %v1002, 0.5
      %v1035 = vmul.f32 %v1003, 0.5
      %v1036 = vmul.f32 %v1004, 0.5
      %v1037 = vmul.f32 %v1005, 0.5
      %v1038 = vmul.f32 %v1006, 0.5
      %v1039 = vadd.f32 %v880, %v943
      %v1040 = vadd.f32 %v882, %v944
      %v1041 = vadd.f32 %v884, %v945
      %v1042 = vadd.f32 %v886, %v946
      %v1043 = vadd.f32 %v888, %v947
      %v1044 = vadd.f32 %v890, %v948
      %v1045 = vadd.f32 %v892, %v949
      %v1046 = vadd.f32 %v894, %v950
      %v1047 = vadd.f32 %v896, %v951
      %v1048 = vadd.f32 %v898, %v952
      %v1049 = vadd.f32 %v900, %v953
      %v1050 = vadd.f32 %v902, %v954
      %v1051 = vadd.f32 %v904, %v955
      %v1052 = vadd.f32 %v906, %v956
      %v1053 = vadd.f32 %v908, %v957
      %v1054 = vadd.f32 %v910, %v958
      %v1055 = vadd.f32 %v912, %v959
      %v1056 = vadd.f32 %v914, %v960
      %v1057 = vadd.f32 %v916, %v961
      %v1058 = vadd.f32 %v918, %v962
      %v1059 = vadd.f32 %v920, %v963
      %v1060 = vadd.f32 %v922, %v964
      %v1061 = vadd.f32 %v924, %v965
      %v1062 = vadd.f32 %v926, %v966
      %v1063 = vadd.f32 %v928, %v967
      %v1064 = vadd.f32 %v930, %v968
      %v1065 = vadd.f32 %v932, %v969
      %v1066 = vadd.f32 %v934, %v970
      %v1067 = vadd.f32 %v936, %v971
      %v1068 = vadd.f32 %v938, %v972
      %v1069 = vadd.f32 %v940, %v973
      %v1070 = vadd.f32 %v942, %v974
      %v1071 = vmul.f32 %v1039, 0.5
      %v1072 = vmul.f32 %v1040, 0.5
      %v1073 = vmul.f32 %v1041, 0.5
      %v1074 = vmul.f32 %v1042, 0.5
      %v1075 = vmul.f32 %v1043, 0.5
      %v1076 = vmul.f32 %v1044, 0.5
      %v1077 = vmul.f32 %v1045, 0.5
      %v1078 = vmul.f32 %v1046, 0.5
      %v1079 = vmul.f32 %v1047, 0.5
      %v1080 = vmul.f32 %v1048, 0.5
      %v1081 = vmul.f32 %v1049, 0.5
      %v1082 = vmul.f32 %v1050, 0.5
      %v1083 = vmul.f32 %v1051, 0.5
      %v1084 = vmul.f32 %v1052, 0.5
      %v1085 = vmul.f32 %v1053, 0.5
      %v1086 = vmul.f32 %v1054, 0.5
      %v1087 = vmul.f32 %v1055, 0.5
      %v1088 = vmul.f32 %v1056, 0.5
      %v1089 = vmul.f32 %v1057, 0.5
      %v1090 = vmul.f32 %v1058, 0.5
      %v1091 = vmul.f32 %v1059, 0.5
      %v1092 = vmul.f32 %v1060, 0.5
      %v1093 = vmul.f32 %v1061, 0.5
      %v1094 = vmul.f32 %v1062, 0.5
      %v1095 = vmul.f32 %v1063, 0.5
      %v1096 = vmul.f32 %v1064, 0.5
      %v1097 = vmul.f32 %v1065, 0.5
      %v1098 = vmul.f32 %v1066, 0.5
      %v1099 = vmul.f32 %v1067, 0.5
      %v1100 = vmul.f32 %v1068, 0.5
      %v1101 = vmul.f32 %v1069, 0.5
      %v1102 = vmul.f32 %v1070, 0.5
      %v1103 = vmul.f32 %v1007, 1.4142135
      %v1104 = vmul.f32 %v1008, 1.4142135
      %v1105 = vmul.f32 %v1009, 1.4142135
      %v1106 = vmul.f32 %v1010, 1.4142135
      %v1107 = vmul.f32 %v1011, 1.4142135
      %v1108 = vmul.f32 %v1012, 1.4142135
      %v1109 = vmul.f32 %v1013, 1.4142135
      %v1110 = vmul.f32 %v1014, 1.4142135
      %v1111 = vmul.f32 %v1015, 1.4142135
      %v1112 = vmul.f32 %v1016, 1.4142135
      %v1113 = vmul.f32 %v1017, 1.4142135
      %v1114 = vmul.f32 %v1018, 1.4142135
      %v1115 = vmul.f32 %v1019, 1.4142135
      %v1116 = vmul.f32 %v1020, 1.4142135
      %v1117 = vmul.f32 %v1021, 1.4142135
      %v1118 = vmul.f32 %v1022, 1.4142135
      %v1119 = vmul.f32 %v1023, 1.4142135
      %v1120 = vmul.f32 %v1024, 1.4142135
      %v1121 = vmul.f32 %v1025, 1.4142135
      %v1122 = vmul.f32 %v1026, 1.4142135
      %v1123 = vmul.f32 %v1027, 1.4142135
      %v1124 = vmul.f32 %v1028, 1.4142135
      %v1125 = vmul.f32 %v1029, 1.4142135
      %v1126 = vmul.f32 %v1030, 1.4142135
      %v1127 = vmul.f32 %v1031, 1.4142135
      %v1128 = vmul.f32 %v1032, 1.4142135
      %v1129 = vmul.f32 %v1033, 1.4142135
      %v1130 = vmul.f32 %v1034, 1.4142135
      %v1131 = vmul.f32 %v1035, 1.4142135
      %v1132 = vmul.f32 %v1036, 1.4142135
      %v1133 = vmul.f32 %v1037, 1.4142135
      %v1134 = vmul.f32 %v1038, 1.4142135
      %v1135 = vmul.f32 %v1103, %v783
      %v1136 = vmul.f32 %v1104, %v784
      %v1137 = vmul.f32 %v1105, %v785
      %v1138 = vmul.f32 %v1106, %v786
      %v1139 = vmul.f32 %v1107, %v787
      %v1140 = vmul.f32 %v1108, %v788
      %v1141 = vmul.f32 %v1109, %v789
      %v1142 = vmul.f32 %v1110, %v790
      %v1143 = vmul.f32 %v1111, %v791
      %v1144 = vmul.f32 %v1112, %v792
      %v1145 = vmul.f32 %v1113, %v793
      %v1146 = vmul.f32 %v1114, %v794
      %v1147 = vmul.f32 %v1115, %v795
      %v1148 = vmul.f32 %v1116, %v796
      %v1149 = vmul.f32 %v1117, %v797
      %v1150 = vmul.f32 %v1118, %v798
      %v1151 = vmul.f32 %v1119, %v799
      %v1152 = vmul.f32 %v1120, %v800
      %v1153 = vmul.f32 %v1121, %v801
      %v1154 = vmul.f32 %v1122, %v802
      %v1155 = vmul.f32 %v1123, %v803
      %v1156 = vmul.f32 %v1124, %v804
      %v1157 = vmul.f32 %v1125, %v805
      %v1158 = vmul.f32 %v1126, %v806
      %v1159 = vmul.f32 %v1127, %v807
      %v1160 = vmul.f32 %v1128, %v808
      %v1161 = vmul.f32 %v1129, %v809
      %v1162 = vmul.f32 %v1130, %v810
      %v1163 = vmul.f32 %v1131, %v811
      %v1164 = vmul.f32 %v1132, %v812
      %v1165 = vmul.f32 %v1133, %v813
      %v1166 = vmul.f32 %v1134, %v814
      %v1167 = vmul.f32 %v429, %v1135
      %v1168 = vmul.f32 %v430, %v1136
      %v1169 = vmul.f32 %v431, %v1137
      %v1170 = vmul.f32 %v432, %v1138
      %v1171 = vmul.f32 %v433, %v1139
      %v1172 = vmul.f32 %v434, %v1140
      %v1173 = vmul.f32 %v435, %v1141
      %v1174 = vmul.f32 %v436, %v1142
      %v1175 = vmul.f32 %v437, %v1143
      %v1176 = vmul.f32 %v438, %v1144
      %v1177 = vmul.f32 %v439, %v1145
      %v1178 = vmul.f32 %v440, %v1146
      %v1179 = vmul.f32 %v441, %v1147
      %v1180 = vmul.f32 %v442, %v1148
      %v1181 = vmul.f32 %v443, %v1149
      %v1182 = vmul.f32 %v444, %v1150
      %v1183 = vmul.f32 %v445, %v1151
      %v1184 = vmul.f32 %v446, %v1152
      %v1185 = vmul.f32 %v447, %v1153
      %v1186 = vmul.f32 %v448, %v1154
      %v1187 = vmul.f32 %v449, %v1155
      %v1188 = vmul.f32 %v450, %v1156
      %v1189 = vmul.f32 %v451, %v1157
      %v1190 = vmul.f32 %v452, %v1158
      %v1191 = vmul.f32 %v453, %v1159
      %v1192 = vmul.f32 %v454, %v1160
      %v1193 = vmul.f32 %v455, %v1161
      %v1194 = vmul.f32 %v456, %v1162
      %v1195 = vmul.f32 %v457, %v1163
      %v1196 = vmul.f32 %v458, %v1164
      %v1197 = vmul.f32 %v459, %v1165
      %v1198 = vmul.f32 %v460, %v1166
      %v1199 = vmul.f32 %v1071, 1.4142135
      %v1200 = vmul.f32 %v1072, 1.4142135
      %v1201 = vmul.f32 %v1073, 1.4142135
      %v1202 = vmul.f32 %v1074, 1.4142135
      %v1203 = vmul.f32 %v1075, 1.4142135
      %v1204 = vmul.f32 %v1076, 1.4142135
      %v1205 = vmul.f32 %v1077, 1.4142135
      %v1206 = vmul.f32 %v1078, 1.4142135
      %v1207 = vmul.f32 %v1079, 1.4142135
      %v1208 = vmul.f32 %v1080, 1.4142135
      %v1209 = vmul.f32 %v1081, 1.4142135
      %v1210 = vmul.f32 %v1082, 1.4142135
      %v1211 = vmul.f32 %v1083, 1.4142135
      %v1212 = vmul.f32 %v1084, 1.4142135
      %v1213 = vmul.f32 %v1085, 1.4142135
      %v1214 = vmul.f32 %v1086, 1.4142135
      %v1215 = vmul.f32 %v1087, 1.4142135
      %v1216 = vmul.f32 %v1088, 1.4142135
      %v1217 = vmul.f32 %v1089, 1.4142135
      %v1218 = vmul.f32 %v1090, 1.4142135
      %v1219 = vmul.f32 %v1091, 1.4142135
      %v1220 = vmul.f32 %v1092, 1.4142135
      %v1221 = vmul.f32 %v1093, 1.4142135
      %v1222 = vmul.f32 %v1094, 1.4142135
      %v1223 = vmul.f32 %v1095, 1.4142135
      %v1224 = vmul.f32 %v1096, 1.4142135
      %v1225 = vmul.f32 %v1097, 1.4142135
      %v1226 = vmul.f32 %v1098, 1.4142135
      %v1227 = vmul.f32 %v1099, 1.4142135
      %v1228 = vmul.f32 %v1100, 1.4142135
      %v1229 = vmul.f32 %v1101, 1.4142135
      %v1230 = vmul.f32 %v1102, 1.4142135
      %v1231 = vsub.f32 1.0, %v247
      %v1233 = vlaneseq
      %v1234 = vshrl.u32 %v1233, 7
      %v1235 = vsub.s32 0, %v1234
      %v1236 = vrot.slane %v1231, %v1235
      %v1237 = vlaneseq
      %v1238 = vshrl.u32 %v1237, 7
      %v1239 = vsub.s32 1, %v1238
      %v1240 = vrot.slane %v1231, %v1239
      %v1243 = vmul.f32 %v1199, %v1236
      %v1244 = vmul.f32 %v1200, %v1240
      %v1245 = vmul.f32 %v1201, %v1236
      %v1246 = vmul.f32 %v1202, %v1240
      %v1247 = vmul.f32 %v1203, %v1236
      %v1248 = vmul.f32 %v1204, %v1240
      %v1249 = vmul.f32 %v1205, %v1236
      %v1250 = vmul.f32 %v1206, %v1240
      %v1251 = vmul.f32 %v1207, %v1236
      %v1252 = vmul.f32 %v1208, %v1240
      %v1253 = vmul.f32 %v1209, %v1236
      %v1254 = vmul.f32 %v1210, %v1240
      %v1255 = vmul.f32 %v1211, %v1236
      %v1256 = vmul.f32 %v1212, %v1240
      %v1257 = vmul.f32 %v1213, %v1236
      %v1258 = vmul.f32 %v1214, %v1240
      %v1259 = vmul.f32 %v1215, %v1236
      %v1260 = vmul.f32 %v1216, %v1240
      %v1261 = vmul.f32 %v1217, %v1236
      %v1262 = vmul.f32 %v1218, %v1240
      %v1263 = vmul.f32 %v1219, %v1236
      %v1264 = vmul.f32 %v1220, %v1240
      %v1265 = vmul.f32 %v1221, %v1236
      %v1266 = vmul.f32 %v1222, %v1240
      %v1267 = vmul.f32 %v1223, %v1236
      %v1268 = vmul.f32 %v1224, %v1240
      %v1269 = vmul.f32 %v1225, %v1236
      %v1270 = vmul.f32 %v1226, %v1240
      %v1271 = vmul.f32 %v1227, %v1236
      %v1272 = vmul.f32 %v1228, %v1240
      %v1273 = vmul.f32 %v1229, %v1236
      %v1274 = vmul.f32 %v1230, %v1240
      %v1275 = vadd.f32 %v1167, %v1243
      %v1276 = vadd.f32 %v1168, %v1244
      %v1277 = vadd.f32 %v1169, %v1245
      %v1278 = vadd.f32 %v1170, %v1246
      %v1279 = vadd.f32 %v1171, %v1247
      %v1280 = vadd.f32 %v1172, %v1248
      %v1281 = vadd.f32 %v1173, %v1249
      %v1282 = vadd.f32 %v1174, %v1250
      %v1283 = vadd.f32 %v1175, %v1251
      %v1284 = vadd.f32 %v1176, %v1252
      %v1285 = vadd.f32 %v1177, %v1253
      %v1286 = vadd.f32 %v1178, %v1254
      %v1287 = vadd.f32 %v1179, %v1255
      %v1288 = vadd.f32 %v1180, %v1256
      %v1289 = vadd.f32 %v1181, %v1257
      %v1290 = vadd.f32 %v1182, %v1258
      %v1291 = vadd.f32 %v1183, %v1259
      %v1292 = vadd.f32 %v1184, %v1260
      %v1293 = vadd.f32 %v1185, %v1261
      %v1294 = vadd.f32 %v1186, %v1262
      %v1295 = vadd.f32 %v1187, %v1263
      %v1296 = vadd.f32 %v1188, %v1264
      %v1297 = vadd.f32 %v1189, %v1265
      %v1298 = vadd.f32 %v1190, %v1266
      %v1299 = vadd.f32 %v1191, %v1267
      %v1300 = vadd.f32 %v1192, %v1268
      %v1301 = vadd.f32 %v1193, %v1269
      %v1302 = vadd.f32 %v1194, %v1270
      %v1303 = vadd.f32 %v1195, %v1271
      %v1304 = vadd.f32 %v1196, %v1272
      %v1305 = vadd.f32 %v1197, %v1273
      %v1306 = vadd.f32 %v1198, %v1274
      %1307 = vst [vmem:[%s228] sm:$0xff] %v1275
      %1308 = vst.msk [vmem:[%s228 + $0x8] sm:$0xff] %vm541, %v1276
      %1309 = vst [vmem:[%s228 + $0x10] sm:$0xff] %v1277
      %1310 = vst.msk [vmem:[%s228 + $0x18] sm:$0xff] %vm541, %v1278
      %1311 = vst [vmem:[%s228 + $0x20] sm:$0xff] %v1279
      %1312 = vst.msk [vmem:[%s228 + $0x28] sm:$0xff] %vm541, %v1280
      %1313 = vst [vmem:[%s228 + $0x30] sm:$0xff] %v1281
      %1314 = vst.msk [vmem:[%s228 + $0x38] sm:$0xff] %vm541, %v1282
      %1315 = vst [vmem:[%s228 + $0x40] sm:$0xff] %v1283
      %1316 = vst.msk [vmem:[%s228 + $0x48] sm:$0xff] %vm541, %v1284
      %1317 = vst [vmem:[%s228 + $0x50] sm:$0xff] %v1285
      %1318 = vst.msk [vmem:[%s228 + $0x58] sm:$0xff] %vm541, %v1286
      %1319 = vst [vmem:[%s228 + $0x60] sm:$0xff] %v1287
      %1320 = vst.msk [vmem:[%s228 + $0x68] sm:$0xff] %vm541, %v1288
      %1321 = vst [vmem:[%s228 + $0x70] sm:$0xff] %v1289
      %1322 = vst.msk [vmem:[%s228 + $0x78] sm:$0xff] %vm541, %v1290
      %1323 = vst [vmem:[%s228 + $0x80] sm:$0xff] %v1291
      %1324 = vst.msk [vmem:[%s228 + $0x88] sm:$0xff] %vm541, %v1292
      %1325 = vst [vmem:[%s228 + $0x90] sm:$0xff] %v1293
      %1326 = vst.msk [vmem:[%s228 + $0x98] sm:$0xff] %vm541, %v1294
      %1327 = vst [vmem:[%s228 + $0xa0] sm:$0xff] %v1295
      %1328 = vst.msk [vmem:[%s228 + $0xa8] sm:$0xff] %vm541, %v1296
      %1329 = vst [vmem:[%s228 + $0xb0] sm:$0xff] %v1297
      %1330 = vst.msk [vmem:[%s228 + $0xb8] sm:$0xff] %vm541, %v1298
      %1331 = vst [vmem:[%s228 + $0xc0] sm:$0xff] %v1299
      %1332 = vst.msk [vmem:[%s228 + $0xc8] sm:$0xff] %vm541, %v1300
      %1333 = vst [vmem:[%s228 + $0xd0] sm:$0xff] %v1301
      %1334 = vst.msk [vmem:[%s228 + $0xd8] sm:$0xff] %vm541, %v1302
      %1335 = vst [vmem:[%s228 + $0xe0] sm:$0xff] %v1303
      %1336 = vst.msk [vmem:[%s228 + $0xe8] sm:$0xff] %vm541, %v1304
      %1337 = vst [vmem:[%s228 + $0xf0] sm:$0xff] %v1305
      %1338 = vst.msk [vmem:[%s228 + $0xf8] sm:$0xff] %vm541, %v1306
      %s1339 = smul.u32 16, %s16
      %p1340 = scmp.lt.s32.totalorder %s1339, 31
      %s1341 = scalar_select %p1340, %s1339, 31
      %s1342 = smul.addr %s1341, 2
      %s1343 = smul.addr %s1342, 8
      %s1344 = scalar_lea.vmem %s5, %s1343
      // Predicated region
      $region41: #{light_hyper_former_forward.3} parent=39 // pred_check
        %p1345 = pneg %p144
      $region42: #{light_hyper_former_forward.3} parent=39 // pred_check_branch
        %1347 = sbr.rel (%p1345) target = $region44
      $region43: #{light_hyper_former_forward.3} parent=39 // pred_region
        %s1348 = smul.u32 16, %s16
      $region44: #{light_hyper_former_forward.3} parent=39 // pred_fallthru
        _
    $region40: #{light_hyper_former_forward.3} parent=5 // pred_fallthru
      _
    %p1349 = scmp.le.s32.totalorder 2, %s11
    // Predicated region
    $region45: #{light_hyper_former_forward.3} parent=5 // pred_check
      %p1350 = pneg %p1349
    $region46: #{light_hyper_former_forward.3} parent=5 // pred_check_branch
      %1352 = sbr.rel (%p1350) target = $region48
    $region47: #{light_hyper_former_forward.3} parent=5 // pred_region
      %s1353 = ssub.s32 %s11, 2
      // Predicated region
      $region49: #{light_hyper_former_forward.3} parent=47 // pred_check
        %p1354 = pneg %p150
      $region50: #{light_hyper_former_forward.3} parent=47 // pred_check_branch
        %1356 = sbr.rel (%p1354) target = $region52
      $region51: #{light_hyper_former_forward.3} parent=47 // pred_region
        %s1357 = smul.u32 16, %s17
        %p1358 = scmp.lt.s32.totalorder %s1357, 31
        %s1359 = scalar_select %p1358, %s1357, 31
        %s1360 = smul.addr %s1359, 2
        %s1361 = smul.addr %s1360, 8
        %s1362 = scalar_lea.vmem %s5, %s1361
      $region52: #{light_hyper_former_forward.3} parent=47 // pred_fallthru
        _
    $region48: #{light_hyper_former_forward.3} parent=5 // pred_fallthru
      _
  $region6: #{light_hyper_former_forward.3} parent=0 // loop_footer
    %s15 = sadd.s32 1, %s11
  $region7: #{light_hyper_former_forward.3} parent=0 // loop_footer_branch
    %10 = sbr.rel target = $region3
  $region8: #{light_hyper_former_forward.3} parent=0 // loop_exit
    _

// kernel: light_hyper_former_forward.4
$region0: #{light_hyper_former_forward.4}
  #allocation0 [shape = 'u32[]', space=smem, size = 0x4, offset = 0x4, fixed_abs, tag = 'smem constant byte address 0x4 - core index']
  #allocation1 [shape = 'u32[144,128]{1,0:T(1,128)}', space=vmem, size = 0x12000, scoped, tag = 'internal scratch']
  %s0 = inlined_call_operand.vmem [shape: f32[4,256,16], index: 0, kind: input, shape index: {}]
  %s1 = inlined_call_operand.vmem [shape: f32[4,256,16], index: 1, kind: input, shape index: {}]
  %s2 = inlined_call_operand.vmem [shape: bf16[16,128], index: 2, kind: input, shape index: {}]
  %s3 = inlined_call_operand.vmem [shape: f32[4,128,16], index: 3, kind: output, shape index: {}]
  %s4 = sld [smem:[#allocation0]]
  $region125: #{light_hyper_former_forward.4} parent=0
    _
  %s6 = ssub.s32 1, %s4
  %s7 = scalar_select 0, %s6, %s4
  $region1: #{light_hyper_former_forward.4} parent=0
    #allocation2 [shape = 'u8[524288]{0}', space=vmem, size = 0x80000, scoped, tag = 'input window, operand 0']
    #allocation3 [shape = 'u8[524288]{0}', space=vmem, size = 0x80000, scoped, tag = 'input window, operand 1']
    loop: start=0, step=1, limit=4
    $region2: #{light_hyper_former_forward.4} parent=1 // loop_pre_header
      _
    $region3: #{light_hyper_former_forward.4} parent=1 // loop_header
      %s9 = sphi 0, %s13
      %p10 = scmp.ge.s32.totalorder %s9, 4
      %s19 = sphi 0, %s21
      %s22 = sphi 0, %s19
      %s23 = sphi 0, %s22
      %s39 = sphi 0, %s23
      %s45 = sphi 0, %s47
      %s48 = sphi 0, %s45
      %s49 = sphi 0, %s48
      %s65 = sphi 0, %s49
      %s69 = sphi 0, %s69
      %s71 = sphi 0, %s69
      %s72 = sphi 0, %s71
      %s86 = sphi 0, %s72
      %s90 = sphi 0, %s90
      %s92 = sphi 0, %s90
      %s93 = sphi 0, %s92
      %s107 = sphi 0, %s93
    $region4: #{light_hyper_former_forward.4} parent=1 // loop_header_branch
      %12 = sbr.rel (%p10) target = $region8
    $region5: #{light_hyper_former_forward.4} parent=1 // loop_body
      %s14 = ssub.s32 %s9, 1
      %s15 = ssub.s32 %s9, 2
      %s16 = sadd.s32 %s9, 1
      %s17 = ssub.s32 %s9, %s16
      %p18 = scmp.eq.s32.totalorder %s17, 0
      %s20 = sadd.s32 %s19, 1
      %s21 = scalar_select %p18, %s19, %s20
      %p24 = pneg %p18
      %p25 = scmp.eq.s32.totalorder %s9, 1
      %p26 = por %p24, %p25
      %p27 = scmp.ne.s32.totalorder %s19, %s22
      %p28 = scmp.eq.s32.totalorder %s9, 0
      %p29 = por %p27, %p28
      %p30 = scmp.ne.s32.totalorder %s19, %s22
      %p31 = scmp.eq.s32.totalorder %s14, 1
      %p32 = por %p30, %p31
      %p33 = scmp.ne.s32.totalorder %s22, %s23
      %p34 = scmp.eq.s32.totalorder %s14, 0
      %p35 = por %p33, %p34
      %p36 = scmp.ne.s32.totalorder %s22, %s23
      %p37 = scmp.eq.s32.totalorder %s15, 1
      %p38 = por %p36, %p37
      %p40 = scmp.ne.s32.totalorder %s23, %s39
      %p41 = scmp.eq.s32.totalorder %s15, 0
      %p42 = por %p40, %p41
      %s43 = ssub.s32 %s9, %s16
      %p44 = scmp.eq.s32.totalorder %s43, 0
      %s46 = sadd.s32 %s45, 1
      %s47 = scalar_select %p44, %s45, %s46
      %p50 = pneg %p44
      %p51 = scmp.eq.s32.totalorder %s9, 1
      %p52 = por %p50, %p51
      %p53 = scmp.ne.s32.totalorder %s45, %s48
      %p54 = scmp.eq.s32.totalorder %s9, 0
      %p55 = por %p53, %p54
      %p56 = scmp.ne.s32.totalorder %s45, %s48
      %p57 = scmp.eq.s32.totalorder %s14, 1
      %p58 = por %p56, %p57
      %p59 = scmp.ne.s32.totalorder %s48, %s49
      %p60 = scmp.eq.s32.totalorder %s14, 0
      %p61 = por %p59, %p60
      %p62 = scmp.ne.s32.totalorder %s48, %s49
      %p63 = scmp.eq.s32.totalorder %s15, 1
      %p64 = por %p62, %p63
      %p66 = scmp.ne.s32.totalorder %s49, %s65
      %p67 = scmp.eq.s32.totalorder %s15, 0
      %p68 = por %p66, %p67
      %s70 = sadd.s32 %s69, 1
      %p73 = scmp.eq.s32.totalorder %s9, 1
      %p74 = scmp.ne.s32.totalorder %s69, %s71
      %p75 = scmp.eq.s32.totalorder %s9, 0
      %p76 = por %p74, %p75
      %p77 = scmp.ne.s32.totalorder %s69, %s71
      %p78 = scmp.eq.s32.totalorder %s14, 1
      %p79 = por %p77, %p78
      %p80 = scmp.ne.s32.totalorder %s71, %s72
      %p81 = scmp.eq.s32.totalorder %s14, 0
      %p82 = por %p80, %p81
      %p83 = scmp.ne.s32.totalorder %s71, %s72
      %p84 = scmp.eq.s32.totalorder %s15, 1
      %p85 = por %p83, %p84
      %p87 = scmp.ne.s32.totalorder %s72, %s86
      %p88 = scmp.eq.s32.totalorder %s15, 0
      %p89 = por %p87, %p88
      %s91 = sadd.s32 %s90, 1
      %p94 = scmp.eq.s32.totalorder %s9, 1
      %p95 = scmp.ne.s32.totalorder %s90, %s92
      %p96 = scmp.eq.s32.totalorder %s9, 0
      %p97 = por %p95, %p96
      %p98 = scmp.ne.s32.totalorder %s90, %s92
      %p99 = scmp.eq.s32.totalorder %s14, 1
      %p100 = por %p98, %p99
      %p101 = scmp.ne.s32.totalorder %s92, %s93
      %p102 = scmp.eq.s32.totalorder %s14, 0
      %p103 = por %p101, %p102
      %p104 = scmp.ne.s32.totalorder %s92, %s93
      %p105 = scmp.eq.s32.totalorder %s15, 1
      %p106 = por %p104, %p105
      %p108 = scmp.ne.s32.totalorder %s93, %s107
      %p109 = scmp.eq.s32.totalorder %s15, 0
      %p110 = por %p108, %p109
      %p111 = scmp.le.s32.totalorder 1, %s9
      %p112 = scmp.lt.s32.totalorder %s9, 3
      %p113 = pnand %p111, %p112
      %p114 = pneg %p113
      // Predicated region
      $region9: #{light_hyper_former_forward.4} parent=5 // pred_check
        _
      $region10: #{light_hyper_former_forward.4} parent=5 // pred_check_branch
        %116 = sbr.rel (%p113) target = $region12
      $region11: #{light_hyper_former_forward.4} parent=5 // pred_region
        %s117 = ssub.s32 %s9, 1
        // Predicated region
        $region13: #{light_hyper_former_forward.4} parent=11 // pred_check
          %p118 = pneg %p82
        $region14: #{light_hyper_former_forward.4} parent=11 // pred_check_branch
          %120 = sbr.rel (%p118) target = $region16
        $region15: #{light_hyper_former_forward.4} parent=11 // pred_region
          _
        $region16: #{light_hyper_former_forward.4} parent=11 // pred_fallthru
          _
      $region12: #{light_hyper_former_forward.4} parent=5 // pred_fallthru
        _
      %p121 = scmp.lt.s32.totalorder %s9, 2
      // Predicated region
      $region17: #{light_hyper_former_forward.4} parent=5 // pred_check
        %p122 = pneg %p121
      $region18: #{light_hyper_former_forward.4} parent=5 // pred_check_branch
        %124 = sbr.rel (%p122) target = $region20
      $region19: #{light_hyper_former_forward.4} parent=5 // pred_region
        // Predicated region
        $region21: #{light_hyper_former_forward.4} parent=19 // pred_check
          %p125 = pneg %p29
        $region22: #{light_hyper_former_forward.4} parent=19 // pred_check_branch
          %127 = sbr.rel (%p125) target = $region24
        $region23: #{light_hyper_former_forward.4} parent=19 // pred_region
          %s128 = sand.u32 %s19, 1
          %s129 = sand.u32 %s19, 1
          %s130 = smul.addr %s129, 512
          %s131 = scalar_lea.vmem [#allocation2], %s130
          %s132 = smul.u32 16, %s9
          %s133 = smul.addr %s132, 8
          %s134 = scalar_lea.vmem %s0, %s133
          // Predicated region
          $region25: #{light_hyper_former_forward.4} parent=23 // pred_check
            _
          $region26: #{light_hyper_former_forward.4} parent=23 // pred_check_branch
            %136 = sbr.rel (0) target = $region28
          $region27: #{light_hyper_former_forward.4} parent=23 // pred_region
            // Predicated region
            $region29: #{light_hyper_former_forward.4} parent=27 // pred_check
              _
            $region30: #{light_hyper_former_forward.4} parent=27 // pred_check_branch
              %138 = sbr.rel (0) target = $region32
            $region31: #{light_hyper_former_forward.4} parent=27 // pred_region
              // Predicated region
              $region44: #{light_hyper_former_forward.4} parent=31 // pred_check
                _
              $region45: #{light_hyper_former_forward.4} parent=31 // pred_check_branch
                %279 = sbr.rel (0) target = $region47
              $region46: #{light_hyper_former_forward.4} parent=31 // pred_region
                loop: start=0, step=1, limit=1
                $region48: #{light_hyper_former_forward.4} parent=46 // loop_pre_header
                  _
                $region49: #{light_hyper_former_forward.4} parent=46 // loop_header
                  %s281 = sphi 0, %s285
                  %p282 = scmp.ge.s32.totalorder %s281, 1
                  %s286 = sphi %s134, %s134
                  %s287 = sphi %s131, %s131
                $region50: #{light_hyper_former_forward.4} parent=46 // loop_header_branch
                  %284 = sbr.rel (%p282) target = $region54
                $region51: #{light_hyper_former_forward.4} parent=46 // loop_body
                  %v288 = vld [vmem:[%s286] sm:$0xff]
                  %289 = vst [vmem:[%s287] sm:$0xff] %v288
                  %v290 = vld [vmem:[%s286 + $0x8] sm:$0xff]
                  %291 = vst [vmem:[%s287 + $0x8] sm:$0xff] %v290
                  %v292 = vld [vmem:[%s286 + $0x10] sm:$0xff]
                  %293 = vst [vmem:[%s287 + $0x10] sm:$0xff] %v292
                  %v294 = vld [vmem:[%s286 + $0x18] sm:$0xff]
                  %295 = vst [vmem:[%s287 + $0x18] sm:$0xff] %v294
                  %v296 = vld [vmem:[%s286 + $0x20] sm:$0xff]
                  %297 = vst [vmem:[%s287 + $0x20] sm:$0xff] %v296
                  %v298 = vld [vmem:[%s286 + $0x28] sm:$0xff]
                  %299 = vst [vmem:[%s287 + $0x28] sm:$0xff] %v298
                  %v300 = vld [vmem:[%s286 + $0x30] sm:$0xff]
                  %301 = vst [vmem:[%s287 + $0x30] sm:$0xff] %v300
                  %v302 = vld [vmem:[%s286 + $0x38] sm:$0xff]
                  %303 = vst [vmem:[%s287 + $0x38] sm:$0xff] %v302
                  %v304 = vld [vmem:[%s286 + $0x40] sm:$0xff]
                  %305 = vst [vmem:[%s287 + $0x40] sm:$0xff] %v304
                  %v306 = vld [vmem:[%s286 + $0x48] sm:$0xff]
                  %307 = vst [vmem:[%s287 + $0x48] sm:$0xff] %v306
                  %v308 = vld [vmem:[%s286 + $0x50] sm:$0xff]
                  %309 = vst [vmem:[%s287 + $0x50] sm:$0xff] %v308
                  %v310 = vld [vmem:[%s286 + $0x58] sm:$0xff]
                  %311 = vst [vmem:[%s287 + $0x58] sm:$0xff] %v310
                  %v312 = vld [vmem:[%s286 + $0x60] sm:$0xff]
                  %313 = vst [vmem:[%s287 + $0x60] sm:$0xff] %v312
                  %v314 = vld [vmem:[%s286 + $0x68] sm:$0xff]
                  %315 = vst [vmem:[%s287 + $0x68] sm:$0xff] %v314
                  %v316 = vld [vmem:[%s286 + $0x70] sm:$0xff]
                  %317 = vst [vmem:[%s287 + $0x70] sm:$0xff] %v316
                  %v318 = vld [vmem:[%s286 + $0x78] sm:$0xff]
                  %319 = vst [vmem:[%s287 + $0x78] sm:$0xff] %v318
                  %v320 = vld [vmem:[%s286 + $0x100] sm:$0xff]
                  %321 = vst [vmem:[%s287 + $0x80] sm:$0xff] %v320
                  %v322 = vld [vmem:[%s286 + $0x108] sm:$0xff]
                  %323 = vst [vmem:[%s287 + $0x88] sm:$0xff] %v322
                  %v324 = vld [vmem:[%s286 + $0x110] sm:$0xff]
                  %325 = vst [vmem:[%s287 + $0x90] sm:$0xff] %v324
                  %v326 = vld [vmem:[%s286 + $0x118] sm:$0xff]
                  %327 = vst [vmem:[%s287 + $0x98] sm:$0xff] %v326
                  %v328 = vld [vmem:[%s286 + $0x120] sm:$0xff]
                  %329 = vst [vmem:[%s287 + $0xa0] sm:$0xff] %v328
                  %v330 = vld [vmem:[%s286 + $0x128] sm:$0xff]
                  %331 = vst [vmem:[%s287 + $0xa8] sm:$0xff] %v330
                  %v332 = vld [vmem:[%s286 + $0x130] sm:$0xff]
                  %333 = vst [vmem:[%s287 + $0xb0] sm:$0xff] %v332
                  %v334 = vld [vmem:[%s286 + $0x138] sm:$0xff]
                  %335 = vst [vmem:[%s287 + $0xb8] sm:$0xff] %v334
                  %v336 = vld [vmem:[%s286 + $0x140] sm:$0xff]
                  %337 = vst [vmem:[%s287 + $0xc0] sm:$0xff] %v336
                  %v338 = vld [vmem:[%s286 + $0x148] sm:$0xff]
                  %339 = vst [vmem:[%s287 + $0xc8] sm:$0xff] %v338
                  %v340 = vld [vmem:[%s286 + $0x150] sm:$0xff]
                  %341 = vst [vmem:[%s287 + $0xd0] sm:$0xff] %v340
                  %v342 = vld [vmem:[%s286 + $0x158] sm:$0xff]
                  %343 = vst [vmem:[%s287 + $0xd8] sm:$0xff] %v342
                  %v344 = vld [vmem:[%s286 + $0x160] sm:$0xff]
                  %345 = vst [vmem:[%s287 + $0xe0] sm:$0xff] %v344
                  %v346 = vld [vmem:[%s286 + $0x168] sm:$0xff]
                  %347 = vst [vmem:[%s287 + $0xe8] sm:$0xff] %v346
                  %v348 = vld [vmem:[%s286 + $0x170] sm:$0xff]
                  %349 = vst [vmem:[%s287 + $0xf0] sm:$0xff] %v348
                  %v350 = vld [vmem:[%s286 + $0x178] sm:$0xff]
                  %351 = vst [vmem:[%s287 + $0xf8] sm:$0xff] %v350
                  %v352 = vld [vmem:[%s286 + $0x200] sm:$0xff]
                  %353 = vst [vmem:[%s287 + $0x100] sm:$0xff] %v352
                  %v354 = vld [vmem:[%s286 + $0x208] sm:$0xff]
                  %355 = vst [vmem:[%s287 + $0x108] sm:$0xff] %v354
                  %v356 = vld [vmem:[%s286 + $0x210] sm:$0xff]
                  %357 = vst [vmem:[%s287 + $0x110] sm:$0xff] %v356
                  %v358 = vld [vmem:[%s286 + $0x218] sm:$0xff]
                  %359 = vst [vmem:[%s287 + $0x118] sm:$0xff] %v358
                  %v360 = vld [vmem:[%s286 + $0x220] sm:$0xff]
                  %361 = vst [vmem:[%s287 + $0x120] sm:$0xff] %v360
                  %v362 = vld [vmem:[%s286 + $0x228] sm:$0xff]
                  %363 = vst [vmem:[%s287 + $0x128] sm:$0xff] %v362
                  %v364 = vld [vmem:[%s286 + $0x230] sm:$0xff]
                  %365 = vst [vmem:[%s287 + $0x130] sm:$0xff] %v364
                  %v366 = vld [vmem:[%s286 + $0x238] sm:$0xff]
                  %367 = vst [vmem:[%s287 + $0x138] sm:$0xff] %v366
                  %v368 = vld [vmem:[%s286 + $0x240] sm:$0xff]
                  %369 = vst [vmem:[%s287 + $0x140] sm:$0xff] %v368
                  %v370 = vld [vmem:[%s286 + $0x248] sm:$0xff]
                  %371 = vst [vmem:[%s287 + $0x148] sm:$0xff] %v370
                  %v372 = vld [vmem:[%s286 + $0x250] sm:$0xff]
                  %373 = vst [vmem:[%s287 + $0x150] sm:$0xff] %v372
                  %v374 = vld [vmem:[%s286 + $0x258] sm:$0xff]
                  %375 = vst [vmem:[%s287 + $0x158] sm:$0xff] %v374
                  %v376 = vld [vmem:[%s286 + $0x260] sm:$0xff]
                  %377 = vst [vmem:[%s287 + $0x160] sm:$0xff] %v376
                  %v378 = vld [vmem:[%s286 + $0x268] sm:$0xff]
                  %379 = vst [vmem:[%s287 + $0x168] sm:$0xff] %v378
                  %v380 = vld [vmem:[%s286 + $0x270] sm:$0xff]
                  %381 = vst [vmem:[%s287 + $0x170] sm:$0xff] %v380
                  %v382 = vld [vmem:[%s286 + $0x278] sm:$0xff]
                  %383 = vst [vmem:[%s287 + $0x178] sm:$0xff] %v382
                  %v384 = vld [vmem:[%s286 + $0x300] sm:$0xff]
                  %385 = vst [vmem:[%s287 + $0x180] sm:$0xff] %v384
                  %v386 = vld [vmem:[%s286 + $0x308] sm:$0xff]
                  %387 = vst [vmem:[%s287 + $0x188] sm:$0xff] %v386
                  %v388 = vld [vmem:[%s286 + $0x310] sm:$0xff]
                  %389 = vst [vmem:[%s287 + $0x190] sm:$0xff] %v388
                  %v390 = vld [vmem:[%s286 + $0x318] sm:$0xff]
                  %391 = vst [vmem:[%s287 + $0x198] sm:$0xff] %v390
                  %v392 = vld [vmem:[%s286 + $0x320] sm:$0xff]
                  %393 = vst [vmem:[%s287 + $0x1a0] sm:$0xff] %v392
                  %v394 = vld [vmem:[%s286 + $0x328] sm:$0xff]
                  %395 = vst [vmem:[%s287 + $0x1a8] sm:$0xff] %v394
                  %v396 = vld [vmem:[%s286 + $0x330] sm:$0xff]
                  %397 = vst [vmem:[%s287 + $0x1b0] sm:$0xff] %v396
                  %v398 = vld [vmem:[%s286 + $0x338] sm:$0xff]
                  %399 = vst [vmem:[%s287 + $0x1b8] sm:$0xff] %v398
                  %v400 = vld [vmem:[%s286 + $0x340] sm:$0xff]
                  %401 = vst [vmem:[%s287 + $0x1c0] sm:$0xff] %v400
                  %v402 = vld [vmem:[%s286 + $0x348] sm:$0xff]
                  %403 = vst [vmem:[%s287 + $0x1c8] sm:$0xff] %v402
                  %v404 = vld [vmem:[%s286 + $0x350] sm:$0xff]
                  %405 = vst [vmem:[%s287 + $0x1d0] sm:$0xff] %v404
                  %v406 = vld [vmem:[%s286 + $0x358] sm:$0xff]
                  %407 = vst [vmem:[%s287 + $0x1d8] sm:$0xff] %v406
                  %v408 = vld [vmem:[%s286 + $0x360] sm:$0xff]
                  %409 = vst [vmem:[%s287 + $0x1e0] sm:$0xff] %v408
                  %v410 = vld [vmem:[%s286 + $0x368] sm:$0xff]
                  %411 = vst [vmem:[%s287 + $0x1e8] sm:$0xff] %v410
                  %v412 = vld [vmem:[%s286 + $0x370] sm:$0xff]
                  %413 = vst [vmem:[%s287 + $0x1f0] sm:$0xff] %v412
                  %v414 = vld [vmem:[%s286 + $0x378] sm:$0xff]
                  %415 = vst [vmem:[%s287 + $0x1f8] sm:$0xff] %v414
                $region52: #{light_hyper_former_forward.4} parent=46 // loop_footer
                  %s285 = sadd.s32 1, %s281
                $region53: #{light_hyper_former_forward.4} parent=46 // loop_footer_branch
                  %280 = sbr.rel target = $region49
                $region54: #{light_hyper_former_forward.4} parent=46 // loop_exit
                  _
              $region47: #{light_hyper_former_forward.4} parent=31 // pred_fallthru
                _
              // Predicated region
              $region55: #{light_hyper_former_forward.4} parent=31 // pred_check
                _
              $region56: #{light_hyper_former_forward.4} parent=31 // pred_check_branch
                %417 = sbr.rel target = $region58
              $region57: #{light_hyper_former_forward.4} parent=31 // pred_region
                _
              $region58: #{light_hyper_former_forward.4} parent=31 // pred_fallthru
                _
            $region32: #{light_hyper_former_forward.4} parent=27 // pred_fallthru
              _
            // Predicated region
            $region33: #{light_hyper_former_forward.4} parent=27 // pred_check
              _
            $region34: #{light_hyper_former_forward.4} parent=27 // pred_check_branch
              %140 = sbr.rel target = $region36
            $region35: #{light_hyper_former_forward.4} parent=27 // pred_region
              loop: start=0, step=1, limit=1
              $region37: #{light_hyper_former_forward.4} parent=35 // loop_pre_header
                _
              $region38: #{light_hyper_former_forward.4} parent=35 // loop_header
                %s143 = sphi 0, %s147
                %p144 = scmp.ge.s32.totalorder %s143, 1
                %s148 = sphi %s134, %s134
                %s149 = sphi %s131, %s131
              $region39: #{light_hyper_former_forward.4} parent=35 // loop_header_branch
                %146 = sbr.rel (%p144) target = $region43
              $region40: #{light_hyper_former_forward.4} parent=35 // loop_body
                %v150 = vld [vmem:[%s148] sm:$0xff]
                %151 = vst [vmem:[%s149] sm:$0xff] %v150
                %v152 = vld [vmem:[%s148 + $0x8] sm:$0xff]
                %153 = vst [vmem:[%s149 + $0x8] sm:$0xff] %v152
                %v154 = vld [vmem:[%s148 + $0x10] sm:$0xff]
                %155 = vst [vmem:[%s149 + $0x10] sm:$0xff] %v154
                %v156 = vld [vmem:[%s148 + $0x18] sm:$0xff]
                %157 = vst [vmem:[%s149 + $0x18] sm:$0xff] %v156
                %v158 = vld [vmem:[%s148 + $0x20] sm:$0xff]
                %159 = vst [vmem:[%s149 + $0x20] sm:$0xff] %v158
                %v160 = vld [vmem:[%s148 + $0x28] sm:$0xff]
                %161 = vst [vmem:[%s149 + $0x28] sm:$0xff] %v160
                %v162 = vld [vmem:[%s148 + $0x30] sm:$0xff]
                %163 = vst [vmem:[%s149 + $0x30] sm:$0xff] %v162
                %v164 = vld [vmem:[%s148 + $0x38] sm:$0xff]
                %165 = vst [vmem:[%s149 + $0x38] sm:$0xff] %v164
                %v166 = vld [vmem:[%s148 + $0x40] sm:$0xff]
                %167 = vst [vmem:[%s149 + $0x40] sm:$0xff] %v166
                %v168 = vld [vmem:[%s148 + $0x48] sm:$0xff]
                %169 = vst [vmem:[%s149 + $0x48] sm:$0xff] %v168
                %v170 = vld [vmem:[%s148 + $0x50] sm:$0xff]
                %171 = vst [vmem:[%s149 + $0x50] sm:$0xff] %v170
                %v172 = vld [vmem:[%s148 + $0x58] sm:$0xff]
                %173 = vst [vmem:[%s149 + $0x58] sm:$0xff] %v172
                %v174 = vld [vmem:[%s148 + $0x60] sm:$0xff]
                %175 = vst [vmem:[%s149 + $0x60] sm:$0xff] %v174
                %v176 = vld [vmem:[%s148 + $0x68] sm:$0xff]
                %177 = vst [vmem:[%s149 + $0x68] sm:$0xff] %v176
                %v178 = vld [vmem:[%s148 + $0x70] sm:$0xff]
                %179 = vst [vmem:[%s149 + $0x70] sm:$0xff] %v178
                %v180 = vld [vmem:[%s148 + $0x78] sm:$0xff]
                %181 = vst [vmem:[%s149 + $0x78] sm:$0xff] %v180
                %v182 = vld [vmem:[%s148 + $0x100] sm:$0xff]
                %183 = vst [vmem:[%s149 + $0x80] sm:$0xff] %v182
                %v184 = vld [vmem:[%s148 + $0x108] sm:$0xff]
                %185 = vst [vmem:[%s149 + $0x88] sm:$0xff] %v184
                %v186 = vld [vmem:[%s148 + $0x110] sm:$0xff]
                %187 = vst [vmem:[%s149 + $0x90] sm:$0xff] %v186
                %v188 = vld [vmem:[%s148 + $0x118] sm:$0xff]
                %189 = vst [vmem:[%s149 + $0x98] sm:$0xff] %v188
                %v190 = vld [vmem:[%s148 + $0x120] sm:$0xff]
                %191 = vst [vmem:[%s149 + $0xa0] sm:$0xff] %v190
                %v192 = vld [vmem:[%s148 + $0x128] sm:$0xff]
                %193 = vst [vmem:[%s149 + $0xa8] sm:$0xff] %v192
                %v194 = vld [vmem:[%s148 + $0x130] sm:$0xff]
                %195 = vst [vmem:[%s149 + $0xb0] sm:$0xff] %v194
                %v196 = vld [vmem:[%s148 + $0x138] sm:$0xff]
                %197 = vst [vmem:[%s149 + $0xb8] sm:$0xff] %v196
                %v198 = vld [vmem:[%s148 + $0x140] sm:$0xff]
                %199 = vst [vmem:[%s149 + $0xc0] sm:$0xff] %v198
                %v200 = vld [vmem:[%s148 + $0x148] sm:$0xff]
                %201 = vst [vmem:[%s149 + $0xc8] sm:$0xff] %v200
                %v202 = vld [vmem:[%s148 + $0x150] sm:$0xff]
                %203 = vst [vmem:[%s149 + $0xd0] sm:$0xff] %v202
                %v204 = vld [vmem:[%s148 + $0x158] sm:$0xff]
                %205 = vst [vmem:[%s149 + $0xd8] sm:$0xff] %v204
                %v206 = vld [vmem:[%s148 + $0x160] sm:$0xff]
                %207 = vst [vmem:[%s149 + $0xe0] sm:$0xff] %v206
                %v208 = vld [vmem:[%s148 + $0x168] sm:$0xff]
                %209 = vst [vmem:[%s149 + $0xe8] sm:$0xff] %v208
                %v210 = vld [vmem:[%s148 + $0x170] sm:$0xff]
                %211 = vst [vmem:[%s149 + $0xf0] sm:$0xff] %v210
                %v212 = vld [vmem:[%s148 + $0x178] sm:$0xff]
                %213 = vst [vmem:[%s149 + $0xf8] sm:$0xff] %v212
                %v214 = vld [vmem:[%s148 + $0x200] sm:$0xff]
                %215 = vst [vmem:[%s149 + $0x100] sm:$0xff] %v214
                %v216 = vld [vmem:[%s148 + $0x208] sm:$0xff]
                %217 = vst [vmem:[%s149 + $0x108] sm:$0xff] %v216
                %v218 = vld [vmem:[%s148 + $0x210] sm:$0xff]
                %219 = vst [vmem:[%s149 + $0x110] sm:$0xff] %v218
                %v220 = vld [vmem:[%s148 + $0x218] sm:$0xff]
                %221 = vst [vmem:[%s149 + $0x118] sm:$0xff] %v220
                %v222 = vld [vmem:[%s148 + $0x220] sm:$0xff]
                %223 = vst [vmem:[%s149 + $0x120] sm:$0xff] %v222
                %v224 = vld [vmem:[%s148 + $0x228] sm:$0xff]
                %225 = vst [vmem:[%s149 + $0x128] sm:$0xff] %v224
                %v226 = vld [vmem:[%s148 + $0x230] sm:$0xff]
                %227 = vst [vmem:[%s149 + $0x130] sm:$0xff] %v226
                %v228 = vld [vmem:[%s148 + $0x238] sm:$0xff]
                %229 = vst [vmem:[%s149 + $0x138] sm:$0xff] %v228
                %v230 = vld [vmem:[%s148 + $0x240] sm:$0xff]
                %231 = vst [vmem:[%s149 + $0x140] sm:$0xff] %v230
                %v232 = vld [vmem:[%s148 + $0x248] sm:$0xff]
                %233 = vst [vmem:[%s149 + $0x148] sm:$0xff] %v232
                %v234 = vld [vmem:[%s148 + $0x250] sm:$0xff]
                %235 = vst [vmem:[%s149 + $0x150] sm:$0xff] %v234
                %v236 = vld [vmem:[%s148 + $0x258] sm:$0xff]
                %237 = vst [vmem:[%s149 + $0x158] sm:$0xff] %v236
                %v238 = vld [vmem:[%s148 + $0x260] sm:$0xff]
                %239 = vst [vmem:[%s149 + $0x160] sm:$0xff] %v238
                %v240 = vld [vmem:[%s148 + $0x268] sm:$0xff]
                %241 = vst [vmem:[%s149 + $0x168] sm:$0xff] %v240
                %v242 = vld [vmem:[%s148 + $0x270] sm:$0xff]
                %243 = vst [vmem:[%s149 + $0x170] sm:$0xff] %v242
                %v244 = vld [vmem:[%s148 + $0x278] sm:$0xff]
                %245 = vst [vmem:[%s149 + $0x178] sm:$0xff] %v244
                %v246 = vld [vmem:[%s148 + $0x300] sm:$0xff]
                %247 = vst [vmem:[%s149 + $0x180] sm:$0xff] %v246
                %v248 = vld [vmem:[%s148 + $0x308] sm:$0xff]
                %249 = vst [vmem:[%s149 + $0x188] sm:$0xff] %v248
                %v250 = vld [vmem:[%s148 + $0x310] sm:$0xff]
                %251 = vst [vmem:[%s149 + $0x190] sm:$0xff] %v250
                %v252 = vld [vmem:[%s148 + $0x318] sm:$0xff]
                %253 = vst [vmem:[%s149 + $0x198] sm:$0xff] %v252
                %v254 = vld [vmem:[%s148 + $0x320] sm:$0xff]
                %255 = vst [vmem:[%s149 + $0x1a0] sm:$0xff] %v254
                %v256 = vld [vmem:[%s148 + $0x328] sm:$0xff]
                %257 = vst [vmem:[%s149 + $0x1a8] sm:$0xff] %v256
                %v258 = vld [vmem:[%s148 + $0x330] sm:$0xff]
                %259 = vst [vmem:[%s149 + $0x1b0] sm:$0xff] %v258
                %v260 = vld [vmem:[%s148 + $0x338] sm:$0xff]
                %261 = vst [vmem:[%s149 + $0x1b8] sm:$0xff] %v260
                %v262 = vld [vmem:[%s148 + $0x340] sm:$0xff]
                %263 = vst [vmem:[%s149 + $0x1c0] sm:$0xff] %v262
                %v264 = vld [vmem:[%s148 + $0x348] sm:$0xff]
                %265 = vst [vmem:[%s149 + $0x1c8] sm:$0xff] %v264
                %v266 = vld [vmem:[%s148 + $0x350] sm:$0xff]
                %267 = vst [vmem:[%s149 + $0x1d0] sm:$0xff] %v266
                %v268 = vld [vmem:[%s148 + $0x358] sm:$0xff]
                %269 = vst [vmem:[%s149 + $0x1d8] sm:$0xff] %v268
                %v270 = vld [vmem:[%s148 + $0x360] sm:$0xff]
                %271 = vst [vmem:[%s149 + $0x1e0] sm:$0xff] %v270
                %v272 = vld [vmem:[%s148 + $0x368] sm:$0xff]
                %273 = vst [vmem:[%s149 + $0x1e8] sm:$0xff] %v272
                %v274 = vld [vmem:[%s148 + $0x370] sm:$0xff]
                %275 = vst [vmem:[%s149 + $0x1f0] sm:$0xff] %v274
                %v276 = vld [vmem:[%s148 + $0x378] sm:$0xff]
                %277 = vst [vmem:[%s149 + $0x1f8] sm:$0xff] %v276
              $region41: #{light_hyper_former_forward.4} parent=35 // loop_footer
                %s147 = sadd.s32 1, %s143
              $region42: #{light_hyper_former_forward.4} parent=35 // loop_footer_branch
                %142 = sbr.rel target = $region38
              $region43: #{light_hyper_former_forward.4} parent=35 // loop_exit
                _
            $region36: #{light_hyper_former_forward.4} parent=27 // pred_fallthru
              _
          $region28: #{light_hyper_former_forward.4} parent=23 // pred_fallthru
            _
          %418 = vnop
        $region24: #{light_hyper_former_forward.4} parent=19 // pred_fallthru
          _
        // Predicated region
        $region59: #{light_hyper_former_forward.4} parent=19 // pred_check
          %p419 = pneg %p55
        $region60: #{light_hyper_former_forward.4} parent=19 // pred_check_branch
          %421 = sbr.rel (%p419) target = $region62
        $region61: #{light_hyper_former_forward.4} parent=19 // pred_region
          %s422 = sand.u32 %s45, 1
          %s423 = sand.u32 %s45, 1
          %s424 = smul.addr %s423, 512
          %s425 = scalar_lea.vmem [#allocation3], %s424
          %s426 = smul.u32 16, %s9
          %s427 = smul.addr %s426, 8
          %s428 = scalar_lea.vmem %s1, %s427
          // Predicated region
          $region63: #{light_hyper_former_forward.4} parent=61 // pred_check
            _
          $region64: #{light_hyper_former_forward.4} parent=61 // pred_check_branch
            %430 = sbr.rel (0) target = $region66
          $region65: #{light_hyper_former_forward.4} parent=61 // pred_region
            // Predicated region
            $region67: #{light_hyper_former_forward.4} parent=65 // pred_check
              _
            $region68: #{light_hyper_former_forward.4} parent=65 // pred_check_branch
              %432 = sbr.rel (0) target = $region70
            $region69: #{light_hyper_former_forward.4} parent=65 // pred_region
              // Predicated region
              $region82: #{light_hyper_former_forward.4} parent=69 // pred_check
                _
              $region83: #{light_hyper_former_forward.4} parent=69 // pred_check_branch
                %573 = sbr.rel (0) target = $region85
              $region84: #{light_hyper_former_forward.4} parent=69 // pred_region
                loop: start=0, step=1, limit=1
                $region86: #{light_hyper_former_forward.4} parent=84 // loop_pre_header
                  _
                $region87: #{light_hyper_former_forward.4} parent=84 // loop_header
                  %s575 = sphi 0, %s579
                  %p576 = scmp.ge.s32.totalorder %s575, 1
                  %s580 = sphi %s428, %s428
                  %s581 = sphi %s425, %s425
                $region88: #{light_hyper_former_forward.4} parent=84 // loop_header_branch
                  %578 = sbr.rel (%p576) target = $region92
                $region89: #{light_hyper_former_forward.4} parent=84 // loop_body
                  %v582 = vld [vmem:[%s580] sm:$0xff]
                  %583 = vst [vmem:[%s581] sm:$0xff] %v582
                  %v584 = vld [vmem:[%s580 + $0x8] sm:$0xff]
                  %585 = vst [vmem:[%s581 + $0x8] sm:$0xff] %v584
                  %v586 = vld [vmem:[%s580 + $0x10] sm:$0xff]
                  %587 = vst [vmem:[%s581 + $0x10] sm:$0xff] %v586
                  %v588 = vld [vmem:[%s580 + $0x18] sm:$0xff]
                  %589 = vst [vmem:[%s581 + $0x18] sm:$0xff] %v588
                  %v590 = vld [vmem:[%s580 + $0x20] sm:$0xff]
                  %591 = vst [vmem:[%s581 + $0x20] sm:$0xff] %v590
                  %v592 = vld [vmem:[%s580 + $0x28] sm:$0xff]
                  %593 = vst [vmem:[%s581 + $0x28] sm:$0xff] %v592
                  %v594 = vld [vmem:[%s580 + $0x30] sm:$0xff]
                  %595 = vst [vmem:[%s581 + $0x30] sm:$0xff] %v594
                  %v596 = vld [vmem:[%s580 + $0x38] sm:$0xff]
                  %597 = vst [vmem:[%s581 + $0x38] sm:$0xff] %v596
                  %v598 = vld [vmem:[%s580 + $0x40] sm:$0xff]
                  %599 = vst [vmem:[%s581 + $0x40] sm:$0xff] %v598
                  %v600 = vld [vmem:[%s580 + $0x48] sm:$0xff]
                  %601 = vst [vmem:[%s581 + $0x48] sm:$0xff] %v600
                  %v602 = vld [vmem:[%s580 + $0x50] sm:$0xff]
                  %603 = vst [vmem:[%s581 + $0x50] sm:$0xff] %v602
                  %v604 = vld [vmem:[%s580 + $0x58] sm:$0xff]
                  %605 = vst [vmem:[%s581 + $0x58] sm:$0xff] %v604
                  %v606 = vld [vmem:[%s580 + $0x60] sm:$0xff]
                  %607 = vst [vmem:[%s581 + $0x60] sm:$0xff] %v606
                  %v608 = vld [vmem:[%s580 + $0x68] sm:$0xff]
                  %609 = vst [vmem:[%s581 + $0x68] sm:$0xff] %v608
                  %v610 = vld [vmem:[%s580 + $0x70] sm:$0xff]
                  %611 = vst [vmem:[%s581 + $0x70] sm:$0xff] %v610
                  %v612 = vld [vmem:[%s580 + $0x78] sm:$0xff]
                  %613 = vst [vmem:[%s581 + $0x78] sm:$0xff] %v612
                  %v614 = vld [vmem:[%s580 + $0x100] sm:$0xff]
                  %615 = vst [vmem:[%s581 + $0x80] sm:$0xff] %v614
                  %v616 = vld [vmem:[%s580 + $0x108] sm:$0xff]
                  %617 = vst [vmem:[%s581 + $0x88] sm:$0xff] %v616
                  %v618 = vld [vmem:[%s580 + $0x110] sm:$0xff]
                  %619 = vst [vmem:[%s581 + $0x90] sm:$0xff] %v618
                  %v620 = vld [vmem:[%s580 + $0x118] sm:$0xff]
                  %621 = vst [vmem:[%s581 + $0x98] sm:$0xff] %v620
                  %v622 = vld [vmem:[%s580 + $0x120] sm:$0xff]
                  %623 = vst [vmem:[%s581 + $0xa0] sm:$0xff] %v622
                  %v624 = vld [vmem:[%s580 + $0x128] sm:$0xff]
                  %625 = vst [vmem:[%s581 + $0xa8] sm:$0xff] %v624
                  %v626 = vld [vmem:[%s580 + $0x130] sm:$0xff]
                  %627 = vst [vmem:[%s581 + $0xb0] sm:$0xff] %v626
                  %v628 = vld [vmem:[%s580 + $0x138] sm:$0xff]
                  %629 = vst [vmem:[%s581 + $0xb8] sm:$0xff] %v628
                  %v630 = vld [vmem:[%s580 + $0x140] sm:$0xff]
                  %631 = vst [vmem:[%s581 + $0xc0] sm:$0xff] %v630
                  %v632 = vld [vmem:[%s580 + $0x148] sm:$0xff]
                  %633 = vst [vmem:[%s581 + $0xc8] sm:$0xff] %v632
                  %v634 = vld [vmem:[%s580 + $0x150] sm:$0xff]
                  %635 = vst [vmem:[%s581 + $0xd0] sm:$0xff] %v634
                  %v636 = vld [vmem:[%s580 + $0x158] sm:$0xff]
                  %637 = vst [vmem:[%s581 + $0xd8] sm:$0xff] %v636
                  %v638 = vld [vmem:[%s580 + $0x160] sm:$0xff]
                  %639 = vst [vmem:[%s581 + $0xe0] sm:$0xff] %v638
                  %v640 = vld [vmem:[%s580 + $0x168] sm:$0xff]
                  %641 = vst [vmem:[%s581 + $0xe8] sm:$0xff] %v640
                  %v642 = vld [vmem:[%s580 + $0x170] sm:$0xff]
                  %643 = vst [vmem:[%s581 + $0xf0] sm:$0xff] %v642
                  %v644 = vld [vmem:[%s580 + $0x178] sm:$0xff]
                  %645 = vst [vmem:[%s581 + $0xf8] sm:$0xff] %v644
                  %v646 = vld [vmem:[%s580 + $0x200] sm:$0xff]
                  %647 = vst [vmem:[%s581 + $0x100] sm:$0xff] %v646
                  %v648 = vld [vmem:[%s580 + $0x208] sm:$0xff]
                  %649 = vst [vmem:[%s581 + $0x108] sm:$0xff] %v648
                  %v650 = vld [vmem:[%s580 + $0x210] sm:$0xff]
                  %651 = vst [vmem:[%s581 + $0x110] sm:$0xff] %v650
                  %v652 = vld [vmem:[%s580 + $0x218] sm:$0xff]
                  %653 = vst [vmem:[%s581 + $0x118] sm:$0xff] %v652
                  %v654 = vld [vmem:[%s580 + $0x220] sm:$0xff]
                  %655 = vst [vmem:[%s581 + $0x120] sm:$0xff] %v654
                  %v656 = vld [vmem:[%s580 + $0x228] sm:$0xff]
                  %657 = vst [vmem:[%s581 + $0x128] sm:$0xff] %v656
                  %v658 = vld [vmem:[%s580 + $0x230] sm:$0xff]
                  %659 = vst [vmem:[%s581 + $0x130] sm:$0xff] %v658
                  %v660 = vld [vmem:[%s580 + $0x238] sm:$0xff]
                  %661 = vst [vmem:[%s581 + $0x138] sm:$0xff] %v660
                  %v662 = vld [vmem:[%s580 + $0x240] sm:$0xff]
                  %663 = vst [vmem:[%s581 + $0x140] sm:$0xff] %v662
                  %v664 = vld [vmem:[%s580 + $0x248] sm:$0xff]
                  %665 = vst [vmem:[%s581 + $0x148] sm:$0xff] %v664
                  %v666 = vld [vmem:[%s580 + $0x250] sm:$0xff]
                  %667 = vst [vmem:[%s581 + $0x150] sm:$0xff] %v666
                  %v668 = vld [vmem:[%s580 + $0x258] sm:$0xff]
                  %669 = vst [vmem:[%s581 + $0x158] sm:$0xff] %v668
                  %v670 = vld [vmem:[%s580 + $0x260] sm:$0xff]
                  %671 = vst [vmem:[%s581 + $0x160] sm:$0xff] %v670
                  %v672 = vld [vmem:[%s580 + $0x268] sm:$0xff]
                  %673 = vst [vmem:[%s581 + $0x168] sm:$0xff] %v672
                  %v674 = vld [vmem:[%s580 + $0x270] sm:$0xff]
                  %675 = vst [vmem:[%s581 + $0x170] sm:$0xff] %v674
                  %v676 = vld [vmem:[%s580 + $0x278] sm:$0xff]
                  %677 = vst [vmem:[%s581 + $0x178] sm:$0xff] %v676
                  %v678 = vld [vmem:[%s580 + $0x300] sm:$0xff]
                  %679 = vst [vmem:[%s581 + $0x180] sm:$0xff] %v678
                  %v680 = vld [vmem:[%s580 + $0x308] sm:$0xff]
                  %681 = vst [vmem:[%s581 + $0x188] sm:$0xff] %v680
                  %v682 = vld [vmem:[%s580 + $0x310] sm:$0xff]
                  %683 = vst [vmem:[%s581 + $0x190] sm:$0xff] %v682
                  %v684 = vld [vmem:[%s580 + $0x318] sm:$0xff]
                  %685 = vst [vmem:[%s581 + $0x198] sm:$0xff] %v684
                  %v686 = vld [vmem:[%s580 + $0x320] sm:$0xff]
                  %687 = vst [vmem:[%s581 + $0x1a0] sm:$0xff] %v686
                  %v688 = vld [vmem:[%s580 + $0x328] sm:$0xff]
                  %689 = vst [vmem:[%s581 + $0x1a8] sm:$0xff] %v688
                  %v690 = vld [vmem:[%s580 + $0x330] sm:$0xff]
                  %691 = vst [vmem:[%s581 + $0x1b0] sm:$0xff] %v690
                  %v692 = vld [vmem:[%s580 + $0x338] sm:$0xff]
                  %693 = vst [vmem:[%s581 + $0x1b8] sm:$0xff] %v692
                  %v694 = vld [vmem:[%s580 + $0x340] sm:$0xff]
                  %695 = vst [vmem:[%s581 + $0x1c0] sm:$0xff] %v694
                  %v696 = vld [vmem:[%s580 + $0x348] sm:$0xff]
                  %697 = vst [vmem:[%s581 + $0x1c8] sm:$0xff] %v696
                  %v698 = vld [vmem:[%s580 + $0x350] sm:$0xff]
                  %699 = vst [vmem:[%s581 + $0x1d0] sm:$0xff] %v698
                  %v700 = vld [vmem:[%s580 + $0x358] sm:$0xff]
                  %701 = vst [vmem:[%s581 + $0x1d8] sm:$0xff] %v700
                  %v702 = vld [vmem:[%s580 + $0x360] sm:$0xff]
                  %703 = vst [vmem:[%s581 + $0x1e0] sm:$0xff] %v702
                  %v704 = vld [vmem:[%s580 + $0x368] sm:$0xff]
                  %705 = vst [vmem:[%s581 + $0x1e8] sm:$0xff] %v704
                  %v706 = vld [vmem:[%s580 + $0x370] sm:$0xff]
                  %707 = vst [vmem:[%s581 + $0x1f0] sm:$0xff] %v706
                  %v708 = vld [vmem:[%s580 + $0x378] sm:$0xff]
                  %709 = vst [vmem:[%s581 + $0x1f8] sm:$0xff] %v708
                $region90: #{light_hyper_former_forward.4} parent=84 // loop_footer
                  %s579 = sadd.s32 1, %s575
                $region91: #{light_hyper_former_forward.4} parent=84 // loop_footer_branch
                  %574 = sbr.rel target = $region87
                $region92: #{light_hyper_former_forward.4} parent=84 // loop_exit
                  _
              $region85: #{light_hyper_former_forward.4} parent=69 // pred_fallthru
                _
              // Predicated region
              $region93: #{light_hyper_former_forward.4} parent=69 // pred_check
                _
              $region94: #{light_hyper_former_forward.4} parent=69 // pred_check_branch
                %711 = sbr.rel target = $region96
              $region95: #{light_hyper_former_forward.4} parent=69 // pred_region
                _
              $region96: #{light_hyper_former_forward.4} parent=69 // pred_fallthru
                _
            $region70: #{light_hyper_former_forward.4} parent=65 // pred_fallthru
              _
            // Predicated region
            $region71: #{light_hyper_former_forward.4} parent=65 // pred_check
              _
            $region72: #{light_hyper_former_forward.4} parent=65 // pred_check_branch
              %434 = sbr.rel target = $region74
            $region73: #{light_hyper_former_forward.4} parent=65 // pred_region
              loop: start=0, step=1, limit=1
              $region75: #{light_hyper_former_forward.4} parent=73 // loop_pre_header
                _
              $region76: #{light_hyper_former_forward.4} parent=73 // loop_header
                %s437 = sphi 0, %s441
                %p438 = scmp.ge.s32.totalorder %s437, 1
                %s442 = sphi %s428, %s428
                %s443 = sphi %s425, %s425
              $region77: #{light_hyper_former_forward.4} parent=73 // loop_header_branch
                %440 = sbr.rel (%p438) target = $region81
              $region78: #{light_hyper_former_forward.4} parent=73 // loop_body
                %v444 = vld [vmem:[%s442] sm:$0xff]
                %445 = vst [vmem:[%s443] sm:$0xff] %v444
                %v446 = vld [vmem:[%s442 + $0x8] sm:$0xff]
                %447 = vst [vmem:[%s443 + $0x8] sm:$0xff] %v446
                %v448 = vld [vmem:[%s442 + $0x10] sm:$0xff]
                %449 = vst [vmem:[%s443 + $0x10] sm:$0xff] %v448
                %v450 = vld [vmem:[%s442 + $0x18] sm:$0xff]
                %451 = vst [vmem:[%s443 + $0x18] sm:$0xff] %v450
                %v452 = vld [vmem:[%s442 + $0x20] sm:$0xff]
                %453 = vst [vmem:[%s443 + $0x20] sm:$0xff] %v452
                %v454 = vld [vmem:[%s442 + $0x28] sm:$0xff]
                %455 = vst [vmem:[%s443 + $0x28] sm:$0xff] %v454
                %v456 = vld [vmem:[%s442 + $0x30] sm:$0xff]
                %457 = vst [vmem:[%s443 + $0x30] sm:$0xff] %v456
                %v458 = vld [vmem:[%s442 + $0x38] sm:$0xff]
                %459 = vst [vmem:[%s443 + $0x38] sm:$0xff] %v458
                %v460 = vld [vmem:[%s442 + $0x40] sm:$0xff]
                %461 = vst [vmem:[%s443 + $0x40] sm:$0xff] %v460
                %v462 = vld [vmem:[%s442 + $0x48] sm:$0xff]
                %463 = vst [vmem:[%s443 + $0x48] sm:$0xff] %v462
                %v464 = vld [vmem:[%s442 + $0x50] sm:$0xff]
                %465 = vst [vmem:[%s443 + $0x50] sm:$0xff] %v464
                %v466 = vld [vmem:[%s442 + $0x58] sm:$0xff]
                %467 = vst [vmem:[%s443 + $0x58] sm:$0xff] %v466
                %v468 = vld [vmem:[%s442 + $0x60] sm:$0xff]
                %469 = vst [vmem:[%s443 + $0x60] sm:$0xff] %v468
                %v470 = vld [vmem:[%s442 + $0x68] sm:$0xff]
                %471 = vst [vmem:[%s443 + $0x68] sm:$0xff] %v470
                %v472 = vld [vmem:[%s442 + $0x70] sm:$0xff]
                %473 = vst [vmem:[%s443 + $0x70] sm:$0xff] %v472
                %v474 = vld [vmem:[%s442 + $0x78] sm:$0xff]
                %475 = vst [vmem:[%s443 + $0x78] sm:$0xff] %v474
                %v476 = vld [vmem:[%s442 + $0x100] sm:$0xff]
                %477 = vst [vmem:[%s443 + $0x80] sm:$0xff] %v476
                %v478 = vld [vmem:[%s442 + $0x108] sm:$0xff]
                %479 = vst [vmem:[%s443 + $0x88] sm:$0xff] %v478
                %v480 = vld [vmem:[%s442 + $0x110] sm:$0xff]
                %481 = vst [vmem:[%s443 + $0x90] sm:$0xff] %v480
                %v482 = vld [vmem:[%s442 + $0x118] sm:$0xff]
                %483 = vst [vmem:[%s443 + $0x98] sm:$0xff] %v482
                %v484 = vld [vmem:[%s442 + $0x120] sm:$0xff]
                %485 = vst [vmem:[%s443 + $0xa0] sm:$0xff] %v484
                %v486 = vld [vmem:[%s442 + $0x128] sm:$0xff]
                %487 = vst [vmem:[%s443 + $0xa8] sm:$0xff] %v486
                %v488 = vld [vmem:[%s442 + $0x130] sm:$0xff]
                %489 = vst [vmem:[%s443 + $0xb0] sm:$0xff] %v488
                %v490 = vld [vmem:[%s442 + $0x138] sm:$0xff]
                %491 = vst [vmem:[%s443 + $0xb8] sm:$0xff] %v490
                %v492 = vld [vmem:[%s442 + $0x140] sm:$0xff]
                %493 = vst [vmem:[%s443 + $0xc0] sm:$0xff] %v492
                %v494 = vld [vmem:[%s442 + $0x148] sm:$0xff]
                %495 = vst [vmem:[%s443 + $0xc8] sm:$0xff] %v494
                %v496 = vld [vmem:[%s442 + $0x150] sm:$0xff]
                %497 = vst [vmem:[%s443 + $0xd0] sm:$0xff] %v496
                %v498 = vld [vmem:[%s442 + $0x158] sm:$0xff]
                %499 = vst [vmem:[%s443 + $0xd8] sm:$0xff] %v498
                %v500 = vld [vmem:[%s442 + $0x160] sm:$0xff]
                %501 = vst [vmem:[%s443 + $0xe0] sm:$0xff] %v500
                %v502 = vld [vmem:[%s442 + $0x168] sm:$0xff]
                %503 = vst [vmem:[%s443 + $0xe8] sm:$0xff] %v502
                %v504 = vld [vmem:[%s442 + $0x170] sm:$0xff]
                %505 = vst [vmem:[%s443 + $0xf0] sm:$0xff] %v504
                %v506 = vld [vmem:[%s442 + $0x178] sm:$0xff]
                %507 = vst [vmem:[%s443 + $0xf8] sm:$0xff] %v506
                %v508 = vld [vmem:[%s442 + $0x200] sm:$0xff]
                %509 = vst [vmem:[%s443 + $0x100] sm:$0xff] %v508
                %v510 = vld [vmem:[%s442 + $0x208] sm:$0xff]
                %511 = vst [vmem:[%s443 + $0x108] sm:$0xff] %v510
                %v512 = vld [vmem:[%s442 + $0x210] sm:$0xff]
                %513 = vst [vmem:[%s443 + $0x110] sm:$0xff] %v512
                %v514 = vld [vmem:[%s442 + $0x218] sm:$0xff]
                %515 = vst [vmem:[%s443 + $0x118] sm:$0xff] %v514
                %v516 = vld [vmem:[%s442 + $0x220] sm:$0xff]
                %517 = vst [vmem:[%s443 + $0x120] sm:$0xff] %v516
                %v518 = vld [vmem:[%s442 + $0x228] sm:$0xff]
                %519 = vst [vmem:[%s443 + $0x128] sm:$0xff] %v518
                %v520 = vld [vmem:[%s442 + $0x230] sm:$0xff]
                %521 = vst [vmem:[%s443 + $0x130] sm:$0xff] %v520
                %v522 = vld [vmem:[%s442 + $0x238] sm:$0xff]
                %523 = vst [vmem:[%s443 + $0x138] sm:$0xff] %v522
                %v524 = vld [vmem:[%s442 + $0x240] sm:$0xff]
                %525 = vst [vmem:[%s443 + $0x140] sm:$0xff] %v524
                %v526 = vld [vmem:[%s442 + $0x248] sm:$0xff]
                %527 = vst [vmem:[%s443 + $0x148] sm:$0xff] %v526
                %v528 = vld [vmem:[%s442 + $0x250] sm:$0xff]
                %529 = vst [vmem:[%s443 + $0x150] sm:$0xff] %v528
                %v530 = vld [vmem:[%s442 + $0x258] sm:$0xff]
                %531 = vst [vmem:[%s443 + $0x158] sm:$0xff] %v530
                %v532 = vld [vmem:[%s442 + $0x260] sm:$0xff]
                %533 = vst [vmem:[%s443 + $0x160] sm:$0xff] %v532
                %v534 = vld [vmem:[%s442 + $0x268] sm:$0xff]
                %535 = vst [vmem:[%s443 + $0x168] sm:$0xff] %v534
                %v536 = vld [vmem:[%s442 + $0x270] sm:$0xff]
                %537 = vst [vmem:[%s443 + $0x170] sm:$0xff] %v536
                %v538 = vld [vmem:[%s442 + $0x278] sm:$0xff]
                %539 = vst [vmem:[%s443 + $0x178] sm:$0xff] %v538
                %v540 = vld [vmem:[%s442 + $0x300] sm:$0xff]
                %541 = vst [vmem:[%s443 + $0x180] sm:$0xff] %v540
                %v542 = vld [vmem:[%s442 + $0x308] sm:$0xff]
                %543 = vst [vmem:[%s443 + $0x188] sm:$0xff] %v542
                %v544 = vld [vmem:[%s442 + $0x310] sm:$0xff]
                %545 = vst [vmem:[%s443 + $0x190] sm:$0xff] %v544
                %v546 = vld [vmem:[%s442 + $0x318] sm:$0xff]
                %547 = vst [vmem:[%s443 + $0x198] sm:$0xff] %v546
                %v548 = vld [vmem:[%s442 + $0x320] sm:$0xff]
                %549 = vst [vmem:[%s443 + $0x1a0] sm:$0xff] %v548
                %v550 = vld [vmem:[%s442 + $0x328] sm:$0xff]
                %551 = vst [vmem:[%s443 + $0x1a8] sm:$0xff] %v550
                %v552 = vld [vmem:[%s442 + $0x330] sm:$0xff]
                %553 = vst [vmem:[%s443 + $0x1b0] sm:$0xff] %v552
                %v554 = vld [vmem:[%s442 + $0x338] sm:$0xff]
                %555 = vst [vmem:[%s443 + $0x1b8] sm:$0xff] %v554
                %v556 = vld [vmem:[%s442 + $0x340] sm:$0xff]
                %557 = vst [vmem:[%s443 + $0x1c0] sm:$0xff] %v556
                %v558 = vld [vmem:[%s442 + $0x348] sm:$0xff]
                %559 = vst [vmem:[%s443 + $0x1c8] sm:$0xff] %v558
                %v560 = vld [vmem:[%s442 + $0x350] sm:$0xff]
                %561 = vst [vmem:[%s443 + $0x1d0] sm:$0xff] %v560
                %v562 = vld [vmem:[%s442 + $0x358] sm:$0xff]
                %563 = vst [vmem:[%s443 + $0x1d8] sm:$0xff] %v562
                %v564 = vld [vmem:[%s442 + $0x360] sm:$0xff]
                %565 = vst [vmem:[%s443 + $0x1e0] sm:$0xff] %v564
                %v566 = vld [vmem:[%s442 + $0x368] sm:$0xff]
                %567 = vst [vmem:[%s443 + $0x1e8] sm:$0xff] %v566
                %v568 = vld [vmem:[%s442 + $0x370] sm:$0xff]
                %569 = vst [vmem:[%s443 + $0x1f0] sm:$0xff] %v568
                %v570 = vld [vmem:[%s442 + $0x378] sm:$0xff]
                %571 = vst [vmem:[%s443 + $0x1f8] sm:$0xff] %v570
              $region79: #{light_hyper_former_forward.4} parent=73 // loop_footer
                %s441 = sadd.s32 1, %s437
              $region80: #{light_hyper_former_forward.4} parent=73 // loop_footer_branch
                %436 = sbr.rel target = $region76
              $region81: #{light_hyper_former_forward.4} parent=73 // loop_exit
                _
            $region74: #{light_hyper_former_forward.4} parent=65 // pred_fallthru
              _
          $region66: #{light_hyper_former_forward.4} parent=61 // pred_fallthru
            _
          %712 = vnop
        $region62: #{light_hyper_former_forward.4} parent=19 // pred_fallthru
          _
      $region20: #{light_hyper_former_forward.4} parent=5 // pred_fallthru
        _
      %p713 = scmp.le.s32.totalorder 1, %s9
      %p714 = scmp.lt.s32.totalorder %s9, 3
      %p715 = pnand %p713, %p714
      %p716 = pneg %p715
      // Predicated region
      $region97: #{light_hyper_former_forward.4} parent=5 // pred_check
        _
      $region98: #{light_hyper_former_forward.4} parent=5 // pred_check_branch
        %718 = sbr.rel (%p715) target = $region100
      $region99: #{light_hyper_former_forward.4} parent=5 // pred_region
        %s719 = ssub.s32 %s9, 1
        %s720 = sand.u32 %s22, 1
        %s721 = sand.u32 %s22, 1
        %s722 = smul.addr %s721, 512
        %s723 = scalar_lea.vmem [#allocation2], %s722
        // Predicated region
        $region101: #{light_hyper_former_forward.4} parent=99 // pred_check
          %p724 = pneg %p35
        $region102: #{light_hyper_former_forward.4} parent=99 // pred_check_branch
          %726 = sbr.rel (%p724) target = $region104
        $region103: #{light_hyper_former_forward.4} parent=99 // pred_region
          _
        $region104: #{light_hyper_former_forward.4} parent=99 // pred_fallthru
          _
        %s727 = sand.u32 %s48, 1
        %s728 = sand.u32 %s48, 1
        %s729 = smul.addr %s728, 512
        %s730 = scalar_lea.vmem [#allocation3], %s729
        // Predicated region
        $region105: #{light_hyper_former_forward.4} parent=99 // pred_check
          %p731 = pneg %p61
        $region106: #{light_hyper_former_forward.4} parent=99 // pred_check_branch
          %733 = sbr.rel (%p731) target = $region108
        $region107: #{light_hyper_former_forward.4} parent=99 // pred_region
          _
        $region108: #{light_hyper_former_forward.4} parent=99 // pred_fallthru
          _
        %s734 = sand.u32 %s22, 1
        %s735 = sand.u32 %s22, 1
        %s736 = smul.addr %s735, 512
        %s737 = scalar_lea.vmem [#allocation2], %s736
        %p738 = pneg %p35
        %p739 = pneg %p32
        %s740 = sand.u32 %s48, 1
        %s741 = sand.u32 %s48, 1
        %s742 = smul.addr %s741, 512
        %s743 = scalar_lea.vmem [#allocation3], %s742
        %p744 = pneg %p61
        %p745 = pneg %p58
        %p746 = pneg %p82
        %p747 = pneg %p79
        %p748 = pneg %p103
        %p749 = pneg %p100
        %s750 = smul.u32 16, %s14
        %s751 = smul.u32 16, %s14
        %p753 = scmp.eq.s32.totalorder %s14, 0
        // Predicated region
        $region109: #{light_hyper_former_forward.4} parent=99 // pred_check
          %p754 = pneg %p753
        $region110: #{light_hyper_former_forward.4} parent=99 // pred_check_branch
          %756 = sbr.rel (%p754) target = $region112
        $region111: #{light_hyper_former_forward.4} parent=99 // pred_region
          %vm757 = vcmask 130048
          %758 = vst.msk [vmem:[%s3] sm:$0xff] %vm757, 0.0
          %759 = vst.msk [vmem:[%s3 + $0x8] sm:$0xff] %vm757, 0.0
          %760 = vst.msk [vmem:[%s3 + $0x10] sm:$0xff] %vm757, 0.0
          %761 = vst.msk [vmem:[%s3 + $0x18] sm:$0xff] %vm757, 0.0
          %762 = vst.msk [vmem:[%s3 + $0x20] sm:$0xff] %vm757, 0.0
          %763 = vst.msk [vmem:[%s3 + $0x28] sm:$0xff] %vm757, 0.0
          %764 = vst.msk [vmem:[%s3 + $0x30] sm:$0xff] %vm757, 0.0
          %765 = vst.msk [vmem:[%s3 + $0x38] sm:$0xff] %vm757, 0.0
          %766 = vst.msk [vmem:[%s3 + $0x40] sm:$0xff] %vm757, 0.0
          %767 = vst.msk [vmem:[%s3 + $0x48] sm:$0xff] %vm757, 0.0
          %768 = vst.msk [vmem:[%s3 + $0x50] sm:$0xff] %vm757, 0.0
          %769 = vst.msk [vmem:[%s3 + $0x58] sm:$0xff] %vm757, 0.0
          %770 = vst.msk [vmem:[%s3 + $0x60] sm:$0xff] %vm757, 0.0
          %771 = vst.msk [vmem:[%s3 + $0x68] sm:$0xff] %vm757, 0.0
          %772 = vst.msk [vmem:[%s3 + $0x70] sm:$0xff] %vm757, 0.0
          %773 = vst.msk [vmem:[%s3 + $0x78] sm:$0xff] %vm757, 0.0
          %774 = vst.msk [vmem:[%s3 + $0x80] sm:$0xff] %vm757, 0.0
          %775 = vst.msk [vmem:[%s3 + $0x88] sm:$0xff] %vm757, 0.0
          %776 = vst.msk [vmem:[%s3 + $0x90] sm:$0xff] %vm757, 0.0
          %777 = vst.msk [vmem:[%s3 + $0x98] sm:$0xff] %vm757, 0.0
          %778 = vst.msk [vmem:[%s3 + $0xa0] sm:$0xff] %vm757, 0.0
          %779 = vst.msk [vmem:[%s3 + $0xa8] sm:$0xff] %vm757, 0.0
          %780 = vst.msk [vmem:[%s3 + $0xb0] sm:$0xff] %vm757, 0.0
          %781 = vst.msk [vmem:[%s3 + $0xb8] sm:$0xff] %vm757, 0.0
          %782 = vst.msk [vmem:[%s3 + $0xc0] sm:$0xff] %vm757, 0.0
          %783 = vst.msk [vmem:[%s3 + $0xc8] sm:$0xff] %vm757, 0.0
          %784 = vst.msk [vmem:[%s3 + $0xd0] sm:$0xff] %vm757, 0.0
          %785 = vst.msk [vmem:[%s3 + $0xd8] sm:$0xff] %vm757, 0.0
          %786 = vst.msk [vmem:[%s3 + $0xe0] sm:$0xff] %vm757, 0.0
          %787 = vst.msk [vmem:[%s3 + $0xe8] sm:$0xff] %vm757, 0.0
          %788 = vst.msk [vmem:[%s3 + $0xf0] sm:$0xff] %vm757, 0.0
          %789 = vst.msk [vmem:[%s3 + $0xf8] sm:$0xff] %vm757, 0.0
          %790 = vst.msk [vmem:[%s3 + $0x100] sm:$0xff] %vm757, 0.0
          %791 = vst.msk [vmem:[%s3 + $0x108] sm:$0xff] %vm757, 0.0
          %792 = vst.msk [vmem:[%s3 + $0x110] sm:$0xff] %vm757, 0.0
          %793 = vst.msk [vmem:[%s3 + $0x118] sm:$0xff] %vm757, 0.0
          %794 = vst.msk [vmem:[%s3 + $0x120] sm:$0xff] %vm757, 0.0
          %795 = vst.msk [vmem:[%s3 + $0x128] sm:$0xff] %vm757, 0.0
          %796 = vst.msk [vmem:[%s3 + $0x130] sm:$0xff] %vm757, 0.0
          %797 = vst.msk [vmem:[%s3 + $0x138] sm:$0xff] %vm757, 0.0
          %798 = vst.msk [vmem:[%s3 + $0x140] sm:$0xff] %vm757, 0.0
          %799 = vst.msk [vmem:[%s3 + $0x148] sm:$0xff] %vm757, 0.0
          %800 = vst.msk [vmem:[%s3 + $0x150] sm:$0xff] %vm757, 0.0
          %801 = vst.msk [vmem:[%s3 + $0x158] sm:$0xff] %vm757, 0.0
          %802 = vst.msk [vmem:[%s3 + $0x160] sm:$0xff] %vm757, 0.0
          %803 = vst.msk [vmem:[%s3 + $0x168] sm:$0xff] %vm757, 0.0
          %804 = vst.msk [vmem:[%s3 + $0x170] sm:$0xff] %vm757, 0.0
          %805 = vst.msk [vmem:[%s3 + $0x178] sm:$0xff] %vm757, 0.0
          %806 = vst.msk [vmem:[%s3 + $0x180] sm:$0xff] %vm757, 0.0
          %807 = vst.msk [vmem:[%s3 + $0x188] sm:$0xff] %vm757, 0.0
          %808 = vst.msk [vmem:[%s3 + $0x190] sm:$0xff] %vm757, 0.0
          %809 = vst.msk [vmem:[%s3 + $0x198] sm:$0xff] %vm757, 0.0
          %810 = vst.msk [vmem:[%s3 + $0x1a0] sm:$0xff] %vm757, 0.0
          %811 = vst.msk [vmem:[%s3 + $0x1a8] sm:$0xff] %vm757, 0.0
          %812 = vst.msk [vmem:[%s3 + $0x1b0] sm:$0xff] %vm757, 0.0
          %813 = vst.msk [vmem:[%s3 + $0x1b8] sm:$0xff] %vm757, 0.0
          %814 = vst.msk [vmem:[%s3 + $0x1c0] sm:$0xff] %vm757, 0.0
          %815 = vst.msk [vmem:[%s3 + $0x1c8] sm:$0xff] %vm757, 0.0
          %816 = vst.msk [vmem:[%s3 + $0x1d0] sm:$0xff] %vm757, 0.0
          %817 = vst.msk [vmem:[%s3 + $0x1d8] sm:$0xff] %vm757, 0.0
          %818 = vst.msk [vmem:[%s3 + $0x1e0] sm:$0xff] %vm757, 0.0
          %819 = vst.msk [vmem:[%s3 + $0x1e8] sm:$0xff] %vm757, 0.0
          %820 = vst.msk [vmem:[%s3 + $0x1f0] sm:$0xff] %vm757, 0.0
          %821 = vst.msk [vmem:[%s3 + $0x1f8] sm:$0xff] %vm757, 0.0
        $region112: #{light_hyper_former_forward.4} parent=99 // pred_fallthru
          _
        %v822 = vld [vmem:[%s723] sm:$0xff]
        %v823 = vld [vmem:[%s723 + $0x8] sm:$0xff]
        %v824 = vld [vmem:[%s723 + $0x10] sm:$0xff]
        %v825 = vld [vmem:[%s723 + $0x18] sm:$0xff]
        %v826 = vld [vmem:[%s723 + $0x20] sm:$0xff]
        %v827 = vld [vmem:[%s723 + $0x28] sm:$0xff]
        %v828 = vld [vmem:[%s723 + $0x30] sm:$0xff]
        %v829 = vld [vmem:[%s723 + $0x38] sm:$0xff]
        %v830 = vld [vmem:[%s723 + $0x40] sm:$0xff]
        %v831 = vld [vmem:[%s723 + $0x48] sm:$0xff]
        %v832 = vld [vmem:[%s723 + $0x50] sm:$0xff]
        %v833 = vld [vmem:[%s723 + $0x58] sm:$0xff]
        %v834 = vld [vmem:[%s723 + $0x60] sm:$0xff]
        %v835 = vld [vmem:[%s723 + $0x68] sm:$0xff]
        %v836 = vld [vmem:[%s723 + $0x70] sm:$0xff]
        %v837 = vld [vmem:[%s723 + $0x78] sm:$0xff]
        %v838 = vld [vmem:[%s723 + $0x80] sm:$0xff]
        %v839 = vld [vmem:[%s723 + $0x88] sm:$0xff]
        %v840 = vld [vmem:[%s723 + $0x90] sm:$0xff]
        %v841 = vld [vmem:[%s723 + $0x98] sm:$0xff]
        %v842 = vld [vmem:[%s723 + $0xa0] sm:$0xff]
        %v843 = vld [vmem:[%s723 + $0xa8] sm:$0xff]
        %v844 = vld [vmem:[%s723 + $0xb0] sm:$0xff]
        %v845 = vld [vmem:[%s723 + $0xb8] sm:$0xff]
        %v846 = vld [vmem:[%s723 + $0xc0] sm:$0xff]
        %v847 = vld [vmem:[%s723 + $0xc8] sm:$0xff]
        %v848 = vld [vmem:[%s723 + $0xd0] sm:$0xff]
        %v849 = vld [vmem:[%s723 + $0xd8] sm:$0xff]
        %v850 = vld [vmem:[%s723 + $0xe0] sm:$0xff]
        %v851 = vld [vmem:[%s723 + $0xe8] sm:$0xff]
        %v852 = vld [vmem:[%s723 + $0xf0] sm:$0xff]
        %v853 = vld [vmem:[%s723 + $0xf8] sm:$0xff]
        %v854 = vld [vmem:[%s723 + $0x100] sm:$0xff]
        %v855 = vld [vmem:[%s723 + $0x108] sm:$0xff]
        %v856 = vld [vmem:[%s723 + $0x110] sm:$0xff]
        %v857 = vld [vmem:[%s723 + $0x118] sm:$0xff]
        %v858 = vld [vmem:[%s723 + $0x120] sm:$0xff]
        %v859 = vld [vmem:[%s723 + $0x128] sm:$0xff]
        %v860 = vld [vmem:[%s723 + $0x130] sm:$0xff]
        %v861 = vld [vmem:[%s723 + $0x138] sm:$0xff]
        %v862 = vld [vmem:[%s723 + $0x140] sm:$0xff]
        %v863 = vld [vmem:[%s723 + $0x148] sm:$0xff]
        %v864 = vld [vmem:[%s723 + $0x150] sm:$0xff]
        %v865 = vld [vmem:[%s723 + $0x158] sm:$0xff]
        %v866 = vld [vmem:[%s723 + $0x160] sm:$0xff]
        %v867 = vld [vmem:[%s723 + $0x168] sm:$0xff]
        %v868 = vld [vmem:[%s723 + $0x170] sm:$0xff]
        %v869 = vld [vmem:[%s723 + $0x178] sm:$0xff]
        %v870 = vld [vmem:[%s723 + $0x180] sm:$0xff]
        %v871 = vld [vmem:[%s723 + $0x188] sm:$0xff]
        %v872 = vld [vmem:[%s723 + $0x190] sm:$0xff]
        %v873 = vld [vmem:[%s723 + $0x198] sm:$0xff]
        %v874 = vld [vmem:[%s723 + $0x1a0] sm:$0xff]
        %v875 = vld [vmem:[%s723 + $0x1a8] sm:$0xff]
        %v876 = vld [vmem:[%s723 + $0x1b0] sm:$0xff]
        %v877 = vld [vmem:[%s723 + $0x1b8] sm:$0xff]
        %v878 = vld [vmem:[%s723 + $0x1c0] sm:$0xff]
        %v879 = vld [vmem:[%s723 + $0x1c8] sm:$0xff]
        %v880 = vld [vmem:[%s723 + $0x1d0] sm:$0xff]
        %v881 = vld [vmem:[%s723 + $0x1d8] sm:$0xff]
        %v882 = vld [vmem:[%s723 + $0x1e0] sm:$0xff]
        %v883 = vld [vmem:[%s723 + $0x1e8] sm:$0xff]
        %v884 = vld [vmem:[%s723 + $0x1f0] sm:$0xff]
        %v885 = vld [vmem:[%s723 + $0x1f8] sm:$0xff]
        %v886 = vld [vmem:[%s730] sm:$0xff]
        %v887 = vld [vmem:[%s730 + $0x8] sm:$0xff]
        %v888 = vld [vmem:[%s730 + $0x10] sm:$0xff]
        %v889 = vld [vmem:[%s730 + $0x18] sm:$0xff]
        %v890 = vld [vmem:[%s730 + $0x20] sm:$0xff]
        %v891 = vld [vmem:[%s730 + $0x28] sm:$0xff]
        %v892 = vld [vmem:[%s730 + $0x30] sm:$0xff]
        %v893 = vld [vmem:[%s730 + $0x38] sm:$0xff]
        %v894 = vld [vmem:[%s730 + $0x40] sm:$0xff]
        %v895 = vld [vmem:[%s730 + $0x48] sm:$0xff]
        %v896 = vld [vmem:[%s730 + $0x50] sm:$0xff]
        %v897 = vld [vmem:[%s730 + $0x58] sm:$0xff]
        %v898 = vld [vmem:[%s730 + $0x60] sm:$0xff]
        %v899 = vld [vmem:[%s730 + $0x68] sm:$0xff]
        %v900 = vld [vmem:[%s730 + $0x70] sm:$0xff]
        %v901 = vld [vmem:[%s730 + $0x78] sm:$0xff]
        %v902 = vld [vmem:[%s730 + $0x80] sm:$0xff]
        %v903 = vld [vmem:[%s730 + $0x88] sm:$0xff]
        %v904 = vld [vmem:[%s730 + $0x90] sm:$0xff]
        %v905 = vld [vmem:[%s730 + $0x98] sm:$0xff]
        %v906 = vld [vmem:[%s730 + $0xa0] sm:$0xff]
        %v907 = vld [vmem:[%s730 + $0xa8] sm:$0xff]
        %v908 = vld [vmem:[%s730 + $0xb0] sm:$0xff]
        %v909 = vld [vmem:[%s730 + $0xb8] sm:$0xff]
        %v910 = vld [vmem:[%s730 + $0xc0] sm:$0xff]
        %v911 = vld [vmem:[%s730 + $0xc8] sm:$0xff]
        %v912 = vld [vmem:[%s730 + $0xd0] sm:$0xff]
        %v913 = vld [vmem:[%s730 + $0xd8] sm:$0xff]
        %v914 = vld [vmem:[%s730 + $0xe0] sm:$0xff]
        %v915 = vld [vmem:[%s730 + $0xe8] sm:$0xff]
        %v916 = vld [vmem:[%s730 + $0xf0] sm:$0xff]
        %v917 = vld [vmem:[%s730 + $0xf8] sm:$0xff]
        %v918 = vld [vmem:[%s730 + $0x100] sm:$0xff]
        %v919 = vld [vmem:[%s730 + $0x108] sm:$0xff]
        %v920 = vld [vmem:[%s730 + $0x110] sm:$0xff]
        %v921 = vld [vmem:[%s730 + $0x118] sm:$0xff]
        %v922 = vld [vmem:[%s730 + $0x120] sm:$0xff]
        %v923 = vld [vmem:[%s730 + $0x128] sm:$0xff]
        %v924 = vld [vmem:[%s730 + $0x130] sm:$0xff]
        %v925 = vld [vmem:[%s730 + $0x138] sm:$0xff]
        %v926 = vld [vmem:[%s730 + $0x140] sm:$0xff]
        %v927 = vld [vmem:[%s730 + $0x148] sm:$0xff]
        %v928 = vld [vmem:[%s730 + $0x150] sm:$0xff]
        %v929 = vld [vmem:[%s730 + $0x158] sm:$0xff]
        %v930 = vld [vmem:[%s730 + $0x160] sm:$0xff]
        %v931 = vld [vmem:[%s730 + $0x168] sm:$0xff]
        %v932 = vld [vmem:[%s730 + $0x170] sm:$0xff]
        %v933 = vld [vmem:[%s730 + $0x178] sm:$0xff]
        %v934 = vld [vmem:[%s730 + $0x180] sm:$0xff]
        %v935 = vld [vmem:[%s730 + $0x188] sm:$0xff]
        %v936 = vld [vmem:[%s730 + $0x190] sm:$0xff]
        %v937 = vld [vmem:[%s730 + $0x198] sm:$0xff]
        %v938 = vld [vmem:[%s730 + $0x1a0] sm:$0xff]
        %v939 = vld [vmem:[%s730 + $0x1a8] sm:$0xff]
        %v940 = vld [vmem:[%s730 + $0x1b0] sm:$0xff]
        %v941 = vld [vmem:[%s730 + $0x1b8] sm:$0xff]
        %v942 = vld [vmem:[%s730 + $0x1c0] sm:$0xff]
        %v943 = vld [vmem:[%s730 + $0x1c8] sm:$0xff]
        %v944 = vld [vmem:[%s730 + $0x1d0] sm:$0xff]
        %v945 = vld [vmem:[%s730 + $0x1d8] sm:$0xff]
        %v946 = vld [vmem:[%s730 + $0x1e0] sm:$0xff]
        %v947 = vld [vmem:[%s730 + $0x1e8] sm:$0xff]
        %v948 = vld [vmem:[%s730 + $0x1f0] sm:$0xff]
        %v949 = vld [vmem:[%s730 + $0x1f8] sm:$0xff]
        %v950 = vlaneseq
        %v951 = vand.u32 %v950, 127
        %vm952 = vcmp.eq.s32.totalorder %v951, 0
        %v953 = vsel %vm952, 1, 0
        %v954 = vcvt.s32.f32 %v953
        %v955 = vmul.f32 %v822, %v954
        %v956 = vmul.f32 %v823, %v954
        %v957 = vmul.f32 %v824, %v954
        %v958 = vmul.f32 %v825, %v954
        %v959 = vmul.f32 %v826, %v954
        %v960 = vmul.f32 %v827, %v954
        %v961 = vmul.f32 %v828, %v954
        %v962 = vmul.f32 %v829, %v954
        %v963 = vmul.f32 %v830, %v954
        %v964 = vmul.f32 %v831, %v954
        %v965 = vmul.f32 %v832, %v954
        %v966 = vmul.f32 %v833, %v954
        %v967 = vmul.f32 %v834, %v954
        %v968 = vmul.f32 %v835, %v954
        %v969 = vmul.f32 %v836, %v954
        %v970 = vmul.f32 %v837, %v954
        %v971 = vmul.f32 %v838, %v954
        %v972 = vmul.f32 %v839, %v954
        %v973 = vmul.f32 %v840, %v954
        %v974 = vmul.f32 %v841, %v954
        %v975 = vmul.f32 %v842, %v954
        %v976 = vmul.f32 %v843, %v954
        %v977 = vmul.f32 %v844, %v954
        %v978 = vmul.f32 %v845, %v954
        %v979 = vmul.f32 %v846, %v954
        %v980 = vmul.f32 %v847, %v954
        %v981 = vmul.f32 %v848, %v954
        %v982 = vmul.f32 %v849, %v954
        %v983 = vmul.f32 %v850, %v954
        %v984 = vmul.f32 %v851, %v954
        %v985 = vmul.f32 %v852, %v954
        %v986 = vmul.f32 %v853, %v954
        %v987 = vmul.f32 %v854, %v954
        %v988 = vmul.f32 %v855, %v954
        %v989 = vmul.f32 %v856, %v954
        %v990 = vmul.f32 %v857, %v954
        %v991 = vmul.f32 %v858, %v954
        %v992 = vmul.f32 %v859, %v954
        %v993 = vmul.f32 %v860, %v954
        %v994 = vmul.f32 %v861, %v954
        %v995 = vmul.f32 %v862, %v954
        %v996 = vmul.f32 %v863, %v954
        %v997 = vmul.f32 %v864, %v954
        %v998 = vmul.f32 %v865, %v954
        %v999 = vmul.f32 %v866, %v954
        %v1000 = vmul.f32 %v867, %v954
        %v1001 = vmul.f32 %v868, %v954
        %v1002 = vmul.f32 %v869, %v954
        %v1003 = vmul.f32 %v870, %v954
        %v1004 = vmul.f32 %v871, %v954
        %v1005 = vmul.f32 %v872, %v954
        %v1006 = vmul.f32 %v873, %v954
        %v1007 = vmul.f32 %v874, %v954
        %v1008 = vmul.f32 %v875, %v954
        %v1009 = vmul.f32 %v876, %v954
        %v1010 = vmul.f32 %v877, %v954
        %v1011 = vmul.f32 %v878, %v954
        %v1012 = vmul.f32 %v879, %v954
        %v1013 = vmul.f32 %v880, %v954
        %v1014 = vmul.f32 %v881, %v954
        %v1015 = vmul.f32 %v882, %v954
        %v1016 = vmul.f32 %v883, %v954
        %v1017 = vmul.f32 %v884, %v954
        %v1018 = vmul.f32 %v885, %v954
        %vm1019 = vcmask 130048
        %v1020 = vsel %vm1019, %v955, 0.0
        %1021 = vadd.xlane.f32.xlu0 %v1020
        %v1022 = vpop.xlane.xlu0 %1021
        %v1023 = vsel %vm1019, %v956, 0.0
        %1024 = vadd.xlane.f32.xlu0 %v1023
        %v1025 = vpop.xlane.xlu0 %1024
        %v1026 = vsel %vm1019, %v957, 0.0
        %1027 = vadd.xlane.f32.xlu0 %v1026
        %v1028 = vpop.xlane.xlu0 %1027
        %v1029 = vsel %vm1019, %v958, 0.0
        %1030 = vadd.xlane.f32.xlu0 %v1029
        %v1031 = vpop.xlane.xlu0 %1030
        %v1032 = vsel %vm1019, %v959, 0.0
        %1033 = vadd.xlane.f32.xlu0 %v1032
        %v1034 = vpop.xlane.xlu0 %1033
        %v1035 = vsel %vm1019, %v960, 0.0
        %1036 = vadd.xlane.f32.xlu0 %v1035
        %v1037 = vpop.xlane.xlu0 %1036
        %v1038 = vsel %vm1019, %v961, 0.0
        %1039 = vadd.xlane.f32.xlu0 %v1038
        %v1040 = vpop.xlane.xlu0 %1039
        %v1041 = vsel %vm1019, %v962, 0.0
        %1042 = vadd.xlane.f32.xlu0 %v1041
        %v1043 = vpop.xlane.xlu0 %1042
        %v1044 = vsel %vm1019, %v963, 0.0
        %1045 = vadd.xlane.f32.xlu0 %v1044
        %v1046 = vpop.xlane.xlu0 %1045
        %v1047 = vsel %vm1019, %v964, 0.0
        %1048 = vadd.xlane.f32.xlu0 %v1047
        %v1049 = vpop.xlane.xlu0 %1048
        %v1050 = vsel %vm1019, %v965, 0.0
        %1051 = vadd.xlane.f32.xlu0 %v1050
        %v1052 = vpop.xlane.xlu0 %1051
        %v1053 = vsel %vm1019, %v966, 0.0
        %1054 = vadd.xlane.f32.xlu0 %v1053
        %v1055 = vpop.xlane.xlu0 %1054
        %v1056 = vsel %vm1019, %v967, 0.0
        %1057 = vadd.xlane.f32.xlu0 %v1056
        %v1058 = vpop.xlane.xlu0 %1057
        %v1059 = vsel %vm1019, %v968, 0.0
        %1060 = vadd.xlane.f32.xlu0 %v1059
        %v1061 = vpop.xlane.xlu0 %1060
        %v1062 = vsel %vm1019, %v969, 0.0
        %1063 = vadd.xlane.f32.xlu0 %v1062
        %v1064 = vpop.xlane.xlu0 %1063
        %v1065 = vsel %vm1019, %v970, 0.0
        %1066 = vadd.xlane.f32.xlu0 %v1065
        %v1067 = vpop.xlane.xlu0 %1066
        %v1068 = vsel %vm1019, %v971, 0.0
        %1069 = vadd.xlane.f32.xlu0 %v1068
        %v1070 = vpop.xlane.xlu0 %1069
        %v1071 = vsel %vm1019, %v972, 0.0
        %1072 = vadd.xlane.f32.xlu0 %v1071
        %v1073 = vpop.xlane.xlu0 %1072
        %v1074 = vsel %vm1019, %v973, 0.0
        %1075 = vadd.xlane.f32.xlu0 %v1074
        %v1076 = vpop.xlane.xlu0 %1075
        %v1077 = vsel %vm1019, %v974, 0.0
        %1078 = vadd.xlane.f32.xlu0 %v1077
        %v1079 = vpop.xlane.xlu0 %1078
        %v1080 = vsel %vm1019, %v975, 0.0
        %1081 = vadd.xlane.f32.xlu0 %v1080
        %v1082 = vpop.xlane.xlu0 %1081
        %v1083 = vsel %vm1019, %v976, 0.0
        %1084 = vadd.xlane.f32.xlu0 %v1083
        %v1085 = vpop.xlane.xlu0 %1084
        %v1086 = vsel %vm1019, %v977, 0.0
        %1087 = vadd.xlane.f32.xlu0 %v1086
        %v1088 = vpop.xlane.xlu0 %1087
        %v1089 = vsel %vm1019, %v978, 0.0
        %1090 = vadd.xlane.f32.xlu0 %v1089
        %v1091 = vpop.xlane.xlu0 %1090
        %v1092 = vsel %vm1019, %v979, 0.0
        %1093 = vadd.xlane.f32.xlu0 %v1092
        %v1094 = vpop.xlane.xlu0 %1093
        %v1095 = vsel %vm1019, %v980, 0.0
        %1096 = vadd.xlane.f32.xlu0 %v1095
        %v1097 = vpop.xlane.xlu0 %1096
        %v1098 = vsel %vm1019, %v981, 0.0
        %1099 = vadd.xlane.f32.xlu0 %v1098
        %v1100 = vpop.xlane.xlu0 %1099
        %v1101 = vsel %vm1019, %v982, 0.0
        %1102 = vadd.xlane.f32.xlu0 %v1101
        %v1103 = vpop.xlane.xlu0 %1102
        %v1104 = vsel %vm1019, %v983, 0.0
        %1105 = vadd.xlane.f32.xlu0 %v1104
        %v1106 = vpop.xlane.xlu0 %1105
        %v1107 = vsel %vm1019, %v984, 0.0
        %1108 = vadd.xlane.f32.xlu0 %v1107
        %v1109 = vpop.xlane.xlu0 %1108
        %v1110 = vsel %vm1019, %v985, 0.0
        %1111 = vadd.xlane.f32.xlu0 %v1110
        %v1112 = vpop.xlane.xlu0 %1111
        %v1113 = vsel %vm1019, %v986, 0.0
        %1114 = vadd.xlane.f32.xlu0 %v1113
        %v1115 = vpop.xlane.xlu0 %1114
        %v1116 = vsel %vm1019, %v987, 0.0
        %1117 = vadd.xlane.f32.xlu0 %v1116
        %v1118 = vpop.xlane.xlu0 %1117
        %v1119 = vsel %vm1019, %v988, 0.0
        %1120 = vadd.xlane.f32.xlu0 %v1119
        %v1121 = vpop.xlane.xlu0 %1120
        %v1122 = vsel %vm1019, %v989, 0.0
        %1123 = vadd.xlane.f32.xlu0 %v1122
        %v1124 = vpop.xlane.xlu0 %1123
        %v1125 = vsel %vm1019, %v990, 0.0
        %1126 = vadd.xlane.f32.xlu0 %v1125
        %v1127 = vpop.xlane.xlu0 %1126
        %v1128 = vsel %vm1019, %v991, 0.0
        %1129 = vadd.xlane.f32.xlu0 %v1128
        %v1130 = vpop.xlane.xlu0 %1129
        %v1131 = vsel %vm1019, %v992, 0.0
        %1132 = vadd.xlane.f32.xlu0 %v1131
        %v1133 = vpop.xlane.xlu0 %1132
        %v1134 = vsel %vm1019, %v993, 0.0
        %1135 = vadd.xlane.f32.xlu0 %v1134
        %v1136 = vpop.xlane.xlu0 %1135
        %v1137 = vsel %vm1019, %v994, 0.0
        %1138 = vadd.xlane.f32.xlu0 %v1137
        %v1139 = vpop.xlane.xlu0 %1138
        %v1140 = vsel %vm1019, %v995, 0.0
        %1141 = vadd.xlane.f32.xlu0 %v1140
        %v1142 = vpop.xlane.xlu0 %1141
        %v1143 = vsel %vm1019, %v996, 0.0
        %1144 = vadd.xlane.f32.xlu0 %v1143
        %v1145 = vpop.xlane.xlu0 %1144
        %v1146 = vsel %vm1019, %v997, 0.0
        %1147 = vadd.xlane.f32.xlu0 %v1146
        %v1148 = vpop.xlane.xlu0 %1147
        %v1149 = vsel %vm1019, %v998, 0.0
        %1150 = vadd.xlane.f32.xlu0 %v1149
        %v1151 = vpop.xlane.xlu0 %1150
        %v1152 = vsel %vm1019, %v999, 0.0
        %1153 = vadd.xlane.f32.xlu0 %v1152
        %v1154 = vpop.xlane.xlu0 %1153
        %v1155 = vsel %vm1019, %v1000, 0.0
        %1156 = vadd.xlane.f32.xlu0 %v1155
        %v1157 = vpop.xlane.xlu0 %1156
        %v1158 = vsel %vm1019, %v1001, 0.0
        %1159 = vadd.xlane.f32.xlu0 %v1158
        %v1160 = vpop.xlane.xlu0 %1159
        %v1161 = vsel %vm1019, %v1002, 0.0
        %1162 = vadd.xlane.f32.xlu0 %v1161
        %v1163 = vpop.xlane.xlu0 %1162
        %v1164 = vsel %vm1019, %v1003, 0.0
        %1165 = vadd.xlane.f32.xlu0 %v1164
        %v1166 = vpop.xlane.xlu0 %1165
        %v1167 = vsel %vm1019, %v1004, 0.0
        %1168 = vadd.xlane.f32.xlu0 %v1167
        %v1169 = vpop.xlane.xlu0 %1168
        %v1170 = vsel %vm1019, %v1005, 0.0
        %1171 = vadd.xlane.f32.xlu0 %v1170
        %v1172 = vpop.xlane.xlu0 %1171
        %v1173 = vsel %vm1019, %v1006, 0.0
        %1174 = vadd.xlane.f32.xlu0 %v1173
        %v1175 = vpop.xlane.xlu0 %1174
        %v1176 = vsel %vm1019, %v1007, 0.0
        %1177 = vadd.xlane.f32.xlu0 %v1176
        %v1178 = vpop.xlane.xlu0 %1177
        %v1179 = vsel %vm1019, %v1008, 0.0
        %1180 = vadd.xlane.f32.xlu0 %v1179
        %v1181 = vpop.xlane.xlu0 %1180
        %v1182 = vsel %vm1019, %v1009, 0.0
        %1183 = vadd.xlane.f32.xlu0 %v1182
        %v1184 = vpop.xlane.xlu0 %1183
        %v1185 = vsel %vm1019, %v1010, 0.0
        %1186 = vadd.xlane.f32.xlu0 %v1185
        %v1187 = vpop.xlane.xlu0 %1186
        %v1188 = vsel %vm1019, %v1011, 0.0
        %1189 = vadd.xlane.f32.xlu0 %v1188
        %v1190 = vpop.xlane.xlu0 %1189
        %v1191 = vsel %vm1019, %v1012, 0.0
        %1192 = vadd.xlane.f32.xlu0 %v1191
        %v1193 = vpop.xlane.xlu0 %1192
        %v1194 = vsel %vm1019, %v1013, 0.0
        %1195 = vadd.xlane.f32.xlu0 %v1194
        %v1196 = vpop.xlane.xlu0 %1195
        %v1197 = vsel %vm1019, %v1014, 0.0
        %1198 = vadd.xlane.f32.xlu0 %v1197
        %v1199 = vpop.xlane.xlu0 %1198
        %v1200 = vsel %vm1019, %v1015, 0.0
        %1201 = vadd.xlane.f32.xlu0 %v1200
        %v1202 = vpop.xlane.xlu0 %1201
        %v1203 = vsel %vm1019, %v1016, 0.0
        %1204 = vadd.xlane.f32.xlu0 %v1203
        %v1205 = vpop.xlane.xlu0 %1204
        %v1206 = vsel %vm1019, %v1017, 0.0
        %1207 = vadd.xlane.f32.xlu0 %v1206
        %v1208 = vpop.xlane.xlu0 %1207
        %v1209 = vsel %vm1019, %v1018, 0.0
        %1210 = vadd.xlane.f32.xlu0 %v1209
        %v1211 = vpop.xlane.xlu0 %1210
        %v1212 = vpack.c.bf16 %v823, %v822
        %v1213 = vpack.c.bf16 %v825, %v824
        %v1214 = vpack.c.bf16 %v827, %v826
        %v1215 = vpack.c.bf16 %v829, %v828
        %v1216 = vpack.c.bf16 %v831, %v830
        %v1217 = vpack.c.bf16 %v833, %v832
        %v1218 = vpack.c.bf16 %v835, %v834
        %v1219 = vpack.c.bf16 %v837, %v836
        %v1220 = vpack.c.bf16 %v839, %v838
        %v1221 = vpack.c.bf16 %v841, %v840
        %v1222 = vpack.c.bf16 %v843, %v842
        %v1223 = vpack.c.bf16 %v845, %v844
        %v1224 = vpack.c.bf16 %v847, %v846
        %v1225 = vpack.c.bf16 %v849, %v848
        %v1226 = vpack.c.bf16 %v851, %v850
        %v1227 = vpack.c.bf16 %v853, %v852
        %v1228 = vpack.c.bf16 %v855, %v854
        %v1229 = vpack.c.bf16 %v857, %v856
        %v1230 = vpack.c.bf16 %v859, %v858
        %v1231 = vpack.c.bf16 %v861, %v860
        %v1232 = vpack.c.bf16 %v863, %v862
        %v1233 = vpack.c.bf16 %v865, %v864
        %v1234 = vpack.c.bf16 %v867, %v866
        %v1235 = vpack.c.bf16 %v869, %v868
        %v1236 = vpack.c.bf16 %v871, %v870
        %v1237 = vpack.c.bf16 %v873, %v872
        %v1238 = vpack.c.bf16 %v875, %v874
        %v1239 = vpack.c.bf16 %v877, %v876
        %v1240 = vpack.c.bf16 %v879, %v878
        %v1241 = vpack.c.bf16 %v881, %v880
        %v1242 = vpack.c.bf16 %v883, %v882
        %v1243 = vpack.c.bf16 %v885, %v884
        %v1244 = vld [vmem:[%s2] sm:$0xf]
        %v1245 = vld [vmem:[%s2 + $0x4] sm:$0xf]
        %v1248 = vunpack.c.l.b16 %v1244
        %v1249 = vunpack.c.l.b16 %v1245
        %v1250 = vpack.c.b16 %v1249, %v1248
        %v1253 = vsel %vm1019, %v1212, 0
        %v1256 = vsel %vm1019, %v1213, 0
        %v1259 = vsel %vm1019, %v1214, 0
        %v1262 = vsel %vm1019, %v1215, 0
        %v1265 = vsel %vm1019, %v1216, 0
        %v1268 = vsel %vm1019, %v1217, 0
        %v1271 = vsel %vm1019, %v1218, 0
        %v1274 = vsel %vm1019, %v1219, 0
        %v1277 = vsel %vm1019, %v1220, 0
        %v1280 = vsel %vm1019, %v1221, 0
        %v1283 = vsel %vm1019, %v1222, 0
        %v1286 = vsel %vm1019, %v1223, 0
        %v1289 = vsel %vm1019, %v1224, 0
        %v1292 = vsel %vm1019, %v1225, 0
        %v1295 = vsel %vm1019, %v1226, 0
        %v1298 = vsel %vm1019, %v1227, 0
        %v1301 = vsel %vm1019, %v1228, 0
        %v1304 = vsel %vm1019, %v1229, 0
        %v1307 = vsel %vm1019, %v1230, 0
        %v1310 = vsel %vm1019, %v1231, 0
        %v1313 = vsel %vm1019, %v1232, 0
        %v1316 = vsel %vm1019, %v1233, 0
        %v1319 = vsel %vm1019, %v1234, 0
        %v1322 = vsel %vm1019, %v1235, 0
        %v1325 = vsel %vm1019, %v1236, 0
        %v1328 = vsel %vm1019, %v1237, 0
        %v1331 = vsel %vm1019, %v1238, 0
        %v1334 = vsel %vm1019, %v1239, 0
        %v1337 = vsel %vm1019, %v1240, 0
        %v1340 = vsel %vm1019, %v1241, 0
        %v1343 = vsel %vm1019, %v1242, 0
        %v1346 = vsel %vm1019, %v1243, 0
        %1348 = vmatprep.subr.bf16.mxu0 0
        %1349 = vmatpush1.bf16.msra.mxu0 %v1250
        %1350 = vmatprep.subr.bf16.mxu0 0
        %1351 = vmatpush1.bf16.msra.mxu0 0
        %1352 = vmatprep.subr.bf16.mxu0 0
        %1353 = vmatpush1.bf16.msra.mxu0 0
        %1354 = vmatprep.subr.bf16.mxu0 0
        %1355 = vmatpush1.bf16.msra.mxu0 0
        %1356 = vmatprep.subr.bf16.mxu0 0
        %1357 = vmatpush1.bf16.msra.mxu0 0
        %1358 = vmatprep.subr.bf16.mxu0 0
        %1359 = vmatpush1.bf16.msra.mxu0 0
        %1360 = vmatprep.subr.bf16.mxu0 0
        %1361 = vmatpush1.bf16.msra.mxu0 0
        %1362 = vmatprep.subr.bf16.mxu0 0
        %1363 = vmatpush1.bf16.msra.mxu0 0
        %1364 = vmatprep.subr.bf16.mxu0 0
        %1365 = vmatpush1.bf16.msra.mxu0 0
        %1366 = vmatprep.subr.bf16.mxu0 0
        %1367 = vmatpush1.bf16.msra.mxu0 0
        %1368 = vmatprep.subr.bf16.mxu0 0
        %1369 = vmatpush1.bf16.msra.mxu0 0
        %1370 = vmatprep.subr.bf16.mxu0 0
        %1371 = vmatpush1.bf16.msra.mxu0 0
        %1372 = vmatprep.subr.bf16.mxu0 0
        %1373 = vmatpush1.bf16.msra.mxu0 0
        %1374 = vmatprep.subr.bf16.mxu0 0
        %1375 = vmatpush1.bf16.msra.mxu0 0
        %1376 = vmatprep.subr.bf16.mxu0 0
        %1377 = vmatpush1.bf16.msra.mxu0 0
        %1378 = vmatprep.subr.bf16.mxu0 0
        %1379 = vmatpush1.bf16.msra.mxu0 0
        %1380 = vmatprep.mubr.bf16.mxu0 0
        %1381 = vmatmul.mubr.bf16.gmra.mrb[0].mxu0 %v1253
        %v1382 = vpop.f32.mrb[0].mxu0
        %v1383 = vadd.f32 0.0, %v1382
        %v1384 = vpop.f32.mrb[0].mxu0
        %v1385 = vpop.f32.mrb[0].mxu0
        %v1386 = vadd.f32 0.0, %v1385
        %v1387 = vpop.f32.mrb[0].mxu0
        %1388 = vmatprep.mubr.bf16.mxu0 0
        %1389 = vmatmul.mubr.bf16.gmra.mrb[0].mxu0 %v1256
        %v1390 = vpop.f32.mrb[0].mxu0
        %v1391 = vadd.f32 0.0, %v1390
        %v1392 = vpop.f32.mrb[0].mxu0
        %v1393 = vpop.f32.mrb[0].mxu0
        %v1394 = vadd.f32 0.0, %v1393
        %v1395 = vpop.f32.mrb[0].mxu0
        %1396 = vmatprep.mubr.bf16.mxu0 0
        %1397 = vmatmul.mubr.bf16.gmra.mrb[0].mxu0 %v1259
        %v1398 = vpop.f32.mrb[0].mxu0
        %v1399 = vadd.f32 0.0, %v1398
        %v1400 = vpop.f32.mrb[0].mxu0
        %v1401 = vpop.f32.mrb[0].mxu0
        %v1402 = vadd.f32 0.0, %v1401
        %v1403 = vpop.f32.mrb[0].mxu0
        %1404 = vmatprep.mubr.bf16.mxu0 0
        %1405 = vmatmul.mubr.bf16.gmra.mrb[0].mxu0 %v1262
        %v1406 = vpop.f32.mrb[0].mxu0
        %v1407 = vadd.f32 0.0, %v1406
        %v1408 = vpop.f32.mrb[0].mxu0
        %v1409 = vpop.f32.mrb[0].mxu0
        %v1410 = vadd.f32 0.0, %v1409
        %v1411 = vpop.f32.mrb[0].mxu0
        %1412 = vmatprep.mubr.bf16.mxu0 0
        %1413 = vmatmul.mubr.bf16.gmra.mrb[0].mxu0 %v1265
        %v1414 = vpop.f32.mrb[0].mxu0
        %v1415 = vadd.f32 0.0, %v1414
        %v1416 = vpop.f32.mrb[0].mxu0
        %v1417 = vpop.f32.mrb[0].mxu0
        %v1418 = vadd.f32 0.0, %v1417
        %v1419 = vpop.f32.mrb[0].mxu0
        %1420 = vmatprep.mubr.bf16.mxu0 0
        %1421 = vmatmul.mubr.bf16.gmra.mrb[0].mxu0 %v1268
        %v1422 = vpop.f32.mrb[0].mxu0
        %v1423 = vadd.f32 0.0, %v1422
        %v1424 = vpop.f32.mrb[0].mxu0
        %v1425 = vpop.f32.mrb[0].mxu0
        %v1426 = vadd.f32 0.0, %v1425
        %v1427 = vpop.f32.mrb[0].mxu0
        %1428 = vmatprep.mubr.bf16.mxu0 0
        %1429 = vmatmul.mubr.bf16.gmra.mrb[0].mxu0 %v1271
        %v1430 = vpop.f32.mrb[0].mxu0
        %v1431 = vadd.f32 0.0, %v1430
        %v1432 = vpop.f32.mrb[0].mxu0
        %v1433 = vpop.f32.mrb[0].mxu0
        %v1434 = vadd.f32 0.0, %v1433
        %v1435 = vpop.f32.mrb[0].mxu0
        %1436 = vmatprep.mubr.bf16.mxu0 0
        %1437 = vmatmul.mubr.bf16.gmra.mrb[0].mxu0 %v1274
        %v1438 = vpop.f32.mrb[0].mxu0
        %v1439 = vadd.f32 0.0, %v1438
        %v1440 = vpop.f32.mrb[0].mxu0
        %v1441 = vpop.f32.mrb[0].mxu0
        %v1442 = vadd.f32 0.0, %v1441
        %v1443 = vpop.f32.mrb[0].mxu0
        %1444 = vmatprep.mubr.bf16.mxu0 0
        %1445 = vmatmul.mubr.bf16.gmra.mrb[0].mxu0 %v1277
        %v1446 = vpop.f32.mrb[0].mxu0
        %v1447 = vadd.f32 0.0, %v1446
        %v1448 = vpop.f32.mrb[0].mxu0
        %v1449 = vpop.f32.mrb[0].mxu0
        %v1450 = vadd.f32 0.0, %v1449
        %v1451 = vpop.f32.mrb[0].mxu0
        %1452 = vmatprep.mubr.bf16.mxu0 0
        %1453 = vmatmul.mubr.bf16.gmra.mrb[0].mxu0 %v1280
        %v1454 = vpop.f32.mrb[0].mxu0
        %v1455 = vadd.f32 0.0, %v1454
        %v1456 = vpop.f32.mrb[0].mxu0
        %v1457 = vpop.f32.mrb[0].mxu0
        %v1458 = vadd.f32 0.0, %v1457
        %v1459 = vpop.f32.mrb[0].mxu0
        %1460 = vmatprep.mubr.bf16.mxu0 0
        %1461 = vmatmul.mubr.bf16.gmra.mrb[0].mxu0 %v1283
        %v1462 = vpop.f32.mrb[0].mxu0
        %v1463 = vadd.f32 0.0, %v1462
        %v1464 = vpop.f32.mrb[0].mxu0
        %v1465 = vpop.f32.mrb[0].mxu0
        %v1466 = vadd.f32 0.0, %v1465
        %v1467 = vpop.f32.mrb[0].mxu0
        %1468 = vmatprep.mubr.bf16.mxu0 0
        %1469 = vmatmul.mubr.bf16.gmra.mrb[0].mxu0 %v1286
        %v1470 = vpop.f32.mrb[0].mxu0
        %v1471 = vadd.f32 0.0, %v1470
        %v1472 = vpop.f32.mrb[0].mxu0
        %v1473 = vpop.f32.mrb[0].mxu0
        %v1474 = vadd.f32 0.0, %v1473
        %v1475 = vpop.f32.mrb[0].mxu0
        %1476 = vmatprep.mubr.bf16.mxu0 0
        %1477 = vmatmul.mubr.bf16.gmra.mrb[0].mxu0 %v1289
        %v1478 = vpop.f32.mrb[0].mxu0
        %v1479 = vadd.f32 0.0, %v1478
        %v1480 = vpop.f32.mrb[0].mxu0
        %v1481 = vpop.f32.mrb[0].mxu0
        %v1482 = vadd.f32 0.0, %v1481
        %v1483 = vpop.f32.mrb[0].mxu0
        %1484 = vmatprep.mubr.bf16.mxu0 0
        %1485 = vmatmul.mubr.bf16.gmra.mrb[0].mxu0 %v1292
        %v1486 = vpop.f32.mrb[0].mxu0
        %v1487 = vadd.f32 0.0, %v1486
        %v1488 = vpop.f32.mrb[0].mxu0
        %v1489 = vpop.f32.mrb[0].mxu0
        %v1490 = vadd.f32 0.0, %v1489
        %v1491 = vpop.f32.mrb[0].mxu0
        %1492 = vmatprep.mubr.bf16.mxu0 0
        %1493 = vmatmul.mubr.bf16.gmra.mrb[0].mxu0 %v1295
        %v1494 = vpop.f32.mrb[0].mxu0
        %v1495 = vadd.f32 0.0, %v1494
        %v1496 = vpop.f32.mrb[0].mxu0
        %v1497 = vpop.f32.mrb[0].mxu0
        %v1498 = vadd.f32 0.0, %v1497
        %v1499 = vpop.f32.mrb[0].mxu0
        %1500 = vmatprep.mubr.bf16.mxu0 0
        %1501 = vmatmul.mubr.bf16.gmra.mrb[0].mxu0 %v1298
        %v1502 = vpop.f32.mrb[0].mxu0
        %v1503 = vadd.f32 0.0, %v1502
        %v1504 = vpop.f32.mrb[0].mxu0
        %v1505 = vpop.f32.mrb[0].mxu0
        %v1506 = vadd.f32 0.0, %v1505
        %v1507 = vpop.f32.mrb[0].mxu0
        %1508 = vmatprep.mubr.bf16.mxu0 0
        %1509 = vmatmul.mubr.bf16.gmra.mrb[0].mxu0 %v1301
        %v1510 = vpop.f32.mrb[0].mxu0
        %v1511 = vadd.f32 0.0, %v1510
        %v1512 = vpop.f32.mrb[0].mxu0
        %v1513 = vpop.f32.mrb[0].mxu0
        %v1514 = vadd.f32 0.0, %v1513
        %v1515 = vpop.f32.mrb[0].mxu0
        %1516 = vmatprep.mubr.bf16.mxu0 0
        %1517 = vmatmul.mubr.bf16.gmra.mrb[0].mxu0 %v1304
        %v1518 = vpop.f32.mrb[0].mxu0
        %v1519 = vadd.f32 0.0, %v1518
        %v1520 = vpop.f32.mrb[0].mxu0
        %v1521 = vpop.f32.mrb[0].mxu0
        %v1522 = vadd.f32 0.0, %v1521
        %v1523 = vpop.f32.mrb[0].mxu0
        %1524 = vmatprep.mubr.bf16.mxu0 0
        %1525 = vmatmul.mubr.bf16.gmra.mrb[0].mxu0 %v1307
        %v1526 = vpop.f32.mrb[0].mxu0
        %v1527 = vadd.f32 0.0, %v1526
        %v1528 = vpop.f32.mrb[0].mxu0
        %v1529 = vpop.f32.mrb[0].mxu0
        %v1530 = vadd.f32 0.0, %v1529
        %v1531 = vpop.f32.mrb[0].mxu0
        %1532 = vmatprep.mubr.bf16.mxu0 0
        %1533 = vmatmul.mubr.bf16.gmra.mrb[0].mxu0 %v1310
        %v1534 = vpop.f32.mrb[0].mxu0
        %v1535 = vadd.f32 0.0, %v1534
        %v1536 = vpop.f32.mrb[0].mxu0
        %v1537 = vpop.f32.mrb[0].mxu0
        %v1538 = vadd.f32 0.0, %v1537
        %v1539 = vpop.f32.mrb[0].mxu0
        %1540 = vmatprep.mubr.bf16.mxu0 0
        %1541 = vmatmul.mubr.bf16.gmra.mrb[0].mxu0 %v1313
        %v1542 = vpop.f32.mrb[0].mxu0
        %v1543 = vadd.f32 0.0, %v1542
        %v1544 = vpop.f32.mrb[0].mxu0
        %v1545 = vpop.f32.mrb[0].mxu0
        %v1546 = vadd.f32 0.0, %v1545
        %v1547 = vpop.f32.mrb[0].mxu0
        %1548 = vmatprep.mubr.bf16.mxu0 0
        %1549 = vmatmul.mubr.bf16.gmra.mrb[0].mxu0 %v1316
        %v1550 = vpop.f32.mrb[0].mxu0
        %v1551 = vadd.f32 0.0, %v1550
        %v1552 = vpop.f32.mrb[0].mxu0
        %v1553 = vpop.f32.mrb[0].mxu0
        %v1554 = vadd.f32 0.0, %v1553
        %v1555 = vpop.f32.mrb[0].mxu0
        %1556 = vmatprep.mubr.bf16.mxu0 0
        %1557 = vmatmul.mubr.bf16.gmra.mrb[0].mxu0 %v1319
        %v1558 = vpop.f32.mrb[0].mxu0
        %v1559 = vadd.f32 0.0, %v1558
        %v1560 = vpop.f32.mrb[0].mxu0
        %v1561 = vpop.f32.mrb[0].mxu0
        %v1562 = vadd.f32 0.0, %v1561
        %v1563 = vpop.f32.mrb[0].mxu0
        %1564 = vmatprep.mubr.bf16.mxu0 0
        %1565 = vmatmul.mubr.bf16.gmra.mrb[0].mxu0 %v1322
        %v1566 = vpop.f32.mrb[0].mxu0
        %v1567 = vadd.f32 0.0, %v1566
        %v1568 = vpop.f32.mrb[0].mxu0
        %v1569 = vpop.f32.mrb[0].mxu0
        %v1570 = vadd.f32 0.0, %v1569
        %v1571 = vpop.f32.mrb[0].mxu0
        %1572 = vmatprep.mubr.bf16.mxu0 0
        %1573 = vmatmul.mubr.bf16.gmra.mrb[0].mxu0 %v1325
        %v1574 = vpop.f32.mrb[0].mxu0
        %v1575 = vadd.f32 0.0, %v1574
        %v1576 = vpop.f32.mrb[0].mxu0
        %v1577 = vpop.f32.mrb[0].mxu0
        %v1578 = vadd.f32 0.0, %v1577
        %v1579 = vpop.f32.mrb[0].mxu0
        %1580 = vmatprep.mubr.bf16.mxu0 0
        %1581 = vmatmul.mubr.bf16.gmra.mrb[0].mxu0 %v1328
        %v1582 = vpop.f32.mrb[0].mxu0
        %v1583 = vadd.f32 0.0, %v1582
        %v1584 = vpop.f32.mrb[0].mxu0
        %v1585 = vpop.f32.mrb[0].mxu0
        %v1586 = vadd.f32 0.0, %v1585
        %v1587 = vpop.f32.mrb[0].mxu0
        %1588 = vmatprep.mubr.bf16.mxu0 0
        %1589 = vmatmul.mubr.bf16.gmra.mrb[0].mxu0 %v1331
        %v1590 = vpop.f32.mrb[0].mxu0
        %v1591 = vadd.f32 0.0, %v1590
        %v1592 = vpop.f32.mrb[0].mxu0
        %v1593 = vpop.f32.mrb[0].mxu0
        %v1594 = vadd.f32 0.0, %v1593
        %v1595 = vpop.f32.mrb[0].mxu0
        %1596 = vmatprep.mubr.bf16.mxu0 0
        %1597 = vmatmul.mubr.bf16.gmra.mrb[0].mxu0 %v1334
        %v1598 = vpop.f32.mrb[0].mxu0
        %v1599 = vadd.f32 0.0, %v1598
        %v1600 = vpop.f32.mrb[0].mxu0
        %v1601 = vpop.f32.mrb[0].mxu0
        %v1602 = vadd.f32 0.0, %v1601
        %v1603 = vpop.f32.mrb[0].mxu0
        %1604 = vmatprep.mubr.bf16.mxu0 0
        %1605 = vmatmul.mubr.bf16.gmra.mrb[0].mxu0 %v1337
        %v1606 = vpop.f32.mrb[0].mxu0
        %v1607 = vadd.f32 0.0, %v1606
        %v1608 = vpop.f32.mrb[0].mxu0
        %v1609 = vpop.f32.mrb[0].mxu0
        %v1610 = vadd.f32 0.0, %v1609
        %v1611 = vpop.f32.mrb[0].mxu0
        %1612 = vmatprep.mubr.bf16.mxu0 0
        %1613 = vmatmul.mubr.bf16.gmra.mrb[0].mxu0 %v1340
        %v1614 = vpop.f32.mrb[0].mxu0
        %v1615 = vadd.f32 0.0, %v1614
        %v1616 = vpop.f32.mrb[0].mxu0
        %v1617 = vpop.f32.mrb[0].mxu0
        %v1618 = vadd.f32 0.0, %v1617
        %v1619 = vpop.f32.mrb[0].mxu0
        %1620 = vmatprep.mubr.bf16.mxu0 0
        %1621 = vmatmul.mubr.bf16.gmra.mrb[0].mxu0 %v1343
        %v1622 = vpop.f32.mrb[0].mxu0
        %v1623 = vadd.f32 0.0, %v1622
        %v1624 = vpop.f32.mrb[0].mxu0
        %v1625 = vpop.f32.mrb[0].mxu0
        %v1626 = vadd.f32 0.0, %v1625
        %v1627 = vpop.f32.mrb[0].mxu0
        %1628 = vmatprep.mubr.bf16.mxu0 0
        %1629 = vmatmul.mubr.bf16.gmra.mrb[0].mxu0 %v1346
        %v1630 = vpop.f32.mrb[0].mxu0
        %v1631 = vadd.f32 0.0, %v1630
        %v1632 = vpop.f32.mrb[0].mxu0
        %v1633 = vpop.f32.mrb[0].mxu0
        %v1634 = vadd.f32 0.0, %v1633
        %v1635 = vpop.f32.mrb[0].mxu0
        %1636 = vdwg.mxu0
        %v1637 = vmul.f32 %v1383, 1.442695
        %v1638 = vpow.pop %v1637
        %v1639 = vmul.f32 %v1386, 1.442695
        %v1640 = vpow.pop %v1639
        %v1641 = vmul.f32 %v1391, 1.442695
        %v1642 = vpow.pop %v1641
        %v1643 = vmul.f32 %v1394, 1.442695
        %v1644 = vpow.pop %v1643
        %v1645 = vmul.f32 %v1399, 1.442695
        %v1646 = vpow.pop %v1645
        %v1647 = vmul.f32 %v1402, 1.442695
        %v1648 = vpow.pop %v1647
        %v1649 = vmul.f32 %v1407, 1.442695
        %v1650 = vpow.pop %v1649
        %v1651 = vmul.f32 %v1410, 1.442695
        %v1652 = vpow.pop %v1651
        %v1653 = vmul.f32 %v1415, 1.442695
        %v1654 = vpow.pop %v1653
        %v1655 = vmul.f32 %v1418, 1.442695
        %v1656 = vpow.pop %v1655
        %v1657 = vmul.f32 %v1423, 1.442695
        %v1658 = vpow.pop %v1657
        %v1659 = vmul.f32 %v1426, 1.442695
        %v1660 = vpow.pop %v1659
        %v1661 = vmul.f32 %v1431, 1.442695
        %v1662 = vpow.pop %v1661
        %v1663 = vmul.f32 %v1434, 1.442695
        %v1664 = vpow.pop %v1663
        %v1665 = vmul.f32 %v1439, 1.442695
        %v1666 = vpow.pop %v1665
        %v1667 = vmul.f32 %v1442, 1.442695
        %v1668 = vpow.pop %v1667
        %v1669 = vmul.f32 %v1447, 1.442695
        %v1670 = vpow.pop %v1669
        %v1671 = vmul.f32 %v1450, 1.442695
        %v1672 = vpow.pop %v1671
        %v1673 = vmul.f32 %v1455, 1.442695
        %v1674 = vpow.pop %v1673
        %v1675 = vmul.f32 %v1458, 1.442695
        %v1676 = vpow.pop %v1675
        %v1677 = vmul.f32 %v1463, 1.442695
        %v1678 = vpow.pop %v1677
        %v1679 = vmul.f32 %v1466, 1.442695
        %v1680 = vpow.pop %v1679
        %v1681 = vmul.f32 %v1471, 1.442695
        %v1682 = vpow.pop %v1681
        %v1683 = vmul.f32 %v1474, 1.442695
        %v1684 = vpow.pop %v1683
        %v1685 = vmul.f32 %v1479, 1.442695
        %v1686 = vpow.pop %v1685
        %v1687 = vmul.f32 %v1482, 1.442695
        %v1688 = vpow.pop %v1687
        %v1689 = vmul.f32 %v1487, 1.442695
        %v1690 = vpow.pop %v1689
        %v1691 = vmul.f32 %v1490, 1.442695
        %v1692 = vpow.pop %v1691
        %v1693 = vmul.f32 %v1495, 1.442695
        %v1694 = vpow.pop %v1693
        %v1695 = vmul.f32 %v1498, 1.442695
        %v1696 = vpow.pop %v1695
        %v1697 = vmul.f32 %v1503, 1.442695
        %v1698 = vpow.pop %v1697
        %v1699 = vmul.f32 %v1506, 1.442695
        %v1700 = vpow.pop %v1699
        %v1701 = vmul.f32 %v1511, 1.442695
        %v1702 = vpow.pop %v1701
        %v1703 = vmul.f32 %v1514, 1.442695
        %v1704 = vpow.pop %v1703
        %v1705 = vmul.f32 %v1519, 1.442695
        %v1706 = vpow.pop %v1705
        %v1707 = vmul.f32 %v1522, 1.442695
        %v1708 = vpow.pop %v1707
        %v1709 = vmul.f32 %v1527, 1.442695
        %v1710 = vpow.pop %v1709
        %v1711 = vmul.f32 %v1530, 1.442695
        %v1712 = vpow.pop %v1711
        %v1713 = vmul.f32 %v1535, 1.442695
        %v1714 = vpow.pop %v1713
        %v1715 = vmul.f32 %v1538, 1.442695
        %v1716 = vpow.pop %v1715
        %v1717 = vmul.f32 %v1543, 1.442695
        %v1718 = vpow.pop %v1717
        %v1719 = vmul.f32 %v1546, 1.442695
        %v1720 = vpow.pop %v1719
        %v1721 = vmul.f32 %v1551, 1.442695
        %v1722 = vpow.pop %v1721
        %v1723 = vmul.f32 %v1554, 1.442695
        %v1724 = vpow.pop %v1723
        %v1725 = vmul.f32 %v1559, 1.442695
        %v1726 = vpow.pop %v1725
        %v1727 = vmul.f32 %v1562, 1.442695
        %v1728 = vpow.pop %v1727
        %v1729 = vmul.f32 %v1567, 1.442695
        %v1730 = vpow.pop %v1729
        %v1731 = vmul.f32 %v1570, 1.442695
        %v1732 = vpow.pop %v1731
        %v1733 = vmul.f32 %v1575, 1.442695
        %v1734 = vpow.pop %v1733
        %v1735 = vmul.f32 %v1578, 1.442695
        %v1736 = vpow.pop %v1735
        %v1737 = vmul.f32 %v1583, 1.442695
        %v1738 = vpow.pop %v1737
        %v1739 = vmul.f32 %v1586, 1.442695
        %v1740 = vpow.pop %v1739
        %v1741 = vmul.f32 %v1591, 1.442695
        %v1742 = vpow.pop %v1741
        %v1743 = vmul.f32 %v1594, 1.442695
        %v1744 = vpow.pop %v1743
        %v1745 = vmul.f32 %v1599, 1.442695
        %v1746 = vpow.pop %v1745
        %v1747 = vmul.f32 %v1602, 1.442695
        %v1748 = vpow.pop %v1747
        %v1749 = vmul.f32 %v1607, 1.442695
        %v1750 = vpow.pop %v1749
        %v1751 = vmul.f32 %v1610, 1.442695
        %v1752 = vpow.pop %v1751
        %v1753 = vmul.f32 %v1615, 1.442695
        %v1754 = vpow.pop %v1753
        %v1755 = vmul.f32 %v1618, 1.442695
        %v1756 = vpow.pop %v1755
        %v1757 = vmul.f32 %v1623, 1.442695
        %v1758 = vpow.pop %v1757
        %v1759 = vmul.f32 %v1626, 1.442695
        %v1760 = vpow.pop %v1759
        %v1761 = vmul.f32 %v1631, 1.442695
        %v1762 = vpow.pop %v1761
        %v1763 = vmul.f32 %v1634, 1.442695
        %v1764 = vpow.pop %v1763
        %v1765 = vmul.f32 %v1022, %v1022
        %v1766 = vmul.f32 %v1025, %v1025
        %v1767 = vmul.f32 %v1028, %v1028
        %v1768 = vmul.f32 %v1031, %v1031
        %v1769 = vmul.f32 %v1034, %v1034
        %v1770 = vmul.f32 %v1037, %v1037
        %v1771 = vmul.f32 %v1040, %v1040
        %v1772 = vmul.f32 %v1043, %v1043
        %v1773 = vmul.f32 %v1046, %v1046
        %v1774 = vmul.f32 %v1049, %v1049
        %v1775 = vmul.f32 %v1052, %v1052
        %v1776 = vmul.f32 %v1055, %v1055
        %v1777 = vmul.f32 %v1058, %v1058
        %v1778 = vmul.f32 %v1061, %v1061
        %v1779 = vmul.f32 %v1064, %v1064
        %v1780 = vmul.f32 %v1067, %v1067
        %v1781 = vmul.f32 %v1070, %v1070
        %v1782 = vmul.f32 %v1073, %v1073
        %v1783 = vmul.f32 %v1076, %v1076
        %v1784 = vmul.f32 %v1079, %v1079
        %v1785 = vmul.f32 %v1082, %v1082
        %v1786 = vmul.f32 %v1085, %v1085
        %v1787 = vmul.f32 %v1088, %v1088
        %v1788 = vmul.f32 %v1091, %v1091
        %v1789 = vmul.f32 %v1094, %v1094
        %v1790 = vmul.f32 %v1097, %v1097
        %v1791 = vmul.f32 %v1100, %v1100
        %v1792 = vmul.f32 %v1103, %v1103
        %v1793 = vmul.f32 %v1106, %v1106
        %v1794 = vmul.f32 %v1109, %v1109
        %v1795 = vmul.f32 %v1112, %v1112
        %v1796 = vmul.f32 %v1115, %v1115
        %v1797 = vmul.f32 %v1118, %v1118
        %v1798 = vmul.f32 %v1121, %v1121
        %v1799 = vmul.f32 %v1124, %v1124
        %v1800 = vmul.f32 %v1127, %v1127
        %v1801 = vmul.f32 %v1130, %v1130
        %v1802 = vmul.f32 %v1133, %v1133
        %v1803 = vmul.f32 %v1136, %v1136
        %v1804 = vmul.f32 %v1139, %v1139
        %v1805 = vmul.f32 %v1142, %v1142
        %v1806 = vmul.f32 %v1145, %v1145
        %v1807 = vmul.f32 %v1148, %v1148
        %v1808 = vmul.f32 %v1151, %v1151
        %v1809 = vmul.f32 %v1154, %v1154
        %v1810 = vmul.f32 %v1157, %v1157
        %v1811 = vmul.f32 %v1160, %v1160
        %v1812 = vmul.f32 %v1163, %v1163
        %v1813 = vmul.f32 %v1166, %v1166
        %v1814 = vmul.f32 %v1169, %v1169
        %v1815 = vmul.f32 %v1172, %v1172
        %v1816 = vmul.f32 %v1175, %v1175
        %v1817 = vmul.f32 %v1178, %v1178
        %v1818 = vmul.f32 %v1181, %v1181
        %v1819 = vmul.f32 %v1184, %v1184
        %v1820 = vmul.f32 %v1187, %v1187
        %v1821 = vmul.f32 %v1190, %v1190
        %v1822 = vmul.f32 %v1193, %v1193
        %v1823 = vmul.f32 %v1196, %v1196
        %v1824 = vmul.f32 %v1199, %v1199
        %v1825 = vmul.f32 %v1202, %v1202
        %v1826 = vmul.f32 %v1205, %v1205
        %v1827 = vmul.f32 %v1208, %v1208
        %v1828 = vmul.f32 %v1211, %v1211
        %v1829 = vsub.f32 0.5, %v1765
        %v1830 = vsub.f32 0.5, %v1766
        %v1831 = vsub.f32 0.5, %v1767
        %v1832 = vsub.f32 0.5, %v1768
        %v1833 = vsub.f32 0.5, %v1769
        %v1834 = vsub.f32 0.5, %v1770
        %v1835 = vsub.f32 0.5, %v1771
        %v1836 = vsub.f32 0.5, %v1772
        %v1837 = vsub.f32 0.5, %v1773
        %v1838 = vsub.f32 0.5, %v1774
        %v1839 = vsub.f32 0.5, %v1775
        %v1840 = vsub.f32 0.5, %v1776
        %v1841 = vsub.f32 0.5, %v1777
        %v1842 = vsub.f32 0.5, %v1778
        %v1843 = vsub.f32 0.5, %v1779
        %v1844 = vsub.f32 0.5, %v1780
        %v1845 = vsub.f32 0.5, %v1781
        %v1846 = vsub.f32 0.5, %v1782
        %v1847 = vsub.f32 0.5, %v1783
        %v1848 = vsub.f32 0.5, %v1784
        %v1849 = vsub.f32 0.5, %v1785
        %v1850 = vsub.f32 0.5, %v1786
        %v1851 = vsub.f32 0.5, %v1787
        %v1852 = vsub.f32 0.5, %v1788
        %v1853 = vsub.f32 0.5, %v1789
        %v1854 = vsub.f32 0.5, %v1790
        %v1855 = vsub.f32 0.5, %v1791
        %v1856 = vsub.f32 0.5, %v1792
        %v1857 = vsub.f32 0.5, %v1793
        %v1858 = vsub.f32 0.5, %v1794
        %v1859 = vsub.f32 0.5, %v1795
        %v1860 = vsub.f32 0.5, %v1796
        %v1861 = vsub.f32 0.5, %v1797
        %v1862 = vsub.f32 0.5, %v1798
        %v1863 = vsub.f32 0.5, %v1799
        %v1864 = vsub.f32 0.5, %v1800
        %v1865 = vsub.f32 0.5, %v1801
        %v1866 = vsub.f32 0.5, %v1802
        %v1867 = vsub.f32 0.5, %v1803
        %v1868 = vsub.f32 0.5, %v1804
        %v1869 = vsub.f32 0.5, %v1805
        %v1870 = vsub.f32 0.5, %v1806
        %v1871 = vsub.f32 0.5, %v1807
        %v1872 = vsub.f32 0.5, %v1808
        %v1873 = vsub.f32 0.5, %v1809
        %v1874 = vsub.f32 0.5, %v1810
        %v1875 = vsub.f32 0.5, %v1811
        %v1876 = vsub.f32 0.5, %v1812
        %v1877 = vsub.f32 0.5, %v1813
        %v1878 = vsub.f32 0.5, %v1814
        %v1879 = vsub.f32 0.5, %v1815
        %v1880 = vsub.f32 0.5, %v1816
        %v1881 = vsub.f32 0.5, %v1817
        %v1882 = vsub.f32 0.5, %v1818
        %v1883 = vsub.f32 0.5, %v1819
        %v1884 = vsub.f32 0.5, %v1820
        %v1885 = vsub.f32 0.5, %v1821
        %v1886 = vsub.f32 0.5, %v1822
        %v1887 = vsub.f32 0.5, %v1823
        %v1888 = vsub.f32 0.5, %v1824
        %v1889 = vsub.f32 0.5, %v1825
        %v1890 = vsub.f32 0.5, %v1826
        %v1891 = vsub.f32 0.5, %v1827
        %v1892 = vsub.f32 0.5, %v1828
        %v1893 = vmul.f32 %v1829, 0.5
        %v1894 = vmul.f32 %v1830, 0.5
        %v1895 = vmul.f32 %v1831, 0.5
        %v1896 = vmul.f32 %v1832, 0.5
        %v1897 = vmul.f32 %v1833, 0.5
        %v1898 = vmul.f32 %v1834, 0.5
        %v1899 = vmul.f32 %v1835, 0.5
        %v1900 = vmul.f32 %v1836, 0.5
        %v1901 = vmul.f32 %v1837, 0.5
        %v1902 = vmul.f32 %v1838, 0.5
        %v1903 = vmul.f32 %v1839, 0.5
        %v1904 = vmul.f32 %v1840, 0.5
        %v1905 = vmul.f32 %v1841, 0.5
        %v1906 = vmul.f32 %v1842, 0.5
        %v1907 = vmul.f32 %v1843, 0.5
        %v1908 = vmul.f32 %v1844, 0.5
        %v1909 = vmul.f32 %v1845, 0.5
        %v1910 = vmul.f32 %v1846, 0.5
        %v1911 = vmul.f32 %v1847, 0.5
        %v1912 = vmul.f32 %v1848, 0.5
        %v1913 = vmul.f32 %v1849, 0.5
        %v1914 = vmul.f32 %v1850, 0.5
        %v1915 = vmul.f32 %v1851, 0.5
        %v1916 = vmul.f32 %v1852, 0.5
        %v1917 = vmul.f32 %v1853, 0.5
        %v1918 = vmul.f32 %v1854, 0.5
        %v1919 = vmul.f32 %v1855, 0.5
        %v1920 = vmul.f32 %v1856, 0.5
        %v1921 = vmul.f32 %v1857, 0.5
        %v1922 = vmul.f32 %v1858, 0.5
        %v1923 = vmul.f32 %v1859, 0.5
        %v1924 = vmul.f32 %v1860, 0.5
        %v1925 = vmul.f32 %v1861, 0.5
        %v1926 = vmul.f32 %v1862, 0.5
        %v1927 = vmul.f32 %v1863, 0.5
        %v1928 = vmul.f32 %v1864, 0.5
        %v1929 = vmul.f32 %v1865, 0.5
        %v1930 = vmul.f32 %v1866, 0.5
        %v1931 = vmul.f32 %v1867, 0.5
        %v1932 = vmul.f32 %v1868, 0.5
        %v1933 = vmul.f32 %v1869, 0.5
        %v1934 = vmul.f32 %v1870, 0.5
        %v1935 = vmul.f32 %v1871, 0.5
        %v1936 = vmul.f32 %v1872, 0.5
        %v1937 = vmul.f32 %v1873, 0.5
        %v1938 = vmul.f32 %v1874, 0.5
        %v1939 = vmul.f32 %v1875, 0.5
        %v1940 = vmul.f32 %v1876, 0.5
        %v1941 = vmul.f32 %v1877, 0.5
        %v1942 = vmul.f32 %v1878, 0.5
        %v1943 = vmul.f32 %v1879, 0.5
        %v1944 = vmul.f32 %v1880, 0.5
        %v1945 = vmul.f32 %v1881, 0.5
        %v1946 = vmul.f32 %v1882, 0.5
        %v1947 = vmul.f32 %v1883, 0.5
        %v1948 = vmul.f32 %v1884, 0.5
        %v1949 = vmul.f32 %v1885, 0.5
        %v1950 = vmul.f32 %v1886, 0.5
        %v1951 = vmul.f32 %v1887, 0.5
        %v1952 = vmul.f32 %v1888, 0.5
        %v1953 = vmul.f32 %v1889, 0.5
        %v1954 = vmul.f32 %v1890, 0.5
        %v1955 = vmul.f32 %v1891, 0.5
        %v1956 = vmul.f32 %v1892, 0.5
        %v1957 = vmul.f32 %v1893, 1.442695
        %v1958 = vpow.pop %v1957
        %v1959 = vmul.f32 %v1894, 1.442695
        %v1960 = vpow.pop %v1959
        %v1961 = vmul.f32 %v1895, 1.442695
        %v1962 = vpow.pop %v1961
        %v1963 = vmul.f32 %v1896, 1.442695
        %v1964 = vpow.pop %v1963
        %v1965 = vmul.f32 %v1897, 1.442695
        %v1966 = vpow.pop %v1965
        %v1967 = vmul.f32 %v1898, 1.442695
        %v1968 = vpow.pop %v1967
        %v1969 = vmul.f32 %v1899, 1.442695
        %v1970 = vpow.pop %v1969
        %v1971 = vmul.f32 %v1900, 1.442695
        %v1972 = vpow.pop %v1971
        %v1973 = vmul.f32 %v1901, 1.442695
        %v1974 = vpow.pop %v1973
        %v1975 = vmul.f32 %v1902, 1.442695
        %v1976 = vpow.pop %v1975
        %v1977 = vmul.f32 %v1903, 1.442695
        %v1978 = vpow.pop %v1977
        %v1979 = vmul.f32 %v1904, 1.442695
        %v1980 = vpow.pop %v1979
        %v1981 = vmul.f32 %v1905, 1.442695
        %v1982 = vpow.pop %v1981
        %v1983 = vmul.f32 %v1906, 1.442695
        %v1984 = vpow.pop %v1983
        %v1985 = vmul.f32 %v1907, 1.442695
        %v1986 = vpow.pop %v1985
        %v1987 = vmul.f32 %v1908, 1.442695
        %v1988 = vpow.pop %v1987
        %v1989 = vmul.f32 %v1909, 1.442695
        %v1990 = vpow.pop %v1989
        %v1991 = vmul.f32 %v1910, 1.442695
        %v1992 = vpow.pop %v1991
        %v1993 = vmul.f32 %v1911, 1.442695
        %v1994 = vpow.pop %v1993
        %v1995 = vmul.f32 %v1912, 1.442695
        %v1996 = vpow.pop %v1995
        %v1997 = vmul.f32 %v1913, 1.442695
        %v1998 = vpow.pop %v1997
        %v1999 = vmul.f32 %v1914, 1.442695
        %v2000 = vpow.pop %v1999
        %v2001 = vmul.f32 %v1915, 1.442695
        %v2002 = vpow.pop %v2001
        %v2003 = vmul.f32 %v1916, 1.442695
        %v2004 = vpow.pop %v2003
        %v2005 = vmul.f32 %v1917, 1.442695
        %v2006 = vpow.pop %v2005
        %v2007 = vmul.f32 %v1918, 1.442695
        %v2008 = vpow.pop %v2007
        %v2009 = vmul.f32 %v1919, 1.442695
        %v2010 = vpow.pop %v2009
        %v2011 = vmul.f32 %v1920, 1.442695
        %v2012 = vpow.pop %v2011
        %v2013 = vmul.f32 %v1921, 1.442695
        %v2014 = vpow.pop %v2013
        %v2015 = vmul.f32 %v1922, 1.442695
        %v2016 = vpow.pop %v2015
        %v2017 = vmul.f32 %v1923, 1.442695
        %v2018 = vpow.pop %v2017
        %v2019 = vmul.f32 %v1924, 1.442695
        %v2020 = vpow.pop %v2019
        %v2021 = vmul.f32 %v1925, 1.442695
        %v2022 = vpow.pop %v2021
        %v2023 = vmul.f32 %v1926, 1.442695
        %v2024 = vpow.pop %v2023
        %v2025 = vmul.f32 %v1927, 1.442695
        %v2026 = vpow.pop %v2025
        %v2027 = vmul.f32 %v1928, 1.442695
        %v2028 = vpow.pop %v2027
        %v2029 = vmul.f32 %v1929, 1.442695
        %v2030 = vpow.pop %v2029
        %v2031 = vmul.f32 %v1930, 1.442695
        %v2032 = vpow.pop %v2031
        %v2033 = vmul.f32 %v1931, 1.442695
        %v2034 = vpow.pop %v2033
        %v2035 = vmul.f32 %v1932, 1.442695
        %v2036 = vpow.pop %v2035
        %v2037 = vmul.f32 %v1933, 1.442695
        %v2038 = vpow.pop %v2037
        %v2039 = vmul.f32 %v1934, 1.442695
        %v2040 = vpow.pop %v2039
        %v2041 = vmul.f32 %v1935, 1.442695
        %v2042 = vpow.pop %v2041
        %v2043 = vmul.f32 %v1936, 1.442695
        %v2044 = vpow.pop %v2043
        %v2045 = vmul.f32 %v1937, 1.442695
        %v2046 = vpow.pop %v2045
        %v2047 = vmul.f32 %v1938, 1.442695
        %v2048 = vpow.pop %v2047
        %v2049 = vmul.f32 %v1939, 1.442695
        %v2050 = vpow.pop %v2049
        %v2051 = vmul.f32 %v1940, 1.442695
        %v2052 = vpow.pop %v2051
        %v2053 = vmul.f32 %v1941, 1.442695
        %v2054 = vpow.pop %v2053
        %v2055 = vmul.f32 %v1942, 1.442695
        %v2056 = vpow.pop %v2055
        %v2057 = vmul.f32 %v1943, 1.442695
        %v2058 = vpow.pop %v2057
        %v2059 = vmul.f32 %v1944, 1.442695
        %v2060 = vpow.pop %v2059
        %v2061 = vmul.f32 %v1945, 1.442695
        %v2062 = vpow.pop %v2061
        %v2063 = vmul.f32 %v1946, 1.442695
        %v2064 = vpow.pop %v2063
        %v2065 = vmul.f32 %v1947, 1.442695
        %v2066 = vpow.pop %v2065
        %v2067 = vmul.f32 %v1948, 1.442695
        %v2068 = vpow.pop %v2067
        %v2069 = vmul.f32 %v1949, 1.442695
        %v2070 = vpow.pop %v2069
        %v2071 = vmul.f32 %v1950, 1.442695
        %v2072 = vpow.pop %v2071
        %v2073 = vmul.f32 %v1951, 1.442695
        %v2074 = vpow.pop %v2073
        %v2075 = vmul.f32 %v1952, 1.442695
        %v2076 = vpow.pop %v2075
        %v2077 = vmul.f32 %v1953, 1.442695
        %v2078 = vpow.pop %v2077
        %v2079 = vmul.f32 %v1954, 1.442695
        %v2080 = vpow.pop %v2079
        %v2081 = vmul.f32 %v1955, 1.442695
        %v2082 = vpow.pop %v2081
        %v2083 = vmul.f32 %v1956, 1.442695
        %v2084 = vpow.pop %v2083
        %v2085 = vmul.f32 %v1958, 0.2581989
        %v2086 = vmul.f32 %v1960, 0.2581989
        %v2087 = vmul.f32 %v1962, 0.2581989
        %v2088 = vmul.f32 %v1964, 0.2581989
        %v2089 = vmul.f32 %v1966, 0.2581989
        %v2090 = vmul.f32 %v1968, 0.2581989
        %v2091 = vmul.f32 %v1970, 0.2581989
        %v2092 = vmul.f32 %v1972, 0.2581989
        %v2093 = vmul.f32 %v1974, 0.2581989
        %v2094 = vmul.f32 %v1976, 0.2581989
        %v2095 = vmul.f32 %v1978, 0.2581989
        %v2096 = vmul.f32 %v1980, 0.2581989
        %v2097 = vmul.f32 %v1982, 0.2581989
        %v2098 = vmul.f32 %v1984, 0.2581989
        %v2099 = vmul.f32 %v1986, 0.2581989
        %v2100 = vmul.f32 %v1988, 0.2581989
        %v2101 = vmul.f32 %v1990, 0.2581989
        %v2102 = vmul.f32 %v1992, 0.2581989
        %v2103 = vmul.f32 %v1994, 0.2581989
        %v2104 = vmul.f32 %v1996, 0.2581989
        %v2105 = vmul.f32 %v1998, 0.2581989
        %v2106 = vmul.f32 %v2000, 0.2581989
        %v2107 = vmul.f32 %v2002, 0.2581989
        %v2108 = vmul.f32 %v2004, 0.2581989
        %v2109 = vmul.f32 %v2006, 0.2581989
        %v2110 = vmul.f32 %v2008, 0.2581989
        %v2111 = vmul.f32 %v2010, 0.2581989
        %v2112 = vmul.f32 %v2012, 0.2581989
        %v2113 = vmul.f32 %v2014, 0.2581989
        %v2114 = vmul.f32 %v2016, 0.2581989
        %v2115 = vmul.f32 %v2018, 0.2581989
        %v2116 = vmul.f32 %v2020, 0.2581989
        %v2117 = vmul.f32 %v2022, 0.2581989
        %v2118 = vmul.f32 %v2024, 0.2581989
        %v2119 = vmul.f32 %v2026, 0.2581989
        %v2120 = vmul.f32 %v2028, 0.2581989
        %v2121 = vmul.f32 %v2030, 0.2581989
        %v2122 = vmul.f32 %v2032, 0.2581989
        %v2123 = vmul.f32 %v2034, 0.2581989
        %v2124 = vmul.f32 %v2036, 0.2581989
        %v2125 = vmul.f32 %v2038, 0.2581989
        %v2126 = vmul.f32 %v2040, 0.2581989
        %v2127 = vmul.f32 %v2042, 0.2581989
        %v2128 = vmul.f32 %v2044, 0.2581989
        %v2129 = vmul.f32 %v2046, 0.2581989
        %v2130 = vmul.f32 %v2048, 0.2581989
        %v2131 = vmul.f32 %v2050, 0.2581989
        %v2132 = vmul.f32 %v2052, 0.2581989
        %v2133 = vmul.f32 %v2054, 0.2581989
        %v2134 = vmul.f32 %v2056, 0.2581989
        %v2135 = vmul.f32 %v2058, 0.2581989
        %v2136 = vmul.f32 %v2060, 0.2581989
        %v2137 = vmul.f32 %v2062, 0.2581989
        %v2138 = vmul.f32 %v2064, 0.2581989
        %v2139 = vmul.f32 %v2066, 0.2581989
        %v2140 = vmul.f32 %v2068, 0.2581989
        %v2141 = vmul.f32 %v2070, 0.2581989
        %v2142 = vmul.f32 %v2072, 0.2581989
        %v2143 = vmul.f32 %v2074, 0.2581989
        %v2144 = vmul.f32 %v2076, 0.2581989
        %v2145 = vmul.f32 %v2078, 0.2581989
        %v2146 = vmul.f32 %v2080, 0.2581989
        %v2147 = vmul.f32 %v2082, 0.2581989
        %v2148 = vmul.f32 %v2084, 0.2581989
        %vm2149 = vcmp.lt.s32.totalorder %v951, 8
        %v2150 = vsel %vm2149, 1, 0
        %v2151 = vcvt.s32.f32 %v2150
        %v2152 = vmul.f32 %v1638, %v2085
        %v2153 = vmul.f32 %v1640, %v2086
        %v2154 = vmul.f32 %v1642, %v2087
        %v2155 = vmul.f32 %v1644, %v2088
        %v2156 = vmul.f32 %v1646, %v2089
        %v2157 = vmul.f32 %v1648, %v2090
        %v2158 = vmul.f32 %v1650, %v2091
        %v2159 = vmul.f32 %v1652, %v2092
        %v2160 = vmul.f32 %v1654, %v2093
        %v2161 = vmul.f32 %v1656, %v2094
        %v2162 = vmul.f32 %v1658, %v2095
        %v2163 = vmul.f32 %v1660, %v2096
        %v2164 = vmul.f32 %v1662, %v2097
        %v2165 = vmul.f32 %v1664, %v2098
        %v2166 = vmul.f32 %v1666, %v2099
        %v2167 = vmul.f32 %v1668, %v2100
        %v2168 = vmul.f32 %v1670, %v2101
        %v2169 = vmul.f32 %v1672, %v2102
        %v2170 = vmul.f32 %v1674, %v2103
        %v2171 = vmul.f32 %v1676, %v2104
        %v2172 = vmul.f32 %v1678, %v2105
        %v2173 = vmul.f32 %v1680, %v2106
        %v2174 = vmul.f32 %v1682, %v2107
        %v2175 = vmul.f32 %v1684, %v2108
        %v2176 = vmul.f32 %v1686, %v2109
        %v2177 = vmul.f32 %v1688, %v2110
        %v2178 = vmul.f32 %v1690, %v2111
        %v2179 = vmul.f32 %v1692, %v2112
        %v2180 = vmul.f32 %v1694, %v2113
        %v2181 = vmul.f32 %v1696, %v2114
        %v2182 = vmul.f32 %v1698, %v2115
        %v2183 = vmul.f32 %v1700, %v2116
        %v2184 = vmul.f32 %v1702, %v2117
        %v2185 = vmul.f32 %v1704, %v2118
        %v2186 = vmul.f32 %v1706, %v2119
        %v2187 = vmul.f32 %v1708, %v2120
        %v2188 = vmul.f32 %v1710, %v2121
        %v2189 = vmul.f32 %v1712, %v2122
        %v2190 = vmul.f32 %v1714, %v2123
        %v2191 = vmul.f32 %v1716, %v2124
        %v2192 = vmul.f32 %v1718, %v2125
        %v2193 = vmul.f32 %v1720, %v2126
        %v2194 = vmul.f32 %v1722, %v2127
        %v2195 = vmul.f32 %v1724, %v2128
        %v2196 = vmul.f32 %v1726, %v2129
        %v2197 = vmul.f32 %v1728, %v2130
        %v2198 = vmul.f32 %v1730, %v2131
        %v2199 = vmul.f32 %v1732, %v2132
        %v2200 = vmul.f32 %v1734, %v2133
        %v2201 = vmul.f32 %v1736, %v2134
        %v2202 = vmul.f32 %v1738, %v2135
        %v2203 = vmul.f32 %v1740, %v2136
        %v2204 = vmul.f32 %v1742, %v2137
        %v2205 = vmul.f32 %v1744, %v2138
        %v2206 = vmul.f32 %v1746, %v2139
        %v2207 = vmul.f32 %v1748, %v2140
        %v2208 = vmul.f32 %v1750, %v2141
        %v2209 = vmul.f32 %v1752, %v2142
        %v2210 = vmul.f32 %v1754, %v2143
        %v2211 = vmul.f32 %v1756, %v2144
        %v2212 = vmul.f32 %v1758, %v2145
        %v2213 = vmul.f32 %v1760, %v2146
        %v2214 = vmul.f32 %v1762, %v2147
        %v2215 = vmul.f32 %v1764, %v2148
        %v2216 = vmul.f32 %v2152, %v2151
        %v2217 = vmul.f32 %v2153, %v2151
        %v2218 = vmul.f32 %v2154, %v2151
        %v2219 = vmul.f32 %v2155, %v2151
        %v2220 = vmul.f32 %v2156, %v2151
        %v2221 = vmul.f32 %v2157, %v2151
        %v2222 = vmul.f32 %v2158, %v2151
        %v2223 = vmul.f32 %v2159, %v2151
        %v2224 = vmul.f32 %v2160, %v2151
        %v2225 = vmul.f32 %v2161, %v2151
        %v2226 = vmul.f32 %v2162, %v2151
        %v2227 = vmul.f32 %v2163, %v2151
        %v2228 = vmul.f32 %v2164, %v2151
        %v2229 = vmul.f32 %v2165, %v2151
        %v2230 = vmul.f32 %v2166, %v2151
        %v2231 = vmul.f32 %v2167, %v2151
        %v2232 = vmul.f32 %v2168, %v2151
        %v2233 = vmul.f32 %v2169, %v2151
        %v2234 = vmul.f32 %v2170, %v2151
        %v2235 = vmul.f32 %v2171, %v2151
        %v2236 = vmul.f32 %v2172, %v2151
        %v2237 = vmul.f32 %v2173, %v2151
        %v2238 = vmul.f32 %v2174, %v2151
        %v2239 = vmul.f32 %v2175, %v2151
        %v2240 = vmul.f32 %v2176, %v2151
        %v2241 = vmul.f32 %v2177, %v2151
        %v2242 = vmul.f32 %v2178, %v2151
        %v2243 = vmul.f32 %v2179, %v2151
        %v2244 = vmul.f32 %v2180, %v2151
        %v2245 = vmul.f32 %v2181, %v2151
        %v2246 = vmul.f32 %v2182, %v2151
        %v2247 = vmul.f32 %v2183, %v2151
        %v2248 = vmul.f32 %v2184, %v2151
        %v2249 = vmul.f32 %v2185, %v2151
        %v2250 = vmul.f32 %v2186, %v2151
        %v2251 = vmul.f32 %v2187, %v2151
        %v2252 = vmul.f32 %v2188, %v2151
        %v2253 = vmul.f32 %v2189, %v2151
        %v2254 = vmul.f32 %v2190, %v2151
        %v2255 = vmul.f32 %v2191, %v2151
        %v2256 = vmul.f32 %v2192, %v2151
        %v2257 = vmul.f32 %v2193, %v2151
        %v2258 = vmul.f32 %v2194, %v2151
        %v2259 = vmul.f32 %v2195, %v2151
        %v2260 = vmul.f32 %v2196, %v2151
        %v2261 = vmul.f32 %v2197, %v2151
        %v2262 = vmul.f32 %v2198, %v2151
        %v2263 = vmul.f32 %v2199, %v2151
        %v2264 = vmul.f32 %v2200, %v2151
        %v2265 = vmul.f32 %v2201, %v2151
        %v2266 = vmul.f32 %v2202, %v2151
        %v2267 = vmul.f32 %v2203, %v2151
        %v2268 = vmul.f32 %v2204, %v2151
        %v2269 = vmul.f32 %v2205, %v2151
        %v2270 = vmul.f32 %v2206, %v2151
        %v2271 = vmul.f32 %v2207, %v2151
        %v2272 = vmul.f32 %v2208, %v2151
        %v2273 = vmul.f32 %v2209, %v2151
        %v2274 = vmul.f32 %v2210, %v2151
        %v2275 = vmul.f32 %v2211, %v2151
        %v2276 = vmul.f32 %v2212, %v2151
        %v2277 = vmul.f32 %v2213, %v2151
        %v2278 = vmul.f32 %v2214, %v2151
        %v2279 = vmul.f32 %v2215, %v2151
        %v2280 = vld [vmem:[%s3] sm:$0xff]
        %v2281 = vld [vmem:[%s3 + $0x8] sm:$0xff]
        %v2282 = vld [vmem:[%s3 + $0x10] sm:$0xff]
        %v2283 = vld [vmem:[%s3 + $0x18] sm:$0xff]
        %v2284 = vld [vmem:[%s3 + $0x20] sm:$0xff]
        %v2285 = vld [vmem:[%s3 + $0x28] sm:$0xff]
        %v2286 = vld [vmem:[%s3 + $0x30] sm:$0xff]
        %v2287 = vld [vmem:[%s3 + $0x38] sm:$0xff]
        %v2288 = vld [vmem:[%s3 + $0x40] sm:$0xff]
        %v2289 = vld [vmem:[%s3 + $0x48] sm:$0xff]
        %v2290 = vld [vmem:[%s3 + $0x50] sm:$0xff]
        %v2291 = vld [vmem:[%s3 + $0x58] sm:$0xff]
        %v2292 = vld [vmem:[%s3 + $0x60] sm:$0xff]
        %v2293 = vld [vmem:[%s3 + $0x68] sm:$0xff]
        %v2294 = vld [vmem:[%s3 + $0x70] sm:$0xff]
        %v2295 = vld [vmem:[%s3 + $0x78] sm:$0xff]
        %v2296 = vld [vmem:[%s3 + $0x80] sm:$0xff]
        %v2297 = vld [vmem:[%s3 + $0x88] sm:$0xff]
        %v2298 = vld [vmem:[%s3 + $0x90] sm:$0xff]
        %v2299 = vld [vmem:[%s3 + $0x98] sm:$0xff]
        %v2300 = vld [vmem:[%s3 + $0xa0] sm:$0xff]
        %v2301 = vld [vmem:[%s3 + $0xa8] sm:$0xff]
        %v2302 = vld [vmem:[%s3 + $0xb0] sm:$0xff]
        %v2303 = vld [vmem:[%s3 + $0xb8] sm:$0xff]
        %v2304 = vld [vmem:[%s3 + $0xc0] sm:$0xff]
        %v2305 = vld [vmem:[%s3 + $0xc8] sm:$0xff]
        %v2306 = vld [vmem:[%s3 + $0xd0] sm:$0xff]
        %v2307 = vld [vmem:[%s3 + $0xd8] sm:$0xff]
        %v2308 = vld [vmem:[%s3 + $0xe0] sm:$0xff]
        %v2309 = vld [vmem:[%s3 + $0xe8] sm:$0xff]
        %v2310 = vld [vmem:[%s3 + $0xf0] sm:$0xff]
        %v2311 = vld [vmem:[%s3 + $0xf8] sm:$0xff]
        %v2312 = vld [vmem:[%s3 + $0x100] sm:$0xff]
        %v2313 = vld [vmem:[%s3 + $0x108] sm:$0xff]
        %v2314 = vld [vmem:[%s3 + $0x110] sm:$0xff]
        %v2315 = vld [vmem:[%s3 + $0x118] sm:$0xff]
        %v2316 = vld [vmem:[%s3 + $0x120] sm:$0xff]
        %v2317 = vld [vmem:[%s3 + $0x128] sm:$0xff]
        %v2318 = vld [vmem:[%s3 + $0x130] sm:$0xff]
        %v2319 = vld [vmem:[%s3 + $0x138] sm:$0xff]
        %v2320 = vld [vmem:[%s3 + $0x140] sm:$0xff]
        %v2321 = vld [vmem:[%s3 + $0x148] sm:$0xff]
        %v2322 = vld [vmem:[%s3 + $0x150] sm:$0xff]
        %v2323 = vld [vmem:[%s3 + $0x158] sm:$0xff]
        %v2324 = vld [vmem:[%s3 + $0x160] sm:$0xff]
        %v2325 = vld [vmem:[%s3 + $0x168] sm:$0xff]
        %v2326 = vld [vmem:[%s3 + $0x170] sm:$0xff]
        %v2327 = vld [vmem:[%s3 + $0x178] sm:$0xff]
        %v2328 = vld [vmem:[%s3 + $0x180] sm:$0xff]
        %v2329 = vld [vmem:[%s3 + $0x188] sm:$0xff]
        %v2330 = vld [vmem:[%s3 + $0x190] sm:$0xff]
        %v2331 = vld [vmem:[%s3 + $0x198] sm:$0xff]
        %v2332 = vld [vmem:[%s3 + $0x1a0] sm:$0xff]
        %v2333 = vld [vmem:[%s3 + $0x1a8] sm:$0xff]
        %v2334 = vld [vmem:[%s3 + $0x1b0] sm:$0xff]
        %v2335 = vld [vmem:[%s3 + $0x1b8] sm:$0xff]
        %v2336 = vld [vmem:[%s3 + $0x1c0] sm:$0xff]
        %v2337 = vld [vmem:[%s3 + $0x1c8] sm:$0xff]
        %v2338 = vld [vmem:[%s3 + $0x1d0] sm:$0xff]
        %v2339 = vld [vmem:[%s3 + $0x1d8] sm:$0xff]
        %v2340 = vld [vmem:[%s3 + $0x1e0] sm:$0xff]
        %v2341 = vld [vmem:[%s3 + $0x1e8] sm:$0xff]
        %v2342 = vld [vmem:[%s3 + $0x1f0] sm:$0xff]
        %v2343 = vld [vmem:[%s3 + $0x1f8] sm:$0xff]
        %v2344 = vpack.c.bf16 %v2217, %v2216
        %v2345 = vpack.c.bf16 %v2219, %v2218
        %v2346 = vpack.c.bf16 %v2221, %v2220
        %v2347 = vpack.c.bf16 %v2223, %v2222
        %v2348 = vpack.c.bf16 %v2225, %v2224
        %v2349 = vpack.c.bf16 %v2227, %v2226
        %v2350 = vpack.c.bf16 %v2229, %v2228
        %v2351 = vpack.c.bf16 %v2231, %v2230
        %v2352 = vpack.c.bf16 %v2233, %v2232
        %v2353 = vpack.c.bf16 %v2235, %v2234
        %v2354 = vpack.c.bf16 %v2237, %v2236
        %v2355 = vpack.c.bf16 %v2239, %v2238
        %v2356 = vpack.c.bf16 %v2241, %v2240
        %v2357 = vpack.c.bf16 %v2243, %v2242
        %v2358 = vpack.c.bf16 %v2245, %v2244
        %v2359 = vpack.c.bf16 %v2247, %v2246
        %v2360 = vpack.c.bf16 %v2249, %v2248
        %v2361 = vpack.c.bf16 %v2251, %v2250
        %v2362 = vpack.c.bf16 %v2253, %v2252
        %v2363 = vpack.c.bf16 %v2255, %v2254
        %v2364 = vpack.c.bf16 %v2257, %v2256
        %v2365 = vpack.c.bf16 %v2259, %v2258
        %v2366 = vpack.c.bf16 %v2261, %v2260
        %v2367 = vpack.c.bf16 %v2263, %v2262
        %v2368 = vpack.c.bf16 %v2265, %v2264
        %v2369 = vpack.c.bf16 %v2267, %v2266
        %v2370 = vpack.c.bf16 %v2269, %v2268
        %v2371 = vpack.c.bf16 %v2271, %v2270
        %v2372 = vpack.c.bf16 %v2273, %v2272
        %v2373 = vpack.c.bf16 %v2275, %v2274
        %v2374 = vpack.c.bf16 %v2277, %v2276
        %v2375 = vpack.c.bf16 %v2279, %v2278
        %v2376 = vpack.c.bf16 %v887, %v886
        %v2377 = vpack.c.bf16 %v889, %v888
        %v2378 = vpack.c.bf16 %v891, %v890
        %v2379 = vpack.c.bf16 %v893, %v892
        %v2380 = vpack.c.bf16 %v895, %v894
        %v2381 = vpack.c.bf16 %v897, %v896
        %v2382 = vpack.c.bf16 %v899, %v898
        %v2383 = vpack.c.bf16 %v901, %v900
        %v2384 = vpack.c.bf16 %v903, %v902
        %v2385 = vpack.c.bf16 %v905, %v904
        %v2386 = vpack.c.bf16 %v907, %v906
        %v2387 = vpack.c.bf16 %v909, %v908
        %v2388 = vpack.c.bf16 %v911, %v910
        %v2389 = vpack.c.bf16 %v913, %v912
        %v2390 = vpack.c.bf16 %v915, %v914
        %v2391 = vpack.c.bf16 %v917, %v916
        %v2392 = vpack.c.bf16 %v919, %v918
        %v2393 = vpack.c.bf16 %v921, %v920
        %v2394 = vpack.c.bf16 %v923, %v922
        %v2395 = vpack.c.bf16 %v925, %v924
        %v2396 = vpack.c.bf16 %v927, %v926
        %v2397 = vpack.c.bf16 %v929, %v928
        %v2398 = vpack.c.bf16 %v931, %v930
        %v2399 = vpack.c.bf16 %v933, %v932
        %v2400 = vpack.c.bf16 %v935, %v934
        %v2401 = vpack.c.bf16 %v937, %v936
        %v2402 = vpack.c.bf16 %v939, %v938
        %v2403 = vpack.c.bf16 %v941, %v940
        %v2404 = vpack.c.bf16 %v943, %v942
        %v2405 = vpack.c.bf16 %v945, %v944
        %v2406 = vpack.c.bf16 %v947, %v946
        %v2407 = vpack.c.bf16 %v949, %v948
        %2408 = vxpose.xlu0.c.b16.start [1/8] %v2344, 128
        %2409 = vxpose.xlu0.c.b16.cont [2/8] %v2345, 128
        %2410 = vxpose.xlu0.c.b16.cont [3/8] %v2346, 128
        %2411 = vxpose.xlu0.c.b16.cont [4/8] %v2347, 128
        %2412 = vxpose.xlu0.c.b16.cont [5/8] %v2348, 128
        %2413 = vxpose.xlu0.c.b16.cont [6/8] %v2349, 128
        %2414 = vxpose.xlu0.c.b16.cont [7/8] %v2350, 128
        %2415 = vxpose.xlu0.c.b16.end [8/8] %v2351, 128
        %v2416 = vpop.trf.xlu0
        %v2417 = vpop.trf.xlu0
        %v2418 = vpop.trf.xlu0
        %v2419 = vpop.trf.xlu0
        %v2420 = vpop.trf.xlu0
        %v2421 = vpop.trf.xlu0
        %v2422 = vpop.trf.xlu0
        %v2423 = vpop.trf.xlu0
        %2424 = vmatprep.subr.bf16.mxu0 0
        %2425 = vmatpush1.bf16.msra.mxu0 %v2376
        %2426 = vmatprep.subr.bf16.mxu0 0
        %2427 = vmatpush1.bf16.msra.mxu0 %v2377
        %2428 = vmatprep.subr.bf16.mxu0 0
        %2429 = vmatpush1.bf16.msra.mxu0 %v2378
        %2430 = vmatprep.subr.bf16.mxu0 0
        %2431 = vmatpush1.bf16.msra.mxu0 %v2379
        %2432 = vmatprep.subr.bf16.mxu0 0
        %2433 = vmatpush1.bf16.msra.mxu0 %v2380
        %2434 = vmatprep.subr.bf16.mxu0 0
        %2435 = vmatpush1.bf16.msra.mxu0 %v2381
        %2436 = vmatprep.subr.bf16.mxu0 0
        %2437 = vmatpush1.bf16.msra.mxu0 %v2382
        %2438 = vmatprep.subr.bf16.mxu0 0
        %2439 = vmatpush1.bf16.msra.mxu0 %v2383
        %2440 = vmatprep.subr.bf16.mxu0 0
        %2441 = vmatpush1.bf16.msra.mxu0 0
        %2442 = vmatprep.subr.bf16.mxu0 0
        %2443 = vmatpush1.bf16.msra.mxu0 0
        %2444 = vmatprep.subr.bf16.mxu0 0
        %2445 = vmatpush1.bf16.msra.mxu0 0
        %2446 = vmatprep.subr.bf16.mxu0 0
        %2447 = vmatpush1.bf16.msra.mxu0 0
        %2448 = vmatprep.subr.bf16.mxu0 0
        %2449 = vmatpush1.bf16.msra.mxu0 0
        %2450 = vmatprep.subr.bf16.mxu0 0
        %2451 = vmatpush1.bf16.msra.mxu0 0
        %2452 = vmatprep.subr.bf16.mxu0 0
        %2453 = vmatpush1.bf16.msra.mxu0 0
        %2454 = vmatprep.subr.bf16.mxu0 0
        %2455 = vmatpush1.bf16.msra.mxu0 0
        %2456 = vmatprep.mubr.bf16.mxu0 0
        %2457 = vmatmul.mubr.bf16.gmra.mrb[0].mxu0 %v2416
        %v2458 = vpop.f32.mrb[0].mxu0
        %v2459 = vadd.f32 0.0, %v2458
        %v2460 = vpop.f32.mrb[0].mxu0
        %v2461 = vpop.f32.mrb[0].mxu0
        %v2462 = vadd.f32 0.0, %v2461
        %v2463 = vpop.f32.mrb[0].mxu0
        %2464 = vmatprep.mubr.bf16.mxu0 0
        %2465 = vmatmul.mubr.bf16.gmra.mrb[0].mxu0 %v2417
        %v2466 = vpop.f32.mrb[0].mxu0
        %v2467 = vadd.f32 0.0, %v2466
        %v2468 = vpop.f32.mrb[0].mxu0
        %v2469 = vpop.f32.mrb[0].mxu0
        %v2470 = vadd.f32 0.0, %v2469
        %v2471 = vpop.f32.mrb[0].mxu0
        %2472 = vmatprep.mubr.bf16.mxu0 0
        %2473 = vmatmul.mubr.bf16.gmra.mrb[0].mxu0 %v2418
        %v2474 = vpop.f32.mrb[0].mxu0
        %v2475 = vadd.f32 0.0, %v2474
        %v2476 = vpop.f32.mrb[0].mxu0
        %v2477 = vpop.f32.mrb[0].mxu0
        %v2478 = vadd.f32 0.0, %v2477
        %v2479 = vpop.f32.mrb[0].mxu0
        %2480 = vmatprep.mubr.bf16.mxu0 0
        %2481 = vmatmul.mubr.bf16.gmra.mrb[0].mxu0 %v2419
        %v2482 = vpop.f32.mrb[0].mxu0
        %v2483 = vadd.f32 0.0, %v2482
        %v2484 = vpop.f32.mrb[0].mxu0
        %v2485 = vpop.f32.mrb[0].mxu0
        %v2486 = vadd.f32 0.0, %v2485
        %v2487 = vpop.f32.mrb[0].mxu0
        %2488 = vmatprep.mubr.bf16.mxu0 0
        %2489 = vmatmul.mubr.bf16.gmra.mrb[0].mxu0 %v2420
        %v2490 = vpop.f32.mrb[0].mxu0
        %v2491 = vadd.f32 0.0, %v2490
        %v2492 = vpop.f32.mrb[0].mxu0
        %v2493 = vpop.f32.mrb[0].mxu0
        %v2494 = vadd.f32 0.0, %v2493
        %v2495 = vpop.f32.mrb[0].mxu0
        %2496 = vmatprep.mubr.bf16.mxu0 0
        %2497 = vmatmul.mubr.bf16.gmra.mrb[0].mxu0 %v2421
        %v2498 = vpop.f32.mrb[0].mxu0
        %v2499 = vadd.f32 0.0, %v2498
        %v2500 = vpop.f32.mrb[0].mxu0
        %v2501 = vpop.f32.mrb[0].mxu0
        %v2502 = vadd.f32 0.0, %v2501
        %v2503 = vpop.f32.mrb[0].mxu0
        %2504 = vmatprep.mubr.bf16.mxu0 0
        %2505 = vmatmul.mubr.bf16.gmra.mrb[0].mxu0 %v2422
        %v2506 = vpop.f32.mrb[0].mxu0
        %v2507 = vadd.f32 0.0, %v2506
        %v2508 = vpop.f32.mrb[0].mxu0
        %v2509 = vpop.f32.mrb[0].mxu0
        %v2510 = vadd.f32 0.0, %v2509
        %v2511 = vpop.f32.mrb[0].mxu0
        %2512 = vmatprep.mubr.bf16.mxu0 0
        %2513 = vmatmul.mubr.bf16.gmra.mrb[0].mxu0 %v2423
        %v2514 = vpop.f32.mrb[0].mxu0
        %v2515 = vadd.f32 0.0, %v2514
        %v2516 = vpop.f32.mrb[0].mxu0
        %v2517 = vpop.f32.mrb[0].mxu0
        %v2518 = vadd.f32 0.0, %v2517
        %v2519 = vpop.f32.mrb[0].mxu0
        %2520 = vdwg.mxu0
        %2521 = vxpose.xlu0.c.b16.start [1/8] %v2352, 128
        %2522 = vxpose.xlu0.c.b16.cont [2/8] %v2353, 128
        %2523 = vxpose.xlu0.c.b16.cont [3/8] %v2354, 128
        %2524 = vxpose.xlu0.c.b16.cont [4/8] %v2355, 128
        %2525 = vxpose.xlu0.c.b16.cont [5/8] %v2356, 128
        %2526 = vxpose.xlu0.c.b16.cont [6/8] %v2357, 128
        %2527 = vxpose.xlu0.c.b16.cont [7/8] %v2358, 128
        %2528 = vxpose.xlu0.c.b16.end [8/8] %v2359, 128
        %v2529 = vpop.trf.xlu0
        %v2530 = vpop.trf.xlu0
        %v2531 = vpop.trf.xlu0
        %v2532 = vpop.trf.xlu0
        %v2533 = vpop.trf.xlu0
        %v2534 = vpop.trf.xlu0
        %v2535 = vpop.trf.xlu0
        %v2536 = vpop.trf.xlu0
        %2537 = vmatprep.subr.bf16.mxu0 0
        %2538 = vmatpush1.bf16.msra.mxu0 %v2384
        %2539 = vmatprep.subr.bf16.mxu0 0
        %2540 = vmatpush1.bf16.msra.mxu0 %v2385
        %2541 = vmatprep.subr.bf16.mxu0 0
        %2542 = vmatpush1.bf16.msra.mxu0 %v2386
        %2543 = vmatprep.subr.bf16.mxu0 0
        %2544 = vmatpush1.bf16.msra.mxu0 %v2387
        %2545 = vmatprep.subr.bf16.mxu0 0
        %2546 = vmatpush1.bf16.msra.mxu0 %v2388
        %2547 = vmatprep.subr.bf16.mxu0 0
        %2548 = vmatpush1.bf16.msra.mxu0 %v2389
        %2549 = vmatprep.subr.bf16.mxu0 0
        %2550 = vmatpush1.bf16.msra.mxu0 %v2390
        %2551 = vmatprep.subr.bf16.mxu0 0
        %2552 = vmatpush1.bf16.msra.mxu0 %v2391
        %2553 = vmatprep.subr.bf16.mxu0 0
        %2554 = vmatpush1.bf16.msra.mxu0 0
        %2555 = vmatprep.subr.bf16.mxu0 0
        %2556 = vmatpush1.bf16.msra.mxu0 0
        %2557 = vmatprep.subr.bf16.mxu0 0
        %2558 = vmatpush1.bf16.msra.mxu0 0
        %2559 = vmatprep.subr.bf16.mxu0 0
        %2560 = vmatpush1.bf16.msra.mxu0 0
        %2561 = vmatprep.subr.bf16.mxu0 0
        %2562 = vmatpush1.bf16.msra.mxu0 0
        %2563 = vmatprep.subr.bf16.mxu0 0
        %2564 = vmatpush1.bf16.msra.mxu0 0
        %2565 = vmatprep.subr.bf16.mxu0 0
        %2566 = vmatpush1.bf16.msra.mxu0 0
        %2567 = vmatprep.subr.bf16.mxu0 0
        %2568 = vmatpush1.bf16.msra.mxu0 0
        %2569 = vmatprep.mubr.bf16.mxu0 0
        %2570 = vmatmul.mubr.bf16.gmra.mrb[0].mxu0 %v2529
        %v2571 = vpop.f32.mrb[0].mxu0
        %v2572 = vadd.f32 0.0, %v2571
        %v2573 = vpop.f32.mrb[0].mxu0
        %v2574 = vpop.f32.mrb[0].mxu0
        %v2575 = vadd.f32 0.0, %v2574
        %v2576 = vpop.f32.mrb[0].mxu0
        %2577 = vmatprep.mubr.bf16.mxu0 0
        %2578 = vmatmul.mubr.bf16.gmra.mrb[0].mxu0 %v2530
        %v2579 = vpop.f32.mrb[0].mxu0
        %v2580 = vadd.f32 0.0, %v2579
        %v2581 = vpop.f32.mrb[0].mxu0
        %v2582 = vpop.f32.mrb[0].mxu0
        %v2583 = vadd.f32 0.0, %v2582
        %v2584 = vpop.f32.mrb[0].mxu0
        %2585 = vmatprep.mubr.bf16.mxu0 0
        %2586 = vmatmul.mubr.bf16.gmra.mrb[0].mxu0 %v2531
        %v2587 = vpop.f32.mrb[0].mxu0
        %v2588 = vadd.f32 0.0, %v2587
        %v2589 = vpop.f32.mrb[0].mxu0
        %v2590 = vpop.f32.mrb[0].mxu0
        %v2591 = vadd.f32 0.0, %v2590
        %v2592 = vpop.f32.mrb[0].mxu0
        %2593 = vmatprep.mubr.bf16.mxu0 0
        %2594 = vmatmul.mubr.bf16.gmra.mrb[0].mxu0 %v2532
        %v2595 = vpop.f32.mrb[0].mxu0
        %v2596 = vadd.f32 0.0, %v2595
        %v2597 = vpop.f32.mrb[0].mxu0
        %v2598 = vpop.f32.mrb[0].mxu0
        %v2599 = vadd.f32 0.0, %v2598
        %v2600 = vpop.f32.mrb[0].mxu0
        %2601 = vmatprep.mubr.bf16.mxu0 0
        %2602 = vmatmul.mubr.bf16.gmra.mrb[0].mxu0 %v2533
        %v2603 = vpop.f32.mrb[0].mxu0
        %v2604 = vadd.f32 0.0, %v2603
        %v2605 = vpop.f32.mrb[0].mxu0
        %v2606 = vpop.f32.mrb[0].mxu0
        %v2607 = vadd.f32 0.0, %v2606
        %v2608 = vpop.f32.mrb[0].mxu0
        %2609 = vmatprep.mubr.bf16.mxu0 0
        %2610 = vmatmul.mubr.bf16.gmra.mrb[0].mxu0 %v2534
        %v2611 = vpop.f32.mrb[0].mxu0
        %v2612 = vadd.f32 0.0, %v2611
        %v2613 = vpop.f32.mrb[0].mxu0
        %v2614 = vpop.f32.mrb[0].mxu0
        %v2615 = vadd.f32 0.0, %v2614
        %v2616 = vpop.f32.mrb[0].mxu0
        %2617 = vmatprep.mubr.bf16.mxu0 0
        %2618 = vmatmul.mubr.bf16.gmra.mrb[0].mxu0 %v2535
        %v2619 = vpop.f32.mrb[0].mxu0
        %v2620 = vadd.f32 0.0, %v2619
        %v2621 = vpop.f32.mrb[0].mxu0
        %v2622 = vpop.f32.mrb[0].mxu0
        %v2623 = vadd.f32 0.0, %v2622
        %v2624 = vpop.f32.mrb[0].mxu0
        %2625 = vmatprep.mubr.bf16.mxu0 0
        %2626 = vmatmul.mubr.bf16.gmra.mrb[0].mxu0 %v2536
        %v2627 = vpop.f32.mrb[0].mxu0
        %v2628 = vadd.f32 0.0, %v2627
        %v2629 = vpop.f32.mrb[0].mxu0
        %v2630 = vpop.f32.mrb[0].mxu0
        %v2631 = vadd.f32 0.0, %v2630
        %v2632 = vpop.f32.mrb[0].mxu0
        %2633 = vdwg.mxu0
        %2634 = vxpose.xlu0.c.b16.start [1/8] %v2360, 128
        %2635 = vxpose.xlu0.c.b16.cont [2/8] %v2361, 128
        %2636 = vxpose.xlu0.c.b16.cont [3/8] %v2362, 128
        %2637 = vxpose.xlu0.c.b16.cont [4/8] %v2363, 128
        %2638 = vxpose.xlu0.c.b16.cont [5/8] %v2364, 128
        %2639 = vxpose.xlu0.c.b16.cont [6/8] %v2365, 128
        %2640 = vxpose.xlu0.c.b16.cont [7/8] %v2366, 128
        %2641 = vxpose.xlu0.c.b16.end [8/8] %v2367, 128
        %v2642 = vpop.trf.xlu0
        %v2643 = vpop.trf.xlu0
        %v2644 = vpop.trf.xlu0
        %v2645 = vpop.trf.xlu0
        %v2646 = vpop.trf.xlu0
        %v2647 = vpop.trf.xlu0
        %v2648 = vpop.trf.xlu0
        %v2649 = vpop.trf.xlu0
        %2650 = vmatprep.subr.bf16.mxu0 0
        %2651 = vmatpush1.bf16.msra.mxu0 %v2392
        %2652 = vmatprep.subr.bf16.mxu0 0
        %2653 = vmatpush1.bf16.msra.mxu0 %v2393
        %2654 = vmatprep.subr.bf16.mxu0 0
        %2655 = vmatpush1.bf16.msra.mxu0 %v2394
        %2656 = vmatprep.subr.bf16.mxu0 0
        %2657 = vmatpush1.bf16.msra.mxu0 %v2395
        %2658 = vmatprep.subr.bf16.mxu0 0
        %2659 = vmatpush1.bf16.msra.mxu0 %v2396
        %2660 = vmatprep.subr.bf16.mxu0 0
        %2661 = vmatpush1.bf16.msra.mxu0 %v2397
        %2662 = vmatprep.subr.bf16.mxu0 0
        %2663 = vmatpush1.bf16.msra.mxu0 %v2398
        %2664 = vmatprep.subr.bf16.mxu0 0
        %2665 = vmatpush1.bf16.msra.mxu0 %v2399
        %2666 = vmatprep.subr.bf16.mxu0 0
        %2667 = vmatpush1.bf16.msra.mxu0 0
        %2668 = vmatprep.subr.bf16.mxu0 0
        %2669 = vmatpush1.bf16.msra.mxu0 0
        %2670 = vmatprep.subr.bf16.mxu0 0
        %2671 = vmatpush1.bf16.msra.mxu0 0
        %2672 = vmatprep.subr.bf16.mxu0 0
        %2673 = vmatpush1.bf16.msra.mxu0 0
        %2674 = vmatprep.subr.bf16.mxu0 0
        %2675 = vmatpush1.bf16.msra.mxu0 0
        %2676 = vmatprep.subr.bf16.mxu0 0
        %2677 = vmatpush1.bf16.msra.mxu0 0
        %2678 = vmatprep.subr.bf16.mxu0 0
        %2679 = vmatpush1.bf16.msra.mxu0 0
        %2680 = vmatprep.subr.bf16.mxu0 0
        %2681 = vmatpush1.bf16.msra.mxu0 0
        %2682 = vmatprep.mubr.bf16.mxu0 0
        %2683 = vmatmul.mubr.bf16.gmra.mrb[0].mxu0 %v2642
        %v2684 = vpop.f32.mrb[0].mxu0
        %v2685 = vadd.f32 0.0, %v2684
        %v2686 = vpop.f32.mrb[0].mxu0
        %v2687 = vpop.f32.mrb[0].mxu0
        %v2688 = vadd.f32 0.0, %v2687
        %v2689 = vpop.f32.mrb[0].mxu0
        %2690 = vmatprep.mubr.bf16.mxu0 0
        %2691 = vmatmul.mubr.bf16.gmra.mrb[0].mxu0 %v2643
        %v2692 = vpop.f32.mrb[0].mxu0
        %v2693 = vadd.f32 0.0, %v2692
        %v2694 = vpop.f32.mrb[0].mxu0
        %v2695 = vpop.f32.mrb[0].mxu0
        %v2696 = vadd.f32 0.0, %v2695
        %v2697 = vpop.f32.mrb[0].mxu0
        %2698 = vmatprep.mubr.bf16.mxu0 0
        %2699 = vmatmul.mubr.bf16.gmra.mrb[0].mxu0 %v2644
        %v2700 = vpop.f32.mrb[0].mxu0
        %v2701 = vadd.f32 0.0, %v2700
        %v2702 = vpop.f32.mrb[0].mxu0
        %v2703 = vpop.f32.mrb[0].mxu0
        %v2704 = vadd.f32 0.0, %v2703
        %v2705 = vpop.f32.mrb[0].mxu0
        %2706 = vmatprep.mubr.bf16.mxu0 0
        %2707 = vmatmul.mubr.bf16.gmra.mrb[0].mxu0 %v2645
        %v2708 = vpop.f32.mrb[0].mxu0
        %v2709 = vadd.f32 0.0, %v2708
        %v2710 = vpop.f32.mrb[0].mxu0
        %v2711 = vpop.f32.mrb[0].mxu0
        %v2712 = vadd.f32 0.0, %v2711
        %v2713 = vpop.f32.mrb[0].mxu0
        %2714 = vmatprep.mubr.bf16.mxu0 0
        %2715 = vmatmul.mubr.bf16.gmra.mrb[0].mxu0 %v2646
        %v2716 = vpop.f32.mrb[0].mxu0
        %v2717 = vadd.f32 0.0, %v2716
        %v2718 = vpop.f32.mrb[0].mxu0
        %v2719 = vpop.f32.mrb[0].mxu0
        %v2720 = vadd.f32 0.0, %v2719
        %v2721 = vpop.f32.mrb[0].mxu0
        %2722 = vmatprep.mubr.bf16.mxu0 0
        %2723 = vmatmul.mubr.bf16.gmra.mrb[0].mxu0 %v2647
        %v2724 = vpop.f32.mrb[0].mxu0
        %v2725 = vadd.f32 0.0, %v2724
        %v2726 = vpop.f32.mrb[0].mxu0
        %v2727 = vpop.f32.mrb[0].mxu0
        %v2728 = vadd.f32 0.0, %v2727
        %v2729 = vpop.f32.mrb[0].mxu0
        %2730 = vmatprep.mubr.bf16.mxu0 0
        %2731 = vmatmul.mubr.bf16.gmra.mrb[0].mxu0 %v2648
        %v2732 = vpop.f32.mrb[0].mxu0
        %v2733 = vadd.f32 0.0, %v2732
        %v2734 = vpop.f32.mrb[0].mxu0
        %v2735 = vpop.f32.mrb[0].mxu0
        %v2736 = vadd.f32 0.0, %v2735
        %v2737 = vpop.f32.mrb[0].mxu0
        %2738 = vmatprep.mubr.bf16.mxu0 0
        %2739 = vmatmul.mubr.bf16.gmra.mrb[0].mxu0 %v2649
        %v2740 = vpop.f32.mrb[0].mxu0
        %v2741 = vadd.f32 0.0, %v2740
        %v2742 = vpop.f32.mrb[0].mxu0
        %v2743 = vpop.f32.mrb[0].mxu0
        %v2744 = vadd.f32 0.0, %v2743
        %v2745 = vpop.f32.mrb[0].mxu0
        %2746 = vdwg.mxu0
        %2747 = vxpose.xlu0.c.b16.start [1/8] %v2368, 128
        %2748 = vxpose.xlu0.c.b16.cont [2/8] %v2369, 128
        %2749 = vxpose.xlu0.c.b16.cont [3/8] %v2370, 128
        %2750 = vxpose.xlu0.c.b16.cont [4/8] %v2371, 128
        %2751 = vxpose.xlu0.c.b16.cont [5/8] %v2372, 128
        %2752 = vxpose.xlu0.c.b16.cont [6/8] %v2373, 128
        %2753 = vxpose.xlu0.c.b16.cont [7/8] %v2374, 128
        %2754 = vxpose.xlu0.c.b16.end [8/8] %v2375, 128
        %v2755 = vpop.trf.xlu0
        %v2756 = vpop.trf.xlu0
        %v2757 = vpop.trf.xlu0
        %v2758 = vpop.trf.xlu0
        %v2759 = vpop.trf.xlu0
        %v2760 = vpop.trf.xlu0
        %v2761 = vpop.trf.xlu0
        %v2762 = vpop.trf.xlu0
        %2763 = vmatprep.subr.bf16.mxu0 0
        %2764 = vmatpush1.bf16.msra.mxu0 %v2400
        %2765 = vmatprep.subr.bf16.mxu0 0
        %2766 = vmatpush1.bf16.msra.mxu0 %v2401
        %2767 = vmatprep.subr.bf16.mxu0 0
        %2768 = vmatpush1.bf16.msra.mxu0 %v2402
        %2769 = vmatprep.subr.bf16.mxu0 0
        %2770 = vmatpush1.bf16.msra.mxu0 %v2403
        %2771 = vmatprep.subr.bf16.mxu0 0
        %2772 = vmatpush1.bf16.msra.mxu0 %v2404
        %2773 = vmatprep.subr.bf16.mxu0 0
        %2774 = vmatpush1.bf16.msra.mxu0 %v2405
        %2775 = vmatprep.subr.bf16.mxu0 0
        %2776 = vmatpush1.bf16.msra.mxu0 %v2406
        %2777 = vmatprep.subr.bf16.mxu0 0
        %2778 = vmatpush1.bf16.msra.mxu0 %v2407
        %2779 = vmatprep.subr.bf16.mxu0 0
        %2780 = vmatpush1.bf16.msra.mxu0 0
        %2781 = vmatprep.subr.bf16.mxu0 0
        %2782 = vmatpush1.bf16.msra.mxu0 0
        %2783 = vmatprep.subr.bf16.mxu0 0
        %2784 = vmatpush1.bf16.msra.mxu0 0
        %2785 = vmatprep.subr.bf16.mxu0 0
        %2786 = vmatpush1.bf16.msra.mxu0 0
        %2787 = vmatprep.subr.bf16.mxu0 0
        %2788 = vmatpush1.bf16.msra.mxu0 0
        %2789 = vmatprep.subr.bf16.mxu0 0
        %2790 = vmatpush1.bf16.msra.mxu0 0
        %2791 = vmatprep.subr.bf16.mxu0 0
        %2792 = vmatpush1.bf16.msra.mxu0 0
        %2793 = vmatprep.subr.bf16.mxu0 0
        %2794 = vmatpush1.bf16.msra.mxu0 0
        %2795 = vmatprep.mubr.bf16.mxu0 0
        %2796 = vmatmul.mubr.bf16.gmra.mrb[0].mxu0 %v2755
        %v2797 = vpop.f32.mrb[0].mxu0
        %v2798 = vadd.f32 0.0, %v2797
        %v2799 = vpop.f32.mrb[0].mxu0
        %v2800 = vpop.f32.mrb[0].mxu0
        %v2801 = vadd.f32 0.0, %v2800
        %v2802 = vpop.f32.mrb[0].mxu0
        %2803 = vmatprep.mubr.bf16.mxu0 0
        %2804 = vmatmul.mubr.bf16.gmra.mrb[0].mxu0 %v2756
        %v2805 = vpop.f32.mrb[0].mxu0
        %v2806 = vadd.f32 0.0, %v2805
        %v2807 = vpop.f32.mrb[0].mxu0
        %v2808 = vpop.f32.mrb[0].mxu0
        %v2809 = vadd.f32 0.0, %v2808
        %v2810 = vpop.f32.mrb[0].mxu0
        %2811 = vmatprep.mubr.bf16.mxu0 0
        %2812 = vmatmul.mubr.bf16.gmra.mrb[0].mxu0 %v2757
        %v2813 = vpop.f32.mrb[0].mxu0
        %v2814 = vadd.f32 0.0, %v2813
        %v2815 = vpop.f32.mrb[0].mxu0
        %v2816 = vpop.f32.mrb[0].mxu0
        %v2817 = vadd.f32 0.0, %v2816
        %v2818 = vpop.f32.mrb[0].mxu0
        %2819 = vmatprep.mubr.bf16.mxu0 0
        %2820 = vmatmul.mubr.bf16.gmra.mrb[0].mxu0 %v2758
        %v2821 = vpop.f32.mrb[0].mxu0
        %v2822 = vadd.f32 0.0, %v2821
        %v2823 = vpop.f32.mrb[0].mxu0
        %v2824 = vpop.f32.mrb[0].mxu0
        %v2825 = vadd.f32 0.0, %v2824
        %v2826 = vpop.f32.mrb[0].mxu0
        %2827 = vmatprep.mubr.bf16.mxu0 0
        %2828 = vmatmul.mubr.bf16.gmra.mrb[0].mxu0 %v2759
        %v2829 = vpop.f32.mrb[0].mxu0
        %v2830 = vadd.f32 0.0, %v2829
        %v2831 = vpop.f32.mrb[0].mxu0
        %v2832 = vpop.f32.mrb[0].mxu0
        %v2833 = vadd.f32 0.0, %v2832
        %v2834 = vpop.f32.mrb[0].mxu0
        %2835 = vmatprep.mubr.bf16.mxu0 0
        %2836 = vmatmul.mubr.bf16.gmra.mrb[0].mxu0 %v2760
        %v2837 = vpop.f32.mrb[0].mxu0
        %v2838 = vadd.f32 0.0, %v2837
        %v2839 = vpop.f32.mrb[0].mxu0
        %v2840 = vpop.f32.mrb[0].mxu0
        %v2841 = vadd.f32 0.0, %v2840
        %v2842 = vpop.f32.mrb[0].mxu0
        %2843 = vmatprep.mubr.bf16.mxu0 0
        %2844 = vmatmul.mubr.bf16.gmra.mrb[0].mxu0 %v2761
        %v2845 = vpop.f32.mrb[0].mxu0
        %v2846 = vadd.f32 0.0, %v2845
        %v2847 = vpop.f32.mrb[0].mxu0
        %v2848 = vpop.f32.mrb[0].mxu0
        %v2849 = vadd.f32 0.0, %v2848
        %v2850 = vpop.f32.mrb[0].mxu0
        %2851 = vmatprep.mubr.bf16.mxu0 0
        %2852 = vmatmul.mubr.bf16.gmra.mrb[0].mxu0 %v2762
        %v2853 = vpop.f32.mrb[0].mxu0
        %v2854 = vadd.f32 0.0, %v2853
        %v2855 = vpop.f32.mrb[0].mxu0
        %v2856 = vpop.f32.mrb[0].mxu0
        %v2857 = vadd.f32 0.0, %v2856
        %v2858 = vpop.f32.mrb[0].mxu0
        %2859 = vdwg.mxu0
        %v2860 = vadd.f32 %v2280, %v2459
        %v2861 = vadd.f32 %v2281, %v2462
        %v2862 = vadd.f32 %v2282, %v2467
        %v2863 = vadd.f32 %v2283, %v2470
        %v2864 = vadd.f32 %v2284, %v2475
        %v2865 = vadd.f32 %v2285, %v2478
        %v2866 = vadd.f32 %v2286, %v2483
        %v2867 = vadd.f32 %v2287, %v2486
        %v2868 = vadd.f32 %v2288, %v2491
        %v2869 = vadd.f32 %v2289, %v2494
        %v2870 = vadd.f32 %v2290, %v2499
        %v2871 = vadd.f32 %v2291, %v2502
        %v2872 = vadd.f32 %v2292, %v2507
        %v2873 = vadd.f32 %v2293, %v2510
        %v2874 = vadd.f32 %v2294, %v2515
        %v2875 = vadd.f32 %v2295, %v2518
        %v2876 = vadd.f32 %v2296, %v2572
        %v2877 = vadd.f32 %v2297, %v2575
        %v2878 = vadd.f32 %v2298, %v2580
        %v2879 = vadd.f32 %v2299, %v2583
        %v2880 = vadd.f32 %v2300, %v2588
        %v2881 = vadd.f32 %v2301, %v2591
        %v2882 = vadd.f32 %v2302, %v2596
        %v2883 = vadd.f32 %v2303, %v2599
        %v2884 = vadd.f32 %v2304, %v2604
        %v2885 = vadd.f32 %v2305, %v2607
        %v2886 = vadd.f32 %v2306, %v2612
        %v2887 = vadd.f32 %v2307, %v2615
        %v2888 = vadd.f32 %v2308, %v2620
        %v2889 = vadd.f32 %v2309, %v2623
        %v2890 = vadd.f32 %v2310, %v2628
        %v2891 = vadd.f32 %v2311, %v2631
        %v2892 = vadd.f32 %v2312, %v2685
        %v2893 = vadd.f32 %v2313, %v2688
        %v2894 = vadd.f32 %v2314, %v2693
        %v2895 = vadd.f32 %v2315, %v2696
        %v2896 = vadd.f32 %v2316, %v2701
        %v2897 = vadd.f32 %v2317, %v2704
        %v2898 = vadd.f32 %v2318, %v2709
        %v2899 = vadd.f32 %v2319, %v2712
        %v2900 = vadd.f32 %v2320, %v2717
        %v2901 = vadd.f32 %v2321, %v2720
        %v2902 = vadd.f32 %v2322, %v2725
        %v2903 = vadd.f32 %v2323, %v2728
        %v2904 = vadd.f32 %v2324, %v2733
        %v2905 = vadd.f32 %v2325, %v2736
        %v2906 = vadd.f32 %v2326, %v2741
        %v2907 = vadd.f32 %v2327, %v2744
        %v2908 = vadd.f32 %v2328, %v2798
        %v2909 = vadd.f32 %v2329, %v2801
        %v2910 = vadd.f32 %v2330, %v2806
        %v2911 = vadd.f32 %v2331, %v2809
        %v2912 = vadd.f32 %v2332, %v2814
        %v2913 = vadd.f32 %v2333, %v2817
        %v2914 = vadd.f32 %v2334, %v2822
        %v2915 = vadd.f32 %v2335, %v2825
        %v2916 = vadd.f32 %v2336, %v2830
        %v2917 = vadd.f32 %v2337, %v2833
        %v2918 = vadd.f32 %v2338, %v2838
        %v2919 = vadd.f32 %v2339, %v2841
        %v2920 = vadd.f32 %v2340, %v2846
        %v2921 = vadd.f32 %v2341, %v2849
        %v2922 = vadd.f32 %v2342, %v2854
        %v2923 = vadd.f32 %v2343, %v2857
        %2924 = vst.msk [vmem:[%s3] sm:$0xff] %vm1019, %v2860
        %2925 = vst.msk [vmem:[%s3 + $0x8] sm:$0xff] %vm1019, %v2861
        %2926 = vst.msk [vmem:[%s3 + $0x10] sm:$0xff] %vm1019, %v2862
        %2927 = vst.msk [vmem:[%s3 + $0x18] sm:$0xff] %vm1019, %v2863
        %2928 = vst.msk [vmem:[%s3 + $0x20] sm:$0xff] %vm1019, %v2864
        %2929 = vst.msk [vmem:[%s3 + $0x28] sm:$0xff] %vm1019, %v2865
        %2930 = vst.msk [vmem:[%s3 + $0x30] sm:$0xff] %vm1019, %v2866
        %2931 = vst.msk [vmem:[%s3 + $0x38] sm:$0xff] %vm1019, %v2867
        %2932 = vst.msk [vmem:[%s3 + $0x40] sm:$0xff] %vm1019, %v2868
        %2933 = vst.msk [vmem:[%s3 + $0x48] sm:$0xff] %vm1019, %v2869
        %2934 = vst.msk [vmem:[%s3 + $0x50] sm:$0xff] %vm1019, %v2870
        %2935 = vst.msk [vmem:[%s3 + $0x58] sm:$0xff] %vm1019, %v2871
        %2936 = vst.msk [vmem:[%s3 + $0x60] sm:$0xff] %vm1019, %v2872
        %2937 = vst.msk [vmem:[%s3 + $0x68] sm:$0xff] %vm1019, %v2873
        %2938 = vst.msk [vmem:[%s3 + $0x70] sm:$0xff] %vm1019, %v2874
        %2939 = vst.msk [vmem:[%s3 + $0x78] sm:$0xff] %vm1019, %v2875
        %2940 = vst.msk [vmem:[%s3 + $0x80] sm:$0xff] %vm1019, %v2876
        %2941 = vst.msk [vmem:[%s3 + $0x88] sm:$0xff] %vm1019, %v2877
        %2942 = vst.msk [vmem:[%s3 + $0x90] sm:$0xff] %vm1019, %v2878
        %2943 = vst.msk [vmem:[%s3 + $0x98] sm:$0xff] %vm1019, %v2879
        %2944 = vst.msk [vmem:[%s3 + $0xa0] sm:$0xff] %vm1019, %v2880
        %2945 = vst.msk [vmem:[%s3 + $0xa8] sm:$0xff] %vm1019, %v2881
        %2946 = vst.msk [vmem:[%s3 + $0xb0] sm:$0xff] %vm1019, %v2882
        %2947 = vst.msk [vmem:[%s3 + $0xb8] sm:$0xff] %vm1019, %v2883
        %2948 = vst.msk [vmem:[%s3 + $0xc0] sm:$0xff] %vm1019, %v2884
        %2949 = vst.msk [vmem:[%s3 + $0xc8] sm:$0xff] %vm1019, %v2885
        %2950 = vst.msk [vmem:[%s3 + $0xd0] sm:$0xff] %vm1019, %v2886
        %2951 = vst.msk [vmem:[%s3 + $0xd8] sm:$0xff] %vm1019, %v2887
        %2952 = vst.msk [vmem:[%s3 + $0xe0] sm:$0xff] %vm1019, %v2888
        %2953 = vst.msk [vmem:[%s3 + $0xe8] sm:$0xff] %vm1019, %v2889
        %2954 = vst.msk [vmem:[%s3 + $0xf0] sm:$0xff] %vm1019, %v2890
        %2955 = vst.msk [vmem:[%s3 + $0xf8] sm:$0xff] %vm1019, %v2891
        %2956 = vst.msk [vmem:[%s3 + $0x100] sm:$0xff] %vm1019, %v2892
        %2957 = vst.msk [vmem:[%s3 + $0x108] sm:$0xff] %vm1019, %v2893
        %2958 = vst.msk [vmem:[%s3 + $0x110] sm:$0xff] %vm1019, %v2894
        %2959 = vst.msk [vmem:[%s3 + $0x118] sm:$0xff] %vm1019, %v2895
        %2960 = vst.msk [vmem:[%s3 + $0x120] sm:$0xff] %vm1019, %v2896
        %2961 = vst.msk [vmem:[%s3 + $0x128] sm:$0xff] %vm1019, %v2897
        %2962 = vst.msk [vmem:[%s3 + $0x130] sm:$0xff] %vm1019, %v2898
        %2963 = vst.msk [vmem:[%s3 + $0x138] sm:$0xff] %vm1019, %v2899
        %2964 = vst.msk [vmem:[%s3 + $0x140] sm:$0xff] %vm1019, %v2900
        %2965 = vst.msk [vmem:[%s3 + $0x148] sm:$0xff] %vm1019, %v2901
        %2966 = vst.msk [vmem:[%s3 + $0x150] sm:$0xff] %vm1019, %v2902
        %2967 = vst.msk [vmem:[%s3 + $0x158] sm:$0xff] %vm1019, %v2903
        %2968 = vst.msk [vmem:[%s3 + $0x160] sm:$0xff] %vm1019, %v2904
        %2969 = vst.msk [vmem:[%s3 + $0x168] sm:$0xff] %vm1019, %v2905
        %2970 = vst.msk [vmem:[%s3 + $0x170] sm:$0xff] %vm1019, %v2906
        %2971 = vst.msk [vmem:[%s3 + $0x178] sm:$0xff] %vm1019, %v2907
        %2972 = vst.msk [vmem:[%s3 + $0x180] sm:$0xff] %vm1019, %v2908
        %2973 = vst.msk [vmem:[%s3 + $0x188] sm:$0xff] %vm1019, %v2909
        %2974 = vst.msk [vmem:[%s3 + $0x190] sm:$0xff] %vm1019, %v2910
        %2975 = vst.msk [vmem:[%s3 + $0x198] sm:$0xff] %vm1019, %v2911
        %2976 = vst.msk [vmem:[%s3 + $0x1a0] sm:$0xff] %vm1019, %v2912
        %2977 = vst.msk [vmem:[%s3 + $0x1a8] sm:$0xff] %vm1019, %v2913
        %2978 = vst.msk [vmem:[%s3 + $0x1b0] sm:$0xff] %vm1019, %v2914
        %2979 = vst.msk [vmem:[%s3 + $0x1b8] sm:$0xff] %vm1019, %v2915
        %2980 = vst.msk [vmem:[%s3 + $0x1c0] sm:$0xff] %vm1019, %v2916
        %2981 = vst.msk [vmem:[%s3 + $0x1c8] sm:$0xff] %vm1019, %v2917
        %2982 = vst.msk [vmem:[%s3 + $0x1d0] sm:$0xff] %vm1019, %v2918
        %2983 = vst.msk [vmem:[%s3 + $0x1d8] sm:$0xff] %vm1019, %v2919
        %2984 = vst.msk [vmem:[%s3 + $0x1e0] sm:$0xff] %vm1019, %v2920
        %2985 = vst.msk [vmem:[%s3 + $0x1e8] sm:$0xff] %vm1019, %v2921
        %2986 = vst.msk [vmem:[%s3 + $0x1f0] sm:$0xff] %vm1019, %v2922
        %2987 = vst.msk [vmem:[%s3 + $0x1f8] sm:$0xff] %vm1019, %v2923
        // Predicated region
        $region113: #{light_hyper_former_forward.4} parent=99 // pred_check
          %p2988 = pneg %p100
        $region114: #{light_hyper_former_forward.4} parent=99 // pred_check_branch
          %2990 = sbr.rel (%p2988) target = $region116
        $region115: #{light_hyper_former_forward.4} parent=99 // pred_region
          _
        $region116: #{light_hyper_former_forward.4} parent=99 // pred_fallthru
          _
        // Predicated region
        $region117: #{light_hyper_former_forward.4} parent=99 // pred_check
          %p2991 = pneg %p100
        $region118: #{light_hyper_former_forward.4} parent=99 // pred_check_branch
          %2993 = sbr.rel (%p2991) target = $region120
        $region119: #{light_hyper_former_forward.4} parent=99 // pred_region
          _
        $region120: #{light_hyper_former_forward.4} parent=99 // pred_fallthru
          _
      $region100: #{light_hyper_former_forward.4} parent=5 // pred_fallthru
        _
      %p2994 = scmp.le.s32.totalorder 2, %s9
      // Predicated region
      $region121: #{light_hyper_former_forward.4} parent=5 // pred_check
        %p2995 = pneg %p2994
      $region122: #{light_hyper_former_forward.4} parent=5 // pred_check_branch
        %2997 = sbr.rel (%p2995) target = $region124
      $region123: #{light_hyper_former_forward.4} parent=5 // pred_region
        %s2998 = ssub.s32 %s9, 2
      $region124: #{light_hyper_former_forward.4} parent=5 // pred_fallthru
        _
    $region6: #{light_hyper_former_forward.4} parent=1 // loop_footer
      %s13 = sadd.s32 1, %s9
    $region7: #{light_hyper_former_forward.4} parent=1 // loop_footer_branch
      %8 = sbr.rel target = $region3
    $region8: #{light_hyper_former_forward.4} parent=1 // loop_exit
      _

// kernel: light_hyper_former_forward.5
$region0: #{light_hyper_former_forward.5}
  #allocation0 [shape = 'u32[]', space=smem, size = 0x4, offset = 0x4, fixed_abs, tag = 'smem constant byte address 0x4 - core index']
  #allocation1 [shape = 'u32[144,128]{1,0:T(1,128)}', space=vmem, size = 0x12000, scoped, tag = 'internal scratch']
  %s0 = inlined_call_operand.vmem [shape: f32[4,256,16], index: 0, kind: input, shape index: {}]
  %s1 = inlined_call_operand.vmem [shape: bf16[4,128,16], index: 1, kind: input, shape index: {}]
  %s2 = inlined_call_operand.vmem [shape: bf16[16,128], index: 2, kind: input, shape index: {}]
  %s3 = inlined_call_operand.vmem [shape: bf16[16,128], index: 3, kind: input, shape index: {}]
  %s4 = inlined_call_operand.vmem [shape: f32[1,128], index: 4, kind: input, shape index: {}]
  %s5 = inlined_call_operand.vmem [shape: f32[256,128], index: 5, kind: output, shape index: {}]
  %s6 = sld [smem:[#allocation0]]
  $region91: #{light_hyper_former_forward.5} parent=0
    _
  %s8 = ssub.s32 1, %s6
  %s9 = scalar_select 0, %s8, %s6
  $region1: #{light_hyper_former_forward.5} parent=0
    #allocation2 [shape = 'u8[524288]{0}', space=vmem, size = 0x80000, scoped, tag = 'input window, operand 0']
    loop: start=0, step=1, limit=4
    $region2: #{light_hyper_former_forward.5} parent=1 // loop_pre_header
      _
    $region3: #{light_hyper_former_forward.5} parent=1 // loop_header
      %s11 = sphi 0, %s15
      %p12 = scmp.ge.s32.totalorder %s11, 4
      %s21 = sphi 0, %s23
      %s24 = sphi 0, %s21
      %s25 = sphi 0, %s24
      %s41 = sphi 0, %s25
      %s45 = sphi 0, %s45
      %s47 = sphi 0, %s45
      %s48 = sphi 0, %s47
      %s62 = sphi 0, %s48
      %s66 = sphi 0, %s66
      %s68 = sphi 0, %s66
      %s69 = sphi 0, %s68
      %s83 = sphi 0, %s69
      %s87 = sphi 0, %s87
      %s89 = sphi 0, %s87
      %s90 = sphi 0, %s89
      %s104 = sphi 0, %s90
      %s108 = sphi 0, %s108
      %s110 = sphi 0, %s108
      %s111 = sphi 0, %s110
      %s125 = sphi 0, %s111
      %s131 = sphi 0, %s133
      %s134 = sphi 0, %s131
      %s135 = sphi 0, %s134
      %s151 = sphi 0, %s135
    $region4: #{light_hyper_former_forward.5} parent=1 // loop_header_branch
      %14 = sbr.rel (%p12) target = $region8
    $region5: #{light_hyper_former_forward.5} parent=1 // loop_body
      %s16 = ssub.s32 %s11, 1
      %s17 = ssub.s32 %s11, 2
      %s18 = sadd.s32 %s11, 1
      %s19 = ssub.s32 %s11, %s18
      %p20 = scmp.eq.s32.totalorder %s19, 0
      %s22 = sadd.s32 %s21, 1
      %s23 = scalar_select %p20, %s21, %s22
      %p26 = pneg %p20
      %p27 = scmp.eq.s32.totalorder %s11, 1
      %p28 = por %p26, %p27
      %p29 = scmp.ne.s32.totalorder %s21, %s24
      %p30 = scmp.eq.s32.totalorder %s11, 0
      %p31 = por %p29, %p30
      %p32 = scmp.ne.s32.totalorder %s21, %s24
      %p33 = scmp.eq.s32.totalorder %s16, 1
      %p34 = por %p32, %p33
      %p35 = scmp.ne.s32.totalorder %s24, %s25
      %p36 = scmp.eq.s32.totalorder %s16, 0
      %p37 = por %p35, %p36
      %p38 = scmp.ne.s32.totalorder %s24, %s25
      %p39 = scmp.eq.s32.totalorder %s17, 1
      %p40 = por %p38, %p39
      %p42 = scmp.ne.s32.totalorder %s25, %s41
      %p43 = scmp.eq.s32.totalorder %s17, 0
      %p44 = por %p42, %p43
      %s46 = sadd.s32 %s45, 1
      %p49 = scmp.eq.s32.totalorder %s11, 1
      %p50 = scmp.ne.s32.totalorder %s45, %s47
      %p51 = scmp.eq.s32.totalorder %s11, 0
      %p52 = por %p50, %p51
      %p53 = scmp.ne.s32.totalorder %s45, %s47
      %p54 = scmp.eq.s32.totalorder %s16, 1
      %p55 = por %p53, %p54
      %p56 = scmp.ne.s32.totalorder %s47, %s48
      %p57 = scmp.eq.s32.totalorder %s16, 0
      %p58 = por %p56, %p57
      %p59 = scmp.ne.s32.totalorder %s47, %s48
      %p60 = scmp.eq.s32.totalorder %s17, 1
      %p61 = por %p59, %p60
      %p63 = scmp.ne.s32.totalorder %s48, %s62
      %p64 = scmp.eq.s32.totalorder %s17, 0
      %p65 = por %p63, %p64
      %s67 = sadd.s32 %s66, 1
      %p70 = scmp.eq.s32.totalorder %s11, 1
      %p71 = scmp.ne.s32.totalorder %s66, %s68
      %p72 = scmp.eq.s32.totalorder %s11, 0
      %p73 = por %p71, %p72
      %p74 = scmp.ne.s32.totalorder %s66, %s68
      %p75 = scmp.eq.s32.totalorder %s16, 1
      %p76 = por %p74, %p75
      %p77 = scmp.ne.s32.totalorder %s68, %s69
      %p78 = scmp.eq.s32.totalorder %s16, 0
      %p79 = por %p77, %p78
      %p80 = scmp.ne.s32.totalorder %s68, %s69
      %p81 = scmp.eq.s32.totalorder %s17, 1
      %p82 = por %p80, %p81
      %p84 = scmp.ne.s32.totalorder %s69, %s83
      %p85 = scmp.eq.s32.totalorder %s17, 0
      %p86 = por %p84, %p85
      %s88 = sadd.s32 %s87, 1
      %p91 = scmp.eq.s32.totalorder %s11, 1
      %p92 = scmp.ne.s32.totalorder %s87, %s89
      %p93 = scmp.eq.s32.totalorder %s11, 0
      %p94 = por %p92, %p93
      %p95 = scmp.ne.s32.totalorder %s87, %s89
      %p96 = scmp.eq.s32.totalorder %s16, 1
      %p97 = por %p95, %p96
      %p98 = scmp.ne.s32.totalorder %s89, %s90
      %p99 = scmp.eq.s32.totalorder %s16, 0
      %p100 = por %p98, %p99
      %p101 = scmp.ne.s32.totalorder %s89, %s90
      %p102 = scmp.eq.s32.totalorder %s17, 1
      %p103 = por %p101, %p102
      %p105 = scmp.ne.s32.totalorder %s90, %s104
      %p106 = scmp.eq.s32.totalorder %s17, 0
      %p107 = por %p105, %p106
      %s109 = sadd.s32 %s108, 1
      %p112 = scmp.eq.s32.totalorder %s11, 1
      %p113 = scmp.ne.s32.totalorder %s108, %s110
      %p114 = scmp.eq.s32.totalorder %s11, 0
      %p115 = por %p113, %p114
      %p116 = scmp.ne.s32.totalorder %s108, %s110
      %p117 = scmp.eq.s32.totalorder %s16, 1
      %p118 = por %p116, %p117
      %p119 = scmp.ne.s32.totalorder %s110, %s111
      %p120 = scmp.eq.s32.totalorder %s16, 0
      %p121 = por %p119, %p120
      %p122 = scmp.ne.s32.totalorder %s110, %s111
      %p123 = scmp.eq.s32.totalorder %s17, 1
      %p124 = por %p122, %p123
      %p126 = scmp.ne.s32.totalorder %s111, %s125
      %p127 = scmp.eq.s32.totalorder %s17, 0
      %p128 = por %p126, %p127
      %s129 = ssub.s32 %s11, %s18
      %p130 = scmp.eq.s32.totalorder %s129, 0
      %s132 = sadd.s32 %s131, 1
      %s133 = scalar_select %p130, %s131, %s132
      %p136 = pneg %p130
      %p137 = scmp.eq.s32.totalorder %s11, 1
      %p138 = por %p136, %p137
      %p139 = scmp.ne.s32.totalorder %s131, %s134
      %p140 = scmp.eq.s32.totalorder %s11, 0
      %p141 = por %p139, %p140
      %p142 = scmp.ne.s32.totalorder %s131, %s134
      %p143 = scmp.eq.s32.totalorder %s16, 1
      %p144 = por %p142, %p143
      %p145 = scmp.ne.s32.totalorder %s134, %s135
      %p146 = scmp.eq.s32.totalorder %s16, 0
      %p147 = por %p145, %p146
      %p148 = scmp.ne.s32.totalorder %s134, %s135
      %p149 = scmp.eq.s32.totalorder %s17, 1
      %p150 = por %p148, %p149
      %p152 = scmp.ne.s32.totalorder %s135, %s151
      %p153 = scmp.eq.s32.totalorder %s17, 0
      %p154 = por %p152, %p153
      %p155 = scmp.le.s32.totalorder 1, %s11
      %p156 = scmp.lt.s32.totalorder %s11, 3
      %p157 = pnand %p155, %p156
      %p158 = pneg %p157
      // Predicated region
      $region9: #{light_hyper_former_forward.5} parent=5 // pred_check
        _
      $region10: #{light_hyper_former_forward.5} parent=5 // pred_check_branch
        %160 = sbr.rel (%p157) target = $region12
      $region11: #{light_hyper_former_forward.5} parent=5 // pred_region
        %s161 = ssub.s32 %s11, 1
        // Predicated region
        $region13: #{light_hyper_former_forward.5} parent=11 // pred_check
          %p162 = pneg %p58
        $region14: #{light_hyper_former_forward.5} parent=11 // pred_check_branch
          %164 = sbr.rel (%p162) target = $region16
        $region15: #{light_hyper_former_forward.5} parent=11 // pred_region
          _
        $region16: #{light_hyper_former_forward.5} parent=11 // pred_fallthru
          _
        // Predicated region
        $region17: #{light_hyper_former_forward.5} parent=11 // pred_check
          %p165 = pneg %p79
        $region18: #{light_hyper_former_forward.5} parent=11 // pred_check_branch
          %167 = sbr.rel (%p165) target = $region20
        $region19: #{light_hyper_former_forward.5} parent=11 // pred_region
          _
        $region20: #{light_hyper_former_forward.5} parent=11 // pred_fallthru
          _
        // Predicated region
        $region21: #{light_hyper_former_forward.5} parent=11 // pred_check
          %p168 = pneg %p100
        $region22: #{light_hyper_former_forward.5} parent=11 // pred_check_branch
          %170 = sbr.rel (%p168) target = $region24
        $region23: #{light_hyper_former_forward.5} parent=11 // pred_region
          _
        $region24: #{light_hyper_former_forward.5} parent=11 // pred_fallthru
          _
        // Predicated region
        $region25: #{light_hyper_former_forward.5} parent=11 // pred_check
          %p171 = pneg %p121
        $region26: #{light_hyper_former_forward.5} parent=11 // pred_check_branch
          %173 = sbr.rel (%p171) target = $region28
        $region27: #{light_hyper_former_forward.5} parent=11 // pred_region
          _
        $region28: #{light_hyper_former_forward.5} parent=11 // pred_fallthru
          _
      $region12: #{light_hyper_former_forward.5} parent=5 // pred_fallthru
        _
      %p174 = scmp.lt.s32.totalorder %s11, 2
      // Predicated region
      $region29: #{light_hyper_former_forward.5} parent=5 // pred_check
        %p175 = pneg %p174
      $region30: #{light_hyper_former_forward.5} parent=5 // pred_check_branch
        %177 = sbr.rel (%p175) target = $region32
      $region31: #{light_hyper_former_forward.5} parent=5 // pred_region
        // Predicated region
        $region33: #{light_hyper_former_forward.5} parent=31 // pred_check
          %p178 = pneg %p31
        $region34: #{light_hyper_former_forward.5} parent=31 // pred_check_branch
          %180 = sbr.rel (%p178) target = $region36
        $region35: #{light_hyper_former_forward.5} parent=31 // pred_region
          %s181 = sand.u32 %s21, 1
          %s182 = sand.u32 %s21, 1
          %s183 = smul.addr %s182, 512
          %s184 = scalar_lea.vmem [#allocation2], %s183
          %s185 = smul.u32 16, %s11
          %s186 = smul.addr %s185, 8
          %s187 = scalar_lea.vmem %s0, %s186
          // Predicated region
          $region37: #{light_hyper_former_forward.5} parent=35 // pred_check
            _
          $region38: #{light_hyper_former_forward.5} parent=35 // pred_check_branch
            %189 = sbr.rel (0) target = $region40
          $region39: #{light_hyper_former_forward.5} parent=35 // pred_region
            // Predicated region
            $region41: #{light_hyper_former_forward.5} parent=39 // pred_check
              _
            $region42: #{light_hyper_former_forward.5} parent=39 // pred_check_branch
              %191 = sbr.rel (0) target = $region44
            $region43: #{light_hyper_former_forward.5} parent=39 // pred_region
              // Predicated region
              $region56: #{light_hyper_former_forward.5} parent=43 // pred_check
                _
              $region57: #{light_hyper_former_forward.5} parent=43 // pred_check_branch
                %332 = sbr.rel (0) target = $region59
              $region58: #{light_hyper_former_forward.5} parent=43 // pred_region
                loop: start=0, step=1, limit=1
                $region60: #{light_hyper_former_forward.5} parent=58 // loop_pre_header
                  _
                $region61: #{light_hyper_former_forward.5} parent=58 // loop_header
                  %s334 = sphi 0, %s338
                  %p335 = scmp.ge.s32.totalorder %s334, 1
                  %s339 = sphi %s187, %s187
                  %s340 = sphi %s184, %s184
                $region62: #{light_hyper_former_forward.5} parent=58 // loop_header_branch
                  %337 = sbr.rel (%p335) target = $region66
                $region63: #{light_hyper_former_forward.5} parent=58 // loop_body
                  %v341 = vld [vmem:[%s339] sm:$0xff]
                  %342 = vst [vmem:[%s340] sm:$0xff] %v341
                  %v343 = vld [vmem:[%s339 + $0x8] sm:$0xff]
                  %344 = vst [vmem:[%s340 + $0x8] sm:$0xff] %v343
                  %v345 = vld [vmem:[%s339 + $0x10] sm:$0xff]
                  %346 = vst [vmem:[%s340 + $0x10] sm:$0xff] %v345
                  %v347 = vld [vmem:[%s339 + $0x18] sm:$0xff]
                  %348 = vst [vmem:[%s340 + $0x18] sm:$0xff] %v347
                  %v349 = vld [vmem:[%s339 + $0x20] sm:$0xff]
                  %350 = vst [vmem:[%s340 + $0x20] sm:$0xff] %v349
                  %v351 = vld [vmem:[%s339 + $0x28] sm:$0xff]
                  %352 = vst [vmem:[%s340 + $0x28] sm:$0xff] %v351
                  %v353 = vld [vmem:[%s339 + $0x30] sm:$0xff]
                  %354 = vst [vmem:[%s340 + $0x30] sm:$0xff] %v353
                  %v355 = vld [vmem:[%s339 + $0x38] sm:$0xff]
                  %356 = vst [vmem:[%s340 + $0x38] sm:$0xff] %v355
                  %v357 = vld [vmem:[%s339 + $0x40] sm:$0xff]
                  %358 = vst [vmem:[%s340 + $0x40] sm:$0xff] %v357
                  %v359 = vld [vmem:[%s339 + $0x48] sm:$0xff]
                  %360 = vst [vmem:[%s340 + $0x48] sm:$0xff] %v359
                  %v361 = vld [vmem:[%s339 + $0x50] sm:$0xff]
                  %362 = vst [vmem:[%s340 + $0x50] sm:$0xff] %v361
                  %v363 = vld [vmem:[%s339 + $0x58] sm:$0xff]
                  %364 = vst [vmem:[%s340 + $0x58] sm:$0xff] %v363
                  %v365 = vld [vmem:[%s339 + $0x60] sm:$0xff]
                  %366 = vst [vmem:[%s340 + $0x60] sm:$0xff] %v365
                  %v367 = vld [vmem:[%s339 + $0x68] sm:$0xff]
                  %368 = vst [vmem:[%s340 + $0x68] sm:$0xff] %v367
                  %v369 = vld [vmem:[%s339 + $0x70] sm:$0xff]
                  %370 = vst [vmem:[%s340 + $0x70] sm:$0xff] %v369
                  %v371 = vld [vmem:[%s339 + $0x78] sm:$0xff]
                  %372 = vst [vmem:[%s340 + $0x78] sm:$0xff] %v371
                  %v373 = vld [vmem:[%s339 + $0x100] sm:$0xff]
                  %374 = vst [vmem:[%s340 + $0x80] sm:$0xff] %v373
                  %v375 = vld [vmem:[%s339 + $0x108] sm:$0xff]
                  %376 = vst [vmem:[%s340 + $0x88] sm:$0xff] %v375
                  %v377 = vld [vmem:[%s339 + $0x110] sm:$0xff]
                  %378 = vst [vmem:[%s340 + $0x90] sm:$0xff] %v377
                  %v379 = vld [vmem:[%s339 + $0x118] sm:$0xff]
                  %380 = vst [vmem:[%s340 + $0x98] sm:$0xff] %v379
                  %v381 = vld [vmem:[%s339 + $0x120] sm:$0xff]
                  %382 = vst [vmem:[%s340 + $0xa0] sm:$0xff] %v381
                  %v383 = vld [vmem:[%s339 + $0x128] sm:$0xff]
                  %384 = vst [vmem:[%s340 + $0xa8] sm:$0xff] %v383
                  %v385 = vld [vmem:[%s339 + $0x130] sm:$0xff]
                  %386 = vst [vmem:[%s340 + $0xb0] sm:$0xff] %v385
                  %v387 = vld [vmem:[%s339 + $0x138] sm:$0xff]
                  %388 = vst [vmem:[%s340 + $0xb8] sm:$0xff] %v387
                  %v389 = vld [vmem:[%s339 + $0x140] sm:$0xff]
                  %390 = vst [vmem:[%s340 + $0xc0] sm:$0xff] %v389
                  %v391 = vld [vmem:[%s339 + $0x148] sm:$0xff]
                  %392 = vst [vmem:[%s340 + $0xc8] sm:$0xff] %v391
                  %v393 = vld [vmem:[%s339 + $0x150] sm:$0xff]
                  %394 = vst [vmem:[%s340 + $0xd0] sm:$0xff] %v393
                  %v395 = vld [vmem:[%s339 + $0x158] sm:$0xff]
                  %396 = vst [vmem:[%s340 + $0xd8] sm:$0xff] %v395
                  %v397 = vld [vmem:[%s339 + $0x160] sm:$0xff]
                  %398 = vst [vmem:[%s340 + $0xe0] sm:$0xff] %v397
                  %v399 = vld [vmem:[%s339 + $0x168] sm:$0xff]
                  %400 = vst [vmem:[%s340 + $0xe8] sm:$0xff] %v399
                  %v401 = vld [vmem:[%s339 + $0x170] sm:$0xff]
                  %402 = vst [vmem:[%s340 + $0xf0] sm:$0xff] %v401
                  %v403 = vld [vmem:[%s339 + $0x178] sm:$0xff]
                  %404 = vst [vmem:[%s340 + $0xf8] sm:$0xff] %v403
                  %v405 = vld [vmem:[%s339 + $0x200] sm:$0xff]
                  %406 = vst [vmem:[%s340 + $0x100] sm:$0xff] %v405
                  %v407 = vld [vmem:[%s339 + $0x208] sm:$0xff]
                  %408 = vst [vmem:[%s340 + $0x108] sm:$0xff] %v407
                  %v409 = vld [vmem:[%s339 + $0x210] sm:$0xff]
                  %410 = vst [vmem:[%s340 + $0x110] sm:$0xff] %v409
                  %v411 = vld [vmem:[%s339 + $0x218] sm:$0xff]
                  %412 = vst [vmem:[%s340 + $0x118] sm:$0xff] %v411
                  %v413 = vld [vmem:[%s339 + $0x220] sm:$0xff]
                  %414 = vst [vmem:[%s340 + $0x120] sm:$0xff] %v413
                  %v415 = vld [vmem:[%s339 + $0x228] sm:$0xff]
                  %416 = vst [vmem:[%s340 + $0x128] sm:$0xff] %v415
                  %v417 = vld [vmem:[%s339 + $0x230] sm:$0xff]
                  %418 = vst [vmem:[%s340 + $0x130] sm:$0xff] %v417
                  %v419 = vld [vmem:[%s339 + $0x238] sm:$0xff]
                  %420 = vst [vmem:[%s340 + $0x138] sm:$0xff] %v419
                  %v421 = vld [vmem:[%s339 + $0x240] sm:$0xff]
                  %422 = vst [vmem:[%s340 + $0x140] sm:$0xff] %v421
                  %v423 = vld [vmem:[%s339 + $0x248] sm:$0xff]
                  %424 = vst [vmem:[%s340 + $0x148] sm:$0xff] %v423
                  %v425 = vld [vmem:[%s339 + $0x250] sm:$0xff]
                  %426 = vst [vmem:[%s340 + $0x150] sm:$0xff] %v425
                  %v427 = vld [vmem:[%s339 + $0x258] sm:$0xff]
                  %428 = vst [vmem:[%s340 + $0x158] sm:$0xff] %v427
                  %v429 = vld [vmem:[%s339 + $0x260] sm:$0xff]
                  %430 = vst [vmem:[%s340 + $0x160] sm:$0xff] %v429
                  %v431 = vld [vmem:[%s339 + $0x268] sm:$0xff]
                  %432 = vst [vmem:[%s340 + $0x168] sm:$0xff] %v431
                  %v433 = vld [vmem:[%s339 + $0x270] sm:$0xff]
                  %434 = vst [vmem:[%s340 + $0x170] sm:$0xff] %v433
                  %v435 = vld [vmem:[%s339 + $0x278] sm:$0xff]
                  %436 = vst [vmem:[%s340 + $0x178] sm:$0xff] %v435
                  %v437 = vld [vmem:[%s339 + $0x300] sm:$0xff]
                  %438 = vst [vmem:[%s340 + $0x180] sm:$0xff] %v437
                  %v439 = vld [vmem:[%s339 + $0x308] sm:$0xff]
                  %440 = vst [vmem:[%s340 + $0x188] sm:$0xff] %v439
                  %v441 = vld [vmem:[%s339 + $0x310] sm:$0xff]
                  %442 = vst [vmem:[%s340 + $0x190] sm:$0xff] %v441
                  %v443 = vld [vmem:[%s339 + $0x318] sm:$0xff]
                  %444 = vst [vmem:[%s340 + $0x198] sm:$0xff] %v443
                  %v445 = vld [vmem:[%s339 + $0x320] sm:$0xff]
                  %446 = vst [vmem:[%s340 + $0x1a0] sm:$0xff] %v445
                  %v447 = vld [vmem:[%s339 + $0x328] sm:$0xff]
                  %448 = vst [vmem:[%s340 + $0x1a8] sm:$0xff] %v447
                  %v449 = vld [vmem:[%s339 + $0x330] sm:$0xff]
                  %450 = vst [vmem:[%s340 + $0x1b0] sm:$0xff] %v449
                  %v451 = vld [vmem:[%s339 + $0x338] sm:$0xff]
                  %452 = vst [vmem:[%s340 + $0x1b8] sm:$0xff] %v451
                  %v453 = vld [vmem:[%s339 + $0x340] sm:$0xff]
                  %454 = vst [vmem:[%s340 + $0x1c0] sm:$0xff] %v453
                  %v455 = vld [vmem:[%s339 + $0x348] sm:$0xff]
                  %456 = vst [vmem:[%s340 + $0x1c8] sm:$0xff] %v455
                  %v457 = vld [vmem:[%s339 + $0x350] sm:$0xff]
                  %458 = vst [vmem:[%s340 + $0x1d0] sm:$0xff] %v457
                  %v459 = vld [vmem:[%s339 + $0x358] sm:$0xff]
                  %460 = vst [vmem:[%s340 + $0x1d8] sm:$0xff] %v459
                  %v461 = vld [vmem:[%s339 + $0x360] sm:$0xff]
                  %462 = vst [vmem:[%s340 + $0x1e0] sm:$0xff] %v461
                  %v463 = vld [vmem:[%s339 + $0x368] sm:$0xff]
                  %464 = vst [vmem:[%s340 + $0x1e8] sm:$0xff] %v463
                  %v465 = vld [vmem:[%s339 + $0x370] sm:$0xff]
                  %466 = vst [vmem:[%s340 + $0x1f0] sm:$0xff] %v465
                  %v467 = vld [vmem:[%s339 + $0x378] sm:$0xff]
                  %468 = vst [vmem:[%s340 + $0x1f8] sm:$0xff] %v467
                $region64: #{light_hyper_former_forward.5} parent=58 // loop_footer
                  %s338 = sadd.s32 1, %s334
                $region65: #{light_hyper_former_forward.5} parent=58 // loop_footer_branch
                  %333 = sbr.rel target = $region61
                $region66: #{light_hyper_former_forward.5} parent=58 // loop_exit
                  _
              $region59: #{light_hyper_former_forward.5} parent=43 // pred_fallthru
                _
              // Predicated region
              $region67: #{light_hyper_former_forward.5} parent=43 // pred_check
                _
              $region68: #{light_hyper_former_forward.5} parent=43 // pred_check_branch
                %470 = sbr.rel target = $region70
              $region69: #{light_hyper_former_forward.5} parent=43 // pred_region
                _
              $region70: #{light_hyper_former_forward.5} parent=43 // pred_fallthru
                _
            $region44: #{light_hyper_former_forward.5} parent=39 // pred_fallthru
              _
            // Predicated region
            $region45: #{light_hyper_former_forward.5} parent=39 // pred_check
              _
            $region46: #{light_hyper_former_forward.5} parent=39 // pred_check_branch
              %193 = sbr.rel target = $region48
            $region47: #{light_hyper_former_forward.5} parent=39 // pred_region
              loop: start=0, step=1, limit=1
              $region49: #{light_hyper_former_forward.5} parent=47 // loop_pre_header
                _
              $region50: #{light_hyper_former_forward.5} parent=47 // loop_header
                %s196 = sphi 0, %s200
                %p197 = scmp.ge.s32.totalorder %s196, 1
                %s201 = sphi %s187, %s187
                %s202 = sphi %s184, %s184
              $region51: #{light_hyper_former_forward.5} parent=47 // loop_header_branch
                %199 = sbr.rel (%p197) target = $region55
              $region52: #{light_hyper_former_forward.5} parent=47 // loop_body
                %v203 = vld [vmem:[%s201] sm:$0xff]
                %204 = vst [vmem:[%s202] sm:$0xff] %v203
                %v205 = vld [vmem:[%s201 + $0x8] sm:$0xff]
                %206 = vst [vmem:[%s202 + $0x8] sm:$0xff] %v205
                %v207 = vld [vmem:[%s201 + $0x10] sm:$0xff]
                %208 = vst [vmem:[%s202 + $0x10] sm:$0xff] %v207
                %v209 = vld [vmem:[%s201 + $0x18] sm:$0xff]
                %210 = vst [vmem:[%s202 + $0x18] sm:$0xff] %v209
                %v211 = vld [vmem:[%s201 + $0x20] sm:$0xff]
                %212 = vst [vmem:[%s202 + $0x20] sm:$0xff] %v211
                %v213 = vld [vmem:[%s201 + $0x28] sm:$0xff]
                %214 = vst [vmem:[%s202 + $0x28] sm:$0xff] %v213
                %v215 = vld [vmem:[%s201 + $0x30] sm:$0xff]
                %216 = vst [vmem:[%s202 + $0x30] sm:$0xff] %v215
                %v217 = vld [vmem:[%s201 + $0x38] sm:$0xff]
                %218 = vst [vmem:[%s202 + $0x38] sm:$0xff] %v217
                %v219 = vld [vmem:[%s201 + $0x40] sm:$0xff]
                %220 = vst [vmem:[%s202 + $0x40] sm:$0xff] %v219
                %v221 = vld [vmem:[%s201 + $0x48] sm:$0xff]
                %222 = vst [vmem:[%s202 + $0x48] sm:$0xff] %v221
                %v223 = vld [vmem:[%s201 + $0x50] sm:$0xff]
                %224 = vst [vmem:[%s202 + $0x50] sm:$0xff] %v223
                %v225 = vld [vmem:[%s201 + $0x58] sm:$0xff]
                %226 = vst [vmem:[%s202 + $0x58] sm:$0xff] %v225
                %v227 = vld [vmem:[%s201 + $0x60] sm:$0xff]
                %228 = vst [vmem:[%s202 + $0x60] sm:$0xff] %v227
                %v229 = vld [vmem:[%s201 + $0x68] sm:$0xff]
                %230 = vst [vmem:[%s202 + $0x68] sm:$0xff] %v229
                %v231 = vld [vmem:[%s201 + $0x70] sm:$0xff]
                %232 = vst [vmem:[%s202 + $0x70] sm:$0xff] %v231
                %v233 = vld [vmem:[%s201 + $0x78] sm:$0xff]
                %234 = vst [vmem:[%s202 + $0x78] sm:$0xff] %v233
                %v235 = vld [vmem:[%s201 + $0x100] sm:$0xff]
                %236 = vst [vmem:[%s202 + $0x80] sm:$0xff] %v235
                %v237 = vld [vmem:[%s201 + $0x108] sm:$0xff]
                %238 = vst [vmem:[%s202 + $0x88] sm:$0xff] %v237
                %v239 = vld [vmem:[%s201 + $0x110] sm:$0xff]
                %240 = vst [vmem:[%s202 + $0x90] sm:$0xff] %v239
                %v241 = vld [vmem:[%s201 + $0x118] sm:$0xff]
                %242 = vst [vmem:[%s202 + $0x98] sm:$0xff] %v241
                %v243 = vld [vmem:[%s201 + $0x120] sm:$0xff]
                %244 = vst [vmem:[%s202 + $0xa0] sm:$0xff] %v243
                %v245 = vld [vmem:[%s201 + $0x128] sm:$0xff]
                %246 = vst [vmem:[%s202 + $0xa8] sm:$0xff] %v245
                %v247 = vld [vmem:[%s201 + $0x130] sm:$0xff]
                %248 = vst [vmem:[%s202 + $0xb0] sm:$0xff] %v247
                %v249 = vld [vmem:[%s201 + $0x138] sm:$0xff]
                %250 = vst [vmem:[%s202 + $0xb8] sm:$0xff] %v249
                %v251 = vld [vmem:[%s201 + $0x140] sm:$0xff]
                %252 = vst [vmem:[%s202 + $0xc0] sm:$0xff] %v251
                %v253 = vld [vmem:[%s201 + $0x148] sm:$0xff]
                %254 = vst [vmem:[%s202 + $0xc8] sm:$0xff] %v253
                %v255 = vld [vmem:[%s201 + $0x150] sm:$0xff]
                %256 = vst [vmem:[%s202 + $0xd0] sm:$0xff] %v255
                %v257 = vld [vmem:[%s201 + $0x158] sm:$0xff]
                %258 = vst [vmem:[%s202 + $0xd8] sm:$0xff] %v257
                %v259 = vld [vmem:[%s201 + $0x160] sm:$0xff]
                %260 = vst [vmem:[%s202 + $0xe0] sm:$0xff] %v259
                %v261 = vld [vmem:[%s201 + $0x168] sm:$0xff]
                %262 = vst [vmem:[%s202 + $0xe8] sm:$0xff] %v261
                %v263 = vld [vmem:[%s201 + $0x170] sm:$0xff]
                %264 = vst [vmem:[%s202 + $0xf0] sm:$0xff] %v263
                %v265 = vld [vmem:[%s201 + $0x178] sm:$0xff]
                %266 = vst [vmem:[%s202 + $0xf8] sm:$0xff] %v265
                %v267 = vld [vmem:[%s201 + $0x200] sm:$0xff]
                %268 = vst [vmem:[%s202 + $0x100] sm:$0xff] %v267
                %v269 = vld [vmem:[%s201 + $0x208] sm:$0xff]
                %270 = vst [vmem:[%s202 + $0x108] sm:$0xff] %v269
                %v271 = vld [vmem:[%s201 + $0x210] sm:$0xff]
                %272 = vst [vmem:[%s202 + $0x110] sm:$0xff] %v271
                %v273 = vld [vmem:[%s201 + $0x218] sm:$0xff]
                %274 = vst [vmem:[%s202 + $0x118] sm:$0xff] %v273
                %v275 = vld [vmem:[%s201 + $0x220] sm:$0xff]
                %276 = vst [vmem:[%s202 + $0x120] sm:$0xff] %v275
                %v277 = vld [vmem:[%s201 + $0x228] sm:$0xff]
                %278 = vst [vmem:[%s202 + $0x128] sm:$0xff] %v277
                %v279 = vld [vmem:[%s201 + $0x230] sm:$0xff]
                %280 = vst [vmem:[%s202 + $0x130] sm:$0xff] %v279
                %v281 = vld [vmem:[%s201 + $0x238] sm:$0xff]
                %282 = vst [vmem:[%s202 + $0x138] sm:$0xff] %v281
                %v283 = vld [vmem:[%s201 + $0x240] sm:$0xff]
                %284 = vst [vmem:[%s202 + $0x140] sm:$0xff] %v283
                %v285 = vld [vmem:[%s201 + $0x248] sm:$0xff]
                %286 = vst [vmem:[%s202 + $0x148] sm:$0xff] %v285
                %v287 = vld [vmem:[%s201 + $0x250] sm:$0xff]
                %288 = vst [vmem:[%s202 + $0x150] sm:$0xff] %v287
                %v289 = vld [vmem:[%s201 + $0x258] sm:$0xff]
                %290 = vst [vmem:[%s202 + $0x158] sm:$0xff] %v289
                %v291 = vld [vmem:[%s201 + $0x260] sm:$0xff]
                %292 = vst [vmem:[%s202 + $0x160] sm:$0xff] %v291
                %v293 = vld [vmem:[%s201 + $0x268] sm:$0xff]
                %294 = vst [vmem:[%s202 + $0x168] sm:$0xff] %v293
                %v295 = vld [vmem:[%s201 + $0x270] sm:$0xff]
                %296 = vst [vmem:[%s202 + $0x170] sm:$0xff] %v295
                %v297 = vld [vmem:[%s201 + $0x278] sm:$0xff]
                %298 = vst [vmem:[%s202 + $0x178] sm:$0xff] %v297
                %v299 = vld [vmem:[%s201 + $0x300] sm:$0xff]
                %300 = vst [vmem:[%s202 + $0x180] sm:$0xff] %v299
                %v301 = vld [vmem:[%s201 + $0x308] sm:$0xff]
                %302 = vst [vmem:[%s202 + $0x188] sm:$0xff] %v301
                %v303 = vld [vmem:[%s201 + $0x310] sm:$0xff]
                %304 = vst [vmem:[%s202 + $0x190] sm:$0xff] %v303
                %v305 = vld [vmem:[%s201 + $0x318] sm:$0xff]
                %306 = vst [vmem:[%s202 + $0x198] sm:$0xff] %v305
                %v307 = vld [vmem:[%s201 + $0x320] sm:$0xff]
                %308 = vst [vmem:[%s202 + $0x1a0] sm:$0xff] %v307
                %v309 = vld [vmem:[%s201 + $0x328] sm:$0xff]
                %310 = vst [vmem:[%s202 + $0x1a8] sm:$0xff] %v309
                %v311 = vld [vmem:[%s201 + $0x330] sm:$0xff]
                %312 = vst [vmem:[%s202 + $0x1b0] sm:$0xff] %v311
                %v313 = vld [vmem:[%s201 + $0x338] sm:$0xff]
                %314 = vst [vmem:[%s202 + $0x1b8] sm:$0xff] %v313
                %v315 = vld [vmem:[%s201 + $0x340] sm:$0xff]
                %316 = vst [vmem:[%s202 + $0x1c0] sm:$0xff] %v315
                %v317 = vld [vmem:[%s201 + $0x348] sm:$0xff]
                %318 = vst [vmem:[%s202 + $0x1c8] sm:$0xff] %v317
                %v319 = vld [vmem:[%s201 + $0x350] sm:$0xff]
                %320 = vst [vmem:[%s202 + $0x1d0] sm:$0xff] %v319
                %v321 = vld [vmem:[%s201 + $0x358] sm:$0xff]
                %322 = vst [vmem:[%s202 + $0x1d8] sm:$0xff] %v321
                %v323 = vld [vmem:[%s201 + $0x360] sm:$0xff]
                %324 = vst [vmem:[%s202 + $0x1e0] sm:$0xff] %v323
                %v325 = vld [vmem:[%s201 + $0x368] sm:$0xff]
                %326 = vst [vmem:[%s202 + $0x1e8] sm:$0xff] %v325
                %v327 = vld [vmem:[%s201 + $0x370] sm:$0xff]
                %328 = vst [vmem:[%s202 + $0x1f0] sm:$0xff] %v327
                %v329 = vld [vmem:[%s201 + $0x378] sm:$0xff]
                %330 = vst [vmem:[%s202 + $0x1f8] sm:$0xff] %v329
              $region53: #{light_hyper_former_forward.5} parent=47 // loop_footer
                %s200 = sadd.s32 1, %s196
              $region54: #{light_hyper_former_forward.5} parent=47 // loop_footer_branch
                %195 = sbr.rel target = $region50
              $region55: #{light_hyper_former_forward.5} parent=47 // loop_exit
                _
            $region48: #{light_hyper_former_forward.5} parent=39 // pred_fallthru
              _
          $region40: #{light_hyper_former_forward.5} parent=35 // pred_fallthru
            _
          %471 = vnop
        $region36: #{light_hyper_former_forward.5} parent=31 // pred_fallthru
          _
      $region32: #{light_hyper_former_forward.5} parent=5 // pred_fallthru
        _
      %p472 = scmp.le.s32.totalorder 1, %s11
      %p473 = scmp.lt.s32.totalorder %s11, 3
      %p474 = pnand %p472, %p473
      %p475 = pneg %p474
      // Predicated region
      $region71: #{light_hyper_former_forward.5} parent=5 // pred_check
        _
      $region72: #{light_hyper_former_forward.5} parent=5 // pred_check_branch
        %477 = sbr.rel (%p474) target = $region74
      $region73: #{light_hyper_former_forward.5} parent=5 // pred_region
        %s478 = ssub.s32 %s11, 1
        %s479 = sand.u32 %s24, 1
        %s480 = sand.u32 %s24, 1
        %s481 = smul.addr %s480, 512
        %s482 = scalar_lea.vmem [#allocation2], %s481
        // Predicated region
        $region75: #{light_hyper_former_forward.5} parent=73 // pred_check
          %p483 = pneg %p37
        $region76: #{light_hyper_former_forward.5} parent=73 // pred_check_branch
          %485 = sbr.rel (%p483) target = $region78
        $region77: #{light_hyper_former_forward.5} parent=73 // pred_region
          _
        $region78: #{light_hyper_former_forward.5} parent=73 // pred_fallthru
          _
        %s486 = sand.u32 %s24, 1
        %s487 = sand.u32 %s24, 1
        %s488 = smul.addr %s487, 512
        %s489 = scalar_lea.vmem [#allocation2], %s488
        %p490 = pneg %p37
        %p491 = pneg %p34
        %p492 = pneg %p58
        %p493 = pneg %p55
        %p494 = pneg %p79
        %p495 = pneg %p76
        %p496 = pneg %p100
        %p497 = pneg %p97
        %p498 = pneg %p121
        %p499 = pneg %p118
        %p500 = pneg %p147
        %p501 = pneg %p144
        %s502 = smul.u32 16, %s16
        %p503 = scmp.lt.s32.totalorder %s502, 31
        %s504 = scalar_select %p503, %s502, 31
        %s505 = smul.addr %s504, 8
        %s506 = scalar_lea.vmem %s5, %s505
        %s507 = smul.u32 16, %s16
        %s508 = smul.u32 16, %s16
        %p509 = scmp.lt.s32.totalorder %s508, 31
        %s510 = scalar_select %p509, %s508, 31
        %s511 = smul.addr %s510, 8
        %s512 = scalar_lea.vmem %s5, %s511
        %s513 = smul.u32 16, %s16
        %v515 = vld [vmem:[%s482] sm:$0xff]
        %v516 = vld [vmem:[%s482 + $0x8] sm:$0xff]
        %v517 = vld [vmem:[%s482 + $0x10] sm:$0xff]
        %v518 = vld [vmem:[%s482 + $0x18] sm:$0xff]
        %v519 = vld [vmem:[%s482 + $0x20] sm:$0xff]
        %v520 = vld [vmem:[%s482 + $0x28] sm:$0xff]
        %v521 = vld [vmem:[%s482 + $0x30] sm:$0xff]
        %v522 = vld [vmem:[%s482 + $0x38] sm:$0xff]
        %v523 = vld [vmem:[%s482 + $0x40] sm:$0xff]
        %v524 = vld [vmem:[%s482 + $0x48] sm:$0xff]
        %v525 = vld [vmem:[%s482 + $0x50] sm:$0xff]
        %v526 = vld [vmem:[%s482 + $0x58] sm:$0xff]
        %v527 = vld [vmem:[%s482 + $0x60] sm:$0xff]
        %v528 = vld [vmem:[%s482 + $0x68] sm:$0xff]
        %v529 = vld [vmem:[%s482 + $0x70] sm:$0xff]
        %v530 = vld [vmem:[%s482 + $0x78] sm:$0xff]
        %v531 = vld [vmem:[%s482 + $0x80] sm:$0xff]
        %v532 = vld [vmem:[%s482 + $0x88] sm:$0xff]
        %v533 = vld [vmem:[%s482 + $0x90] sm:$0xff]
        %v534 = vld [vmem:[%s482 + $0x98] sm:$0xff]
        %v535 = vld [vmem:[%s482 + $0xa0] sm:$0xff]
        %v536 = vld [vmem:[%s482 + $0xa8] sm:$0xff]
        %v537 = vld [vmem:[%s482 + $0xb0] sm:$0xff]
        %v538 = vld [vmem:[%s482 + $0xb8] sm:$0xff]
        %v539 = vld [vmem:[%s482 + $0xc0] sm:$0xff]
        %v540 = vld [vmem:[%s482 + $0xc8] sm:$0xff]
        %v541 = vld [vmem:[%s482 + $0xd0] sm:$0xff]
        %v542 = vld [vmem:[%s482 + $0xd8] sm:$0xff]
        %v543 = vld [vmem:[%s482 + $0xe0] sm:$0xff]
        %v544 = vld [vmem:[%s482 + $0xe8] sm:$0xff]
        %v545 = vld [vmem:[%s482 + $0xf0] sm:$0xff]
        %v546 = vld [vmem:[%s482 + $0xf8] sm:$0xff]
        %v547 = vld [vmem:[%s482 + $0x100] sm:$0xff]
        %v548 = vld [vmem:[%s482 + $0x108] sm:$0xff]
        %v549 = vld [vmem:[%s482 + $0x110] sm:$0xff]
        %v550 = vld [vmem:[%s482 + $0x118] sm:$0xff]
        %v551 = vld [vmem:[%s482 + $0x120] sm:$0xff]
        %v552 = vld [vmem:[%s482 + $0x128] sm:$0xff]
        %v553 = vld [vmem:[%s482 + $0x130] sm:$0xff]
        %v554 = vld [vmem:[%s482 + $0x138] sm:$0xff]
        %v555 = vld [vmem:[%s482 + $0x140] sm:$0xff]
        %v556 = vld [vmem:[%s482 + $0x148] sm:$0xff]
        %v557 = vld [vmem:[%s482 + $0x150] sm:$0xff]
        %v558 = vld [vmem:[%s482 + $0x158] sm:$0xff]
        %v559 = vld [vmem:[%s482 + $0x160] sm:$0xff]
        %v560 = vld [vmem:[%s482 + $0x168] sm:$0xff]
        %v561 = vld [vmem:[%s482 + $0x170] sm:$0xff]
        %v562 = vld [vmem:[%s482 + $0x178] sm:$0xff]
        %v563 = vld [vmem:[%s482 + $0x180] sm:$0xff]
        %v564 = vld [vmem:[%s482 + $0x188] sm:$0xff]
        %v565 = vld [vmem:[%s482 + $0x190] sm:$0xff]
        %v566 = vld [vmem:[%s482 + $0x198] sm:$0xff]
        %v567 = vld [vmem:[%s482 + $0x1a0] sm:$0xff]
        %v568 = vld [vmem:[%s482 + $0x1a8] sm:$0xff]
        %v569 = vld [vmem:[%s482 + $0x1b0] sm:$0xff]
        %v570 = vld [vmem:[%s482 + $0x1b8] sm:$0xff]
        %v571 = vld [vmem:[%s482 + $0x1c0] sm:$0xff]
        %v572 = vld [vmem:[%s482 + $0x1c8] sm:$0xff]
        %v573 = vld [vmem:[%s482 + $0x1d0] sm:$0xff]
        %v574 = vld [vmem:[%s482 + $0x1d8] sm:$0xff]
        %v575 = vld [vmem:[%s482 + $0x1e0] sm:$0xff]
        %v576 = vld [vmem:[%s482 + $0x1e8] sm:$0xff]
        %v577 = vld [vmem:[%s482 + $0x1f0] sm:$0xff]
        %v578 = vld [vmem:[%s482 + $0x1f8] sm:$0xff]
        %v579 = vlaneseq
        %v580 = vand.u32 %v579, 127
        %vm581 = vcmp.eq.s32.totalorder %v580, 0
        %v582 = vsel %vm581, 1, 0
        %v583 = vcvt.s32.f32 %v582
        %v584 = vmul.f32 %v583, 2.0
        %v585 = vsub.f32 1.0, %v584
        %v586 = vmul.f32 %v515, %v583
        %v587 = vmul.f32 %v516, %v583
        %v588 = vmul.f32 %v517, %v583
        %v589 = vmul.f32 %v518, %v583
        %v590 = vmul.f32 %v519, %v583
        %v591 = vmul.f32 %v520, %v583
        %v592 = vmul.f32 %v521, %v583
        %v593 = vmul.f32 %v522, %v583
        %v594 = vmul.f32 %v523, %v583
        %v595 = vmul.f32 %v524, %v583
        %v596 = vmul.f32 %v525, %v583
        %v597 = vmul.f32 %v526, %v583
        %v598 = vmul.f32 %v527, %v583
        %v599 = vmul.f32 %v528, %v583
        %v600 = vmul.f32 %v529, %v583
        %v601 = vmul.f32 %v530, %v583
        %v602 = vmul.f32 %v531, %v583
        %v603 = vmul.f32 %v532, %v583
        %v604 = vmul.f32 %v533, %v583
        %v605 = vmul.f32 %v534, %v583
        %v606 = vmul.f32 %v535, %v583
        %v607 = vmul.f32 %v536, %v583
        %v608 = vmul.f32 %v537, %v583
        %v609 = vmul.f32 %v538, %v583
        %v610 = vmul.f32 %v539, %v583
        %v611 = vmul.f32 %v540, %v583
        %v612 = vmul.f32 %v541, %v583
        %v613 = vmul.f32 %v542, %v583
        %v614 = vmul.f32 %v543, %v583
        %v615 = vmul.f32 %v544, %v583
        %v616 = vmul.f32 %v545, %v583
        %v617 = vmul.f32 %v546, %v583
        %v618 = vmul.f32 %v547, %v583
        %v619 = vmul.f32 %v548, %v583
        %v620 = vmul.f32 %v549, %v583
        %v621 = vmul.f32 %v550, %v583
        %v622 = vmul.f32 %v551, %v583
        %v623 = vmul.f32 %v552, %v583
        %v624 = vmul.f32 %v553, %v583
        %v625 = vmul.f32 %v554, %v583
        %v626 = vmul.f32 %v555, %v583
        %v627 = vmul.f32 %v556, %v583
        %v628 = vmul.f32 %v557, %v583
        %v629 = vmul.f32 %v558, %v583
        %v630 = vmul.f32 %v559, %v583
        %v631 = vmul.f32 %v560, %v583
        %v632 = vmul.f32 %v561, %v583
        %v633 = vmul.f32 %v562, %v583
        %v634 = vmul.f32 %v563, %v583
        %v635 = vmul.f32 %v564, %v583
        %v636 = vmul.f32 %v565, %v583
        %v637 = vmul.f32 %v566, %v583
        %v638 = vmul.f32 %v567, %v583
        %v639 = vmul.f32 %v568, %v583
        %v640 = vmul.f32 %v569, %v583
        %v641 = vmul.f32 %v570, %v583
        %v642 = vmul.f32 %v571, %v583
        %v643 = vmul.f32 %v572, %v583
        %v644 = vmul.f32 %v573, %v583
        %v645 = vmul.f32 %v574, %v583
        %v646 = vmul.f32 %v575, %v583
        %v647 = vmul.f32 %v576, %v583
        %v648 = vmul.f32 %v577, %v583
        %v649 = vmul.f32 %v578, %v583
        %vm650 = vcmask 130048
        %v651 = vsel %vm650, %v586, 0.0
        %652 = vadd.xlane.f32.xlu0 %v651
        %v653 = vpop.xlane.xlu0 %652
        %v654 = vsel %vm650, %v587, 0.0
        %655 = vadd.xlane.f32.xlu0 %v654
        %v656 = vpop.xlane.xlu0 %655
        %v657 = vsel %vm650, %v588, 0.0
        %658 = vadd.xlane.f32.xlu0 %v657
        %v659 = vpop.xlane.xlu0 %658
        %v660 = vsel %vm650, %v589, 0.0
        %661 = vadd.xlane.f32.xlu0 %v660
        %v662 = vpop.xlane.xlu0 %661
        %v663 = vsel %vm650, %v590, 0.0
        %664 = vadd.xlane.f32.xlu0 %v663
        %v665 = vpop.xlane.xlu0 %664
        %v666 = vsel %vm650, %v591, 0.0
        %667 = vadd.xlane.f32.xlu0 %v666
        %v668 = vpop.xlane.xlu0 %667
        %v669 = vsel %vm650, %v592, 0.0
        %670 = vadd.xlane.f32.xlu0 %v669
        %v671 = vpop.xlane.xlu0 %670
        %v672 = vsel %vm650, %v593, 0.0
        %673 = vadd.xlane.f32.xlu0 %v672
        %v674 = vpop.xlane.xlu0 %673
        %v675 = vsel %vm650, %v594, 0.0
        %676 = vadd.xlane.f32.xlu0 %v675
        %v677 = vpop.xlane.xlu0 %676
        %v678 = vsel %vm650, %v595, 0.0
        %679 = vadd.xlane.f32.xlu0 %v678
        %v680 = vpop.xlane.xlu0 %679
        %v681 = vsel %vm650, %v596, 0.0
        %682 = vadd.xlane.f32.xlu0 %v681
        %v683 = vpop.xlane.xlu0 %682
        %v684 = vsel %vm650, %v597, 0.0
        %685 = vadd.xlane.f32.xlu0 %v684
        %v686 = vpop.xlane.xlu0 %685
        %v687 = vsel %vm650, %v598, 0.0
        %688 = vadd.xlane.f32.xlu0 %v687
        %v689 = vpop.xlane.xlu0 %688
        %v690 = vsel %vm650, %v599, 0.0
        %691 = vadd.xlane.f32.xlu0 %v690
        %v692 = vpop.xlane.xlu0 %691
        %v693 = vsel %vm650, %v600, 0.0
        %694 = vadd.xlane.f32.xlu0 %v693
        %v695 = vpop.xlane.xlu0 %694
        %v696 = vsel %vm650, %v601, 0.0
        %697 = vadd.xlane.f32.xlu0 %v696
        %v698 = vpop.xlane.xlu0 %697
        %v699 = vsel %vm650, %v602, 0.0
        %700 = vadd.xlane.f32.xlu0 %v699
        %v701 = vpop.xlane.xlu0 %700
        %v702 = vsel %vm650, %v603, 0.0
        %703 = vadd.xlane.f32.xlu0 %v702
        %v704 = vpop.xlane.xlu0 %703
        %v705 = vsel %vm650, %v604, 0.0
        %706 = vadd.xlane.f32.xlu0 %v705
        %v707 = vpop.xlane.xlu0 %706
        %v708 = vsel %vm650, %v605, 0.0
        %709 = vadd.xlane.f32.xlu0 %v708
        %v710 = vpop.xlane.xlu0 %709
        %v711 = vsel %vm650, %v606, 0.0
        %712 = vadd.xlane.f32.xlu0 %v711
        %v713 = vpop.xlane.xlu0 %712
        %v714 = vsel %vm650, %v607, 0.0
        %715 = vadd.xlane.f32.xlu0 %v714
        %v716 = vpop.xlane.xlu0 %715
        %v717 = vsel %vm650, %v608, 0.0
        %718 = vadd.xlane.f32.xlu0 %v717
        %v719 = vpop.xlane.xlu0 %718
        %v720 = vsel %vm650, %v609, 0.0
        %721 = vadd.xlane.f32.xlu0 %v720
        %v722 = vpop.xlane.xlu0 %721
        %v723 = vsel %vm650, %v610, 0.0
        %724 = vadd.xlane.f32.xlu0 %v723
        %v725 = vpop.xlane.xlu0 %724
        %v726 = vsel %vm650, %v611, 0.0
        %727 = vadd.xlane.f32.xlu0 %v726
        %v728 = vpop.xlane.xlu0 %727
        %v729 = vsel %vm650, %v612, 0.0
        %730 = vadd.xlane.f32.xlu0 %v729
        %v731 = vpop.xlane.xlu0 %730
        %v732 = vsel %vm650, %v613, 0.0
        %733 = vadd.xlane.f32.xlu0 %v732
        %v734 = vpop.xlane.xlu0 %733
        %v735 = vsel %vm650, %v614, 0.0
        %736 = vadd.xlane.f32.xlu0 %v735
        %v737 = vpop.xlane.xlu0 %736
        %v738 = vsel %vm650, %v615, 0.0
        %739 = vadd.xlane.f32.xlu0 %v738
        %v740 = vpop.xlane.xlu0 %739
        %v741 = vsel %vm650, %v616, 0.0
        %742 = vadd.xlane.f32.xlu0 %v741
        %v743 = vpop.xlane.xlu0 %742
        %v744 = vsel %vm650, %v617, 0.0
        %745 = vadd.xlane.f32.xlu0 %v744
        %v746 = vpop.xlane.xlu0 %745
        %v747 = vsel %vm650, %v618, 0.0
        %748 = vadd.xlane.f32.xlu0 %v747
        %v749 = vpop.xlane.xlu0 %748
        %v750 = vsel %vm650, %v619, 0.0
        %751 = vadd.xlane.f32.xlu0 %v750
        %v752 = vpop.xlane.xlu0 %751
        %v753 = vsel %vm650, %v620, 0.0
        %754 = vadd.xlane.f32.xlu0 %v753
        %v755 = vpop.xlane.xlu0 %754
        %v756 = vsel %vm650, %v621, 0.0
        %757 = vadd.xlane.f32.xlu0 %v756
        %v758 = vpop.xlane.xlu0 %757
        %v759 = vsel %vm650, %v622, 0.0
        %760 = vadd.xlane.f32.xlu0 %v759
        %v761 = vpop.xlane.xlu0 %760
        %v762 = vsel %vm650, %v623, 0.0
        %763 = vadd.xlane.f32.xlu0 %v762
        %v764 = vpop.xlane.xlu0 %763
        %v765 = vsel %vm650, %v624, 0.0
        %766 = vadd.xlane.f32.xlu0 %v765
        %v767 = vpop.xlane.xlu0 %766
        %v768 = vsel %vm650, %v625, 0.0
        %769 = vadd.xlane.f32.xlu0 %v768
        %v770 = vpop.xlane.xlu0 %769
        %v771 = vsel %vm650, %v626, 0.0
        %772 = vadd.xlane.f32.xlu0 %v771
        %v773 = vpop.xlane.xlu0 %772
        %v774 = vsel %vm650, %v627, 0.0
        %775 = vadd.xlane.f32.xlu0 %v774
        %v776 = vpop.xlane.xlu0 %775
        %v777 = vsel %vm650, %v628, 0.0
        %778 = vadd.xlane.f32.xlu0 %v777
        %v779 = vpop.xlane.xlu0 %778
        %v780 = vsel %vm650, %v629, 0.0
        %781 = vadd.xlane.f32.xlu0 %v780
        %v782 = vpop.xlane.xlu0 %781
        %v783 = vsel %vm650, %v630, 0.0
        %784 = vadd.xlane.f32.xlu0 %v783
        %v785 = vpop.xlane.xlu0 %784
        %v786 = vsel %vm650, %v631, 0.0
        %787 = vadd.xlane.f32.xlu0 %v786
        %v788 = vpop.xlane.xlu0 %787
        %v789 = vsel %vm650, %v632, 0.0
        %790 = vadd.xlane.f32.xlu0 %v789
        %v791 = vpop.xlane.xlu0 %790
        %v792 = vsel %vm650, %v633, 0.0
        %793 = vadd.xlane.f32.xlu0 %v792
        %v794 = vpop.xlane.xlu0 %793
        %v795 = vsel %vm650, %v634, 0.0
        %796 = vadd.xlane.f32.xlu0 %v795
        %v797 = vpop.xlane.xlu0 %796
        %v798 = vsel %vm650, %v635, 0.0
        %799 = vadd.xlane.f32.xlu0 %v798
        %v800 = vpop.xlane.xlu0 %799
        %v801 = vsel %vm650, %v636, 0.0
        %802 = vadd.xlane.f32.xlu0 %v801
        %v803 = vpop.xlane.xlu0 %802
        %v804 = vsel %vm650, %v637, 0.0
        %805 = vadd.xlane.f32.xlu0 %v804
        %v806 = vpop.xlane.xlu0 %805
        %v807 = vsel %vm650, %v638, 0.0
        %808 = vadd.xlane.f32.xlu0 %v807
        %v809 = vpop.xlane.xlu0 %808
        %v810 = vsel %vm650, %v639, 0.0
        %811 = vadd.xlane.f32.xlu0 %v810
        %v812 = vpop.xlane.xlu0 %811
        %v813 = vsel %vm650, %v640, 0.0
        %814 = vadd.xlane.f32.xlu0 %v813
        %v815 = vpop.xlane.xlu0 %814
        %v816 = vsel %vm650, %v641, 0.0
        %817 = vadd.xlane.f32.xlu0 %v816
        %v818 = vpop.xlane.xlu0 %817
        %v819 = vsel %vm650, %v642, 0.0
        %820 = vadd.xlane.f32.xlu0 %v819
        %v821 = vpop.xlane.xlu0 %820
        %v822 = vsel %vm650, %v643, 0.0
        %823 = vadd.xlane.f32.xlu0 %v822
        %v824 = vpop.xlane.xlu0 %823
        %v825 = vsel %vm650, %v644, 0.0
        %826 = vadd.xlane.f32.xlu0 %v825
        %v827 = vpop.xlane.xlu0 %826
        %v828 = vsel %vm650, %v645, 0.0
        %829 = vadd.xlane.f32.xlu0 %v828
        %v830 = vpop.xlane.xlu0 %829
        %v831 = vsel %vm650, %v646, 0.0
        %832 = vadd.xlane.f32.xlu0 %v831
        %v833 = vpop.xlane.xlu0 %832
        %v834 = vsel %vm650, %v647, 0.0
        %835 = vadd.xlane.f32.xlu0 %v834
        %v836 = vpop.xlane.xlu0 %835
        %v837 = vsel %vm650, %v648, 0.0
        %838 = vadd.xlane.f32.xlu0 %v837
        %v839 = vpop.xlane.xlu0 %838
        %v840 = vsel %vm650, %v649, 0.0
        %841 = vadd.xlane.f32.xlu0 %v840
        %v842 = vpop.xlane.xlu0 %841
        %v843 = vpack.c.bf16 %v516, %v515
        %v844 = vpack.c.bf16 %v518, %v517
        %v845 = vpack.c.bf16 %v520, %v519
        %v846 = vpack.c.bf16 %v522, %v521
        %v847 = vpack.c.bf16 %v524, %v523
        %v848 = vpack.c.bf16 %v526, %v525
        %v849 = vpack.c.bf16 %v528, %v527
        %v850 = vpack.c.bf16 %v530, %v529
        %v851 = vpack.c.bf16 %v532, %v531
        %v852 = vpack.c.bf16 %v534, %v533
        %v853 = vpack.c.bf16 %v536, %v535
        %v854 = vpack.c.bf16 %v538, %v537
        %v855 = vpack.c.bf16 %v540, %v539
        %v856 = vpack.c.bf16 %v542, %v541
        %v857 = vpack.c.bf16 %v544, %v543
        %v858 = vpack.c.bf16 %v546, %v545
        %v859 = vpack.c.bf16 %v548, %v547
        %v860 = vpack.c.bf16 %v550, %v549
        %v861 = vpack.c.bf16 %v552, %v551
        %v862 = vpack.c.bf16 %v554, %v553
        %v863 = vpack.c.bf16 %v556, %v555
        %v864 = vpack.c.bf16 %v558, %v557
        %v865 = vpack.c.bf16 %v560, %v559
        %v866 = vpack.c.bf16 %v562, %v561
        %v867 = vpack.c.bf16 %v564, %v563
        %v868 = vpack.c.bf16 %v566, %v565
        %v869 = vpack.c.bf16 %v568, %v567
        %v870 = vpack.c.bf16 %v570, %v569
        %v871 = vpack.c.bf16 %v572, %v571
        %v872 = vpack.c.bf16 %v574, %v573
        %v873 = vpack.c.bf16 %v576, %v575
        %v874 = vpack.c.bf16 %v578, %v577
        %v875 = vld [vmem:[%s2] sm:$0xf]
        %v876 = vld [vmem:[%s2 + $0x4] sm:$0xf]
        %v879 = vunpack.c.l.b16 %v875
        %v880 = vunpack.c.l.b16 %v876
        %v881 = vpack.c.b16 %v880, %v879
        %v884 = vsel %vm650, %v843, 0
        %v887 = vsel %vm650, %v844, 0
        %v890 = vsel %vm650, %v845, 0
        %v893 = vsel %vm650, %v846, 0
        %v896 = vsel %vm650, %v847, 0
        %v899 = vsel %vm650, %v848, 0
        %v902 = vsel %vm650, %v849, 0
        %v905 = vsel %vm650, %v850, 0
        %v908 = vsel %vm650, %v851, 0
        %v911 = vsel %vm650, %v852, 0
        %v914 = vsel %vm650, %v853, 0
        %v917 = vsel %vm650, %v854, 0
        %v920 = vsel %vm650, %v855, 0
        %v923 = vsel %vm650, %v856, 0
        %v926 = vsel %vm650, %v857, 0
        %v929 = vsel %vm650, %v858, 0
        %v932 = vsel %vm650, %v859, 0
        %v935 = vsel %vm650, %v860, 0
        %v938 = vsel %vm650, %v861, 0
        %v941 = vsel %vm650, %v862, 0
        %v944 = vsel %vm650, %v863, 0
        %v947 = vsel %vm650, %v864, 0
        %v950 = vsel %vm650, %v865, 0
        %v953 = vsel %vm650, %v866, 0
        %v956 = vsel %vm650, %v867, 0
        %v959 = vsel %vm650, %v868, 0
        %v962 = vsel %vm650, %v869, 0
        %v965 = vsel %vm650, %v870, 0
        %v968 = vsel %vm650, %v871, 0
        %v971 = vsel %vm650, %v872, 0
        %v974 = vsel %vm650, %v873, 0
        %v977 = vsel %vm650, %v874, 0
        %979 = vmatprep.subr.bf16.mxu0 0
        %980 = vmatpush1.bf16.msra.mxu0 %v881
        %981 = vmatprep.subr.bf16.mxu0 0
        %982 = vmatpush1.bf16.msra.mxu0 0
        %983 = vmatprep.subr.bf16.mxu0 0
        %984 = vmatpush1.bf16.msra.mxu0 0
        %985 = vmatprep.subr.bf16.mxu0 0
        %986 = vmatpush1.bf16.msra.mxu0 0
        %987 = vmatprep.subr.bf16.mxu0 0
        %988 = vmatpush1.bf16.msra.mxu0 0
        %989 = vmatprep.subr.bf16.mxu0 0
        %990 = vmatpush1.bf16.msra.mxu0 0
        %991 = vmatprep.subr.bf16.mxu0 0
        %992 = vmatpush1.bf16.msra.mxu0 0
        %993 = vmatprep.subr.bf16.mxu0 0
        %994 = vmatpush1.bf16.msra.mxu0 0
        %995 = vmatprep.subr.bf16.mxu0 0
        %996 = vmatpush1.bf16.msra.mxu0 0
        %997 = vmatprep.subr.bf16.mxu0 0
        %998 = vmatpush1.bf16.msra.mxu0 0
        %999 = vmatprep.subr.bf16.mxu0 0
        %1000 = vmatpush1.bf16.msra.mxu0 0
        %1001 = vmatprep.subr.bf16.mxu0 0
        %1002 = vmatpush1.bf16.msra.mxu0 0
        %1003 = vmatprep.subr.bf16.mxu0 0
        %1004 = vmatpush1.bf16.msra.mxu0 0
        %1005 = vmatprep.subr.bf16.mxu0 0
        %1006 = vmatpush1.bf16.msra.mxu0 0
        %1007 = vmatprep.subr.bf16.mxu0 0
        %1008 = vmatpush1.bf16.msra.mxu0 0
        %1009 = vmatprep.subr.bf16.mxu0 0
        %1010 = vmatpush1.bf16.msra.mxu0 0
        %1011 = vmatprep.mubr.bf16.mxu0 0
        %1012 = vmatmul.mubr.bf16.gmra.mrb[0].mxu0 %v884
        %v1013 = vpop.f32.mrb[0].mxu0
        %v1014 = vadd.f32 0.0, %v1013
        %v1015 = vpop.f32.mrb[0].mxu0
        %v1016 = vpop.f32.mrb[0].mxu0
        %v1017 = vadd.f32 0.0, %v1016
        %v1018 = vpop.f32.mrb[0].mxu0
        %1019 = vmatprep.mubr.bf16.mxu0 0
        %1020 = vmatmul.mubr.bf16.gmra.mrb[0].mxu0 %v887
        %v1021 = vpop.f32.mrb[0].mxu0
        %v1022 = vadd.f32 0.0, %v1021
        %v1023 = vpop.f32.mrb[0].mxu0
        %v1024 = vpop.f32.mrb[0].mxu0
        %v1025 = vadd.f32 0.0, %v1024
        %v1026 = vpop.f32.mrb[0].mxu0
        %1027 = vmatprep.mubr.bf16.mxu0 0
        %1028 = vmatmul.mubr.bf16.gmra.mrb[0].mxu0 %v890
        %v1029 = vpop.f32.mrb[0].mxu0
        %v1030 = vadd.f32 0.0, %v1029
        %v1031 = vpop.f32.mrb[0].mxu0
        %v1032 = vpop.f32.mrb[0].mxu0
        %v1033 = vadd.f32 0.0, %v1032
        %v1034 = vpop.f32.mrb[0].mxu0
        %1035 = vmatprep.mubr.bf16.mxu0 0
        %1036 = vmatmul.mubr.bf16.gmra.mrb[0].mxu0 %v893
        %v1037 = vpop.f32.mrb[0].mxu0
        %v1038 = vadd.f32 0.0, %v1037
        %v1039 = vpop.f32.mrb[0].mxu0
        %v1040 = vpop.f32.mrb[0].mxu0
        %v1041 = vadd.f32 0.0, %v1040
        %v1042 = vpop.f32.mrb[0].mxu0
        %1043 = vmatprep.mubr.bf16.mxu0 0
        %1044 = vmatmul.mubr.bf16.gmra.mrb[0].mxu0 %v896
        %v1045 = vpop.f32.mrb[0].mxu0
        %v1046 = vadd.f32 0.0, %v1045
        %v1047 = vpop.f32.mrb[0].mxu0
        %v1048 = vpop.f32.mrb[0].mxu0
        %v1049 = vadd.f32 0.0, %v1048
        %v1050 = vpop.f32.mrb[0].mxu0
        %1051 = vmatprep.mubr.bf16.mxu0 0
        %1052 = vmatmul.mubr.bf16.gmra.mrb[0].mxu0 %v899
        %v1053 = vpop.f32.mrb[0].mxu0
        %v1054 = vadd.f32 0.0, %v1053
        %v1055 = vpop.f32.mrb[0].mxu0
        %v1056 = vpop.f32.mrb[0].mxu0
        %v1057 = vadd.f32 0.0, %v1056
        %v1058 = vpop.f32.mrb[0].mxu0
        %1059 = vmatprep.mubr.bf16.mxu0 0
        %1060 = vmatmul.mubr.bf16.gmra.mrb[0].mxu0 %v902
        %v1061 = vpop.f32.mrb[0].mxu0
        %v1062 = vadd.f32 0.0, %v1061
        %v1063 = vpop.f32.mrb[0].mxu0
        %v1064 = vpop.f32.mrb[0].mxu0
        %v1065 = vadd.f32 0.0, %v1064
        %v1066 = vpop.f32.mrb[0].mxu0
        %1067 = vmatprep.mubr.bf16.mxu0 0
        %1068 = vmatmul.mubr.bf16.gmra.mrb[0].mxu0 %v905
        %v1069 = vpop.f32.mrb[0].mxu0
        %v1070 = vadd.f32 0.0, %v1069
        %v1071 = vpop.f32.mrb[0].mxu0
        %v1072 = vpop.f32.mrb[0].mxu0
        %v1073 = vadd.f32 0.0, %v1072
        %v1074 = vpop.f32.mrb[0].mxu0
        %1075 = vmatprep.mubr.bf16.mxu0 0
        %1076 = vmatmul.mubr.bf16.gmra.mrb[0].mxu0 %v908
        %v1077 = vpop.f32.mrb[0].mxu0
        %v1078 = vadd.f32 0.0, %v1077
        %v1079 = vpop.f32.mrb[0].mxu0
        %v1080 = vpop.f32.mrb[0].mxu0
        %v1081 = vadd.f32 0.0, %v1080
        %v1082 = vpop.f32.mrb[0].mxu0
        %1083 = vmatprep.mubr.bf16.mxu0 0
        %1084 = vmatmul.mubr.bf16.gmra.mrb[0].mxu0 %v911
        %v1085 = vpop.f32.mrb[0].mxu0
        %v1086 = vadd.f32 0.0, %v1085
        %v1087 = vpop.f32.mrb[0].mxu0
        %v1088 = vpop.f32.mrb[0].mxu0
        %v1089 = vadd.f32 0.0, %v1088
        %v1090 = vpop.f32.mrb[0].mxu0
        %1091 = vmatprep.mubr.bf16.mxu0 0
        %1092 = vmatmul.mubr.bf16.gmra.mrb[0].mxu0 %v914
        %v1093 = vpop.f32.mrb[0].mxu0
        %v1094 = vadd.f32 0.0, %v1093
        %v1095 = vpop.f32.mrb[0].mxu0
        %v1096 = vpop.f32.mrb[0].mxu0
        %v1097 = vadd.f32 0.0, %v1096
        %v1098 = vpop.f32.mrb[0].mxu0
        %1099 = vmatprep.mubr.bf16.mxu0 0
        %1100 = vmatmul.mubr.bf16.gmra.mrb[0].mxu0 %v917
        %v1101 = vpop.f32.mrb[0].mxu0
        %v1102 = vadd.f32 0.0, %v1101
        %v1103 = vpop.f32.mrb[0].mxu0
        %v1104 = vpop.f32.mrb[0].mxu0
        %v1105 = vadd.f32 0.0, %v1104
        %v1106 = vpop.f32.mrb[0].mxu0
        %1107 = vmatprep.mubr.bf16.mxu0 0
        %1108 = vmatmul.mubr.bf16.gmra.mrb[0].mxu0 %v920
        %v1109 = vpop.f32.mrb[0].mxu0
        %v1110 = vadd.f32 0.0, %v1109
        %v1111 = vpop.f32.mrb[0].mxu0
        %v1112 = vpop.f32.mrb[0].mxu0
        %v1113 = vadd.f32 0.0, %v1112
        %v1114 = vpop.f32.mrb[0].mxu0
        %1115 = vmatprep.mubr.bf16.mxu0 0
        %1116 = vmatmul.mubr.bf16.gmra.mrb[0].mxu0 %v923
        %v1117 = vpop.f32.mrb[0].mxu0
        %v1118 = vadd.f32 0.0, %v1117
        %v1119 = vpop.f32.mrb[0].mxu0
        %v1120 = vpop.f32.mrb[0].mxu0
        %v1121 = vadd.f32 0.0, %v1120
        %v1122 = vpop.f32.mrb[0].mxu0
        %1123 = vmatprep.mubr.bf16.mxu0 0
        %1124 = vmatmul.mubr.bf16.gmra.mrb[0].mxu0 %v926
        %v1125 = vpop.f32.mrb[0].mxu0
        %v1126 = vadd.f32 0.0, %v1125
        %v1127 = vpop.f32.mrb[0].mxu0
        %v1128 = vpop.f32.mrb[0].mxu0
        %v1129 = vadd.f32 0.0, %v1128
        %v1130 = vpop.f32.mrb[0].mxu0
        %1131 = vmatprep.mubr.bf16.mxu0 0
        %1132 = vmatmul.mubr.bf16.gmra.mrb[0].mxu0 %v929
        %v1133 = vpop.f32.mrb[0].mxu0
        %v1134 = vadd.f32 0.0, %v1133
        %v1135 = vpop.f32.mrb[0].mxu0
        %v1136 = vpop.f32.mrb[0].mxu0
        %v1137 = vadd.f32 0.0, %v1136
        %v1138 = vpop.f32.mrb[0].mxu0
        %1139 = vmatprep.mubr.bf16.mxu0 0
        %1140 = vmatmul.mubr.bf16.gmra.mrb[0].mxu0 %v932
        %v1141 = vpop.f32.mrb[0].mxu0
        %v1142 = vadd.f32 0.0, %v1141
        %v1143 = vpop.f32.mrb[0].mxu0
        %v1144 = vpop.f32.mrb[0].mxu0
        %v1145 = vadd.f32 0.0, %v1144
        %v1146 = vpop.f32.mrb[0].mxu0
        %1147 = vmatprep.mubr.bf16.mxu0 0
        %1148 = vmatmul.mubr.bf16.gmra.mrb[0].mxu0 %v935
        %v1149 = vpop.f32.mrb[0].mxu0
        %v1150 = vadd.f32 0.0, %v1149
        %v1151 = vpop.f32.mrb[0].mxu0
        %v1152 = vpop.f32.mrb[0].mxu0
        %v1153 = vadd.f32 0.0, %v1152
        %v1154 = vpop.f32.mrb[0].mxu0
        %1155 = vmatprep.mubr.bf16.mxu0 0
        %1156 = vmatmul.mubr.bf16.gmra.mrb[0].mxu0 %v938
        %v1157 = vpop.f32.mrb[0].mxu0
        %v1158 = vadd.f32 0.0, %v1157
        %v1159 = vpop.f32.mrb[0].mxu0
        %v1160 = vpop.f32.mrb[0].mxu0
        %v1161 = vadd.f32 0.0, %v1160
        %v1162 = vpop.f32.mrb[0].mxu0
        %1163 = vmatprep.mubr.bf16.mxu0 0
        %1164 = vmatmul.mubr.bf16.gmra.mrb[0].mxu0 %v941
        %v1165 = vpop.f32.mrb[0].mxu0
        %v1166 = vadd.f32 0.0, %v1165
        %v1167 = vpop.f32.mrb[0].mxu0
        %v1168 = vpop.f32.mrb[0].mxu0
        %v1169 = vadd.f32 0.0, %v1168
        %v1170 = vpop.f32.mrb[0].mxu0
        %1171 = vmatprep.mubr.bf16.mxu0 0
        %1172 = vmatmul.mubr.bf16.gmra.mrb[0].mxu0 %v944
        %v1173 = vpop.f32.mrb[0].mxu0
        %v1174 = vadd.f32 0.0, %v1173
        %v1175 = vpop.f32.mrb[0].mxu0
        %v1176 = vpop.f32.mrb[0].mxu0
        %v1177 = vadd.f32 0.0, %v1176
        %v1178 = vpop.f32.mrb[0].mxu0
        %1179 = vmatprep.mubr.bf16.mxu0 0
        %1180 = vmatmul.mubr.bf16.gmra.mrb[0].mxu0 %v947
        %v1181 = vpop.f32.mrb[0].mxu0
        %v1182 = vadd.f32 0.0, %v1181
        %v1183 = vpop.f32.mrb[0].mxu0
        %v1184 = vpop.f32.mrb[0].mxu0
        %v1185 = vadd.f32 0.0, %v1184
        %v1186 = vpop.f32.mrb[0].mxu0
        %1187 = vmatprep.mubr.bf16.mxu0 0
        %1188 = vmatmul.mubr.bf16.gmra.mrb[0].mxu0 %v950
        %v1189 = vpop.f32.mrb[0].mxu0
        %v1190 = vadd.f32 0.0, %v1189
        %v1191 = vpop.f32.mrb[0].mxu0
        %v1192 = vpop.f32.mrb[0].mxu0
        %v1193 = vadd.f32 0.0, %v1192
        %v1194 = vpop.f32.mrb[0].mxu0
        %1195 = vmatprep.mubr.bf16.mxu0 0
        %1196 = vmatmul.mubr.bf16.gmra.mrb[0].mxu0 %v953
        %v1197 = vpop.f32.mrb[0].mxu0
        %v1198 = vadd.f32 0.0, %v1197
        %v1199 = vpop.f32.mrb[0].mxu0
        %v1200 = vpop.f32.mrb[0].mxu0
        %v1201 = vadd.f32 0.0, %v1200
        %v1202 = vpop.f32.mrb[0].mxu0
        %1203 = vmatprep.mubr.bf16.mxu0 0
        %1204 = vmatmul.mubr.bf16.gmra.mrb[0].mxu0 %v956
        %v1205 = vpop.f32.mrb[0].mxu0
        %v1206 = vadd.f32 0.0, %v1205
        %v1207 = vpop.f32.mrb[0].mxu0
        %v1208 = vpop.f32.mrb[0].mxu0
        %v1209 = vadd.f32 0.0, %v1208
        %v1210 = vpop.f32.mrb[0].mxu0
        %1211 = vmatprep.mubr.bf16.mxu0 0
        %1212 = vmatmul.mubr.bf16.gmra.mrb[0].mxu0 %v959
        %v1213 = vpop.f32.mrb[0].mxu0
        %v1214 = vadd.f32 0.0, %v1213
        %v1215 = vpop.f32.mrb[0].mxu0
        %v1216 = vpop.f32.mrb[0].mxu0
        %v1217 = vadd.f32 0.0, %v1216
        %v1218 = vpop.f32.mrb[0].mxu0
        %1219 = vmatprep.mubr.bf16.mxu0 0
        %1220 = vmatmul.mubr.bf16.gmra.mrb[0].mxu0 %v962
        %v1221 = vpop.f32.mrb[0].mxu0
        %v1222 = vadd.f32 0.0, %v1221
        %v1223 = vpop.f32.mrb[0].mxu0
        %v1224 = vpop.f32.mrb[0].mxu0
        %v1225 = vadd.f32 0.0, %v1224
        %v1226 = vpop.f32.mrb[0].mxu0
        %1227 = vmatprep.mubr.bf16.mxu0 0
        %1228 = vmatmul.mubr.bf16.gmra.mrb[0].mxu0 %v965
        %v1229 = vpop.f32.mrb[0].mxu0
        %v1230 = vadd.f32 0.0, %v1229
        %v1231 = vpop.f32.mrb[0].mxu0
        %v1232 = vpop.f32.mrb[0].mxu0
        %v1233 = vadd.f32 0.0, %v1232
        %v1234 = vpop.f32.mrb[0].mxu0
        %1235 = vmatprep.mubr.bf16.mxu0 0
        %1236 = vmatmul.mubr.bf16.gmra.mrb[0].mxu0 %v968
        %v1237 = vpop.f32.mrb[0].mxu0
        %v1238 = vadd.f32 0.0, %v1237
        %v1239 = vpop.f32.mrb[0].mxu0
        %v1240 = vpop.f32.mrb[0].mxu0
        %v1241 = vadd.f32 0.0, %v1240
        %v1242 = vpop.f32.mrb[0].mxu0
        %1243 = vmatprep.mubr.bf16.mxu0 0
        %1244 = vmatmul.mubr.bf16.gmra.mrb[0].mxu0 %v971
        %v1245 = vpop.f32.mrb[0].mxu0
        %v1246 = vadd.f32 0.0, %v1245
        %v1247 = vpop.f32.mrb[0].mxu0
        %v1248 = vpop.f32.mrb[0].mxu0
        %v1249 = vadd.f32 0.0, %v1248
        %v1250 = vpop.f32.mrb[0].mxu0
        %1251 = vmatprep.mubr.bf16.mxu0 0
        %1252 = vmatmul.mubr.bf16.gmra.mrb[0].mxu0 %v974
        %v1253 = vpop.f32.mrb[0].mxu0
        %v1254 = vadd.f32 0.0, %v1253
        %v1255 = vpop.f32.mrb[0].mxu0
        %v1256 = vpop.f32.mrb[0].mxu0
        %v1257 = vadd.f32 0.0, %v1256
        %v1258 = vpop.f32.mrb[0].mxu0
        %1259 = vmatprep.mubr.bf16.mxu0 0
        %1260 = vmatmul.mubr.bf16.gmra.mrb[0].mxu0 %v977
        %v1261 = vpop.f32.mrb[0].mxu0
        %v1262 = vadd.f32 0.0, %v1261
        %v1263 = vpop.f32.mrb[0].mxu0
        %v1264 = vpop.f32.mrb[0].mxu0
        %v1265 = vadd.f32 0.0, %v1264
        %v1266 = vpop.f32.mrb[0].mxu0
        %1267 = vdwg.mxu0
        %v1268 = vmul.f32 %v1014, 1.442695
        %v1269 = vpow.pop %v1268
        %v1270 = vmul.f32 %v1017, 1.442695
        %v1271 = vpow.pop %v1270
        %v1272 = vmul.f32 %v1022, 1.442695
        %v1273 = vpow.pop %v1272
        %v1274 = vmul.f32 %v1025, 1.442695
        %v1275 = vpow.pop %v1274
        %v1276 = vmul.f32 %v1030, 1.442695
        %v1277 = vpow.pop %v1276
        %v1278 = vmul.f32 %v1033, 1.442695
        %v1279 = vpow.pop %v1278
        %v1280 = vmul.f32 %v1038, 1.442695
        %v1281 = vpow.pop %v1280
        %v1282 = vmul.f32 %v1041, 1.442695
        %v1283 = vpow.pop %v1282
        %v1284 = vmul.f32 %v1046, 1.442695
        %v1285 = vpow.pop %v1284
        %v1286 = vmul.f32 %v1049, 1.442695
        %v1287 = vpow.pop %v1286
        %v1288 = vmul.f32 %v1054, 1.442695
        %v1289 = vpow.pop %v1288
        %v1290 = vmul.f32 %v1057, 1.442695
        %v1291 = vpow.pop %v1290
        %v1292 = vmul.f32 %v1062, 1.442695
        %v1293 = vpow.pop %v1292
        %v1294 = vmul.f32 %v1065, 1.442695
        %v1295 = vpow.pop %v1294
        %v1296 = vmul.f32 %v1070, 1.442695
        %v1297 = vpow.pop %v1296
        %v1298 = vmul.f32 %v1073, 1.442695
        %v1299 = vpow.pop %v1298
        %v1300 = vmul.f32 %v1078, 1.442695
        %v1301 = vpow.pop %v1300
        %v1302 = vmul.f32 %v1081, 1.442695
        %v1303 = vpow.pop %v1302
        %v1304 = vmul.f32 %v1086, 1.442695
        %v1305 = vpow.pop %v1304
        %v1306 = vmul.f32 %v1089, 1.442695
        %v1307 = vpow.pop %v1306
        %v1308 = vmul.f32 %v1094, 1.442695
        %v1309 = vpow.pop %v1308
        %v1310 = vmul.f32 %v1097, 1.442695
        %v1311 = vpow.pop %v1310
        %v1312 = vmul.f32 %v1102, 1.442695
        %v1313 = vpow.pop %v1312
        %v1314 = vmul.f32 %v1105, 1.442695
        %v1315 = vpow.pop %v1314
        %v1316 = vmul.f32 %v1110, 1.442695
        %v1317 = vpow.pop %v1316
        %v1318 = vmul.f32 %v1113, 1.442695
        %v1319 = vpow.pop %v1318
        %v1320 = vmul.f32 %v1118, 1.442695
        %v1321 = vpow.pop %v1320
        %v1322 = vmul.f32 %v1121, 1.442695
        %v1323 = vpow.pop %v1322
        %v1324 = vmul.f32 %v1126, 1.442695
        %v1325 = vpow.pop %v1324
        %v1326 = vmul.f32 %v1129, 1.442695
        %v1327 = vpow.pop %v1326
        %v1328 = vmul.f32 %v1134, 1.442695
        %v1329 = vpow.pop %v1328
        %v1330 = vmul.f32 %v1137, 1.442695
        %v1331 = vpow.pop %v1330
        %v1332 = vmul.f32 %v1142, 1.442695
        %v1333 = vpow.pop %v1332
        %v1334 = vmul.f32 %v1145, 1.442695
        %v1335 = vpow.pop %v1334
        %v1336 = vmul.f32 %v1150, 1.442695
        %v1337 = vpow.pop %v1336
        %v1338 = vmul.f32 %v1153, 1.442695
        %v1339 = vpow.pop %v1338
        %v1340 = vmul.f32 %v1158, 1.442695
        %v1341 = vpow.pop %v1340
        %v1342 = vmul.f32 %v1161, 1.442695
        %v1343 = vpow.pop %v1342
        %v1344 = vmul.f32 %v1166, 1.442695
        %v1345 = vpow.pop %v1344
        %v1346 = vmul.f32 %v1169, 1.442695
        %v1347 = vpow.pop %v1346
        %v1348 = vmul.f32 %v1174, 1.442695
        %v1349 = vpow.pop %v1348
        %v1350 = vmul.f32 %v1177, 1.442695
        %v1351 = vpow.pop %v1350
        %v1352 = vmul.f32 %v1182, 1.442695
        %v1353 = vpow.pop %v1352
        %v1354 = vmul.f32 %v1185, 1.442695
        %v1355 = vpow.pop %v1354
        %v1356 = vmul.f32 %v1190, 1.442695
        %v1357 = vpow.pop %v1356
        %v1358 = vmul.f32 %v1193, 1.442695
        %v1359 = vpow.pop %v1358
        %v1360 = vmul.f32 %v1198, 1.442695
        %v1361 = vpow.pop %v1360
        %v1362 = vmul.f32 %v1201, 1.442695
        %v1363 = vpow.pop %v1362
        %v1364 = vmul.f32 %v1206, 1.442695
        %v1365 = vpow.pop %v1364
        %v1366 = vmul.f32 %v1209, 1.442695
        %v1367 = vpow.pop %v1366
        %v1368 = vmul.f32 %v1214, 1.442695
        %v1369 = vpow.pop %v1368
        %v1370 = vmul.f32 %v1217, 1.442695
        %v1371 = vpow.pop %v1370
        %v1372 = vmul.f32 %v1222, 1.442695
        %v1373 = vpow.pop %v1372
        %v1374 = vmul.f32 %v1225, 1.442695
        %v1375 = vpow.pop %v1374
        %v1376 = vmul.f32 %v1230, 1.442695
        %v1377 = vpow.pop %v1376
        %v1378 = vmul.f32 %v1233, 1.442695
        %v1379 = vpow.pop %v1378
        %v1380 = vmul.f32 %v1238, 1.442695
        %v1381 = vpow.pop %v1380
        %v1382 = vmul.f32 %v1241, 1.442695
        %v1383 = vpow.pop %v1382
        %v1384 = vmul.f32 %v1246, 1.442695
        %v1385 = vpow.pop %v1384
        %v1386 = vmul.f32 %v1249, 1.442695
        %v1387 = vpow.pop %v1386
        %v1388 = vmul.f32 %v1254, 1.442695
        %v1389 = vpow.pop %v1388
        %v1390 = vmul.f32 %v1257, 1.442695
        %v1391 = vpow.pop %v1390
        %v1392 = vmul.f32 %v1262, 1.442695
        %v1393 = vpow.pop %v1392
        %v1394 = vmul.f32 %v1265, 1.442695
        %v1395 = vpow.pop %v1394
        %v1396 = vmul.f32 %v653, %v653
        %v1397 = vmul.f32 %v656, %v656
        %v1398 = vmul.f32 %v659, %v659
        %v1399 = vmul.f32 %v662, %v662
        %v1400 = vmul.f32 %v665, %v665
        %v1401 = vmul.f32 %v668, %v668
        %v1402 = vmul.f32 %v671, %v671
        %v1403 = vmul.f32 %v674, %v674
        %v1404 = vmul.f32 %v677, %v677
        %v1405 = vmul.f32 %v680, %v680
        %v1406 = vmul.f32 %v683, %v683
        %v1407 = vmul.f32 %v686, %v686
        %v1408 = vmul.f32 %v689, %v689
        %v1409 = vmul.f32 %v692, %v692
        %v1410 = vmul.f32 %v695, %v695
        %v1411 = vmul.f32 %v698, %v698
        %v1412 = vmul.f32 %v701, %v701
        %v1413 = vmul.f32 %v704, %v704
        %v1414 = vmul.f32 %v707, %v707
        %v1415 = vmul.f32 %v710, %v710
        %v1416 = vmul.f32 %v713, %v713
        %v1417 = vmul.f32 %v716, %v716
        %v1418 = vmul.f32 %v719, %v719
        %v1419 = vmul.f32 %v722, %v722
        %v1420 = vmul.f32 %v725, %v725
        %v1421 = vmul.f32 %v728, %v728
        %v1422 = vmul.f32 %v731, %v731
        %v1423 = vmul.f32 %v734, %v734
        %v1424 = vmul.f32 %v737, %v737
        %v1425 = vmul.f32 %v740, %v740
        %v1426 = vmul.f32 %v743, %v743
        %v1427 = vmul.f32 %v746, %v746
        %v1428 = vmul.f32 %v749, %v749
        %v1429 = vmul.f32 %v752, %v752
        %v1430 = vmul.f32 %v755, %v755
        %v1431 = vmul.f32 %v758, %v758
        %v1432 = vmul.f32 %v761, %v761
        %v1433 = vmul.f32 %v764, %v764
        %v1434 = vmul.f32 %v767, %v767
        %v1435 = vmul.f32 %v770, %v770
        %v1436 = vmul.f32 %v773, %v773
        %v1437 = vmul.f32 %v776, %v776
        %v1438 = vmul.f32 %v779, %v779
        %v1439 = vmul.f32 %v782, %v782
        %v1440 = vmul.f32 %v785, %v785
        %v1441 = vmul.f32 %v788, %v788
        %v1442 = vmul.f32 %v791, %v791
        %v1443 = vmul.f32 %v794, %v794
        %v1444 = vmul.f32 %v797, %v797
        %v1445 = vmul.f32 %v800, %v800
        %v1446 = vmul.f32 %v803, %v803
        %v1447 = vmul.f32 %v806, %v806
        %v1448 = vmul.f32 %v809, %v809
        %v1449 = vmul.f32 %v812, %v812
        %v1450 = vmul.f32 %v815, %v815
        %v1451 = vmul.f32 %v818, %v818
        %v1452 = vmul.f32 %v821, %v821
        %v1453 = vmul.f32 %v824, %v824
        %v1454 = vmul.f32 %v827, %v827
        %v1455 = vmul.f32 %v830, %v830
        %v1456 = vmul.f32 %v833, %v833
        %v1457 = vmul.f32 %v836, %v836
        %v1458 = vmul.f32 %v839, %v839
        %v1459 = vmul.f32 %v842, %v842
        %v1460 = vsub.f32 0.5, %v1396
        %v1461 = vsub.f32 0.5, %v1397
        %v1462 = vsub.f32 0.5, %v1398
        %v1463 = vsub.f32 0.5, %v1399
        %v1464 = vsub.f32 0.5, %v1400
        %v1465 = vsub.f32 0.5, %v1401
        %v1466 = vsub.f32 0.5, %v1402
        %v1467 = vsub.f32 0.5, %v1403
        %v1468 = vsub.f32 0.5, %v1404
        %v1469 = vsub.f32 0.5, %v1405
        %v1470 = vsub.f32 0.5, %v1406
        %v1471 = vsub.f32 0.5, %v1407
        %v1472 = vsub.f32 0.5, %v1408
        %v1473 = vsub.f32 0.5, %v1409
        %v1474 = vsub.f32 0.5, %v1410
        %v1475 = vsub.f32 0.5, %v1411
        %v1476 = vsub.f32 0.5, %v1412
        %v1477 = vsub.f32 0.5, %v1413
        %v1478 = vsub.f32 0.5, %v1414
        %v1479 = vsub.f32 0.5, %v1415
        %v1480 = vsub.f32 0.5, %v1416
        %v1481 = vsub.f32 0.5, %v1417
        %v1482 = vsub.f32 0.5, %v1418
        %v1483 = vsub.f32 0.5, %v1419
        %v1484 = vsub.f32 0.5, %v1420
        %v1485 = vsub.f32 0.5, %v1421
        %v1486 = vsub.f32 0.5, %v1422
        %v1487 = vsub.f32 0.5, %v1423
        %v1488 = vsub.f32 0.5, %v1424
        %v1489 = vsub.f32 0.5, %v1425
        %v1490 = vsub.f32 0.5, %v1426
        %v1491 = vsub.f32 0.5, %v1427
        %v1492 = vsub.f32 0.5, %v1428
        %v1493 = vsub.f32 0.5, %v1429
        %v1494 = vsub.f32 0.5, %v1430
        %v1495 = vsub.f32 0.5, %v1431
        %v1496 = vsub.f32 0.5, %v1432
        %v1497 = vsub.f32 0.5, %v1433
        %v1498 = vsub.f32 0.5, %v1434
        %v1499 = vsub.f32 0.5, %v1435
        %v1500 = vsub.f32 0.5, %v1436
        %v1501 = vsub.f32 0.5, %v1437
        %v1502 = vsub.f32 0.5, %v1438
        %v1503 = vsub.f32 0.5, %v1439
        %v1504 = vsub.f32 0.5, %v1440
        %v1505 = vsub.f32 0.5, %v1441
        %v1506 = vsub.f32 0.5, %v1442
        %v1507 = vsub.f32 0.5, %v1443
        %v1508 = vsub.f32 0.5, %v1444
        %v1509 = vsub.f32 0.5, %v1445
        %v1510 = vsub.f32 0.5, %v1446
        %v1511 = vsub.f32 0.5, %v1447
        %v1512 = vsub.f32 0.5, %v1448
        %v1513 = vsub.f32 0.5, %v1449
        %v1514 = vsub.f32 0.5, %v1450
        %v1515 = vsub.f32 0.5, %v1451
        %v1516 = vsub.f32 0.5, %v1452
        %v1517 = vsub.f32 0.5, %v1453
        %v1518 = vsub.f32 0.5, %v1454
        %v1519 = vsub.f32 0.5, %v1455
        %v1520 = vsub.f32 0.5, %v1456
        %v1521 = vsub.f32 0.5, %v1457
        %v1522 = vsub.f32 0.5, %v1458
        %v1523 = vsub.f32 0.5, %v1459
        %v1524 = vmul.f32 %v1460, 0.5
        %v1525 = vmul.f32 %v1461, 0.5
        %v1526 = vmul.f32 %v1462, 0.5
        %v1527 = vmul.f32 %v1463, 0.5
        %v1528 = vmul.f32 %v1464, 0.5
        %v1529 = vmul.f32 %v1465, 0.5
        %v1530 = vmul.f32 %v1466, 0.5
        %v1531 = vmul.f32 %v1467, 0.5
        %v1532 = vmul.f32 %v1468, 0.5
        %v1533 = vmul.f32 %v1469, 0.5
        %v1534 = vmul.f32 %v1470, 0.5
        %v1535 = vmul.f32 %v1471, 0.5
        %v1536 = vmul.f32 %v1472, 0.5
        %v1537 = vmul.f32 %v1473, 0.5
        %v1538 = vmul.f32 %v1474, 0.5
        %v1539 = vmul.f32 %v1475, 0.5
        %v1540 = vmul.f32 %v1476, 0.5
        %v1541 = vmul.f32 %v1477, 0.5
        %v1542 = vmul.f32 %v1478, 0.5
        %v1543 = vmul.f32 %v1479, 0.5
        %v1544 = vmul.f32 %v1480, 0.5
        %v1545 = vmul.f32 %v1481, 0.5
        %v1546 = vmul.f32 %v1482, 0.5
        %v1547 = vmul.f32 %v1483, 0.5
        %v1548 = vmul.f32 %v1484, 0.5
        %v1549 = vmul.f32 %v1485, 0.5
        %v1550 = vmul.f32 %v1486, 0.5
        %v1551 = vmul.f32 %v1487, 0.5
        %v1552 = vmul.f32 %v1488, 0.5
        %v1553 = vmul.f32 %v1489, 0.5
        %v1554 = vmul.f32 %v1490, 0.5
        %v1555 = vmul.f32 %v1491, 0.5
        %v1556 = vmul.f32 %v1492, 0.5
        %v1557 = vmul.f32 %v1493, 0.5
        %v1558 = vmul.f32 %v1494, 0.5
        %v1559 = vmul.f32 %v1495, 0.5
        %v1560 = vmul.f32 %v1496, 0.5
        %v1561 = vmul.f32 %v1497, 0.5
        %v1562 = vmul.f32 %v1498, 0.5
        %v1563 = vmul.f32 %v1499, 0.5
        %v1564 = vmul.f32 %v1500, 0.5
        %v1565 = vmul.f32 %v1501, 0.5
        %v1566 = vmul.f32 %v1502, 0.5
        %v1567 = vmul.f32 %v1503, 0.5
        %v1568 = vmul.f32 %v1504, 0.5
        %v1569 = vmul.f32 %v1505, 0.5
        %v1570 = vmul.f32 %v1506, 0.5
        %v1571 = vmul.f32 %v1507, 0.5
        %v1572 = vmul.f32 %v1508, 0.5
        %v1573 = vmul.f32 %v1509, 0.5
        %v1574 = vmul.f32 %v1510, 0.5
        %v1575 = vmul.f32 %v1511, 0.5
        %v1576 = vmul.f32 %v1512, 0.5
        %v1577 = vmul.f32 %v1513, 0.5
        %v1578 = vmul.f32 %v1514, 0.5
        %v1579 = vmul.f32 %v1515, 0.5
        %v1580 = vmul.f32 %v1516, 0.5
        %v1581 = vmul.f32 %v1517, 0.5
        %v1582 = vmul.f32 %v1518, 0.5
        %v1583 = vmul.f32 %v1519, 0.5
        %v1584 = vmul.f32 %v1520, 0.5
        %v1585 = vmul.f32 %v1521, 0.5
        %v1586 = vmul.f32 %v1522, 0.5
        %v1587 = vmul.f32 %v1523, 0.5
        %v1588 = vmul.f32 %v1524, 1.442695
        %v1589 = vpow.pop %v1588
        %v1590 = vmul.f32 %v1525, 1.442695
        %v1591 = vpow.pop %v1590
        %v1592 = vmul.f32 %v1526, 1.442695
        %v1593 = vpow.pop %v1592
        %v1594 = vmul.f32 %v1527, 1.442695
        %v1595 = vpow.pop %v1594
        %v1596 = vmul.f32 %v1528, 1.442695
        %v1597 = vpow.pop %v1596
        %v1598 = vmul.f32 %v1529, 1.442695
        %v1599 = vpow.pop %v1598
        %v1600 = vmul.f32 %v1530, 1.442695
        %v1601 = vpow.pop %v1600
        %v1602 = vmul.f32 %v1531, 1.442695
        %v1603 = vpow.pop %v1602
        %v1604 = vmul.f32 %v1532, 1.442695
        %v1605 = vpow.pop %v1604
        %v1606 = vmul.f32 %v1533, 1.442695
        %v1607 = vpow.pop %v1606
        %v1608 = vmul.f32 %v1534, 1.442695
        %v1609 = vpow.pop %v1608
        %v1610 = vmul.f32 %v1535, 1.442695
        %v1611 = vpow.pop %v1610
        %v1612 = vmul.f32 %v1536, 1.442695
        %v1613 = vpow.pop %v1612
        %v1614 = vmul.f32 %v1537, 1.442695
        %v1615 = vpow.pop %v1614
        %v1616 = vmul.f32 %v1538, 1.442695
        %v1617 = vpow.pop %v1616
        %v1618 = vmul.f32 %v1539, 1.442695
        %v1619 = vpow.pop %v1618
        %v1620 = vmul.f32 %v1540, 1.442695
        %v1621 = vpow.pop %v1620
        %v1622 = vmul.f32 %v1541, 1.442695
        %v1623 = vpow.pop %v1622
        %v1624 = vmul.f32 %v1542, 1.442695
        %v1625 = vpow.pop %v1624
        %v1626 = vmul.f32 %v1543, 1.442695
        %v1627 = vpow.pop %v1626
        %v1628 = vmul.f32 %v1544, 1.442695
        %v1629 = vpow.pop %v1628
        %v1630 = vmul.f32 %v1545, 1.442695
        %v1631 = vpow.pop %v1630
        %v1632 = vmul.f32 %v1546, 1.442695
        %v1633 = vpow.pop %v1632
        %v1634 = vmul.f32 %v1547, 1.442695
        %v1635 = vpow.pop %v1634
        %v1636 = vmul.f32 %v1548, 1.442695
        %v1637 = vpow.pop %v1636
        %v1638 = vmul.f32 %v1549, 1.442695
        %v1639 = vpow.pop %v1638
        %v1640 = vmul.f32 %v1550, 1.442695
        %v1641 = vpow.pop %v1640
        %v1642 = vmul.f32 %v1551, 1.442695
        %v1643 = vpow.pop %v1642
        %v1644 = vmul.f32 %v1552, 1.442695
        %v1645 = vpow.pop %v1644
        %v1646 = vmul.f32 %v1553, 1.442695
        %v1647 = vpow.pop %v1646
        %v1648 = vmul.f32 %v1554, 1.442695
        %v1649 = vpow.pop %v1648
        %v1650 = vmul.f32 %v1555, 1.442695
        %v1651 = vpow.pop %v1650
        %v1652 = vmul.f32 %v1556, 1.442695
        %v1653 = vpow.pop %v1652
        %v1654 = vmul.f32 %v1557, 1.442695
        %v1655 = vpow.pop %v1654
        %v1656 = vmul.f32 %v1558, 1.442695
        %v1657 = vpow.pop %v1656
        %v1658 = vmul.f32 %v1559, 1.442695
        %v1659 = vpow.pop %v1658
        %v1660 = vmul.f32 %v1560, 1.442695
        %v1661 = vpow.pop %v1660
        %v1662 = vmul.f32 %v1561, 1.442695
        %v1663 = vpow.pop %v1662
        %v1664 = vmul.f32 %v1562, 1.442695
        %v1665 = vpow.pop %v1664
        %v1666 = vmul.f32 %v1563, 1.442695
        %v1667 = vpow.pop %v1666
        %v1668 = vmul.f32 %v1564, 1.442695
        %v1669 = vpow.pop %v1668
        %v1670 = vmul.f32 %v1565, 1.442695
        %v1671 = vpow.pop %v1670
        %v1672 = vmul.f32 %v1566, 1.442695
        %v1673 = vpow.pop %v1672
        %v1674 = vmul.f32 %v1567, 1.442695
        %v1675 = vpow.pop %v1674
        %v1676 = vmul.f32 %v1568, 1.442695
        %v1677 = vpow.pop %v1676
        %v1678 = vmul.f32 %v1569, 1.442695
        %v1679 = vpow.pop %v1678
        %v1680 = vmul.f32 %v1570, 1.442695
        %v1681 = vpow.pop %v1680
        %v1682 = vmul.f32 %v1571, 1.442695
        %v1683 = vpow.pop %v1682
        %v1684 = vmul.f32 %v1572, 1.442695
        %v1685 = vpow.pop %v1684
        %v1686 = vmul.f32 %v1573, 1.442695
        %v1687 = vpow.pop %v1686
        %v1688 = vmul.f32 %v1574, 1.442695
        %v1689 = vpow.pop %v1688
        %v1690 = vmul.f32 %v1575, 1.442695
        %v1691 = vpow.pop %v1690
        %v1692 = vmul.f32 %v1576, 1.442695
        %v1693 = vpow.pop %v1692
        %v1694 = vmul.f32 %v1577, 1.442695
        %v1695 = vpow.pop %v1694
        %v1696 = vmul.f32 %v1578, 1.442695
        %v1697 = vpow.pop %v1696
        %v1698 = vmul.f32 %v1579, 1.442695
        %v1699 = vpow.pop %v1698
        %v1700 = vmul.f32 %v1580, 1.442695
        %v1701 = vpow.pop %v1700
        %v1702 = vmul.f32 %v1581, 1.442695
        %v1703 = vpow.pop %v1702
        %v1704 = vmul.f32 %v1582, 1.442695
        %v1705 = vpow.pop %v1704
        %v1706 = vmul.f32 %v1583, 1.442695
        %v1707 = vpow.pop %v1706
        %v1708 = vmul.f32 %v1584, 1.442695
        %v1709 = vpow.pop %v1708
        %v1710 = vmul.f32 %v1585, 1.442695
        %v1711 = vpow.pop %v1710
        %v1712 = vmul.f32 %v1586, 1.442695
        %v1713 = vpow.pop %v1712
        %v1714 = vmul.f32 %v1587, 1.442695
        %v1715 = vpow.pop %v1714
        %v1716 = vmul.f32 %v1589, 0.2581989
        %v1717 = vmul.f32 %v1591, 0.2581989
        %v1718 = vmul.f32 %v1593, 0.2581989
        %v1719 = vmul.f32 %v1595, 0.2581989
        %v1720 = vmul.f32 %v1597, 0.2581989
        %v1721 = vmul.f32 %v1599, 0.2581989
        %v1722 = vmul.f32 %v1601, 0.2581989
        %v1723 = vmul.f32 %v1603, 0.2581989
        %v1724 = vmul.f32 %v1605, 0.2581989
        %v1725 = vmul.f32 %v1607, 0.2581989
        %v1726 = vmul.f32 %v1609, 0.2581989
        %v1727 = vmul.f32 %v1611, 0.2581989
        %v1728 = vmul.f32 %v1613, 0.2581989
        %v1729 = vmul.f32 %v1615, 0.2581989
        %v1730 = vmul.f32 %v1617, 0.2581989
        %v1731 = vmul.f32 %v1619, 0.2581989
        %v1732 = vmul.f32 %v1621, 0.2581989
        %v1733 = vmul.f32 %v1623, 0.2581989
        %v1734 = vmul.f32 %v1625, 0.2581989
        %v1735 = vmul.f32 %v1627, 0.2581989
        %v1736 = vmul.f32 %v1629, 0.2581989
        %v1737 = vmul.f32 %v1631, 0.2581989
        %v1738 = vmul.f32 %v1633, 0.2581989
        %v1739 = vmul.f32 %v1635, 0.2581989
        %v1740 = vmul.f32 %v1637, 0.2581989
        %v1741 = vmul.f32 %v1639, 0.2581989
        %v1742 = vmul.f32 %v1641, 0.2581989
        %v1743 = vmul.f32 %v1643, 0.2581989
        %v1744 = vmul.f32 %v1645, 0.2581989
        %v1745 = vmul.f32 %v1647, 0.2581989
        %v1746 = vmul.f32 %v1649, 0.2581989
        %v1747 = vmul.f32 %v1651, 0.2581989
        %v1748 = vmul.f32 %v1653, 0.2581989
        %v1749 = vmul.f32 %v1655, 0.2581989
        %v1750 = vmul.f32 %v1657, 0.2581989
        %v1751 = vmul.f32 %v1659, 0.2581989
        %v1752 = vmul.f32 %v1661, 0.2581989
        %v1753 = vmul.f32 %v1663, 0.2581989
        %v1754 = vmul.f32 %v1665, 0.2581989
        %v1755 = vmul.f32 %v1667, 0.2581989
        %v1756 = vmul.f32 %v1669, 0.2581989
        %v1757 = vmul.f32 %v1671, 0.2581989
        %v1758 = vmul.f32 %v1673, 0.2581989
        %v1759 = vmul.f32 %v1675, 0.2581989
        %v1760 = vmul.f32 %v1677, 0.2581989
        %v1761 = vmul.f32 %v1679, 0.2581989
        %v1762 = vmul.f32 %v1681, 0.2581989
        %v1763 = vmul.f32 %v1683, 0.2581989
        %v1764 = vmul.f32 %v1685, 0.2581989
        %v1765 = vmul.f32 %v1687, 0.2581989
        %v1766 = vmul.f32 %v1689, 0.2581989
        %v1767 = vmul.f32 %v1691, 0.2581989
        %v1768 = vmul.f32 %v1693, 0.2581989
        %v1769 = vmul.f32 %v1695, 0.2581989
        %v1770 = vmul.f32 %v1697, 0.2581989
        %v1771 = vmul.f32 %v1699, 0.2581989
        %v1772 = vmul.f32 %v1701, 0.2581989
        %v1773 = vmul.f32 %v1703, 0.2581989
        %v1774 = vmul.f32 %v1705, 0.2581989
        %v1775 = vmul.f32 %v1707, 0.2581989
        %v1776 = vmul.f32 %v1709, 0.2581989
        %v1777 = vmul.f32 %v1711, 0.2581989
        %v1778 = vmul.f32 %v1713, 0.2581989
        %v1779 = vmul.f32 %v1715, 0.2581989
        %vm1780 = vcmp.lt.s32.totalorder %v580, 8
        %v1781 = vsel %vm1780, 1, 0
        %v1782 = vcvt.s32.f32 %v1781
        %v1783 = vmul.f32 %v1269, %v1716
        %v1784 = vmul.f32 %v1271, %v1717
        %v1785 = vmul.f32 %v1273, %v1718
        %v1786 = vmul.f32 %v1275, %v1719
        %v1787 = vmul.f32 %v1277, %v1720
        %v1788 = vmul.f32 %v1279, %v1721
        %v1789 = vmul.f32 %v1281, %v1722
        %v1790 = vmul.f32 %v1283, %v1723
        %v1791 = vmul.f32 %v1285, %v1724
        %v1792 = vmul.f32 %v1287, %v1725
        %v1793 = vmul.f32 %v1289, %v1726
        %v1794 = vmul.f32 %v1291, %v1727
        %v1795 = vmul.f32 %v1293, %v1728
        %v1796 = vmul.f32 %v1295, %v1729
        %v1797 = vmul.f32 %v1297, %v1730
        %v1798 = vmul.f32 %v1299, %v1731
        %v1799 = vmul.f32 %v1301, %v1732
        %v1800 = vmul.f32 %v1303, %v1733
        %v1801 = vmul.f32 %v1305, %v1734
        %v1802 = vmul.f32 %v1307, %v1735
        %v1803 = vmul.f32 %v1309, %v1736
        %v1804 = vmul.f32 %v1311, %v1737
        %v1805 = vmul.f32 %v1313, %v1738
        %v1806 = vmul.f32 %v1315, %v1739
        %v1807 = vmul.f32 %v1317, %v1740
        %v1808 = vmul.f32 %v1319, %v1741
        %v1809 = vmul.f32 %v1321, %v1742
        %v1810 = vmul.f32 %v1323, %v1743
        %v1811 = vmul.f32 %v1325, %v1744
        %v1812 = vmul.f32 %v1327, %v1745
        %v1813 = vmul.f32 %v1329, %v1746
        %v1814 = vmul.f32 %v1331, %v1747
        %v1815 = vmul.f32 %v1333, %v1748
        %v1816 = vmul.f32 %v1335, %v1749
        %v1817 = vmul.f32 %v1337, %v1750
        %v1818 = vmul.f32 %v1339, %v1751
        %v1819 = vmul.f32 %v1341, %v1752
        %v1820 = vmul.f32 %v1343, %v1753
        %v1821 = vmul.f32 %v1345, %v1754
        %v1822 = vmul.f32 %v1347, %v1755
        %v1823 = vmul.f32 %v1349, %v1756
        %v1824 = vmul.f32 %v1351, %v1757
        %v1825 = vmul.f32 %v1353, %v1758
        %v1826 = vmul.f32 %v1355, %v1759
        %v1827 = vmul.f32 %v1357, %v1760
        %v1828 = vmul.f32 %v1359, %v1761
        %v1829 = vmul.f32 %v1361, %v1762
        %v1830 = vmul.f32 %v1363, %v1763
        %v1831 = vmul.f32 %v1365, %v1764
        %v1832 = vmul.f32 %v1367, %v1765
        %v1833 = vmul.f32 %v1369, %v1766
        %v1834 = vmul.f32 %v1371, %v1767
        %v1835 = vmul.f32 %v1373, %v1768
        %v1836 = vmul.f32 %v1375, %v1769
        %v1837 = vmul.f32 %v1377, %v1770
        %v1838 = vmul.f32 %v1379, %v1771
        %v1839 = vmul.f32 %v1381, %v1772
        %v1840 = vmul.f32 %v1383, %v1773
        %v1841 = vmul.f32 %v1385, %v1774
        %v1842 = vmul.f32 %v1387, %v1775
        %v1843 = vmul.f32 %v1389, %v1776
        %v1844 = vmul.f32 %v1391, %v1777
        %v1845 = vmul.f32 %v1393, %v1778
        %v1846 = vmul.f32 %v1395, %v1779
        %v1847 = vmul.f32 %v1783, %v1782
        %v1848 = vmul.f32 %v1784, %v1782
        %v1849 = vmul.f32 %v1785, %v1782
        %v1850 = vmul.f32 %v1786, %v1782
        %v1851 = vmul.f32 %v1787, %v1782
        %v1852 = vmul.f32 %v1788, %v1782
        %v1853 = vmul.f32 %v1789, %v1782
        %v1854 = vmul.f32 %v1790, %v1782
        %v1855 = vmul.f32 %v1791, %v1782
        %v1856 = vmul.f32 %v1792, %v1782
        %v1857 = vmul.f32 %v1793, %v1782
        %v1858 = vmul.f32 %v1794, %v1782
        %v1859 = vmul.f32 %v1795, %v1782
        %v1860 = vmul.f32 %v1796, %v1782
        %v1861 = vmul.f32 %v1797, %v1782
        %v1862 = vmul.f32 %v1798, %v1782
        %v1863 = vmul.f32 %v1799, %v1782
        %v1864 = vmul.f32 %v1800, %v1782
        %v1865 = vmul.f32 %v1801, %v1782
        %v1866 = vmul.f32 %v1802, %v1782
        %v1867 = vmul.f32 %v1803, %v1782
        %v1868 = vmul.f32 %v1804, %v1782
        %v1869 = vmul.f32 %v1805, %v1782
        %v1870 = vmul.f32 %v1806, %v1782
        %v1871 = vmul.f32 %v1807, %v1782
        %v1872 = vmul.f32 %v1808, %v1782
        %v1873 = vmul.f32 %v1809, %v1782
        %v1874 = vmul.f32 %v1810, %v1782
        %v1875 = vmul.f32 %v1811, %v1782
        %v1876 = vmul.f32 %v1812, %v1782
        %v1877 = vmul.f32 %v1813, %v1782
        %v1878 = vmul.f32 %v1814, %v1782
        %v1879 = vmul.f32 %v1815, %v1782
        %v1880 = vmul.f32 %v1816, %v1782
        %v1881 = vmul.f32 %v1817, %v1782
        %v1882 = vmul.f32 %v1818, %v1782
        %v1883 = vmul.f32 %v1819, %v1782
        %v1884 = vmul.f32 %v1820, %v1782
        %v1885 = vmul.f32 %v1821, %v1782
        %v1886 = vmul.f32 %v1822, %v1782
        %v1887 = vmul.f32 %v1823, %v1782
        %v1888 = vmul.f32 %v1824, %v1782
        %v1889 = vmul.f32 %v1825, %v1782
        %v1890 = vmul.f32 %v1826, %v1782
        %v1891 = vmul.f32 %v1827, %v1782
        %v1892 = vmul.f32 %v1828, %v1782
        %v1893 = vmul.f32 %v1829, %v1782
        %v1894 = vmul.f32 %v1830, %v1782
        %v1895 = vmul.f32 %v1831, %v1782
        %v1896 = vmul.f32 %v1832, %v1782
        %v1897 = vmul.f32 %v1833, %v1782
        %v1898 = vmul.f32 %v1834, %v1782
        %v1899 = vmul.f32 %v1835, %v1782
        %v1900 = vmul.f32 %v1836, %v1782
        %v1901 = vmul.f32 %v1837, %v1782
        %v1902 = vmul.f32 %v1838, %v1782
        %v1903 = vmul.f32 %v1839, %v1782
        %v1904 = vmul.f32 %v1840, %v1782
        %v1905 = vmul.f32 %v1841, %v1782
        %v1906 = vmul.f32 %v1842, %v1782
        %v1907 = vmul.f32 %v1843, %v1782
        %v1908 = vmul.f32 %v1844, %v1782
        %v1909 = vmul.f32 %v1845, %v1782
        %v1910 = vmul.f32 %v1846, %v1782
        %v1911 = vpack.c.bf16 %v1848, %v1847
        %v1912 = vpack.c.bf16 %v1850, %v1849
        %v1913 = vpack.c.bf16 %v1852, %v1851
        %v1914 = vpack.c.bf16 %v1854, %v1853
        %v1915 = vpack.c.bf16 %v1856, %v1855
        %v1916 = vpack.c.bf16 %v1858, %v1857
        %v1917 = vpack.c.bf16 %v1860, %v1859
        %v1918 = vpack.c.bf16 %v1862, %v1861
        %v1919 = vpack.c.bf16 %v1864, %v1863
        %v1920 = vpack.c.bf16 %v1866, %v1865
        %v1921 = vpack.c.bf16 %v1868, %v1867
        %v1922 = vpack.c.bf16 %v1870, %v1869
        %v1923 = vpack.c.bf16 %v1872, %v1871
        %v1924 = vpack.c.bf16 %v1874, %v1873
        %v1925 = vpack.c.bf16 %v1876, %v1875
        %v1926 = vpack.c.bf16 %v1878, %v1877
        %v1927 = vpack.c.bf16 %v1880, %v1879
        %v1928 = vpack.c.bf16 %v1882, %v1881
        %v1929 = vpack.c.bf16 %v1884, %v1883
        %v1930 = vpack.c.bf16 %v1886, %v1885
        %v1931 = vpack.c.bf16 %v1888, %v1887
        %v1932 = vpack.c.bf16 %v1890, %v1889
        %v1933 = vpack.c.bf16 %v1892, %v1891
        %v1934 = vpack.c.bf16 %v1894, %v1893
        %v1935 = vpack.c.bf16 %v1896, %v1895
        %v1936 = vpack.c.bf16 %v1898, %v1897
        %v1937 = vpack.c.bf16 %v1900, %v1899
        %v1938 = vpack.c.bf16 %v1902, %v1901
        %v1939 = vpack.c.bf16 %v1904, %v1903
        %v1940 = vpack.c.bf16 %v1906, %v1905
        %v1941 = vpack.c.bf16 %v1908, %v1907
        %v1942 = vpack.c.bf16 %v1910, %v1909
        %v1943 = vld [vmem:[%s1] sm:$0xf]
        %v1944 = vld [vmem:[%s1 + $0x4] sm:$0xf]
        %v1945 = vld [vmem:[%s1 + $0x8] sm:$0xf]
        %v1946 = vld [vmem:[%s1 + $0xc] sm:$0xf]
        %v1947 = vld [vmem:[%s1 + $0x10] sm:$0xf]
        %v1948 = vld [vmem:[%s1 + $0x14] sm:$0xf]
        %v1949 = vld [vmem:[%s1 + $0x18] sm:$0xf]
        %v1950 = vld [vmem:[%s1 + $0x1c] sm:$0xf]
        %v1951 = vld [vmem:[%s1 + $0x20] sm:$0xf]
        %v1952 = vld [vmem:[%s1 + $0x24] sm:$0xf]
        %v1953 = vld [vmem:[%s1 + $0x28] sm:$0xf]
        %v1954 = vld [vmem:[%s1 + $0x2c] sm:$0xf]
        %v1955 = vld [vmem:[%s1 + $0x30] sm:$0xf]
        %v1956 = vld [vmem:[%s1 + $0x34] sm:$0xf]
        %v1957 = vld [vmem:[%s1 + $0x38] sm:$0xf]
        %v1958 = vld [vmem:[%s1 + $0x3c] sm:$0xf]
        %v1959 = vld [vmem:[%s1 + $0x40] sm:$0xf]
        %v1960 = vld [vmem:[%s1 + $0x44] sm:$0xf]
        %v1961 = vld [vmem:[%s1 + $0x48] sm:$0xf]
        %v1962 = vld [vmem:[%s1 + $0x4c] sm:$0xf]
        %v1963 = vld [vmem:[%s1 + $0x50] sm:$0xf]
        %v1964 = vld [vmem:[%s1 + $0x54] sm:$0xf]
        %v1965 = vld [vmem:[%s1 + $0x58] sm:$0xf]
        %v1966 = vld [vmem:[%s1 + $0x5c] sm:$0xf]
        %v1967 = vld [vmem:[%s1 + $0x60] sm:$0xf]
        %v1968 = vld [vmem:[%s1 + $0x64] sm:$0xf]
        %v1969 = vld [vmem:[%s1 + $0x68] sm:$0xf]
        %v1970 = vld [vmem:[%s1 + $0x6c] sm:$0xf]
        %v1971 = vld [vmem:[%s1 + $0x70] sm:$0xf]
        %v1972 = vld [vmem:[%s1 + $0x74] sm:$0xf]
        %v1973 = vld [vmem:[%s1 + $0x78] sm:$0xf]
        %v1974 = vld [vmem:[%s1 + $0x7c] sm:$0xf]
        %v1975 = vld [vmem:[%s1 + $0x80] sm:$0xf]
        %v1976 = vld [vmem:[%s1 + $0x84] sm:$0xf]
        %v1977 = vld [vmem:[%s1 + $0x88] sm:$0xf]
        %v1978 = vld [vmem:[%s1 + $0x8c] sm:$0xf]
        %v1979 = vld [vmem:[%s1 + $0x90] sm:$0xf]
        %v1980 = vld [vmem:[%s1 + $0x94] sm:$0xf]
        %v1981 = vld [vmem:[%s1 + $0x98] sm:$0xf]
        %v1982 = vld [vmem:[%s1 + $0x9c] sm:$0xf]
        %v1983 = vld [vmem:[%s1 + $0xa0] sm:$0xf]
        %v1984 = vld [vmem:[%s1 + $0xa4] sm:$0xf]
        %v1985 = vld [vmem:[%s1 + $0xa8] sm:$0xf]
        %v1986 = vld [vmem:[%s1 + $0xac] sm:$0xf]
        %v1987 = vld [vmem:[%s1 + $0xb0] sm:$0xf]
        %v1988 = vld [vmem:[%s1 + $0xb4] sm:$0xf]
        %v1989 = vld [vmem:[%s1 + $0xb8] sm:$0xf]
        %v1990 = vld [vmem:[%s1 + $0xbc] sm:$0xf]
        %v1991 = vld [vmem:[%s1 + $0xc0] sm:$0xf]
        %v1992 = vld [vmem:[%s1 + $0xc4] sm:$0xf]
        %v1993 = vld [vmem:[%s1 + $0xc8] sm:$0xf]
        %v1994 = vld [vmem:[%s1 + $0xcc] sm:$0xf]
        %v1995 = vld [vmem:[%s1 + $0xd0] sm:$0xf]
        %v1996 = vld [vmem:[%s1 + $0xd4] sm:$0xf]
        %v1997 = vld [vmem:[%s1 + $0xd8] sm:$0xf]
        %v1998 = vld [vmem:[%s1 + $0xdc] sm:$0xf]
        %v1999 = vld [vmem:[%s1 + $0xe0] sm:$0xf]
        %v2000 = vld [vmem:[%s1 + $0xe4] sm:$0xf]
        %v2001 = vld [vmem:[%s1 + $0xe8] sm:$0xf]
        %v2002 = vld [vmem:[%s1 + $0xec] sm:$0xf]
        %v2003 = vld [vmem:[%s1 + $0xf0] sm:$0xf]
        %v2004 = vld [vmem:[%s1 + $0xf4] sm:$0xf]
        %v2005 = vld [vmem:[%s1 + $0xf8] sm:$0xf]
        %v2006 = vld [vmem:[%s1 + $0xfc] sm:$0xf]
        %v2023 = vunpack.c.l.b16 %v1943
        %v2024 = vunpack.c.l.b16 %v1944
        %v2025 = vunpack.c.l.b16 %v1945
        %v2026 = vunpack.c.l.b16 %v1946
        %v2027 = vunpack.c.l.b16 %v1947
        %v2028 = vunpack.c.l.b16 %v1948
        %v2029 = vunpack.c.l.b16 %v1949
        %v2030 = vunpack.c.l.b16 %v1950
        %v2031 = vunpack.c.l.b16 %v1951
        %v2032 = vunpack.c.l.b16 %v1952
        %v2033 = vunpack.c.l.b16 %v1953
        %v2034 = vunpack.c.l.b16 %v1954
        %v2035 = vunpack.c.l.b16 %v1955
        %v2036 = vunpack.c.l.b16 %v1956
        %v2037 = vunpack.c.l.b16 %v1957
        %v2038 = vunpack.c.l.b16 %v1958
        %v2039 = vpack.c.b16 %v2024, %v2023
        %v2040 = vpack.c.b16 %v2026, %v2025
        %v2041 = vpack.c.b16 %v2028, %v2027
        %v2042 = vpack.c.b16 %v2030, %v2029
        %v2043 = vpack.c.b16 %v2032, %v2031
        %v2044 = vpack.c.b16 %v2034, %v2033
        %v2045 = vpack.c.b16 %v2036, %v2035
        %v2046 = vpack.c.b16 %v2038, %v2037
        %2055 = vmatprep.subr.bf16.mxu0 0
        %2056 = vmatpush1.bf16.msra.mxu0 %v2039
        %2057 = vmatprep.subr.bf16.mxu0 0
        %2058 = vmatpush1.bf16.msra.mxu0 %v2040
        %2059 = vmatprep.subr.bf16.mxu0 0
        %2060 = vmatpush1.bf16.msra.mxu0 %v2041
        %2061 = vmatprep.subr.bf16.mxu0 0
        %2062 = vmatpush1.bf16.msra.mxu0 %v2042
        %2063 = vmatprep.subr.bf16.mxu0 0
        %2064 = vmatpush1.bf16.msra.mxu0 %v2043
        %2065 = vmatprep.subr.bf16.mxu0 0
        %2066 = vmatpush1.bf16.msra.mxu0 %v2044
        %2067 = vmatprep.subr.bf16.mxu0 0
        %2068 = vmatpush1.bf16.msra.mxu0 %v2045
        %2069 = vmatprep.subr.bf16.mxu0 0
        %2070 = vmatpush1.bf16.msra.mxu0 %v2046
        %2071 = vmatprep.subr.bf16.mxu0 0
        %2072 = vmatpush1.bf16.msra.mxu0 0
        %2073 = vmatprep.subr.bf16.mxu0 0
        %2074 = vmatpush1.bf16.msra.mxu0 0
        %2075 = vmatprep.subr.bf16.mxu0 0
        %2076 = vmatpush1.bf16.msra.mxu0 0
        %2077 = vmatprep.subr.bf16.mxu0 0
        %2078 = vmatpush1.bf16.msra.mxu0 0
        %2079 = vmatprep.subr.bf16.mxu0 0
        %2080 = vmatpush1.bf16.msra.mxu0 0
        %2081 = vmatprep.subr.bf16.mxu0 0
        %2082 = vmatpush1.bf16.msra.mxu0 0
        %2083 = vmatprep.subr.bf16.mxu0 0
        %2084 = vmatpush1.bf16.msra.mxu0 0
        %2085 = vmatprep.subr.bf16.mxu0 0
        %2086 = vmatpush1.bf16.msra.mxu0 0
        %2087 = vmatprep.mubr.bf16.mxu0 0
        %2088 = vmatmul.mubr.bf16.gmra.mrb[0].mxu0 %v1911
        %v2089 = vpop.f32.mrb[0].mxu0
        %v2090 = vadd.f32 0.0, %v2089
        %v2091 = vpop.f32.mrb[0].mxu0
        %v2092 = vpop.f32.mrb[0].mxu0
        %v2093 = vadd.f32 0.0, %v2092
        %v2094 = vpop.f32.mrb[0].mxu0
        %2095 = vmatprep.mubr.bf16.mxu0 0
        %2096 = vmatmul.mubr.bf16.gmra.mrb[0].mxu0 %v1912
        %v2097 = vpop.f32.mrb[0].mxu0
        %v2098 = vadd.f32 0.0, %v2097
        %v2099 = vpop.f32.mrb[0].mxu0
        %v2100 = vpop.f32.mrb[0].mxu0
        %v2101 = vadd.f32 0.0, %v2100
        %v2102 = vpop.f32.mrb[0].mxu0
        %2103 = vmatprep.mubr.bf16.mxu0 0
        %2104 = vmatmul.mubr.bf16.gmra.mrb[0].mxu0 %v1913
        %v2105 = vpop.f32.mrb[0].mxu0
        %v2106 = vadd.f32 0.0, %v2105
        %v2107 = vpop.f32.mrb[0].mxu0
        %v2108 = vpop.f32.mrb[0].mxu0
        %v2109 = vadd.f32 0.0, %v2108
        %v2110 = vpop.f32.mrb[0].mxu0
        %2111 = vmatprep.mubr.bf16.mxu0 0
        %2112 = vmatmul.mubr.bf16.gmra.mrb[0].mxu0 %v1914
        %v2113 = vpop.f32.mrb[0].mxu0
        %v2114 = vadd.f32 0.0, %v2113
        %v2115 = vpop.f32.mrb[0].mxu0
        %v2116 = vpop.f32.mrb[0].mxu0
        %v2117 = vadd.f32 0.0, %v2116
        %v2118 = vpop.f32.mrb[0].mxu0
        %2119 = vmatprep.mubr.bf16.mxu0 0
        %2120 = vmatmul.mubr.bf16.gmra.mrb[0].mxu0 %v1915
        %v2121 = vpop.f32.mrb[0].mxu0
        %v2122 = vadd.f32 0.0, %v2121
        %v2123 = vpop.f32.mrb[0].mxu0
        %v2124 = vpop.f32.mrb[0].mxu0
        %v2125 = vadd.f32 0.0, %v2124
        %v2126 = vpop.f32.mrb[0].mxu0
        %2127 = vmatprep.mubr.bf16.mxu0 0
        %2128 = vmatmul.mubr.bf16.gmra.mrb[0].mxu0 %v1916
        %v2129 = vpop.f32.mrb[0].mxu0
        %v2130 = vadd.f32 0.0, %v2129
        %v2131 = vpop.f32.mrb[0].mxu0
        %v2132 = vpop.f32.mrb[0].mxu0
        %v2133 = vadd.f32 0.0, %v2132
        %v2134 = vpop.f32.mrb[0].mxu0
        %2135 = vmatprep.mubr.bf16.mxu0 0
        %2136 = vmatmul.mubr.bf16.gmra.mrb[0].mxu0 %v1917
        %v2137 = vpop.f32.mrb[0].mxu0
        %v2138 = vadd.f32 0.0, %v2137
        %v2139 = vpop.f32.mrb[0].mxu0
        %v2140 = vpop.f32.mrb[0].mxu0
        %v2141 = vadd.f32 0.0, %v2140
        %v2142 = vpop.f32.mrb[0].mxu0
        %2143 = vmatprep.mubr.bf16.mxu0 0
        %2144 = vmatmul.mubr.bf16.gmra.mrb[0].mxu0 %v1918
        %v2145 = vpop.f32.mrb[0].mxu0
        %v2146 = vadd.f32 0.0, %v2145
        %v2147 = vpop.f32.mrb[0].mxu0
        %v2148 = vpop.f32.mrb[0].mxu0
        %v2149 = vadd.f32 0.0, %v2148
        %v2150 = vpop.f32.mrb[0].mxu0
        %2151 = vdwg.mxu0
        %v2168 = vunpack.c.l.b16 %v1959
        %v2169 = vunpack.c.l.b16 %v1960
        %v2170 = vunpack.c.l.b16 %v1961
        %v2171 = vunpack.c.l.b16 %v1962
        %v2172 = vunpack.c.l.b16 %v1963
        %v2173 = vunpack.c.l.b16 %v1964
        %v2174 = vunpack.c.l.b16 %v1965
        %v2175 = vunpack.c.l.b16 %v1966
        %v2176 = vunpack.c.l.b16 %v1967
        %v2177 = vunpack.c.l.b16 %v1968
        %v2178 = vunpack.c.l.b16 %v1969
        %v2179 = vunpack.c.l.b16 %v1970
        %v2180 = vunpack.c.l.b16 %v1971
        %v2181 = vunpack.c.l.b16 %v1972
        %v2182 = vunpack.c.l.b16 %v1973
        %v2183 = vunpack.c.l.b16 %v1974
        %v2184 = vpack.c.b16 %v2169, %v2168
        %v2185 = vpack.c.b16 %v2171, %v2170
        %v2186 = vpack.c.b16 %v2173, %v2172
        %v2187 = vpack.c.b16 %v2175, %v2174
        %v2188 = vpack.c.b16 %v2177, %v2176
        %v2189 = vpack.c.b16 %v2179, %v2178
        %v2190 = vpack.c.b16 %v2181, %v2180
        %v2191 = vpack.c.b16 %v2183, %v2182
        %2200 = vmatprep.subr.bf16.mxu0 0
        %2201 = vmatpush1.bf16.msra.mxu0 %v2184
        %2202 = vmatprep.subr.bf16.mxu0 0
        %2203 = vmatpush1.bf16.msra.mxu0 %v2185
        %2204 = vmatprep.subr.bf16.mxu0 0
        %2205 = vmatpush1.bf16.msra.mxu0 %v2186
        %2206 = vmatprep.subr.bf16.mxu0 0
        %2207 = vmatpush1.bf16.msra.mxu0 %v2187
        %2208 = vmatprep.subr.bf16.mxu0 0
        %2209 = vmatpush1.bf16.msra.mxu0 %v2188
        %2210 = vmatprep.subr.bf16.mxu0 0
        %2211 = vmatpush1.bf16.msra.mxu0 %v2189
        %2212 = vmatprep.subr.bf16.mxu0 0
        %2213 = vmatpush1.bf16.msra.mxu0 %v2190
        %2214 = vmatprep.subr.bf16.mxu0 0
        %2215 = vmatpush1.bf16.msra.mxu0 %v2191
        %2216 = vmatprep.subr.bf16.mxu0 0
        %2217 = vmatpush1.bf16.msra.mxu0 0
        %2218 = vmatprep.subr.bf16.mxu0 0
        %2219 = vmatpush1.bf16.msra.mxu0 0
        %2220 = vmatprep.subr.bf16.mxu0 0
        %2221 = vmatpush1.bf16.msra.mxu0 0
        %2222 = vmatprep.subr.bf16.mxu0 0
        %2223 = vmatpush1.bf16.msra.mxu0 0
        %2224 = vmatprep.subr.bf16.mxu0 0
        %2225 = vmatpush1.bf16.msra.mxu0 0
        %2226 = vmatprep.subr.bf16.mxu0 0
        %2227 = vmatpush1.bf16.msra.mxu0 0
        %2228 = vmatprep.subr.bf16.mxu0 0
        %2229 = vmatpush1.bf16.msra.mxu0 0
        %2230 = vmatprep.subr.bf16.mxu0 0
        %2231 = vmatpush1.bf16.msra.mxu0 0
        %2232 = vmatprep.mubr.bf16.mxu0 0
        %2233 = vmatmul.mubr.bf16.gmra.mrb[0].mxu0 %v1919
        %v2234 = vpop.f32.mrb[0].mxu0
        %v2235 = vadd.f32 0.0, %v2234
        %v2236 = vpop.f32.mrb[0].mxu0
        %v2237 = vpop.f32.mrb[0].mxu0
        %v2238 = vadd.f32 0.0, %v2237
        %v2239 = vpop.f32.mrb[0].mxu0
        %2240 = vmatprep.mubr.bf16.mxu0 0
        %2241 = vmatmul.mubr.bf16.gmra.mrb[0].mxu0 %v1920
        %v2242 = vpop.f32.mrb[0].mxu0
        %v2243 = vadd.f32 0.0, %v2242
        %v2244 = vpop.f32.mrb[0].mxu0
        %v2245 = vpop.f32.mrb[0].mxu0
        %v2246 = vadd.f32 0.0, %v2245
        %v2247 = vpop.f32.mrb[0].mxu0
        %2248 = vmatprep.mubr.bf16.mxu0 0
        %2249 = vmatmul.mubr.bf16.gmra.mrb[0].mxu0 %v1921
        %v2250 = vpop.f32.mrb[0].mxu0
        %v2251 = vadd.f32 0.0, %v2250
        %v2252 = vpop.f32.mrb[0].mxu0
        %v2253 = vpop.f32.mrb[0].mxu0
        %v2254 = vadd.f32 0.0, %v2253
        %v2255 = vpop.f32.mrb[0].mxu0
        %2256 = vmatprep.mubr.bf16.mxu0 0
        %2257 = vmatmul.mubr.bf16.gmra.mrb[0].mxu0 %v1922
        %v2258 = vpop.f32.mrb[0].mxu0
        %v2259 = vadd.f32 0.0, %v2258
        %v2260 = vpop.f32.mrb[0].mxu0
        %v2261 = vpop.f32.mrb[0].mxu0
        %v2262 = vadd.f32 0.0, %v2261
        %v2263 = vpop.f32.mrb[0].mxu0
        %2264 = vmatprep.mubr.bf16.mxu0 0
        %2265 = vmatmul.mubr.bf16.gmra.mrb[0].mxu0 %v1923
        %v2266 = vpop.f32.mrb[0].mxu0
        %v2267 = vadd.f32 0.0, %v2266
        %v2268 = vpop.f32.mrb[0].mxu0
        %v2269 = vpop.f32.mrb[0].mxu0
        %v2270 = vadd.f32 0.0, %v2269
        %v2271 = vpop.f32.mrb[0].mxu0
        %2272 = vmatprep.mubr.bf16.mxu0 0
        %2273 = vmatmul.mubr.bf16.gmra.mrb[0].mxu0 %v1924
        %v2274 = vpop.f32.mrb[0].mxu0
        %v2275 = vadd.f32 0.0, %v2274
        %v2276 = vpop.f32.mrb[0].mxu0
        %v2277 = vpop.f32.mrb[0].mxu0
        %v2278 = vadd.f32 0.0, %v2277
        %v2279 = vpop.f32.mrb[0].mxu0
        %2280 = vmatprep.mubr.bf16.mxu0 0
        %2281 = vmatmul.mubr.bf16.gmra.mrb[0].mxu0 %v1925
        %v2282 = vpop.f32.mrb[0].mxu0
        %v2283 = vadd.f32 0.0, %v2282
        %v2284 = vpop.f32.mrb[0].mxu0
        %v2285 = vpop.f32.mrb[0].mxu0
        %v2286 = vadd.f32 0.0, %v2285
        %v2287 = vpop.f32.mrb[0].mxu0
        %2288 = vmatprep.mubr.bf16.mxu0 0
        %2289 = vmatmul.mubr.bf16.gmra.mrb[0].mxu0 %v1926
        %v2290 = vpop.f32.mrb[0].mxu0
        %v2291 = vadd.f32 0.0, %v2290
        %v2292 = vpop.f32.mrb[0].mxu0
        %v2293 = vpop.f32.mrb[0].mxu0
        %v2294 = vadd.f32 0.0, %v2293
        %v2295 = vpop.f32.mrb[0].mxu0
        %2296 = vdwg.mxu0
        %v2313 = vunpack.c.l.b16 %v1975
        %v2314 = vunpack.c.l.b16 %v1976
        %v2315 = vunpack.c.l.b16 %v1977
        %v2316 = vunpack.c.l.b16 %v1978
        %v2317 = vunpack.c.l.b16 %v1979
        %v2318 = vunpack.c.l.b16 %v1980
        %v2319 = vunpack.c.l.b16 %v1981
        %v2320 = vunpack.c.l.b16 %v1982
        %v2321 = vunpack.c.l.b16 %v1983
        %v2322 = vunpack.c.l.b16 %v1984
        %v2323 = vunpack.c.l.b16 %v1985
        %v2324 = vunpack.c.l.b16 %v1986
        %v2325 = vunpack.c.l.b16 %v1987
        %v2326 = vunpack.c.l.b16 %v1988
        %v2327 = vunpack.c.l.b16 %v1989
        %v2328 = vunpack.c.l.b16 %v1990
        %v2329 = vpack.c.b16 %v2314, %v2313
        %v2330 = vpack.c.b16 %v2316, %v2315
        %v2331 = vpack.c.b16 %v2318, %v2317
        %v2332 = vpack.c.b16 %v2320, %v2319
        %v2333 = vpack.c.b16 %v2322, %v2321
        %v2334 = vpack.c.b16 %v2324, %v2323
        %v2335 = vpack.c.b16 %v2326, %v2325
        %v2336 = vpack.c.b16 %v2328, %v2327
        %2345 = vmatprep.subr.bf16.mxu0 0
        %2346 = vmatpush1.bf16.msra.mxu0 %v2329
        %2347 = vmatprep.subr.bf16.mxu0 0
        %2348 = vmatpush1.bf16.msra.mxu0 %v2330
        %2349 = vmatprep.subr.bf16.mxu0 0
        %2350 = vmatpush1.bf16.msra.mxu0 %v2331
        %2351 = vmatprep.subr.bf16.mxu0 0
        %2352 = vmatpush1.bf16.msra.mxu0 %v2332
        %2353 = vmatprep.subr.bf16.mxu0 0
        %2354 = vmatpush1.bf16.msra.mxu0 %v2333
        %2355 = vmatprep.subr.bf16.mxu0 0
        %2356 = vmatpush1.bf16.msra.mxu0 %v2334
        %2357 = vmatprep.subr.bf16.mxu0 0
        %2358 = vmatpush1.bf16.msra.mxu0 %v2335
        %2359 = vmatprep.subr.bf16.mxu0 0
        %2360 = vmatpush1.bf16.msra.mxu0 %v2336
        %2361 = vmatprep.subr.bf16.mxu0 0
        %2362 = vmatpush1.bf16.msra.mxu0 0
        %2363 = vmatprep.subr.bf16.mxu0 0
        %2364 = vmatpush1.bf16.msra.mxu0 0
        %2365 = vmatprep.subr.bf16.mxu0 0
        %2366 = vmatpush1.bf16.msra.mxu0 0
        %2367 = vmatprep.subr.bf16.mxu0 0
        %2368 = vmatpush1.bf16.msra.mxu0 0
        %2369 = vmatprep.subr.bf16.mxu0 0
        %2370 = vmatpush1.bf16.msra.mxu0 0
        %2371 = vmatprep.subr.bf16.mxu0 0
        %2372 = vmatpush1.bf16.msra.mxu0 0
        %2373 = vmatprep.subr.bf16.mxu0 0
        %2374 = vmatpush1.bf16.msra.mxu0 0
        %2375 = vmatprep.subr.bf16.mxu0 0
        %2376 = vmatpush1.bf16.msra.mxu0 0
        %2377 = vmatprep.mubr.bf16.mxu0 0
        %2378 = vmatmul.mubr.bf16.gmra.mrb[0].mxu0 %v1927
        %v2379 = vpop.f32.mrb[0].mxu0
        %v2380 = vadd.f32 0.0, %v2379
        %v2381 = vpop.f32.mrb[0].mxu0
        %v2382 = vpop.f32.mrb[0].mxu0
        %v2383 = vadd.f32 0.0, %v2382
        %v2384 = vpop.f32.mrb[0].mxu0
        %2385 = vmatprep.mubr.bf16.mxu0 0
        %2386 = vmatmul.mubr.bf16.gmra.mrb[0].mxu0 %v1928
        %v2387 = vpop.f32.mrb[0].mxu0
        %v2388 = vadd.f32 0.0, %v2387
        %v2389 = vpop.f32.mrb[0].mxu0
        %v2390 = vpop.f32.mrb[0].mxu0
        %v2391 = vadd.f32 0.0, %v2390
        %v2392 = vpop.f32.mrb[0].mxu0
        %2393 = vmatprep.mubr.bf16.mxu0 0
        %2394 = vmatmul.mubr.bf16.gmra.mrb[0].mxu0 %v1929
        %v2395 = vpop.f32.mrb[0].mxu0
        %v2396 = vadd.f32 0.0, %v2395
        %v2397 = vpop.f32.mrb[0].mxu0
        %v2398 = vpop.f32.mrb[0].mxu0
        %v2399 = vadd.f32 0.0, %v2398
        %v2400 = vpop.f32.mrb[0].mxu0
        %2401 = vmatprep.mubr.bf16.mxu0 0
        %2402 = vmatmul.mubr.bf16.gmra.mrb[0].mxu0 %v1930
        %v2403 = vpop.f32.mrb[0].mxu0
        %v2404 = vadd.f32 0.0, %v2403
        %v2405 = vpop.f32.mrb[0].mxu0
        %v2406 = vpop.f32.mrb[0].mxu0
        %v2407 = vadd.f32 0.0, %v2406
        %v2408 = vpop.f32.mrb[0].mxu0
        %2409 = vmatprep.mubr.bf16.mxu0 0
        %2410 = vmatmul.mubr.bf16.gmra.mrb[0].mxu0 %v1931
        %v2411 = vpop.f32.mrb[0].mxu0
        %v2412 = vadd.f32 0.0, %v2411
        %v2413 = vpop.f32.mrb[0].mxu0
        %v2414 = vpop.f32.mrb[0].mxu0
        %v2415 = vadd.f32 0.0, %v2414
        %v2416 = vpop.f32.mrb[0].mxu0
        %2417 = vmatprep.mubr.bf16.mxu0 0
        %2418 = vmatmul.mubr.bf16.gmra.mrb[0].mxu0 %v1932
        %v2419 = vpop.f32.mrb[0].mxu0
        %v2420 = vadd.f32 0.0, %v2419
        %v2421 = vpop.f32.mrb[0].mxu0
        %v2422 = vpop.f32.mrb[0].mxu0
        %v2423 = vadd.f32 0.0, %v2422
        %v2424 = vpop.f32.mrb[0].mxu0
        %2425 = vmatprep.mubr.bf16.mxu0 0
        %2426 = vmatmul.mubr.bf16.gmra.mrb[0].mxu0 %v1933
        %v2427 = vpop.f32.mrb[0].mxu0
        %v2428 = vadd.f32 0.0, %v2427
        %v2429 = vpop.f32.mrb[0].mxu0
        %v2430 = vpop.f32.mrb[0].mxu0
        %v2431 = vadd.f32 0.0, %v2430
        %v2432 = vpop.f32.mrb[0].mxu0
        %2433 = vmatprep.mubr.bf16.mxu0 0
        %2434 = vmatmul.mubr.bf16.gmra.mrb[0].mxu0 %v1934
        %v2435 = vpop.f32.mrb[0].mxu0
        %v2436 = vadd.f32 0.0, %v2435
        %v2437 = vpop.f32.mrb[0].mxu0
        %v2438 = vpop.f32.mrb[0].mxu0
        %v2439 = vadd.f32 0.0, %v2438
        %v2440 = vpop.f32.mrb[0].mxu0
        %2441 = vdwg.mxu0
        %v2458 = vunpack.c.l.b16 %v1991
        %v2459 = vunpack.c.l.b16 %v1992
        %v2460 = vunpack.c.l.b16 %v1993
        %v2461 = vunpack.c.l.b16 %v1994
        %v2462 = vunpack.c.l.b16 %v1995
        %v2463 = vunpack.c.l.b16 %v1996
        %v2464 = vunpack.c.l.b16 %v1997
        %v2465 = vunpack.c.l.b16 %v1998
        %v2466 = vunpack.c.l.b16 %v1999
        %v2467 = vunpack.c.l.b16 %v2000
        %v2468 = vunpack.c.l.b16 %v2001
        %v2469 = vunpack.c.l.b16 %v2002
        %v2470 = vunpack.c.l.b16 %v2003
        %v2471 = vunpack.c.l.b16 %v2004
        %v2472 = vunpack.c.l.b16 %v2005
        %v2473 = vunpack.c.l.b16 %v2006
        %v2474 = vpack.c.b16 %v2459, %v2458
        %v2475 = vpack.c.b16 %v2461, %v2460
        %v2476 = vpack.c.b16 %v2463, %v2462
        %v2477 = vpack.c.b16 %v2465, %v2464
        %v2478 = vpack.c.b16 %v2467, %v2466
        %v2479 = vpack.c.b16 %v2469, %v2468
        %v2480 = vpack.c.b16 %v2471, %v2470
        %v2481 = vpack.c.b16 %v2473, %v2472
        %2490 = vmatprep.subr.bf16.mxu0 0
        %2491 = vmatpush1.bf16.msra.mxu0 %v2474
        %2492 = vmatprep.subr.bf16.mxu0 0
        %2493 = vmatpush1.bf16.msra.mxu0 %v2475
        %2494 = vmatprep.subr.bf16.mxu0 0
        %2495 = vmatpush1.bf16.msra.mxu0 %v2476
        %2496 = vmatprep.subr.bf16.mxu0 0
        %2497 = vmatpush1.bf16.msra.mxu0 %v2477
        %2498 = vmatprep.subr.bf16.mxu0 0
        %2499 = vmatpush1.bf16.msra.mxu0 %v2478
        %2500 = vmatprep.subr.bf16.mxu0 0
        %2501 = vmatpush1.bf16.msra.mxu0 %v2479
        %2502 = vmatprep.subr.bf16.mxu0 0
        %2503 = vmatpush1.bf16.msra.mxu0 %v2480
        %2504 = vmatprep.subr.bf16.mxu0 0
        %2505 = vmatpush1.bf16.msra.mxu0 %v2481
        %2506 = vmatprep.subr.bf16.mxu0 0
        %2507 = vmatpush1.bf16.msra.mxu0 0
        %2508 = vmatprep.subr.bf16.mxu0 0
        %2509 = vmatpush1.bf16.msra.mxu0 0
        %2510 = vmatprep.subr.bf16.mxu0 0
        %2511 = vmatpush1.bf16.msra.mxu0 0
        %2512 = vmatprep.subr.bf16.mxu0 0
        %2513 = vmatpush1.bf16.msra.mxu0 0
        %2514 = vmatprep.subr.bf16.mxu0 0
        %2515 = vmatpush1.bf16.msra.mxu0 0
        %2516 = vmatprep.subr.bf16.mxu0 0
        %2517 = vmatpush1.bf16.msra.mxu0 0
        %2518 = vmatprep.subr.bf16.mxu0 0
        %2519 = vmatpush1.bf16.msra.mxu0 0
        %2520 = vmatprep.subr.bf16.mxu0 0
        %2521 = vmatpush1.bf16.msra.mxu0 0
        %2522 = vmatprep.mubr.bf16.mxu0 0
        %2523 = vmatmul.mubr.bf16.gmra.mrb[0].mxu0 %v1935
        %v2524 = vpop.f32.mrb[0].mxu0
        %v2525 = vadd.f32 0.0, %v2524
        %v2526 = vpop.f32.mrb[0].mxu0
        %v2527 = vpop.f32.mrb[0].mxu0
        %v2528 = vadd.f32 0.0, %v2527
        %v2529 = vpop.f32.mrb[0].mxu0
        %2530 = vmatprep.mubr.bf16.mxu0 0
        %2531 = vmatmul.mubr.bf16.gmra.mrb[0].mxu0 %v1936
        %v2532 = vpop.f32.mrb[0].mxu0
        %v2533 = vadd.f32 0.0, %v2532
        %v2534 = vpop.f32.mrb[0].mxu0
        %v2535 = vpop.f32.mrb[0].mxu0
        %v2536 = vadd.f32 0.0, %v2535
        %v2537 = vpop.f32.mrb[0].mxu0
        %2538 = vmatprep.mubr.bf16.mxu0 0
        %2539 = vmatmul.mubr.bf16.gmra.mrb[0].mxu0 %v1937
        %v2540 = vpop.f32.mrb[0].mxu0
        %v2541 = vadd.f32 0.0, %v2540
        %v2542 = vpop.f32.mrb[0].mxu0
        %v2543 = vpop.f32.mrb[0].mxu0
        %v2544 = vadd.f32 0.0, %v2543
        %v2545 = vpop.f32.mrb[0].mxu0
        %2546 = vmatprep.mubr.bf16.mxu0 0
        %2547 = vmatmul.mubr.bf16.gmra.mrb[0].mxu0 %v1938
        %v2548 = vpop.f32.mrb[0].mxu0
        %v2549 = vadd.f32 0.0, %v2548
        %v2550 = vpop.f32.mrb[0].mxu0
        %v2551 = vpop.f32.mrb[0].mxu0
        %v2552 = vadd.f32 0.0, %v2551
        %v2553 = vpop.f32.mrb[0].mxu0
        %2554 = vmatprep.mubr.bf16.mxu0 0
        %2555 = vmatmul.mubr.bf16.gmra.mrb[0].mxu0 %v1939
        %v2556 = vpop.f32.mrb[0].mxu0
        %v2557 = vadd.f32 0.0, %v2556
        %v2558 = vpop.f32.mrb[0].mxu0
        %v2559 = vpop.f32.mrb[0].mxu0
        %v2560 = vadd.f32 0.0, %v2559
        %v2561 = vpop.f32.mrb[0].mxu0
        %2562 = vmatprep.mubr.bf16.mxu0 0
        %2563 = vmatmul.mubr.bf16.gmra.mrb[0].mxu0 %v1940
        %v2564 = vpop.f32.mrb[0].mxu0
        %v2565 = vadd.f32 0.0, %v2564
        %v2566 = vpop.f32.mrb[0].mxu0
        %v2567 = vpop.f32.mrb[0].mxu0
        %v2568 = vadd.f32 0.0, %v2567
        %v2569 = vpop.f32.mrb[0].mxu0
        %2570 = vmatprep.mubr.bf16.mxu0 0
        %2571 = vmatmul.mubr.bf16.gmra.mrb[0].mxu0 %v1941
        %v2572 = vpop.f32.mrb[0].mxu0
        %v2573 = vadd.f32 0.0, %v2572
        %v2574 = vpop.f32.mrb[0].mxu0
        %v2575 = vpop.f32.mrb[0].mxu0
        %v2576 = vadd.f32 0.0, %v2575
        %v2577 = vpop.f32.mrb[0].mxu0
        %2578 = vmatprep.mubr.bf16.mxu0 0
        %2579 = vmatmul.mubr.bf16.gmra.mrb[0].mxu0 %v1942
        %v2580 = vpop.f32.mrb[0].mxu0
        %v2581 = vadd.f32 0.0, %v2580
        %v2582 = vpop.f32.mrb[0].mxu0
        %v2583 = vpop.f32.mrb[0].mxu0
        %v2584 = vadd.f32 0.0, %v2583
        %v2585 = vpop.f32.mrb[0].mxu0
        %2586 = vdwg.mxu0
        %v2587 = vmul.f32 %v2090, %v2090
        %v2588 = vmul.f32 %v2093, %v2093
        %v2589 = vmul.f32 %v2098, %v2098
        %v2590 = vmul.f32 %v2101, %v2101
        %v2591 = vmul.f32 %v2106, %v2106
        %v2592 = vmul.f32 %v2109, %v2109
        %v2593 = vmul.f32 %v2114, %v2114
        %v2594 = vmul.f32 %v2117, %v2117
        %v2595 = vmul.f32 %v2122, %v2122
        %v2596 = vmul.f32 %v2125, %v2125
        %v2597 = vmul.f32 %v2130, %v2130
        %v2598 = vmul.f32 %v2133, %v2133
        %v2599 = vmul.f32 %v2138, %v2138
        %v2600 = vmul.f32 %v2141, %v2141
        %v2601 = vmul.f32 %v2146, %v2146
        %v2602 = vmul.f32 %v2149, %v2149
        %v2603 = vmul.f32 %v2235, %v2235
        %v2604 = vmul.f32 %v2238, %v2238
        %v2605 = vmul.f32 %v2243, %v2243
        %v2606 = vmul.f32 %v2246, %v2246
        %v2607 = vmul.f32 %v2251, %v2251
        %v2608 = vmul.f32 %v2254, %v2254
        %v2609 = vmul.f32 %v2259, %v2259
        %v2610 = vmul.f32 %v2262, %v2262
        %v2611 = vmul.f32 %v2267, %v2267
        %v2612 = vmul.f32 %v2270, %v2270
        %v2613 = vmul.f32 %v2275, %v2275
        %v2614 = vmul.f32 %v2278, %v2278
        %v2615 = vmul.f32 %v2283, %v2283
        %v2616 = vmul.f32 %v2286, %v2286
        %v2617 = vmul.f32 %v2291, %v2291
        %v2618 = vmul.f32 %v2294, %v2294
        %v2619 = vmul.f32 %v2380, %v2380
        %v2620 = vmul.f32 %v2383, %v2383
        %v2621 = vmul.f32 %v2388, %v2388
        %v2622 = vmul.f32 %v2391, %v2391
        %v2623 = vmul.f32 %v2396, %v2396
        %v2624 = vmul.f32 %v2399, %v2399
        %v2625 = vmul.f32 %v2404, %v2404
        %v2626 = vmul.f32 %v2407, %v2407
        %v2627 = vmul.f32 %v2412, %v2412
        %v2628 = vmul.f32 %v2415, %v2415
        %v2629 = vmul.f32 %v2420, %v2420
        %v2630 = vmul.f32 %v2423, %v2423
        %v2631 = vmul.f32 %v2428, %v2428
        %v2632 = vmul.f32 %v2431, %v2431
        %v2633 = vmul.f32 %v2436, %v2436
        %v2634 = vmul.f32 %v2439, %v2439
        %v2635 = vmul.f32 %v2525, %v2525
        %v2636 = vmul.f32 %v2528, %v2528
        %v2637 = vmul.f32 %v2533, %v2533
        %v2638 = vmul.f32 %v2536, %v2536
        %v2639 = vmul.f32 %v2541, %v2541
        %v2640 = vmul.f32 %v2544, %v2544
        %v2641 = vmul.f32 %v2549, %v2549
        %v2642 = vmul.f32 %v2552, %v2552
        %v2643 = vmul.f32 %v2557, %v2557
        %v2644 = vmul.f32 %v2560, %v2560
        %v2645 = vmul.f32 %v2565, %v2565
        %v2646 = vmul.f32 %v2568, %v2568
        %v2647 = vmul.f32 %v2573, %v2573
        %v2648 = vmul.f32 %v2576, %v2576
        %v2649 = vmul.f32 %v2581, %v2581
        %v2650 = vmul.f32 %v2584, %v2584
        %v2651 = vmul.f32 %v2587, %v585
        %v2652 = vmul.f32 %v2588, %v585
        %v2653 = vmul.f32 %v2589, %v585
        %v2654 = vmul.f32 %v2590, %v585
        %v2655 = vmul.f32 %v2591, %v585
        %v2656 = vmul.f32 %v2592, %v585
        %v2657 = vmul.f32 %v2593, %v585
        %v2658 = vmul.f32 %v2594, %v585
        %v2659 = vmul.f32 %v2595, %v585
        %v2660 = vmul.f32 %v2596, %v585
        %v2661 = vmul.f32 %v2597, %v585
        %v2662 = vmul.f32 %v2598, %v585
        %v2663 = vmul.f32 %v2599, %v585
        %v2664 = vmul.f32 %v2600, %v585
        %v2665 = vmul.f32 %v2601, %v585
        %v2666 = vmul.f32 %v2602, %v585
        %v2667 = vmul.f32 %v2603, %v585
        %v2668 = vmul.f32 %v2604, %v585
        %v2669 = vmul.f32 %v2605, %v585
        %v2670 = vmul.f32 %v2606, %v585
        %v2671 = vmul.f32 %v2607, %v585
        %v2672 = vmul.f32 %v2608, %v585
        %v2673 = vmul.f32 %v2609, %v585
        %v2674 = vmul.f32 %v2610, %v585
        %v2675 = vmul.f32 %v2611, %v585
        %v2676 = vmul.f32 %v2612, %v585
        %v2677 = vmul.f32 %v2613, %v585
        %v2678 = vmul.f32 %v2614, %v585
        %v2679 = vmul.f32 %v2615, %v585
        %v2680 = vmul.f32 %v2616, %v585
        %v2681 = vmul.f32 %v2617, %v585
        %v2682 = vmul.f32 %v2618, %v585
        %v2683 = vmul.f32 %v2619, %v585
        %v2684 = vmul.f32 %v2620, %v585
        %v2685 = vmul.f32 %v2621, %v585
        %v2686 = vmul.f32 %v2622, %v585
        %v2687 = vmul.f32 %v2623, %v585
        %v2688 = vmul.f32 %v2624, %v585
        %v2689 = vmul.f32 %v2625, %v585
        %v2690 = vmul.f32 %v2626, %v585
        %v2691 = vmul.f32 %v2627, %v585
        %v2692 = vmul.f32 %v2628, %v585
        %v2693 = vmul.f32 %v2629, %v585
        %v2694 = vmul.f32 %v2630, %v585
        %v2695 = vmul.f32 %v2631, %v585
        %v2696 = vmul.f32 %v2632, %v585
        %v2697 = vmul.f32 %v2633, %v585
        %v2698 = vmul.f32 %v2634, %v585
        %v2699 = vmul.f32 %v2635, %v585
        %v2700 = vmul.f32 %v2636, %v585
        %v2701 = vmul.f32 %v2637, %v585
        %v2702 = vmul.f32 %v2638, %v585
        %v2703 = vmul.f32 %v2639, %v585
        %v2704 = vmul.f32 %v2640, %v585
        %v2705 = vmul.f32 %v2641, %v585
        %v2706 = vmul.f32 %v2642, %v585
        %v2707 = vmul.f32 %v2643, %v585
        %v2708 = vmul.f32 %v2644, %v585
        %v2709 = vmul.f32 %v2645, %v585
        %v2710 = vmul.f32 %v2646, %v585
        %v2711 = vmul.f32 %v2647, %v585
        %v2712 = vmul.f32 %v2648, %v585
        %v2713 = vmul.f32 %v2649, %v585
        %v2714 = vmul.f32 %v2650, %v585
        %v2715 = vsel %vm650, %v2651, 0.0
        %2716 = vadd.xlane.f32.xlu0 %v2715
        %v2717 = vpop.xlane.xlu0 %2716
        %v2718 = vsel %vm650, %v2652, 0.0
        %2719 = vadd.xlane.f32.xlu0 %v2718
        %v2720 = vpop.xlane.xlu0 %2719
        %v2721 = vsel %vm650, %v2653, 0.0
        %2722 = vadd.xlane.f32.xlu0 %v2721
        %v2723 = vpop.xlane.xlu0 %2722
        %v2724 = vsel %vm650, %v2654, 0.0
        %2725 = vadd.xlane.f32.xlu0 %v2724
        %v2726 = vpop.xlane.xlu0 %2725
        %v2727 = vsel %vm650, %v2655, 0.0
        %2728 = vadd.xlane.f32.xlu0 %v2727
        %v2729 = vpop.xlane.xlu0 %2728
        %v2730 = vsel %vm650, %v2656, 0.0
        %2731 = vadd.xlane.f32.xlu0 %v2730
        %v2732 = vpop.xlane.xlu0 %2731
        %v2733 = vsel %vm650, %v2657, 0.0
        %2734 = vadd.xlane.f32.xlu0 %v2733
        %v2735 = vpop.xlane.xlu0 %2734
        %v2736 = vsel %vm650, %v2658, 0.0
        %2737 = vadd.xlane.f32.xlu0 %v2736
        %v2738 = vpop.xlane.xlu0 %2737
        %v2739 = vsel %vm650, %v2659, 0.0
        %2740 = vadd.xlane.f32.xlu0 %v2739
        %v2741 = vpop.xlane.xlu0 %2740
        %v2742 = vsel %vm650, %v2660, 0.0
        %2743 = vadd.xlane.f32.xlu0 %v2742
        %v2744 = vpop.xlane.xlu0 %2743
        %v2745 = vsel %vm650, %v2661, 0.0
        %2746 = vadd.xlane.f32.xlu0 %v2745
        %v2747 = vpop.xlane.xlu0 %2746
        %v2748 = vsel %vm650, %v2662, 0.0
        %2749 = vadd.xlane.f32.xlu0 %v2748
        %v2750 = vpop.xlane.xlu0 %2749
        %v2751 = vsel %vm650, %v2663, 0.0
        %2752 = vadd.xlane.f32.xlu0 %v2751
        %v2753 = vpop.xlane.xlu0 %2752
        %v2754 = vsel %vm650, %v2664, 0.0
        %2755 = vadd.xlane.f32.xlu0 %v2754
        %v2756 = vpop.xlane.xlu0 %2755
        %v2757 = vsel %vm650, %v2665, 0.0
        %2758 = vadd.xlane.f32.xlu0 %v2757
        %v2759 = vpop.xlane.xlu0 %2758
        %v2760 = vsel %vm650, %v2666, 0.0
        %2761 = vadd.xlane.f32.xlu0 %v2760
        %v2762 = vpop.xlane.xlu0 %2761
        %v2763 = vsel %vm650, %v2667, 0.0
        %2764 = vadd.xlane.f32.xlu0 %v2763
        %v2765 = vpop.xlane.xlu0 %2764
        %v2766 = vsel %vm650, %v2668, 0.0
        %2767 = vadd.xlane.f32.xlu0 %v2766
        %v2768 = vpop.xlane.xlu0 %2767
        %v2769 = vsel %vm650, %v2669, 0.0
        %2770 = vadd.xlane.f32.xlu0 %v2769
        %v2771 = vpop.xlane.xlu0 %2770
        %v2772 = vsel %vm650, %v2670, 0.0
        %2773 = vadd.xlane.f32.xlu0 %v2772
        %v2774 = vpop.xlane.xlu0 %2773
        %v2775 = vsel %vm650, %v2671, 0.0
        %2776 = vadd.xlane.f32.xlu0 %v2775
        %v2777 = vpop.xlane.xlu0 %2776
        %v2778 = vsel %vm650, %v2672, 0.0
        %2779 = vadd.xlane.f32.xlu0 %v2778
        %v2780 = vpop.xlane.xlu0 %2779
        %v2781 = vsel %vm650, %v2673, 0.0
        %2782 = vadd.xlane.f32.xlu0 %v2781
        %v2783 = vpop.xlane.xlu0 %2782
        %v2784 = vsel %vm650, %v2674, 0.0
        %2785 = vadd.xlane.f32.xlu0 %v2784
        %v2786 = vpop.xlane.xlu0 %2785
        %v2787 = vsel %vm650, %v2675, 0.0
        %2788 = vadd.xlane.f32.xlu0 %v2787
        %v2789 = vpop.xlane.xlu0 %2788
        %v2790 = vsel %vm650, %v2676, 0.0
        %2791 = vadd.xlane.f32.xlu0 %v2790
        %v2792 = vpop.xlane.xlu0 %2791
        %v2793 = vsel %vm650, %v2677, 0.0
        %2794 = vadd.xlane.f32.xlu0 %v2793
        %v2795 = vpop.xlane.xlu0 %2794
        %v2796 = vsel %vm650, %v2678, 0.0
        %2797 = vadd.xlane.f32.xlu0 %v2796
        %v2798 = vpop.xlane.xlu0 %2797
        %v2799 = vsel %vm650, %v2679, 0.0
        %2800 = vadd.xlane.f32.xlu0 %v2799
        %v2801 = vpop.xlane.xlu0 %2800
        %v2802 = vsel %vm650, %v2680, 0.0
        %2803 = vadd.xlane.f32.xlu0 %v2802
        %v2804 = vpop.xlane.xlu0 %2803
        %v2805 = vsel %vm650, %v2681, 0.0
        %2806 = vadd.xlane.f32.xlu0 %v2805
        %v2807 = vpop.xlane.xlu0 %2806
        %v2808 = vsel %vm650, %v2682, 0.0
        %2809 = vadd.xlane.f32.xlu0 %v2808
        %v2810 = vpop.xlane.xlu0 %2809
        %v2811 = vsel %vm650, %v2683, 0.0
        %2812 = vadd.xlane.f32.xlu0 %v2811
        %v2813 = vpop.xlane.xlu0 %2812
        %v2814 = vsel %vm650, %v2684, 0.0
        %2815 = vadd.xlane.f32.xlu0 %v2814
        %v2816 = vpop.xlane.xlu0 %2815
        %v2817 = vsel %vm650, %v2685, 0.0
        %2818 = vadd.xlane.f32.xlu0 %v2817
        %v2819 = vpop.xlane.xlu0 %2818
        %v2820 = vsel %vm650, %v2686, 0.0
        %2821 = vadd.xlane.f32.xlu0 %v2820
        %v2822 = vpop.xlane.xlu0 %2821
        %v2823 = vsel %vm650, %v2687, 0.0
        %2824 = vadd.xlane.f32.xlu0 %v2823
        %v2825 = vpop.xlane.xlu0 %2824
        %v2826 = vsel %vm650, %v2688, 0.0
        %2827 = vadd.xlane.f32.xlu0 %v2826
        %v2828 = vpop.xlane.xlu0 %2827
        %v2829 = vsel %vm650, %v2689, 0.0
        %2830 = vadd.xlane.f32.xlu0 %v2829
        %v2831 = vpop.xlane.xlu0 %2830
        %v2832 = vsel %vm650, %v2690, 0.0
        %2833 = vadd.xlane.f32.xlu0 %v2832
        %v2834 = vpop.xlane.xlu0 %2833
        %v2835 = vsel %vm650, %v2691, 0.0
        %2836 = vadd.xlane.f32.xlu0 %v2835
        %v2837 = vpop.xlane.xlu0 %2836
        %v2838 = vsel %vm650, %v2692, 0.0
        %2839 = vadd.xlane.f32.xlu0 %v2838
        %v2840 = vpop.xlane.xlu0 %2839
        %v2841 = vsel %vm650, %v2693, 0.0
        %2842 = vadd.xlane.f32.xlu0 %v2841
        %v2843 = vpop.xlane.xlu0 %2842
        %v2844 = vsel %vm650, %v2694, 0.0
        %2845 = vadd.xlane.f32.xlu0 %v2844
        %v2846 = vpop.xlane.xlu0 %2845
        %v2847 = vsel %vm650, %v2695, 0.0
        %2848 = vadd.xlane.f32.xlu0 %v2847
        %v2849 = vpop.xlane.xlu0 %2848
        %v2850 = vsel %vm650, %v2696, 0.0
        %2851 = vadd.xlane.f32.xlu0 %v2850
        %v2852 = vpop.xlane.xlu0 %2851
        %v2853 = vsel %vm650, %v2697, 0.0
        %2854 = vadd.xlane.f32.xlu0 %v2853
        %v2855 = vpop.xlane.xlu0 %2854
        %v2856 = vsel %vm650, %v2698, 0.0
        %2857 = vadd.xlane.f32.xlu0 %v2856
        %v2858 = vpop.xlane.xlu0 %2857
        %v2859 = vsel %vm650, %v2699, 0.0
        %2860 = vadd.xlane.f32.xlu0 %v2859
        %v2861 = vpop.xlane.xlu0 %2860
        %v2862 = vsel %vm650, %v2700, 0.0
        %2863 = vadd.xlane.f32.xlu0 %v2862
        %v2864 = vpop.xlane.xlu0 %2863
        %v2865 = vsel %vm650, %v2701, 0.0
        %2866 = vadd.xlane.f32.xlu0 %v2865
        %v2867 = vpop.xlane.xlu0 %2866
        %v2868 = vsel %vm650, %v2702, 0.0
        %2869 = vadd.xlane.f32.xlu0 %v2868
        %v2870 = vpop.xlane.xlu0 %2869
        %v2871 = vsel %vm650, %v2703, 0.0
        %2872 = vadd.xlane.f32.xlu0 %v2871
        %v2873 = vpop.xlane.xlu0 %2872
        %v2874 = vsel %vm650, %v2704, 0.0
        %2875 = vadd.xlane.f32.xlu0 %v2874
        %v2876 = vpop.xlane.xlu0 %2875
        %v2877 = vsel %vm650, %v2705, 0.0
        %2878 = vadd.xlane.f32.xlu0 %v2877
        %v2879 = vpop.xlane.xlu0 %2878
        %v2880 = vsel %vm650, %v2706, 0.0
        %2881 = vadd.xlane.f32.xlu0 %v2880
        %v2882 = vpop.xlane.xlu0 %2881
        %v2883 = vsel %vm650, %v2707, 0.0
        %2884 = vadd.xlane.f32.xlu0 %v2883
        %v2885 = vpop.xlane.xlu0 %2884
        %v2886 = vsel %vm650, %v2708, 0.0
        %2887 = vadd.xlane.f32.xlu0 %v2886
        %v2888 = vpop.xlane.xlu0 %2887
        %v2889 = vsel %vm650, %v2709, 0.0
        %2890 = vadd.xlane.f32.xlu0 %v2889
        %v2891 = vpop.xlane.xlu0 %2890
        %v2892 = vsel %vm650, %v2710, 0.0
        %2893 = vadd.xlane.f32.xlu0 %v2892
        %v2894 = vpop.xlane.xlu0 %2893
        %v2895 = vsel %vm650, %v2711, 0.0
        %2896 = vadd.xlane.f32.xlu0 %v2895
        %v2897 = vpop.xlane.xlu0 %2896
        %v2898 = vsel %vm650, %v2712, 0.0
        %2899 = vadd.xlane.f32.xlu0 %v2898
        %v2900 = vpop.xlane.xlu0 %2899
        %v2901 = vsel %vm650, %v2713, 0.0
        %2902 = vadd.xlane.f32.xlu0 %v2901
        %v2903 = vpop.xlane.xlu0 %2902
        %v2904 = vsel %vm650, %v2714, 0.0
        %2905 = vadd.xlane.f32.xlu0 %v2904
        %v2906 = vpop.xlane.xlu0 %2905
        %v2907 = vand.u32 2147483647, %v2717
        %v2908 = vand.u32 2147483647, %v2720
        %v2909 = vand.u32 2147483647, %v2723
        %v2910 = vand.u32 2147483647, %v2726
        %v2911 = vand.u32 2147483647, %v2729
        %v2912 = vand.u32 2147483647, %v2732
        %v2913 = vand.u32 2147483647, %v2735
        %v2914 = vand.u32 2147483647, %v2738
        %v2915 = vand.u32 2147483647, %v2741
        %v2916 = vand.u32 2147483647, %v2744
        %v2917 = vand.u32 2147483647, %v2747
        %v2918 = vand.u32 2147483647, %v2750
        %v2919 = vand.u32 2147483647, %v2753
        %v2920 = vand.u32 2147483647, %v2756
        %v2921 = vand.u32 2147483647, %v2759
        %v2922 = vand.u32 2147483647, %v2762
        %v2923 = vand.u32 2147483647, %v2765
        %v2924 = vand.u32 2147483647, %v2768
        %v2925 = vand.u32 2147483647, %v2771
        %v2926 = vand.u32 2147483647, %v2774
        %v2927 = vand.u32 2147483647, %v2777
        %v2928 = vand.u32 2147483647, %v2780
        %v2929 = vand.u32 2147483647, %v2783
        %v2930 = vand.u32 2147483647, %v2786
        %v2931 = vand.u32 2147483647, %v2789
        %v2932 = vand.u32 2147483647, %v2792
        %v2933 = vand.u32 2147483647, %v2795
        %v2934 = vand.u32 2147483647, %v2798
        %v2935 = vand.u32 2147483647, %v2801
        %v2936 = vand.u32 2147483647, %v2804
        %v2937 = vand.u32 2147483647, %v2807
        %v2938 = vand.u32 2147483647, %v2810
        %v2939 = vand.u32 2147483647, %v2813
        %v2940 = vand.u32 2147483647, %v2816
        %v2941 = vand.u32 2147483647, %v2819
        %v2942 = vand.u32 2147483647, %v2822
        %v2943 = vand.u32 2147483647, %v2825
        %v2944 = vand.u32 2147483647, %v2828
        %v2945 = vand.u32 2147483647, %v2831
        %v2946 = vand.u32 2147483647, %v2834
        %v2947 = vand.u32 2147483647, %v2837
        %v2948 = vand.u32 2147483647, %v2840
        %v2949 = vand.u32 2147483647, %v2843
        %v2950 = vand.u32 2147483647, %v2846
        %v2951 = vand.u32 2147483647, %v2849
        %v2952 = vand.u32 2147483647, %v2852
        %v2953 = vand.u32 2147483647, %v2855
        %v2954 = vand.u32 2147483647, %v2858
        %v2955 = vand.u32 2147483647, %v2861
        %v2956 = vand.u32 2147483647, %v2864
        %v2957 = vand.u32 2147483647, %v2867
        %v2958 = vand.u32 2147483647, %v2870
        %v2959 = vand.u32 2147483647, %v2873
        %v2960 = vand.u32 2147483647, %v2876
        %v2961 = vand.u32 2147483647, %v2879
        %v2962 = vand.u32 2147483647, %v2882
        %v2963 = vand.u32 2147483647, %v2885
        %v2964 = vand.u32 2147483647, %v2888
        %v2965 = vand.u32 2147483647, %v2891
        %v2966 = vand.u32 2147483647, %v2894
        %v2967 = vand.u32 2147483647, %v2897
        %v2968 = vand.u32 2147483647, %v2900
        %v2969 = vand.u32 2147483647, %v2903
        %v2970 = vand.u32 2147483647, %v2906
        %v2971 = vmax.f32 %v2907, 1e-15
        %v2972 = vmax.f32 %v2908, 1e-15
        %v2973 = vmax.f32 %v2909, 1e-15
        %v2974 = vmax.f32 %v2910, 1e-15
        %v2975 = vmax.f32 %v2911, 1e-15
        %v2976 = vmax.f32 %v2912, 1e-15
        %v2977 = vmax.f32 %v2913, 1e-15
        %v2978 = vmax.f32 %v2914, 1e-15
        %v2979 = vmax.f32 %v2915, 1e-15
        %v2980 = vmax.f32 %v2916, 1e-15
        %v2981 = vmax.f32 %v2917, 1e-15
        %v2982 = vmax.f32 %v2918, 1e-15
        %v2983 = vmax.f32 %v2919, 1e-15
        %v2984 = vmax.f32 %v2920, 1e-15
        %v2985 = vmax.f32 %v2921, 1e-15
        %v2986 = vmax.f32 %v2922, 1e-15
        %v2987 = vmax.f32 %v2923, 1e-15
        %v2988 = vmax.f32 %v2924, 1e-15
        %v2989 = vmax.f32 %v2925, 1e-15
        %v2990 = vmax.f32 %v2926, 1e-15
        %v2991 = vmax.f32 %v2927, 1e-15
        %v2992 = vmax.f32 %v2928, 1e-15
        %v2993 = vmax.f32 %v2929, 1e-15
        %v2994 = vmax.f32 %v2930, 1e-15
        %v2995 = vmax.f32 %v2931, 1e-15
        %v2996 = vmax.f32 %v2932, 1e-15
        %v2997 = vmax.f32 %v2933, 1e-15
        %v2998 = vmax.f32 %v2934, 1e-15
        %v2999 = vmax.f32 %v2935, 1e-15
        %v3000 = vmax.f32 %v2936, 1e-15
        %v3001 = vmax.f32 %v2937, 1e-15
        %v3002 = vmax.f32 %v2938, 1e-15
        %v3003 = vmax.f32 %v2939, 1e-15
        %v3004 = vmax.f32 %v2940, 1e-15
        %v3005 = vmax.f32 %v2941, 1e-15
        %v3006 = vmax.f32 %v2942, 1e-15
        %v3007 = vmax.f32 %v2943, 1e-15
        %v3008 = vmax.f32 %v2944, 1e-15
        %v3009 = vmax.f32 %v2945, 1e-15
        %v3010 = vmax.f32 %v2946, 1e-15
        %v3011 = vmax.f32 %v2947, 1e-15
        %v3012 = vmax.f32 %v2948, 1e-15
        %v3013 = vmax.f32 %v2949, 1e-15
        %v3014 = vmax.f32 %v2950, 1e-15
        %v3015 = vmax.f32 %v2951, 1e-15
        %v3016 = vmax.f32 %v2952, 1e-15
        %v3017 = vmax.f32 %v2953, 1e-15
        %v3018 = vmax.f32 %v2954, 1e-15
        %v3019 = vmax.f32 %v2955, 1e-15
        %v3020 = vmax.f32 %v2956, 1e-15
        %v3021 = vmax.f32 %v2957, 1e-15
        %v3022 = vmax.f32 %v2958, 1e-15
        %v3023 = vmax.f32 %v2959, 1e-15
        %v3024 = vmax.f32 %v2960, 1e-15
        %v3025 = vmax.f32 %v2961, 1e-15
        %v3026 = vmax.f32 %v2962, 1e-15
        %v3027 = vmax.f32 %v2963, 1e-15
        %v3028 = vmax.f32 %v2964, 1e-15
        %v3029 = vmax.f32 %v2965, 1e-15
        %v3030 = vmax.f32 %v2966, 1e-15
        %v3031 = vmax.f32 %v2967, 1e-15
        %v3032 = vmax.f32 %v2968, 1e-15
        %v3033 = vmax.f32 %v2969, 1e-15
        %v3034 = vmax.f32 %v2970, 1e-15
        %v3035 = vrsqrt.pop %v2971
        %v3036 = vrsqrt.pop %v2972
        %v3037 = vrsqrt.pop %v2973
        %v3038 = vrsqrt.pop %v2974
        %v3039 = vrsqrt.pop %v2975
        %v3040 = vrsqrt.pop %v2976
        %v3041 = vrsqrt.pop %v2977
        %v3042 = vrsqrt.pop %v2978
        %v3043 = vrsqrt.pop %v2979
        %v3044 = vrsqrt.pop %v2980
        %v3045 = vrsqrt.pop %v2981
        %v3046 = vrsqrt.pop %v2982
        %v3047 = vrsqrt.pop %v2983
        %v3048 = vrsqrt.pop %v2984
        %v3049 = vrsqrt.pop %v2985
        %v3050 = vrsqrt.pop %v2986
        %v3051 = vrsqrt.pop %v2987
        %v3052 = vrsqrt.pop %v2988
        %v3053 = vrsqrt.pop %v2989
        %v3054 = vrsqrt.pop %v2990
        %v3055 = vrsqrt.pop %v2991
        %v3056 = vrsqrt.pop %v2992
        %v3057 = vrsqrt.pop %v2993
        %v3058 = vrsqrt.pop %v2994
        %v3059 = vrsqrt.pop %v2995
        %v3060 = vrsqrt.pop %v2996
        %v3061 = vrsqrt.pop %v2997
        %v3062 = vrsqrt.pop %v2998
        %v3063 = vrsqrt.pop %v2999
        %v3064 = vrsqrt.pop %v3000
        %v3065 = vrsqrt.pop %v3001
        %v3066 = vrsqrt.pop %v3002
        %v3067 = vrsqrt.pop %v3003
        %v3068 = vrsqrt.pop %v3004
        %v3069 = vrsqrt.pop %v3005
        %v3070 = vrsqrt.pop %v3006
        %v3071 = vrsqrt.pop %v3007
        %v3072 = vrsqrt.pop %v3008
        %v3073 = vrsqrt.pop %v3009
        %v3074 = vrsqrt.pop %v3010
        %v3075 = vrsqrt.pop %v3011
        %v3076 = vrsqrt.pop %v3012
        %v3077 = vrsqrt.pop %v3013
        %v3078 = vrsqrt.pop %v3014
        %v3079 = vrsqrt.pop %v3015
        %v3080 = vrsqrt.pop %v3016
        %v3081 = vrsqrt.pop %v3017
        %v3082 = vrsqrt.pop %v3018
        %v3083 = vrsqrt.pop %v3019
        %v3084 = vrsqrt.pop %v3020
        %v3085 = vrsqrt.pop %v3021
        %v3086 = vrsqrt.pop %v3022
        %v3087 = vrsqrt.pop %v3023
        %v3088 = vrsqrt.pop %v3024
        %v3089 = vrsqrt.pop %v3025
        %v3090 = vrsqrt.pop %v3026
        %v3091 = vrsqrt.pop %v3027
        %v3092 = vrsqrt.pop %v3028
        %v3093 = vrsqrt.pop %v3029
        %v3094 = vrsqrt.pop %v3030
        %v3095 = vrsqrt.pop %v3031
        %v3096 = vrsqrt.pop %v3032
        %v3097 = vrsqrt.pop %v3033
        %v3098 = vrsqrt.pop %v3034
        %v3099 = vmul.f32 %v3035, 0.35355338
        %v3100 = vmul.f32 %v3036, 0.35355338
        %v3101 = vmul.f32 %v3037, 0.35355338
        %v3102 = vmul.f32 %v3038, 0.35355338
        %v3103 = vmul.f32 %v3039, 0.35355338
        %v3104 = vmul.f32 %v3040, 0.35355338
        %v3105 = vmul.f32 %v3041, 0.35355338
        %v3106 = vmul.f32 %v3042, 0.35355338
        %v3107 = vmul.f32 %v3043, 0.35355338
        %v3108 = vmul.f32 %v3044, 0.35355338
        %v3109 = vmul.f32 %v3045, 0.35355338
        %v3110 = vmul.f32 %v3046, 0.35355338
        %v3111 = vmul.f32 %v3047, 0.35355338
        %v3112 = vmul.f32 %v3048, 0.35355338
        %v3113 = vmul.f32 %v3049, 0.35355338
        %v3114 = vmul.f32 %v3050, 0.35355338
        %v3115 = vmul.f32 %v3051, 0.35355338
        %v3116 = vmul.f32 %v3052, 0.35355338
        %v3117 = vmul.f32 %v3053, 0.35355338
        %v3118 = vmul.f32 %v3054, 0.35355338
        %v3119 = vmul.f32 %v3055, 0.35355338
        %v3120 = vmul.f32 %v3056, 0.35355338
        %v3121 = vmul.f32 %v3057, 0.35355338
        %v3122 = vmul.f32 %v3058, 0.35355338
        %v3123 = vmul.f32 %v3059, 0.35355338
        %v3124 = vmul.f32 %v3060, 0.35355338
        %v3125 = vmul.f32 %v3061, 0.35355338
        %v3126 = vmul.f32 %v3062, 0.35355338
        %v3127 = vmul.f32 %v3063, 0.35355338
        %v3128 = vmul.f32 %v3064, 0.35355338
        %v3129 = vmul.f32 %v3065, 0.35355338
        %v3130 = vmul.f32 %v3066, 0.35355338
        %v3131 = vmul.f32 %v3067, 0.35355338
        %v3132 = vmul.f32 %v3068, 0.35355338
        %v3133 = vmul.f32 %v3069, 0.35355338
        %v3134 = vmul.f32 %v3070, 0.35355338
        %v3135 = vmul.f32 %v3071, 0.35355338
        %v3136 = vmul.f32 %v3072, 0.35355338
        %v3137 = vmul.f32 %v3073, 0.35355338
        %v3138 = vmul.f32 %v3074, 0.35355338
        %v3139 = vmul.f32 %v3075, 0.35355338
        %v3140 = vmul.f32 %v3076, 0.35355338
        %v3141 = vmul.f32 %v3077, 0.35355338
        %v3142 = vmul.f32 %v3078, 0.35355338
        %v3143 = vmul.f32 %v3079, 0.35355338
        %v3144 = vmul.f32 %v3080, 0.35355338
        %v3145 = vmul.f32 %v3081, 0.35355338
        %v3146 = vmul.f32 %v3082, 0.35355338
        %v3147 = vmul.f32 %v3083, 0.35355338
        %v3148 = vmul.f32 %v3084, 0.35355338
        %v3149 = vmul.f32 %v3085, 0.35355338
        %v3150 = vmul.f32 %v3086, 0.35355338
        %v3151 = vmul.f32 %v3087, 0.35355338
        %v3152 = vmul.f32 %v3088, 0.35355338
        %v3153 = vmul.f32 %v3089, 0.35355338
        %v3154 = vmul.f32 %v3090, 0.35355338
        %v3155 = vmul.f32 %v3091, 0.35355338
        %v3156 = vmul.f32 %v3092, 0.35355338
        %v3157 = vmul.f32 %v3093, 0.35355338
        %v3158 = vmul.f32 %v3094, 0.35355338
        %v3159 = vmul.f32 %v3095, 0.35355338
        %v3160 = vmul.f32 %v3096, 0.35355338
        %v3161 = vmul.f32 %v3097, 0.35355338
        %v3162 = vmul.f32 %v3098, 0.35355338
        %v3163 = vmul.f32 %v2090, %v3099
        %v3164 = vmul.f32 %v2093, %v3100
        %v3165 = vmul.f32 %v2098, %v3101
        %v3166 = vmul.f32 %v2101, %v3102
        %v3167 = vmul.f32 %v2106, %v3103
        %v3168 = vmul.f32 %v2109, %v3104
        %v3169 = vmul.f32 %v2114, %v3105
        %v3170 = vmul.f32 %v2117, %v3106
        %v3171 = vmul.f32 %v2122, %v3107
        %v3172 = vmul.f32 %v2125, %v3108
        %v3173 = vmul.f32 %v2130, %v3109
        %v3174 = vmul.f32 %v2133, %v3110
        %v3175 = vmul.f32 %v2138, %v3111
        %v3176 = vmul.f32 %v2141, %v3112
        %v3177 = vmul.f32 %v2146, %v3113
        %v3178 = vmul.f32 %v2149, %v3114
        %v3179 = vmul.f32 %v2235, %v3115
        %v3180 = vmul.f32 %v2238, %v3116
        %v3181 = vmul.f32 %v2243, %v3117
        %v3182 = vmul.f32 %v2246, %v3118
        %v3183 = vmul.f32 %v2251, %v3119
        %v3184 = vmul.f32 %v2254, %v3120
        %v3185 = vmul.f32 %v2259, %v3121
        %v3186 = vmul.f32 %v2262, %v3122
        %v3187 = vmul.f32 %v2267, %v3123
        %v3188 = vmul.f32 %v2270, %v3124
        %v3189 = vmul.f32 %v2275, %v3125
        %v3190 = vmul.f32 %v2278, %v3126
        %v3191 = vmul.f32 %v2283, %v3127
        %v3192 = vmul.f32 %v2286, %v3128
        %v3193 = vmul.f32 %v2291, %v3129
        %v3194 = vmul.f32 %v2294, %v3130
        %v3195 = vmul.f32 %v2380, %v3131
        %v3196 = vmul.f32 %v2383, %v3132
        %v3197 = vmul.f32 %v2388, %v3133
        %v3198 = vmul.f32 %v2391, %v3134
        %v3199 = vmul.f32 %v2396, %v3135
        %v3200 = vmul.f32 %v2399, %v3136
        %v3201 = vmul.f32 %v2404, %v3137
        %v3202 = vmul.f32 %v2407, %v3138
        %v3203 = vmul.f32 %v2412, %v3139
        %v3204 = vmul.f32 %v2415, %v3140
        %v3205 = vmul.f32 %v2420, %v3141
        %v3206 = vmul.f32 %v2423, %v3142
        %v3207 = vmul.f32 %v2428, %v3143
        %v3208 = vmul.f32 %v2431, %v3144
        %v3209 = vmul.f32 %v2436, %v3145
        %v3210 = vmul.f32 %v2439, %v3146
        %v3211 = vmul.f32 %v2525, %v3147
        %v3212 = vmul.f32 %v2528, %v3148
        %v3213 = vmul.f32 %v2533, %v3149
        %v3214 = vmul.f32 %v2536, %v3150
        %v3215 = vmul.f32 %v2541, %v3151
        %v3216 = vmul.f32 %v2544, %v3152
        %v3217 = vmul.f32 %v2549, %v3153
        %v3218 = vmul.f32 %v2552, %v3154
        %v3219 = vmul.f32 %v2557, %v3155
        %v3220 = vmul.f32 %v2560, %v3156
        %v3221 = vmul.f32 %v2565, %v3157
        %v3222 = vmul.f32 %v2568, %v3158
        %v3223 = vmul.f32 %v2573, %v3159
        %v3224 = vmul.f32 %v2576, %v3160
        %v3225 = vmul.f32 %v2581, %v3161
        %v3226 = vmul.f32 %v2584, %v3162
        %v3227 = vsel %vm650, %v3163, 0.0
        %v3228 = vsel %vm650, %v3179, 0.0
        %v3229 = vadd.f32 %v3227, %v3228
        %v3230 = vsel %vm650, %v3195, 0.0
        %v3231 = vadd.f32 %v3229, %v3230
        %v3232 = vsel %vm650, %v3211, 0.0
        %v3233 = vadd.f32 %v3231, %v3232
        %v3234 = vsel %vm650, %v3164, 0.0
        %v3235 = vsel %vm650, %v3180, 0.0
        %v3236 = vadd.f32 %v3234, %v3235
        %v3237 = vsel %vm650, %v3196, 0.0
        %v3238 = vadd.f32 %v3236, %v3237
        %v3239 = vsel %vm650, %v3212, 0.0
        %v3240 = vadd.f32 %v3238, %v3239
        %v3241 = vsel %vm650, %v3165, 0.0
        %v3242 = vsel %vm650, %v3181, 0.0
        %v3243 = vadd.f32 %v3241, %v3242
        %v3244 = vsel %vm650, %v3197, 0.0
        %v3245 = vadd.f32 %v3243, %v3244
        %v3246 = vsel %vm650, %v3213, 0.0
        %v3247 = vadd.f32 %v3245, %v3246
        %v3248 = vsel %vm650, %v3166, 0.0
        %v3249 = vsel %vm650, %v3182, 0.0
        %v3250 = vadd.f32 %v3248, %v3249
        %v3251 = vsel %vm650, %v3198, 0.0
        %v3252 = vadd.f32 %v3250, %v3251
        %v3253 = vsel %vm650, %v3214, 0.0
        %v3254 = vadd.f32 %v3252, %v3253
        %v3255 = vsel %vm650, %v3167, 0.0
        %v3256 = vsel %vm650, %v3183, 0.0
        %v3257 = vadd.f32 %v3255, %v3256
        %v3258 = vsel %vm650, %v3199, 0.0
        %v3259 = vadd.f32 %v3257, %v3258
        %v3260 = vsel %vm650, %v3215, 0.0
        %v3261 = vadd.f32 %v3259, %v3260
        %v3262 = vsel %vm650, %v3168, 0.0
        %v3263 = vsel %vm650, %v3184, 0.0
        %v3264 = vadd.f32 %v3262, %v3263
        %v3265 = vsel %vm650, %v3200, 0.0
        %v3266 = vadd.f32 %v3264, %v3265
        %v3267 = vsel %vm650, %v3216, 0.0
        %v3268 = vadd.f32 %v3266, %v3267
        %v3269 = vsel %vm650, %v3169, 0.0
        %v3270 = vsel %vm650, %v3185, 0.0
        %v3271 = vadd.f32 %v3269, %v3270
        %v3272 = vsel %vm650, %v3201, 0.0
        %v3273 = vadd.f32 %v3271, %v3272
        %v3274 = vsel %vm650, %v3217, 0.0
        %v3275 = vadd.f32 %v3273, %v3274
        %v3276 = vsel %vm650, %v3170, 0.0
        %v3277 = vsel %vm650, %v3186, 0.0
        %v3278 = vadd.f32 %v3276, %v3277
        %v3279 = vsel %vm650, %v3202, 0.0
        %v3280 = vadd.f32 %v3278, %v3279
        %v3281 = vsel %vm650, %v3218, 0.0
        %v3282 = vadd.f32 %v3280, %v3281
        %v3283 = vsel %vm650, %v3171, 0.0
        %v3284 = vsel %vm650, %v3187, 0.0
        %v3285 = vadd.f32 %v3283, %v3284
        %v3286 = vsel %vm650, %v3203, 0.0
        %v3287 = vadd.f32 %v3285, %v3286
        %v3288 = vsel %vm650, %v3219, 0.0
        %v3289 = vadd.f32 %v3287, %v3288
        %v3290 = vsel %vm650, %v3172, 0.0
        %v3291 = vsel %vm650, %v3188, 0.0
        %v3292 = vadd.f32 %v3290, %v3291
        %v3293 = vsel %vm650, %v3204, 0.0
        %v3294 = vadd.f32 %v3292, %v3293
        %v3295 = vsel %vm650, %v3220, 0.0
        %v3296 = vadd.f32 %v3294, %v3295
        %v3297 = vsel %vm650, %v3173, 0.0
        %v3298 = vsel %vm650, %v3189, 0.0
        %v3299 = vadd.f32 %v3297, %v3298
        %v3300 = vsel %vm650, %v3205, 0.0
        %v3301 = vadd.f32 %v3299, %v3300
        %v3302 = vsel %vm650, %v3221, 0.0
        %v3303 = vadd.f32 %v3301, %v3302
        %v3304 = vsel %vm650, %v3174, 0.0
        %v3305 = vsel %vm650, %v3190, 0.0
        %v3306 = vadd.f32 %v3304, %v3305
        %v3307 = vsel %vm650, %v3206, 0.0
        %v3308 = vadd.f32 %v3306, %v3307
        %v3309 = vsel %vm650, %v3222, 0.0
        %v3310 = vadd.f32 %v3308, %v3309
        %v3311 = vsel %vm650, %v3175, 0.0
        %v3312 = vsel %vm650, %v3191, 0.0
        %v3313 = vadd.f32 %v3311, %v3312
        %v3314 = vsel %vm650, %v3207, 0.0
        %v3315 = vadd.f32 %v3313, %v3314
        %v3316 = vsel %vm650, %v3223, 0.0
        %v3317 = vadd.f32 %v3315, %v3316
        %v3318 = vsel %vm650, %v3176, 0.0
        %v3319 = vsel %vm650, %v3192, 0.0
        %v3320 = vadd.f32 %v3318, %v3319
        %v3321 = vsel %vm650, %v3208, 0.0
        %v3322 = vadd.f32 %v3320, %v3321
        %v3323 = vsel %vm650, %v3224, 0.0
        %v3324 = vadd.f32 %v3322, %v3323
        %v3325 = vsel %vm650, %v3177, 0.0
        %v3326 = vsel %vm650, %v3193, 0.0
        %v3327 = vadd.f32 %v3325, %v3326
        %v3328 = vsel %vm650, %v3209, 0.0
        %v3329 = vadd.f32 %v3327, %v3328
        %v3330 = vsel %vm650, %v3225, 0.0
        %v3331 = vadd.f32 %v3329, %v3330
        %v3332 = vsel %vm650, %v3178, 0.0
        %v3333 = vsel %vm650, %v3194, 0.0
        %v3334 = vadd.f32 %v3332, %v3333
        %v3335 = vsel %vm650, %v3210, 0.0
        %v3336 = vadd.f32 %v3334, %v3335
        %v3337 = vsel %vm650, %v3226, 0.0
        %v3338 = vadd.f32 %v3336, %v3337
        %v3339 = vsub.f32 1.0, %v583
        %v3340 = vmul.f32 %v3233, %v3233
        %v3341 = vmul.f32 %v3240, %v3240
        %v3342 = vmul.f32 %v3247, %v3247
        %v3343 = vmul.f32 %v3254, %v3254
        %v3344 = vmul.f32 %v3261, %v3261
        %v3345 = vmul.f32 %v3268, %v3268
        %v3346 = vmul.f32 %v3275, %v3275
        %v3347 = vmul.f32 %v3282, %v3282
        %v3348 = vmul.f32 %v3289, %v3289
        %v3349 = vmul.f32 %v3296, %v3296
        %v3350 = vmul.f32 %v3303, %v3303
        %v3351 = vmul.f32 %v3310, %v3310
        %v3352 = vmul.f32 %v3317, %v3317
        %v3353 = vmul.f32 %v3324, %v3324
        %v3354 = vmul.f32 %v3331, %v3331
        %v3355 = vmul.f32 %v3338, %v3338
        %v3356 = vmul.f32 %v3340, %v585
        %v3357 = vmul.f32 %v3341, %v585
        %v3358 = vmul.f32 %v3342, %v585
        %v3359 = vmul.f32 %v3343, %v585
        %v3360 = vmul.f32 %v3344, %v585
        %v3361 = vmul.f32 %v3345, %v585
        %v3362 = vmul.f32 %v3346, %v585
        %v3363 = vmul.f32 %v3347, %v585
        %v3364 = vmul.f32 %v3348, %v585
        %v3365 = vmul.f32 %v3349, %v585
        %v3366 = vmul.f32 %v3350, %v585
        %v3367 = vmul.f32 %v3351, %v585
        %v3368 = vmul.f32 %v3352, %v585
        %v3369 = vmul.f32 %v3353, %v585
        %v3370 = vmul.f32 %v3354, %v585
        %v3371 = vmul.f32 %v3355, %v585
        %v3372 = vsel %vm650, %v3356, 0.0
        %3373 = vadd.xlane.f32.xlu0 %v3372
        %v3374 = vpop.xlane.xlu0 %3373
        %v3375 = vsel %vm650, %v3357, 0.0
        %3376 = vadd.xlane.f32.xlu0 %v3375
        %v3377 = vpop.xlane.xlu0 %3376
        %v3378 = vsel %vm650, %v3358, 0.0
        %3379 = vadd.xlane.f32.xlu0 %v3378
        %v3380 = vpop.xlane.xlu0 %3379
        %v3381 = vsel %vm650, %v3359, 0.0
        %3382 = vadd.xlane.f32.xlu0 %v3381
        %v3383 = vpop.xlane.xlu0 %3382
        %v3384 = vsel %vm650, %v3360, 0.0
        %3385 = vadd.xlane.f32.xlu0 %v3384
        %v3386 = vpop.xlane.xlu0 %3385
        %v3387 = vsel %vm650, %v3361, 0.0
        %3388 = vadd.xlane.f32.xlu0 %v3387
        %v3389 = vpop.xlane.xlu0 %3388
        %v3390 = vsel %vm650, %v3362, 0.0
        %3391 = vadd.xlane.f32.xlu0 %v3390
        %v3392 = vpop.xlane.xlu0 %3391
        %v3393 = vsel %vm650, %v3363, 0.0
        %3394 = vadd.xlane.f32.xlu0 %v3393
        %v3395 = vpop.xlane.xlu0 %3394
        %v3396 = vsel %vm650, %v3364, 0.0
        %3397 = vadd.xlane.f32.xlu0 %v3396
        %v3398 = vpop.xlane.xlu0 %3397
        %v3399 = vsel %vm650, %v3365, 0.0
        %3400 = vadd.xlane.f32.xlu0 %v3399
        %v3401 = vpop.xlane.xlu0 %3400
        %v3402 = vsel %vm650, %v3366, 0.0
        %3403 = vadd.xlane.f32.xlu0 %v3402
        %v3404 = vpop.xlane.xlu0 %3403
        %v3405 = vsel %vm650, %v3367, 0.0
        %3406 = vadd.xlane.f32.xlu0 %v3405
        %v3407 = vpop.xlane.xlu0 %3406
        %v3408 = vsel %vm650, %v3368, 0.0
        %3409 = vadd.xlane.f32.xlu0 %v3408
        %v3410 = vpop.xlane.xlu0 %3409
        %v3411 = vsel %vm650, %v3369, 0.0
        %3412 = vadd.xlane.f32.xlu0 %v3411
        %v3413 = vpop.xlane.xlu0 %3412
        %v3414 = vsel %vm650, %v3370, 0.0
        %3415 = vadd.xlane.f32.xlu0 %v3414
        %v3416 = vpop.xlane.xlu0 %3415
        %v3417 = vsel %vm650, %v3371, 0.0
        %3418 = vadd.xlane.f32.xlu0 %v3417
        %v3419 = vpop.xlane.xlu0 %3418
        %v3420 = vand.u32 2147483647, %v3374
        %v3421 = vand.u32 2147483647, %v3377
        %v3422 = vand.u32 2147483647, %v3380
        %v3423 = vand.u32 2147483647, %v3383
        %v3424 = vand.u32 2147483647, %v3386
        %v3425 = vand.u32 2147483647, %v3389
        %v3426 = vand.u32 2147483647, %v3392
        %v3427 = vand.u32 2147483647, %v3395
        %v3428 = vand.u32 2147483647, %v3398
        %v3429 = vand.u32 2147483647, %v3401
        %v3430 = vand.u32 2147483647, %v3404
        %v3431 = vand.u32 2147483647, %v3407
        %v3432 = vand.u32 2147483647, %v3410
        %v3433 = vand.u32 2147483647, %v3413
        %v3434 = vand.u32 2147483647, %v3416
        %v3435 = vand.u32 2147483647, %v3419
        %v3436 = vmax.f32 %v3420, 1e-15
        %v3437 = vmax.f32 %v3421, 1e-15
        %v3438 = vmax.f32 %v3422, 1e-15
        %v3439 = vmax.f32 %v3423, 1e-15
        %v3440 = vmax.f32 %v3424, 1e-15
        %v3441 = vmax.f32 %v3425, 1e-15
        %v3442 = vmax.f32 %v3426, 1e-15
        %v3443 = vmax.f32 %v3427, 1e-15
        %v3444 = vmax.f32 %v3428, 1e-15
        %v3445 = vmax.f32 %v3429, 1e-15
        %v3446 = vmax.f32 %v3430, 1e-15
        %v3447 = vmax.f32 %v3431, 1e-15
        %v3448 = vmax.f32 %v3432, 1e-15
        %v3449 = vmax.f32 %v3433, 1e-15
        %v3450 = vmax.f32 %v3434, 1e-15
        %v3451 = vmax.f32 %v3435, 1e-15
        %v3452 = vrsqrt.pop %v3436
        %v3453 = vrsqrt.pop %v3437
        %v3454 = vrsqrt.pop %v3438
        %v3455 = vrsqrt.pop %v3439
        %v3456 = vrsqrt.pop %v3440
        %v3457 = vrsqrt.pop %v3441
        %v3458 = vrsqrt.pop %v3442
        %v3459 = vrsqrt.pop %v3443
        %v3460 = vrsqrt.pop %v3444
        %v3461 = vrsqrt.pop %v3445
        %v3462 = vrsqrt.pop %v3446
        %v3463 = vrsqrt.pop %v3447
        %v3464 = vrsqrt.pop %v3448
        %v3465 = vrsqrt.pop %v3449
        %v3466 = vrsqrt.pop %v3450
        %v3467 = vrsqrt.pop %v3451
        %v3468 = vmul.f32 %v3452, 1.4142135
        %v3469 = vmul.f32 %v3453, 1.4142135
        %v3470 = vmul.f32 %v3454, 1.4142135
        %v3471 = vmul.f32 %v3455, 1.4142135
        %v3472 = vmul.f32 %v3456, 1.4142135
        %v3473 = vmul.f32 %v3457, 1.4142135
        %v3474 = vmul.f32 %v3458, 1.4142135
        %v3475 = vmul.f32 %v3459, 1.4142135
        %v3476 = vmul.f32 %v3460, 1.4142135
        %v3477 = vmul.f32 %v3461, 1.4142135
        %v3478 = vmul.f32 %v3462, 1.4142135
        %v3479 = vmul.f32 %v3463, 1.4142135
        %v3480 = vmul.f32 %v3464, 1.4142135
        %v3481 = vmul.f32 %v3465, 1.4142135
        %v3482 = vmul.f32 %v3466, 1.4142135
        %v3483 = vmul.f32 %v3467, 1.4142135
        %v3484 = vmul.f32 %v3233, %v3468
        %v3485 = vmul.f32 %v3240, %v3469
        %v3486 = vmul.f32 %v3247, %v3470
        %v3487 = vmul.f32 %v3254, %v3471
        %v3488 = vmul.f32 %v3261, %v3472
        %v3489 = vmul.f32 %v3268, %v3473
        %v3490 = vmul.f32 %v3275, %v3474
        %v3491 = vmul.f32 %v3282, %v3475
        %v3492 = vmul.f32 %v3289, %v3476
        %v3493 = vmul.f32 %v3296, %v3477
        %v3494 = vmul.f32 %v3303, %v3478
        %v3495 = vmul.f32 %v3310, %v3479
        %v3496 = vmul.f32 %v3317, %v3480
        %v3497 = vmul.f32 %v3324, %v3481
        %v3498 = vmul.f32 %v3331, %v3482
        %v3499 = vmul.f32 %v3338, %v3483
        %v3500 = vmul.f32 %v3484, %v3339
        %v3501 = vmul.f32 %v3485, %v3339
        %v3502 = vmul.f32 %v3486, %v3339
        %v3503 = vmul.f32 %v3487, %v3339
        %v3504 = vmul.f32 %v3488, %v3339
        %v3505 = vmul.f32 %v3489, %v3339
        %v3506 = vmul.f32 %v3490, %v3339
        %v3507 = vmul.f32 %v3491, %v3339
        %v3508 = vmul.f32 %v3492, %v3339
        %v3509 = vmul.f32 %v3493, %v3339
        %v3510 = vmul.f32 %v3494, %v3339
        %v3511 = vmul.f32 %v3495, %v3339
        %v3512 = vmul.f32 %v3496, %v3339
        %v3513 = vmul.f32 %v3497, %v3339
        %v3514 = vmul.f32 %v3498, %v3339
        %v3515 = vmul.f32 %v3499, %v3339
        %v3516 = vmul.f32 %v3500, %v3500
        %v3517 = vmul.f32 %v3501, %v3501
        %v3518 = vmul.f32 %v3502, %v3502
        %v3519 = vmul.f32 %v3503, %v3503
        %v3520 = vmul.f32 %v3504, %v3504
        %v3521 = vmul.f32 %v3505, %v3505
        %v3522 = vmul.f32 %v3506, %v3506
        %v3523 = vmul.f32 %v3507, %v3507
        %v3524 = vmul.f32 %v3508, %v3508
        %v3525 = vmul.f32 %v3509, %v3509
        %v3526 = vmul.f32 %v3510, %v3510
        %v3527 = vmul.f32 %v3511, %v3511
        %v3528 = vmul.f32 %v3512, %v3512
        %v3529 = vmul.f32 %v3513, %v3513
        %v3530 = vmul.f32 %v3514, %v3514
        %v3531 = vmul.f32 %v3515, %v3515
        %v3532 = vsel %vm650, %v3516, 0.0
        %3533 = vadd.xlane.f32.xlu0 %v3532
        %v3534 = vpop.xlane.xlu0 %3533
        %v3535 = vsel %vm650, %v3517, 0.0
        %3536 = vadd.xlane.f32.xlu0 %v3535
        %v3537 = vpop.xlane.xlu0 %3536
        %v3538 = vsel %vm650, %v3518, 0.0
        %3539 = vadd.xlane.f32.xlu0 %v3538
        %v3540 = vpop.xlane.xlu0 %3539
        %v3541 = vsel %vm650, %v3519, 0.0
        %3542 = vadd.xlane.f32.xlu0 %v3541
        %v3543 = vpop.xlane.xlu0 %3542
        %v3544 = vsel %vm650, %v3520, 0.0
        %3545 = vadd.xlane.f32.xlu0 %v3544
        %v3546 = vpop.xlane.xlu0 %3545
        %v3547 = vsel %vm650, %v3521, 0.0
        %3548 = vadd.xlane.f32.xlu0 %v3547
        %v3549 = vpop.xlane.xlu0 %3548
        %v3550 = vsel %vm650, %v3522, 0.0
        %3551 = vadd.xlane.f32.xlu0 %v3550
        %v3552 = vpop.xlane.xlu0 %3551
        %v3553 = vsel %vm650, %v3523, 0.0
        %3554 = vadd.xlane.f32.xlu0 %v3553
        %v3555 = vpop.xlane.xlu0 %3554
        %v3556 = vsel %vm650, %v3524, 0.0
        %3557 = vadd.xlane.f32.xlu0 %v3556
        %v3558 = vpop.xlane.xlu0 %3557
        %v3559 = vsel %vm650, %v3525, 0.0
        %3560 = vadd.xlane.f32.xlu0 %v3559
        %v3561 = vpop.xlane.xlu0 %3560
        %v3562 = vsel %vm650, %v3526, 0.0
        %3563 = vadd.xlane.f32.xlu0 %v3562
        %v3564 = vpop.xlane.xlu0 %3563
        %v3565 = vsel %vm650, %v3527, 0.0
        %3566 = vadd.xlane.f32.xlu0 %v3565
        %v3567 = vpop.xlane.xlu0 %3566
        %v3568 = vsel %vm650, %v3528, 0.0
        %3569 = vadd.xlane.f32.xlu0 %v3568
        %v3570 = vpop.xlane.xlu0 %3569
        %v3571 = vsel %vm650, %v3529, 0.0
        %3572 = vadd.xlane.f32.xlu0 %v3571
        %v3573 = vpop.xlane.xlu0 %3572
        %v3574 = vsel %vm650, %v3530, 0.0
        %3575 = vadd.xlane.f32.xlu0 %v3574
        %v3576 = vpop.xlane.xlu0 %3575
        %v3577 = vsel %vm650, %v3531, 0.0
        %3578 = vadd.xlane.f32.xlu0 %v3577
        %v3579 = vpop.xlane.xlu0 %3578
        %v3580 = vmax.f32 %v3534, 1e-30
        %v3581 = vmax.f32 %v3537, 1e-30
        %v3582 = vmax.f32 %v3540, 1e-30
        %v3583 = vmax.f32 %v3543, 1e-30
        %v3584 = vmax.f32 %v3546, 1e-30
        %v3585 = vmax.f32 %v3549, 1e-30
        %v3586 = vmax.f32 %v3552, 1e-30
        %v3587 = vmax.f32 %v3555, 1e-30
        %v3588 = vmax.f32 %v3558, 1e-30
        %v3589 = vmax.f32 %v3561, 1e-30
        %v3590 = vmax.f32 %v3564, 1e-30
        %v3591 = vmax.f32 %v3567, 1e-30
        %v3592 = vmax.f32 %v3570, 1e-30
        %v3593 = vmax.f32 %v3573, 1e-30
        %v3594 = vmax.f32 %v3576, 1e-30
        %v3595 = vmax.f32 %v3579, 1e-30
        %v3596 = vrsqrt.pop %v3580
        %v3597 = vrsqrt.pop %v3581
        %v3598 = vrsqrt.pop %v3582
        %v3599 = vrsqrt.pop %v3583
        %v3600 = vrsqrt.pop %v3584
        %v3601 = vrsqrt.pop %v3585
        %v3602 = vrsqrt.pop %v3586
        %v3603 = vrsqrt.pop %v3587
        %v3604 = vrsqrt.pop %v3588
        %v3605 = vrsqrt.pop %v3589
        %v3606 = vrsqrt.pop %v3590
        %v3607 = vrsqrt.pop %v3591
        %v3608 = vrsqrt.pop %v3592
        %v3609 = vrsqrt.pop %v3593
        %v3610 = vrsqrt.pop %v3594
        %v3611 = vrsqrt.pop %v3595
        %v3612 = vmul.f32 %v3484, %v583
        %v3613 = vmul.f32 %v3485, %v583
        %v3614 = vmul.f32 %v3486, %v583
        %v3615 = vmul.f32 %v3487, %v583
        %v3616 = vmul.f32 %v3488, %v583
        %v3617 = vmul.f32 %v3489, %v583
        %v3618 = vmul.f32 %v3490, %v583
        %v3619 = vmul.f32 %v3491, %v583
        %v3620 = vmul.f32 %v3492, %v583
        %v3621 = vmul.f32 %v3493, %v583
        %v3622 = vmul.f32 %v3494, %v583
        %v3623 = vmul.f32 %v3495, %v583
        %v3624 = vmul.f32 %v3496, %v583
        %v3625 = vmul.f32 %v3497, %v583
        %v3626 = vmul.f32 %v3498, %v583
        %v3627 = vmul.f32 %v3499, %v583
        %v3628 = vsel %vm650, %v3612, 0.0
        %3629 = vadd.xlane.f32.xlu0 %v3628
        %v3630 = vpop.xlane.xlu0 %3629
        %v3631 = vsel %vm650, %v3613, 0.0
        %3632 = vadd.xlane.f32.xlu0 %v3631
        %v3633 = vpop.xlane.xlu0 %3632
        %v3634 = vsel %vm650, %v3614, 0.0
        %3635 = vadd.xlane.f32.xlu0 %v3634
        %v3636 = vpop.xlane.xlu0 %3635
        %v3637 = vsel %vm650, %v3615, 0.0
        %3638 = vadd.xlane.f32.xlu0 %v3637
        %v3639 = vpop.xlane.xlu0 %3638
        %v3640 = vsel %vm650, %v3616, 0.0
        %3641 = vadd.xlane.f32.xlu0 %v3640
        %v3642 = vpop.xlane.xlu0 %3641
        %v3643 = vsel %vm650, %v3617, 0.0
        %3644 = vadd.xlane.f32.xlu0 %v3643
        %v3645 = vpop.xlane.xlu0 %3644
        %v3646 = vsel %vm650, %v3618, 0.0
        %3647 = vadd.xlane.f32.xlu0 %v3646
        %v3648 = vpop.xlane.xlu0 %3647
        %v3649 = vsel %vm650, %v3619, 0.0
        %3650 = vadd.xlane.f32.xlu0 %v3649
        %v3651 = vpop.xlane.xlu0 %3650
        %v3652 = vsel %vm650, %v3620, 0.0
        %3653 = vadd.xlane.f32.xlu0 %v3652
        %v3654 = vpop.xlane.xlu0 %3653
        %v3655 = vsel %vm650, %v3621, 0.0
        %3656 = vadd.xlane.f32.xlu0 %v3655
        %v3657 = vpop.xlane.xlu0 %3656
        %v3658 = vsel %vm650, %v3622, 0.0
        %3659 = vadd.xlane.f32.xlu0 %v3658
        %v3660 = vpop.xlane.xlu0 %3659
        %v3661 = vsel %vm650, %v3623, 0.0
        %3662 = vadd.xlane.f32.xlu0 %v3661
        %v3663 = vpop.xlane.xlu0 %3662
        %v3664 = vsel %vm650, %v3624, 0.0
        %3665 = vadd.xlane.f32.xlu0 %v3664
        %v3666 = vpop.xlane.xlu0 %3665
        %v3667 = vsel %vm650, %v3625, 0.0
        %3668 = vadd.xlane.f32.xlu0 %v3667
        %v3669 = vpop.xlane.xlu0 %3668
        %v3670 = vsel %vm650, %v3626, 0.0
        %3671 = vadd.xlane.f32.xlu0 %v3670
        %v3672 = vpop.xlane.xlu0 %3671
        %v3673 = vsel %vm650, %v3627, 0.0
        %3674 = vadd.xlane.f32.xlu0 %v3673
        %v3675 = vpop.xlane.xlu0 %3674
        %v3676 = vmul.f32 %v3630, 0.70710677
        %v3677 = vmul.f32 %v3633, 0.70710677
        %v3678 = vmul.f32 %v3636, 0.70710677
        %v3679 = vmul.f32 %v3639, 0.70710677
        %v3680 = vmul.f32 %v3642, 0.70710677
        %v3681 = vmul.f32 %v3645, 0.70710677
        %v3682 = vmul.f32 %v3648, 0.70710677
        %v3683 = vmul.f32 %v3651, 0.70710677
        %v3684 = vmul.f32 %v3654, 0.70710677
        %v3685 = vmul.f32 %v3657, 0.70710677
        %v3686 = vmul.f32 %v3660, 0.70710677
        %v3687 = vmul.f32 %v3663, 0.70710677
        %v3688 = vmul.f32 %v3666, 0.70710677
        %v3689 = vmul.f32 %v3669, 0.70710677
        %v3690 = vmul.f32 %v3672, 0.70710677
        %v3691 = vmul.f32 %v3675, 0.70710677
        %v3692 = vmax.f32 %v3676, 1.0000001
        %v3693 = vmax.f32 %v3677, 1.0000001
        %v3694 = vmax.f32 %v3678, 1.0000001
        %v3695 = vmax.f32 %v3679, 1.0000001
        %v3696 = vmax.f32 %v3680, 1.0000001
        %v3697 = vmax.f32 %v3681, 1.0000001
        %v3698 = vmax.f32 %v3682, 1.0000001
        %v3699 = vmax.f32 %v3683, 1.0000001
        %v3700 = vmax.f32 %v3684, 1.0000001
        %v3701 = vmax.f32 %v3685, 1.0000001
        %v3702 = vmax.f32 %v3686, 1.0000001
        %v3703 = vmax.f32 %v3687, 1.0000001
        %v3704 = vmax.f32 %v3688, 1.0000001
        %v3705 = vmax.f32 %v3689, 1.0000001
        %v3706 = vmax.f32 %v3690, 1.0000001
        %v3707 = vmax.f32 %v3691, 1.0000001
        %v3708 = vmul.f32 %v3692, %v3692
        %v3709 = vmul.f32 %v3693, %v3693
        %v3710 = vmul.f32 %v3694, %v3694
        %v3711 = vmul.f32 %v3695, %v3695
        %v3712 = vmul.f32 %v3696, %v3696
        %v3713 = vmul.f32 %v3697, %v3697
        %v3714 = vmul.f32 %v3698, %v3698
        %v3715 = vmul.f32 %v3699, %v3699
        %v3716 = vmul.f32 %v3700, %v3700
        %v3717 = vmul.f32 %v3701, %v3701
        %v3718 = vmul.f32 %v3702, %v3702
        %v3719 = vmul.f32 %v3703, %v3703
        %v3720 = vmul.f32 %v3704, %v3704
        %v3721 = vmul.f32 %v3705, %v3705
        %v3722 = vmul.f32 %v3706, %v3706
        %v3723 = vmul.f32 %v3707, %v3707
        %v3724 = vsub.f32 %v3708, 1.0
        %v3725 = vsub.f32 %v3709, 1.0
        %v3726 = vsub.f32 %v3710, 1.0
        %v3727 = vsub.f32 %v3711, 1.0
        %v3728 = vsub.f32 %v3712, 1.0
        %v3729 = vsub.f32 %v3713, 1.0
        %v3730 = vsub.f32 %v3714, 1.0
        %v3731 = vsub.f32 %v3715, 1.0
        %v3732 = vsub.f32 %v3716, 1.0
        %v3733 = vsub.f32 %v3717, 1.0
        %v3734 = vsub.f32 %v3718, 1.0
        %v3735 = vsub.f32 %v3719, 1.0
        %v3736 = vsub.f32 %v3720, 1.0
        %v3737 = vsub.f32 %v3721, 1.0
        %v3738 = vsub.f32 %v3722, 1.0
        %v3739 = vsub.f32 %v3723, 1.0
        %v3740 = vrsqrt.pop %v3724
        %v3741 = vmul.f32 %v3724, %v3740
        %vm3742 = vcmp.eq.f32.partialorder %v3724, inf
        %v3743 = vsel %vm3742, %v3724, %v3741
        %vm3744 = vcmp.eq.f32.partialorder %v3724, 0.0
        %v3745 = vand.u32 %v3724, 2147483648
        %v3746 = vsel %vm3744, %v3745, %v3743
        %v3747 = vrsqrt.pop %v3725
        %v3748 = vmul.f32 %v3725, %v3747
        %vm3749 = vcmp.eq.f32.partialorder %v3725, inf
        %v3750 = vsel %vm3749, %v3725, %v3748
        %vm3751 = vcmp.eq.f32.partialorder %v3725, 0.0
        %v3752 = vand.u32 %v3725, 2147483648
        %v3753 = vsel %vm3751, %v3752, %v3750
        %v3754 = vrsqrt.pop %v3726
        %v3755 = vmul.f32 %v3726, %v3754
        %vm3756 = vcmp.eq.f32.partialorder %v3726, inf
        %v3757 = vsel %vm3756, %v3726, %v3755
        %vm3758 = vcmp.eq.f32.partialorder %v3726, 0.0
        %v3759 = vand.u32 %v3726, 2147483648
        %v3760 = vsel %vm3758, %v3759, %v3757
        %v3761 = vrsqrt.pop %v3727
        %v3762 = vmul.f32 %v3727, %v3761
        %vm3763 = vcmp.eq.f32.partialorder %v3727, inf
        %v3764 = vsel %vm3763, %v3727, %v3762
        %vm3765 = vcmp.eq.f32.partialorder %v3727, 0.0
        %v3766 = vand.u32 %v3727, 2147483648
        %v3767 = vsel %vm3765, %v3766, %v3764
        %v3768 = vrsqrt.pop %v3728
        %v3769 = vmul.f32 %v3728, %v3768
        %vm3770 = vcmp.eq.f32.partialorder %v3728, inf
        %v3771 = vsel %vm3770, %v3728, %v3769
        %vm3772 = vcmp.eq.f32.partialorder %v3728, 0.0
        %v3773 = vand.u32 %v3728, 2147483648
        %v3774 = vsel %vm3772, %v3773, %v3771
        %v3775 = vrsqrt.pop %v3729
        %v3776 = vmul.f32 %v3729, %v3775
        %vm3777 = vcmp.eq.f32.partialorder %v3729, inf
        %v3778 = vsel %vm3777, %v3729, %v3776
        %vm3779 = vcmp.eq.f32.partialorder %v3729, 0.0
        %v3780 = vand.u32 %v3729, 2147483648
        %v3781 = vsel %vm3779, %v3780, %v3778
        %v3782 = vrsqrt.pop %v3730
        %v3783 = vmul.f32 %v3730, %v3782
        %vm3784 = vcmp.eq.f32.partialorder %v3730, inf
        %v3785 = vsel %vm3784, %v3730, %v3783
        %vm3786 = vcmp.eq.f32.partialorder %v3730, 0.0
        %v3787 = vand.u32 %v3730, 2147483648
        %v3788 = vsel %vm3786, %v3787, %v3785
        %v3789 = vrsqrt.pop %v3731
        %v3790 = vmul.f32 %v3731, %v3789
        %vm3791 = vcmp.eq.f32.partialorder %v3731, inf
        %v3792 = vsel %vm3791, %v3731, %v3790
        %vm3793 = vcmp.eq.f32.partialorder %v3731, 0.0
        %v3794 = vand.u32 %v3731, 2147483648
        %v3795 = vsel %vm3793, %v3794, %v3792
        %v3796 = vrsqrt.pop %v3732
        %v3797 = vmul.f32 %v3732, %v3796
        %vm3798 = vcmp.eq.f32.partialorder %v3732, inf
        %v3799 = vsel %vm3798, %v3732, %v3797
        %vm3800 = vcmp.eq.f32.partialorder %v3732, 0.0
        %v3801 = vand.u32 %v3732, 2147483648
        %v3802 = vsel %vm3800, %v3801, %v3799
        %v3803 = vrsqrt.pop %v3733
        %v3804 = vmul.f32 %v3733, %v3803
        %vm3805 = vcmp.eq.f32.partialorder %v3733, inf
        %v3806 = vsel %vm3805, %v3733, %v3804
        %vm3807 = vcmp.eq.f32.partialorder %v3733, 0.0
        %v3808 = vand.u32 %v3733, 2147483648
        %v3809 = vsel %vm3807, %v3808, %v3806
        %v3810 = vrsqrt.pop %v3734
        %v3811 = vmul.f32 %v3734, %v3810
        %vm3812 = vcmp.eq.f32.partialorder %v3734, inf
        %v3813 = vsel %vm3812, %v3734, %v3811
        %vm3814 = vcmp.eq.f32.partialorder %v3734, 0.0
        %v3815 = vand.u32 %v3734, 2147483648
        %v3816 = vsel %vm3814, %v3815, %v3813
        %v3817 = vrsqrt.pop %v3735
        %v3818 = vmul.f32 %v3735, %v3817
        %vm3819 = vcmp.eq.f32.partialorder %v3735, inf
        %v3820 = vsel %vm3819, %v3735, %v3818
        %vm3821 = vcmp.eq.f32.partialorder %v3735, 0.0
        %v3822 = vand.u32 %v3735, 2147483648
        %v3823 = vsel %vm3821, %v3822, %v3820
        %v3824 = vrsqrt.pop %v3736
        %v3825 = vmul.f32 %v3736, %v3824
        %vm3826 = vcmp.eq.f32.partialorder %v3736, inf
        %v3827 = vsel %vm3826, %v3736, %v3825
        %vm3828 = vcmp.eq.f32.partialorder %v3736, 0.0
        %v3829 = vand.u32 %v3736, 2147483648
        %v3830 = vsel %vm3828, %v3829, %v3827
        %v3831 = vrsqrt.pop %v3737
        %v3832 = vmul.f32 %v3737, %v3831
        %vm3833 = vcmp.eq.f32.partialorder %v3737, inf
        %v3834 = vsel %vm3833, %v3737, %v3832
        %vm3835 = vcmp.eq.f32.partialorder %v3737, 0.0
        %v3836 = vand.u32 %v3737, 2147483648
        %v3837 = vsel %vm3835, %v3836, %v3834
        %v3838 = vrsqrt.pop %v3738
        %v3839 = vmul.f32 %v3738, %v3838
        %vm3840 = vcmp.eq.f32.partialorder %v3738, inf
        %v3841 = vsel %vm3840, %v3738, %v3839
        %vm3842 = vcmp.eq.f32.partialorder %v3738, 0.0
        %v3843 = vand.u32 %v3738, 2147483648
        %v3844 = vsel %vm3842, %v3843, %v3841
        %v3845 = vrsqrt.pop %v3739
        %v3846 = vmul.f32 %v3739, %v3845
        %vm3847 = vcmp.eq.f32.partialorder %v3739, inf
        %v3848 = vsel %vm3847, %v3739, %v3846
        %vm3849 = vcmp.eq.f32.partialorder %v3739, 0.0
        %v3850 = vand.u32 %v3739, 2147483648
        %v3851 = vsel %vm3849, %v3850, %v3848
        %v3852 = vadd.f32 %v3692, %v3746
        %v3853 = vadd.f32 %v3693, %v3753
        %v3854 = vadd.f32 %v3694, %v3760
        %v3855 = vadd.f32 %v3695, %v3767
        %v3856 = vadd.f32 %v3696, %v3774
        %v3857 = vadd.f32 %v3697, %v3781
        %v3858 = vadd.f32 %v3698, %v3788
        %v3859 = vadd.f32 %v3699, %v3795
        %v3860 = vadd.f32 %v3700, %v3802
        %v3861 = vadd.f32 %v3701, %v3809
        %v3862 = vadd.f32 %v3702, %v3816
        %v3863 = vadd.f32 %v3703, %v3823
        %v3864 = vadd.f32 %v3704, %v3830
        %v3865 = vadd.f32 %v3705, %v3837
        %v3866 = vadd.f32 %v3706, %v3844
        %v3867 = vadd.f32 %v3707, %v3851
        %v3868 = vlog2.pop %v3852
        %v3869 = vmul.f32 %v3868, 0.6931472
        %v3870 = vlog2.pop %v3853
        %v3871 = vmul.f32 %v3870, 0.6931472
        %v3872 = vlog2.pop %v3854
        %v3873 = vmul.f32 %v3872, 0.6931472
        %v3874 = vlog2.pop %v3855
        %v3875 = vmul.f32 %v3874, 0.6931472
        %v3876 = vlog2.pop %v3856
        %v3877 = vmul.f32 %v3876, 0.6931472
        %v3878 = vlog2.pop %v3857
        %v3879 = vmul.f32 %v3878, 0.6931472
        %v3880 = vlog2.pop %v3858
        %v3881 = vmul.f32 %v3880, 0.6931472
        %v3882 = vlog2.pop %v3859
        %v3883 = vmul.f32 %v3882, 0.6931472
        %v3884 = vlog2.pop %v3860
        %v3885 = vmul.f32 %v3884, 0.6931472
        %v3886 = vlog2.pop %v3861
        %v3887 = vmul.f32 %v3886, 0.6931472
        %v3888 = vlog2.pop %v3862
        %v3889 = vmul.f32 %v3888, 0.6931472
        %v3890 = vlog2.pop %v3863
        %v3891 = vmul.f32 %v3890, 0.6931472
        %v3892 = vlog2.pop %v3864
        %v3893 = vmul.f32 %v3892, 0.6931472
        %v3894 = vlog2.pop %v3865
        %v3895 = vmul.f32 %v3894, 0.6931472
        %v3896 = vlog2.pop %v3866
        %v3897 = vmul.f32 %v3896, 0.6931472
        %v3898 = vlog2.pop %v3867
        %v3899 = vmul.f32 %v3898, 0.6931472
        %v3900 = vmul.f32 %v3869, 1.4142135
        %v3901 = vmul.f32 %v3871, 1.4142135
        %v3902 = vmul.f32 %v3873, 1.4142135
        %v3903 = vmul.f32 %v3875, 1.4142135
        %v3904 = vmul.f32 %v3877, 1.4142135
        %v3905 = vmul.f32 %v3879, 1.4142135
        %v3906 = vmul.f32 %v3881, 1.4142135
        %v3907 = vmul.f32 %v3883, 1.4142135
        %v3908 = vmul.f32 %v3885, 1.4142135
        %v3909 = vmul.f32 %v3887, 1.4142135
        %v3910 = vmul.f32 %v3889, 1.4142135
        %v3911 = vmul.f32 %v3891, 1.4142135
        %v3912 = vmul.f32 %v3893, 1.4142135
        %v3913 = vmul.f32 %v3895, 1.4142135
        %v3914 = vmul.f32 %v3897, 1.4142135
        %v3915 = vmul.f32 %v3899, 1.4142135
        %v3916 = vmul.f32 %v3900, %v3596
        %v3917 = vmul.f32 %v3901, %v3597
        %v3918 = vmul.f32 %v3902, %v3598
        %v3919 = vmul.f32 %v3903, %v3599
        %v3920 = vmul.f32 %v3904, %v3600
        %v3921 = vmul.f32 %v3905, %v3601
        %v3922 = vmul.f32 %v3906, %v3602
        %v3923 = vmul.f32 %v3907, %v3603
        %v3924 = vmul.f32 %v3908, %v3604
        %v3925 = vmul.f32 %v3909, %v3605
        %v3926 = vmul.f32 %v3910, %v3606
        %v3927 = vmul.f32 %v3911, %v3607
        %v3928 = vmul.f32 %v3912, %v3608
        %v3929 = vmul.f32 %v3913, %v3609
        %v3930 = vmul.f32 %v3914, %v3610
        %v3931 = vmul.f32 %v3915, %v3611
        %v3932 = vmul.f32 %v3500, %v3916
        %v3933 = vmul.f32 %v3501, %v3917
        %v3934 = vmul.f32 %v3502, %v3918
        %v3935 = vmul.f32 %v3503, %v3919
        %v3936 = vmul.f32 %v3504, %v3920
        %v3937 = vmul.f32 %v3505, %v3921
        %v3938 = vmul.f32 %v3506, %v3922
        %v3939 = vmul.f32 %v3507, %v3923
        %v3940 = vmul.f32 %v3508, %v3924
        %v3941 = vmul.f32 %v3509, %v3925
        %v3942 = vmul.f32 %v3510, %v3926
        %v3943 = vmul.f32 %v3511, %v3927
        %v3944 = vmul.f32 %v3512, %v3928
        %v3945 = vmul.f32 %v3513, %v3929
        %v3946 = vmul.f32 %v3514, %v3930
        %v3947 = vmul.f32 %v3515, %v3931
        %v3948 = vpack.c.bf16 %v3933, %v3932
        %v3949 = vpack.c.bf16 %v3935, %v3934
        %v3950 = vpack.c.bf16 %v3937, %v3936
        %v3951 = vpack.c.bf16 %v3939, %v3938
        %v3952 = vpack.c.bf16 %v3941, %v3940
        %v3953 = vpack.c.bf16 %v3943, %v3942
        %v3954 = vpack.c.bf16 %v3945, %v3944
        %v3955 = vpack.c.bf16 %v3947, %v3946
        %v3956 = vld [vmem:[%s3] sm:$0xf]
        %v3957 = vld [vmem:[%s3 + $0x4] sm:$0xf]
        %v3958 = vld [vmem:[%s4] sm:$0x1]
        %v3960 = vlaneseq
        %v3961 = vshrl.u32 %v3960, 7
        %v3962 = vsub.s32 0, %v3961
        %v3963 = vrot.slane %v3958, %v3962
        %v3967 = vunpack.c.l.b16 %v3956
        %v3968 = vunpack.c.l.b16 %v3957
        %v3969 = vpack.c.b16 %v3968, %v3967
        %v3972 = vsel %vm650, %v3948, 0
        %v3975 = vsel %vm650, %v3949, 0
        %v3978 = vsel %vm650, %v3950, 0
        %v3981 = vsel %vm650, %v3951, 0
        %v3984 = vsel %vm650, %v3952, 0
        %v3987 = vsel %vm650, %v3953, 0
        %v3990 = vsel %vm650, %v3954, 0
        %v3993 = vsel %vm650, %v3955, 0
        %3995 = vmatprep.subr.bf16.mxu0 0
        %3996 = vmatpush1.bf16.msra.mxu0 %v3969
        %3997 = vmatprep.subr.bf16.mxu0 0
        %3998 = vmatpush1.bf16.msra.mxu0 0
        %3999 = vmatprep.subr.bf16.mxu0 0
        %4000 = vmatpush1.bf16.msra.mxu0 0
        %4001 = vmatprep.subr.bf16.mxu0 0
        %4002 = vmatpush1.bf16.msra.mxu0 0
        %4003 = vmatprep.subr.bf16.mxu0 0
        %4004 = vmatpush1.bf16.msra.mxu0 0
        %4005 = vmatprep.subr.bf16.mxu0 0
        %4006 = vmatpush1.bf16.msra.mxu0 0
        %4007 = vmatprep.subr.bf16.mxu0 0
        %4008 = vmatpush1.bf16.msra.mxu0 0
        %4009 = vmatprep.subr.bf16.mxu0 0
        %4010 = vmatpush1.bf16.msra.mxu0 0
        %4011 = vmatprep.subr.bf16.mxu0 0
        %4012 = vmatpush1.bf16.msra.mxu0 0
        %4013 = vmatprep.subr.bf16.mxu0 0
        %4014 = vmatpush1.bf16.msra.mxu0 0
        %4015 = vmatprep.subr.bf16.mxu0 0
        %4016 = vmatpush1.bf16.msra.mxu0 0
        %4017 = vmatprep.subr.bf16.mxu0 0
        %4018 = vmatpush1.bf16.msra.mxu0 0
        %4019 = vmatprep.subr.bf16.mxu0 0
        %4020 = vmatpush1.bf16.msra.mxu0 0
        %4021 = vmatprep.subr.bf16.mxu0 0
        %4022 = vmatpush1.bf16.msra.mxu0 0
        %4023 = vmatprep.subr.bf16.mxu0 0
        %4024 = vmatpush1.bf16.msra.mxu0 0
        %4025 = vmatprep.subr.bf16.mxu0 0
        %4026 = vmatpush1.bf16.msra.mxu0 0
        %4027 = vmatprep.mubr.bf16.mxu0 0
        %4028 = vmatmul.mubr.bf16.gmra.mrb[0].mxu0 %v3972
        %v4029 = vpop.f32.mrb[0].mxu0
        %v4030 = vadd.f32 %v3963, %v4029
        %v4031 = vpop.f32.mrb[0].mxu0
        %v4032 = vpop.f32.mrb[0].mxu0
        %v4033 = vadd.f32 %v3963, %v4032
        %v4034 = vpop.f32.mrb[0].mxu0
        %4035 = vmatprep.mubr.bf16.mxu0 0
        %4036 = vmatmul.mubr.bf16.gmra.mrb[0].mxu0 %v3975
        %v4037 = vpop.f32.mrb[0].mxu0
        %v4038 = vadd.f32 %v3963, %v4037
        %v4039 = vpop.f32.mrb[0].mxu0
        %v4040 = vpop.f32.mrb[0].mxu0
        %v4041 = vadd.f32 %v3963, %v4040
        %v4042 = vpop.f32.mrb[0].mxu0
        %4043 = vmatprep.mubr.bf16.mxu0 0
        %4044 = vmatmul.mubr.bf16.gmra.mrb[0].mxu0 %v3978
        %v4045 = vpop.f32.mrb[0].mxu0
        %v4046 = vadd.f32 %v3963, %v4045
        %v4047 = vpop.f32.mrb[0].mxu0
        %v4048 = vpop.f32.mrb[0].mxu0
        %v4049 = vadd.f32 %v3963, %v4048
        %v4050 = vpop.f32.mrb[0].mxu0
        %4051 = vmatprep.mubr.bf16.mxu0 0
        %4052 = vmatmul.mubr.bf16.gmra.mrb[0].mxu0 %v3981
        %v4053 = vpop.f32.mrb[0].mxu0
        %v4054 = vadd.f32 %v3963, %v4053
        %v4055 = vpop.f32.mrb[0].mxu0
        %v4056 = vpop.f32.mrb[0].mxu0
        %v4057 = vadd.f32 %v3963, %v4056
        %v4058 = vpop.f32.mrb[0].mxu0
        %4059 = vmatprep.mubr.bf16.mxu0 0
        %4060 = vmatmul.mubr.bf16.gmra.mrb[0].mxu0 %v3984
        %v4061 = vpop.f32.mrb[0].mxu0
        %v4062 = vadd.f32 %v3963, %v4061
        %v4063 = vpop.f32.mrb[0].mxu0
        %v4064 = vpop.f32.mrb[0].mxu0
        %v4065 = vadd.f32 %v3963, %v4064
        %v4066 = vpop.f32.mrb[0].mxu0
        %4067 = vmatprep.mubr.bf16.mxu0 0
        %4068 = vmatmul.mubr.bf16.gmra.mrb[0].mxu0 %v3987
        %v4069 = vpop.f32.mrb[0].mxu0
        %v4070 = vadd.f32 %v3963, %v4069
        %v4071 = vpop.f32.mrb[0].mxu0
        %v4072 = vpop.f32.mrb[0].mxu0
        %v4073 = vadd.f32 %v3963, %v4072
        %v4074 = vpop.f32.mrb[0].mxu0
        %4075 = vmatprep.mubr.bf16.mxu0 0
        %4076 = vmatmul.mubr.bf16.gmra.mrb[0].mxu0 %v3990
        %v4077 = vpop.f32.mrb[0].mxu0
        %v4078 = vadd.f32 %v3963, %v4077
        %v4079 = vpop.f32.mrb[0].mxu0
        %v4080 = vpop.f32.mrb[0].mxu0
        %v4081 = vadd.f32 %v3963, %v4080
        %v4082 = vpop.f32.mrb[0].mxu0
        %4083 = vmatprep.mubr.bf16.mxu0 0
        %4084 = vmatmul.mubr.bf16.gmra.mrb[0].mxu0 %v3993
        %v4085 = vpop.f32.mrb[0].mxu0
        %v4086 = vadd.f32 %v3963, %v4085
        %v4087 = vpop.f32.mrb[0].mxu0
        %v4088 = vpop.f32.mrb[0].mxu0
        %v4089 = vadd.f32 %v3963, %v4088
        %v4090 = vpop.f32.mrb[0].mxu0
        %4091 = vdwg.mxu0
        %v4092 = vmul.f32 %v4030, %v3339
        %v4093 = vmul.f32 %v4033, %v3339
        %v4094 = vmul.f32 %v4038, %v3339
        %v4095 = vmul.f32 %v4041, %v3339
        %v4096 = vmul.f32 %v4046, %v3339
        %v4097 = vmul.f32 %v4049, %v3339
        %v4098 = vmul.f32 %v4054, %v3339
        %v4099 = vmul.f32 %v4057, %v3339
        %v4100 = vmul.f32 %v4062, %v3339
        %v4101 = vmul.f32 %v4065, %v3339
        %v4102 = vmul.f32 %v4070, %v3339
        %v4103 = vmul.f32 %v4073, %v3339
        %v4104 = vmul.f32 %v4078, %v3339
        %v4105 = vmul.f32 %v4081, %v3339
        %v4106 = vmul.f32 %v4086, %v3339
        %v4107 = vmul.f32 %v4089, %v3339
        %v4108 = vmul.f32 %v4092, %v4092
        %v4109 = vmul.f32 %v4093, %v4093
        %v4110 = vmul.f32 %v4094, %v4094
        %v4111 = vmul.f32 %v4095, %v4095
        %v4112 = vmul.f32 %v4096, %v4096
        %v4113 = vmul.f32 %v4097, %v4097
        %v4114 = vmul.f32 %v4098, %v4098
        %v4115 = vmul.f32 %v4099, %v4099
        %v4116 = vmul.f32 %v4100, %v4100
        %v4117 = vmul.f32 %v4101, %v4101
        %v4118 = vmul.f32 %v4102, %v4102
        %v4119 = vmul.f32 %v4103, %v4103
        %v4120 = vmul.f32 %v4104, %v4104
        %v4121 = vmul.f32 %v4105, %v4105
        %v4122 = vmul.f32 %v4106, %v4106
        %v4123 = vmul.f32 %v4107, %v4107
        %4124 = vadd.xlane.f32.xlu0 %v4108
        %v4125 = vpop.xlane.xlu0 %4124
        %4126 = vadd.xlane.f32.xlu0 %v4109
        %v4127 = vpop.xlane.xlu0 %4126
        %4128 = vadd.xlane.f32.xlu0 %v4110
        %v4129 = vpop.xlane.xlu0 %4128
        %4130 = vadd.xlane.f32.xlu0 %v4111
        %v4131 = vpop.xlane.xlu0 %4130
        %4132 = vadd.xlane.f32.xlu0 %v4112
        %v4133 = vpop.xlane.xlu0 %4132
        %4134 = vadd.xlane.f32.xlu0 %v4113
        %v4135 = vpop.xlane.xlu0 %4134
        %4136 = vadd.xlane.f32.xlu0 %v4114
        %v4137 = vpop.xlane.xlu0 %4136
        %4138 = vadd.xlane.f32.xlu0 %v4115
        %v4139 = vpop.xlane.xlu0 %4138
        %4140 = vadd.xlane.f32.xlu0 %v4116
        %v4141 = vpop.xlane.xlu0 %4140
        %4142 = vadd.xlane.f32.xlu0 %v4117
        %v4143 = vpop.xlane.xlu0 %4142
        %4144 = vadd.xlane.f32.xlu0 %v4118
        %v4145 = vpop.xlane.xlu0 %4144
        %4146 = vadd.xlane.f32.xlu0 %v4119
        %v4147 = vpop.xlane.xlu0 %4146
        %4148 = vadd.xlane.f32.xlu0 %v4120
        %v4149 = vpop.xlane.xlu0 %4148
        %4150 = vadd.xlane.f32.xlu0 %v4121
        %v4151 = vpop.xlane.xlu0 %4150
        %4152 = vadd.xlane.f32.xlu0 %v4122
        %v4153 = vpop.xlane.xlu0 %4152
        %4154 = vadd.xlane.f32.xlu0 %v4123
        %v4155 = vpop.xlane.xlu0 %4154
        %v4156 = vmax.f32 %v4125, 1e-30
        %v4157 = vmax.f32 %v4127, 1e-30
        %v4158 = vmax.f32 %v4129, 1e-30
        %v4159 = vmax.f32 %v4131, 1e-30
        %v4160 = vmax.f32 %v4133, 1e-30
        %v4161 = vmax.f32 %v4135, 1e-30
        %v4162 = vmax.f32 %v4137, 1e-30
        %v4163 = vmax.f32 %v4139, 1e-30
        %v4164 = vmax.f32 %v4141, 1e-30
        %v4165 = vmax.f32 %v4143, 1e-30
        %v4166 = vmax.f32 %v4145, 1e-30
        %v4167 = vmax.f32 %v4147, 1e-30
        %v4168 = vmax.f32 %v4149, 1e-30
        %v4169 = vmax.f32 %v4151, 1e-30
        %v4170 = vmax.f32 %v4153, 1e-30
        %v4171 = vmax.f32 %v4155, 1e-30
        %v4172 = vrsqrt.pop %v4156
        %v4173 = vrsqrt.pop %v4157
        %v4174 = vrsqrt.pop %v4158
        %v4175 = vrsqrt.pop %v4159
        %v4176 = vrsqrt.pop %v4160
        %v4177 = vrsqrt.pop %v4161
        %v4178 = vrsqrt.pop %v4162
        %v4179 = vrsqrt.pop %v4163
        %v4180 = vrsqrt.pop %v4164
        %v4181 = vrsqrt.pop %v4165
        %v4182 = vrsqrt.pop %v4166
        %v4183 = vrsqrt.pop %v4167
        %v4184 = vrsqrt.pop %v4168
        %v4185 = vrsqrt.pop %v4169
        %v4186 = vrsqrt.pop %v4170
        %v4187 = vrsqrt.pop %v4171
        %v4188 = vmul.f32 %v4125, %v4172
        %v4189 = vmul.f32 %v4127, %v4173
        %v4190 = vmul.f32 %v4129, %v4174
        %v4191 = vmul.f32 %v4131, %v4175
        %v4192 = vmul.f32 %v4133, %v4176
        %v4193 = vmul.f32 %v4135, %v4177
        %v4194 = vmul.f32 %v4137, %v4178
        %v4195 = vmul.f32 %v4139, %v4179
        %v4196 = vmul.f32 %v4141, %v4180
        %v4197 = vmul.f32 %v4143, %v4181
        %v4198 = vmul.f32 %v4145, %v4182
        %v4199 = vmul.f32 %v4147, %v4183
        %v4200 = vmul.f32 %v4149, %v4184
        %v4201 = vmul.f32 %v4151, %v4185
        %v4202 = vmul.f32 %v4153, %v4186
        %v4203 = vmul.f32 %v4155, %v4187
        %v4204 = vmul.f32 %v4188, 0.70710677
        %v4205 = vmul.f32 %v4189, 0.70710677
        %v4206 = vmul.f32 %v4190, 0.70710677
        %v4207 = vmul.f32 %v4191, 0.70710677
        %v4208 = vmul.f32 %v4192, 0.70710677
        %v4209 = vmul.f32 %v4193, 0.70710677
        %v4210 = vmul.f32 %v4194, 0.70710677
        %v4211 = vmul.f32 %v4195, 0.70710677
        %v4212 = vmul.f32 %v4196, 0.70710677
        %v4213 = vmul.f32 %v4197, 0.70710677
        %v4214 = vmul.f32 %v4198, 0.70710677
        %v4215 = vmul.f32 %v4199, 0.70710677
        %v4216 = vmul.f32 %v4200, 0.70710677
        %v4217 = vmul.f32 %v4201, 0.70710677
        %v4218 = vmul.f32 %v4202, 0.70710677
        %v4219 = vmul.f32 %v4203, 0.70710677
        %v4220 = vmul.f32 %v4204, 1.442695
        %v4221 = vpow.pop %v4220
        %v4222 = vmul.f32 %v4205, 1.442695
        %v4223 = vpow.pop %v4222
        %v4224 = vmul.f32 %v4206, 1.442695
        %v4225 = vpow.pop %v4224
        %v4226 = vmul.f32 %v4207, 1.442695
        %v4227 = vpow.pop %v4226
        %v4228 = vmul.f32 %v4208, 1.442695
        %v4229 = vpow.pop %v4228
        %v4230 = vmul.f32 %v4209, 1.442695
        %v4231 = vpow.pop %v4230
        %v4232 = vmul.f32 %v4210, 1.442695
        %v4233 = vpow.pop %v4232
        %v4234 = vmul.f32 %v4211, 1.442695
        %v4235 = vpow.pop %v4234
        %v4236 = vmul.f32 %v4212, 1.442695
        %v4237 = vpow.pop %v4236
        %v4238 = vmul.f32 %v4213, 1.442695
        %v4239 = vpow.pop %v4238
        %v4240 = vmul.f32 %v4214, 1.442695
        %v4241 = vpow.pop %v4240
        %v4242 = vmul.f32 %v4215, 1.442695
        %v4243 = vpow.pop %v4242
        %v4244 = vmul.f32 %v4216, 1.442695
        %v4245 = vpow.pop %v4244
        %v4246 = vmul.f32 %v4217, 1.442695
        %v4247 = vpow.pop %v4246
        %v4248 = vmul.f32 %v4218, 1.442695
        %v4249 = vpow.pop %v4248
        %v4250 = vmul.f32 %v4219, 1.442695
        %v4251 = vpow.pop %v4250
        %v4252 = vrcp.pop %v4221
        %v4253 = vrcp.pop %v4223
        %v4254 = vrcp.pop %v4225
        %v4255 = vrcp.pop %v4227
        %v4256 = vrcp.pop %v4229
        %v4257 = vrcp.pop %v4231
        %v4258 = vrcp.pop %v4233
        %v4259 = vrcp.pop %v4235
        %v4260 = vrcp.pop %v4237
        %v4261 = vrcp.pop %v4239
        %v4262 = vrcp.pop %v4241
        %v4263 = vrcp.pop %v4243
        %v4264 = vrcp.pop %v4245
        %v4265 = vrcp.pop %v4247
        %v4266 = vrcp.pop %v4249
        %v4267 = vrcp.pop %v4251
        %v4268 = vsub.f32 %v4221, %v4252
        %v4269 = vsub.f32 %v4223, %v4253
        %v4270 = vsub.f32 %v4225, %v4254
        %v4271 = vsub.f32 %v4227, %v4255
        %v4272 = vsub.f32 %v4229, %v4256
        %v4273 = vsub.f32 %v4231, %v4257
        %v4274 = vsub.f32 %v4233, %v4258
        %v4275 = vsub.f32 %v4235, %v4259
        %v4276 = vsub.f32 %v4237, %v4260
        %v4277 = vsub.f32 %v4239, %v4261
        %v4278 = vsub.f32 %v4241, %v4262
        %v4279 = vsub.f32 %v4243, %v4263
        %v4280 = vsub.f32 %v4245, %v4264
        %v4281 = vsub.f32 %v4247, %v4265
        %v4282 = vsub.f32 %v4249, %v4266
        %v4283 = vsub.f32 %v4251, %v4267
        %v4284 = vmul.f32 %v4268, 0.5
        %v4285 = vmul.f32 %v4269, 0.5
        %v4286 = vmul.f32 %v4270, 0.5
        %v4287 = vmul.f32 %v4271, 0.5
        %v4288 = vmul.f32 %v4272, 0.5
        %v4289 = vmul.f32 %v4273, 0.5
        %v4290 = vmul.f32 %v4274, 0.5
        %v4291 = vmul.f32 %v4275, 0.5
        %v4292 = vmul.f32 %v4276, 0.5
        %v4293 = vmul.f32 %v4277, 0.5
        %v4294 = vmul.f32 %v4278, 0.5
        %v4295 = vmul.f32 %v4279, 0.5
        %v4296 = vmul.f32 %v4280, 0.5
        %v4297 = vmul.f32 %v4281, 0.5
        %v4298 = vmul.f32 %v4282, 0.5
        %v4299 = vmul.f32 %v4283, 0.5
        %v4300 = vadd.f32 %v4221, %v4252
        %v4301 = vadd.f32 %v4223, %v4253
        %v4302 = vadd.f32 %v4225, %v4254
        %v4303 = vadd.f32 %v4227, %v4255
        %v4304 = vadd.f32 %v4229, %v4256
        %v4305 = vadd.f32 %v4231, %v4257
        %v4306 = vadd.f32 %v4233, %v4258
        %v4307 = vadd.f32 %v4235, %v4259
        %v4308 = vadd.f32 %v4237, %v4260
        %v4309 = vadd.f32 %v4239, %v4261
        %v4310 = vadd.f32 %v4241, %v4262
        %v4311 = vadd.f32 %v4243, %v4263
        %v4312 = vadd.f32 %v4245, %v4264
        %v4313 = vadd.f32 %v4247, %v4265
        %v4314 = vadd.f32 %v4249, %v4266
        %v4315 = vadd.f32 %v4251, %v4267
        %v4316 = vmul.f32 %v4300, 0.5
        %v4317 = vmul.f32 %v4301, 0.5
        %v4318 = vmul.f32 %v4302, 0.5
        %v4319 = vmul.f32 %v4303, 0.5
        %v4320 = vmul.f32 %v4304, 0.5
        %v4321 = vmul.f32 %v4305, 0.5
        %v4322 = vmul.f32 %v4306, 0.5
        %v4323 = vmul.f32 %v4307, 0.5
        %v4324 = vmul.f32 %v4308, 0.5
        %v4325 = vmul.f32 %v4309, 0.5
        %v4326 = vmul.f32 %v4310, 0.5
        %v4327 = vmul.f32 %v4311, 0.5
        %v4328 = vmul.f32 %v4312, 0.5
        %v4329 = vmul.f32 %v4313, 0.5
        %v4330 = vmul.f32 %v4314, 0.5
        %v4331 = vmul.f32 %v4315, 0.5
        %v4332 = vmul.f32 %v4284, 1.4142135
        %v4333 = vmul.f32 %v4285, 1.4142135
        %v4334 = vmul.f32 %v4286, 1.4142135
        %v4335 = vmul.f32 %v4287, 1.4142135
        %v4336 = vmul.f32 %v4288, 1.4142135
        %v4337 = vmul.f32 %v4289, 1.4142135
        %v4338 = vmul.f32 %v4290, 1.4142135
        %v4339 = vmul.f32 %v4291, 1.4142135
        %v4340 = vmul.f32 %v4292, 1.4142135
        %v4341 = vmul.f32 %v4293, 1.4142135
        %v4342 = vmul.f32 %v4294, 1.4142135
        %v4343 = vmul.f32 %v4295, 1.4142135
        %v4344 = vmul.f32 %v4296, 1.4142135
        %v4345 = vmul.f32 %v4297, 1.4142135
        %v4346 = vmul.f32 %v4298, 1.4142135
        %v4347 = vmul.f32 %v4299, 1.4142135
        %v4348 = vmul.f32 %v4332, %v4172
        %v4349 = vmul.f32 %v4333, %v4173
        %v4350 = vmul.f32 %v4334, %v4174
        %v4351 = vmul.f32 %v4335, %v4175
        %v4352 = vmul.f32 %v4336, %v4176
        %v4353 = vmul.f32 %v4337, %v4177
        %v4354 = vmul.f32 %v4338, %v4178
        %v4355 = vmul.f32 %v4339, %v4179
        %v4356 = vmul.f32 %v4340, %v4180
        %v4357 = vmul.f32 %v4341, %v4181
        %v4358 = vmul.f32 %v4342, %v4182
        %v4359 = vmul.f32 %v4343, %v4183
        %v4360 = vmul.f32 %v4344, %v4184
        %v4361 = vmul.f32 %v4345, %v4185
        %v4362 = vmul.f32 %v4346, %v4186
        %v4363 = vmul.f32 %v4347, %v4187
        %v4364 = vmul.f32 %v4092, %v4348
        %v4365 = vmul.f32 %v4093, %v4349
        %v4366 = vmul.f32 %v4094, %v4350
        %v4367 = vmul.f32 %v4095, %v4351
        %v4368 = vmul.f32 %v4096, %v4352
        %v4369 = vmul.f32 %v4097, %v4353
        %v4370 = vmul.f32 %v4098, %v4354
        %v4371 = vmul.f32 %v4099, %v4355
        %v4372 = vmul.f32 %v4100, %v4356
        %v4373 = vmul.f32 %v4101, %v4357
        %v4374 = vmul.f32 %v4102, %v4358
        %v4375 = vmul.f32 %v4103, %v4359
        %v4376 = vmul.f32 %v4104, %v4360
        %v4377 = vmul.f32 %v4105, %v4361
        %v4378 = vmul.f32 %v4106, %v4362
        %v4379 = vmul.f32 %v4107, %v4363
        %v4380 = vmul.f32 %v4316, 1.4142135
        %v4381 = vmul.f32 %v4317, 1.4142135
        %v4382 = vmul.f32 %v4318, 1.4142135
        %v4383 = vmul.f32 %v4319, 1.4142135
        %v4384 = vmul.f32 %v4320, 1.4142135
        %v4385 = vmul.f32 %v4321, 1.4142135
        %v4386 = vmul.f32 %v4322, 1.4142135
        %v4387 = vmul.f32 %v4323, 1.4142135
        %v4388 = vmul.f32 %v4324, 1.4142135
        %v4389 = vmul.f32 %v4325, 1.4142135
        %v4390 = vmul.f32 %v4326, 1.4142135
        %v4391 = vmul.f32 %v4327, 1.4142135
        %v4392 = vmul.f32 %v4328, 1.4142135
        %v4393 = vmul.f32 %v4329, 1.4142135
        %v4394 = vmul.f32 %v4330, 1.4142135
        %v4395 = vmul.f32 %v4331, 1.4142135
        %v4396 = vmul.f32 %v4380, %v583
        %v4397 = vmul.f32 %v4381, %v583
        %v4398 = vmul.f32 %v4382, %v583
        %v4399 = vmul.f32 %v4383, %v583
        %v4400 = vmul.f32 %v4384, %v583
        %v4401 = vmul.f32 %v4385, %v583
        %v4402 = vmul.f32 %v4386, %v583
        %v4403 = vmul.f32 %v4387, %v583
        %v4404 = vmul.f32 %v4388, %v583
        %v4405 = vmul.f32 %v4389, %v583
        %v4406 = vmul.f32 %v4390, %v583
        %v4407 = vmul.f32 %v4391, %v583
        %v4408 = vmul.f32 %v4392, %v583
        %v4409 = vmul.f32 %v4393, %v583
        %v4410 = vmul.f32 %v4394, %v583
        %v4411 = vmul.f32 %v4395, %v583
        %v4412 = vadd.f32 %v4364, %v4396
        %v4413 = vadd.f32 %v4365, %v4397
        %v4414 = vadd.f32 %v4366, %v4398
        %v4415 = vadd.f32 %v4367, %v4399
        %v4416 = vadd.f32 %v4368, %v4400
        %v4417 = vadd.f32 %v4369, %v4401
        %v4418 = vadd.f32 %v4370, %v4402
        %v4419 = vadd.f32 %v4371, %v4403
        %v4420 = vadd.f32 %v4372, %v4404
        %v4421 = vadd.f32 %v4373, %v4405
        %v4422 = vadd.f32 %v4374, %v4406
        %v4423 = vadd.f32 %v4375, %v4407
        %v4424 = vadd.f32 %v4376, %v4408
        %v4425 = vadd.f32 %v4377, %v4409
        %v4426 = vadd.f32 %v4378, %v4410
        %v4427 = vadd.f32 %v4379, %v4411
        %4428 = vst [vmem:[%s512] sm:$0xff] %v4412
        %4429 = vst [vmem:[%s512 + $0x8] sm:$0xff] %v4413
        %4430 = vst [vmem:[%s512 + $0x10] sm:$0xff] %v4414
        %4431 = vst [vmem:[%s512 + $0x18] sm:$0xff] %v4415
        %4432 = vst [vmem:[%s512 + $0x20] sm:$0xff] %v4416
        %4433 = vst [vmem:[%s512 + $0x28] sm:$0xff] %v4417
        %4434 = vst [vmem:[%s512 + $0x30] sm:$0xff] %v4418
        %4435 = vst [vmem:[%s512 + $0x38] sm:$0xff] %v4419
        %4436 = vst [vmem:[%s512 + $0x40] sm:$0xff] %v4420
        %4437 = vst [vmem:[%s512 + $0x48] sm:$0xff] %v4421
        %4438 = vst [vmem:[%s512 + $0x50] sm:$0xff] %v4422
        %4439 = vst [vmem:[%s512 + $0x58] sm:$0xff] %v4423
        %4440 = vst [vmem:[%s512 + $0x60] sm:$0xff] %v4424
        %4441 = vst [vmem:[%s512 + $0x68] sm:$0xff] %v4425
        %4442 = vst [vmem:[%s512 + $0x70] sm:$0xff] %v4426
        %4443 = vst [vmem:[%s512 + $0x78] sm:$0xff] %v4427
        %s4444 = smul.u32 16, %s16
        %p4445 = scmp.lt.s32.totalorder %s4444, 31
        %s4446 = scalar_select %p4445, %s4444, 31
        %s4447 = smul.addr %s4446, 8
        %s4448 = scalar_lea.vmem %s5, %s4447
        // Predicated region
        $region79: #{light_hyper_former_forward.5} parent=73 // pred_check
          %p4449 = pneg %p144
        $region80: #{light_hyper_former_forward.5} parent=73 // pred_check_branch
          %4451 = sbr.rel (%p4449) target = $region82
        $region81: #{light_hyper_former_forward.5} parent=73 // pred_region
          %s4452 = smul.u32 16, %s16
        $region82: #{light_hyper_former_forward.5} parent=73 // pred_fallthru
          _
      $region74: #{light_hyper_former_forward.5} parent=5 // pred_fallthru
        _
      %p4453 = scmp.le.s32.totalorder 2, %s11
      // Predicated region
      $region83: #{light_hyper_former_forward.5} parent=5 // pred_check
        %p4454 = pneg %p4453
      $region84: #{light_hyper_former_forward.5} parent=5 // pred_check_branch
        %4456 = sbr.rel (%p4454) target = $region86
      $region85: #{light_hyper_former_forward.5} parent=5 // pred_region
        %s4457 = ssub.s32 %s11, 2
        // Predicated region
        $region87: #{light_hyper_former_forward.5} parent=85 // pred_check
          %p4458 = pneg %p150
        $region88: #{light_hyper_former_forward.5} parent=85 // pred_check_branch
          %4460 = sbr.rel (%p4458) target = $region90
        $region89: #{light_hyper_former_forward.5} parent=85 // pred_region
          %s4461 = smul.u32 16, %s17
          %p4462 = scmp.lt.s32.totalorder %s4461, 31
          %s4463 = scalar_select %p4462, %s4461, 31
          %s4464 = smul.addr %s4463, 8
          %s4465 = scalar_lea.vmem %s5, %s4464
        $region90: #{light_hyper_former_forward.5} parent=85 // pred_fallthru
          _
      $region86: #{light_hyper_former_forward.5} parent=5 // pred_fallthru
        _
    $region6: #{light_hyper_former_forward.5} parent=1 // loop_footer
      %s15 = sadd.s32 1, %s11
    $region7: #{light_hyper_former_forward.5} parent=1 // loop_footer_branch
      %10 = sbr.rel target = $region3
    $region8: #{light_hyper_former_forward.5} parent=1 // loop_exit
      _

</llo_original>
